<compile_context>
chip_gen: v6e
topology: v6e:2x2x1
jax: 0.10.0
libtpu: 0.0.40
codegen_flags: <defaults>
</compile_context>

<pallas_src>
import jax
import jax.numpy as jnp
from jax.experimental import pallas as pl
from jax.experimental.pallas import tpu as pltpu

_EPS = 1e-5


# --------------------------------------------------------------------------
# Generation-aware, byte-based tile planning.
# --------------------------------------------------------------------------
def _round_up(x, m):
    return ((x + m - 1) // m) * m


def _vmem_capacity_bytes():
    try:
        info = pltpu.get_tpu_info()
        cap = getattr(info, "vmem_capacity_bytes", None)
        if cap:
            return int(cap)
    except Exception:
        pass
    return 64 << 20                      # conservative (v7x-sized) fallback


def _plan_contact_tiles(n_pad, m_pad, d0, d, h):
    """Pick (TN, TM) so all live intermediates + double-buffered I/O blocks
    fit a generation-specific budget (~VMEM/8: 8 MiB on v7x, 16 MiB v5e/v6e)."""
    vmem = _vmem_capacity_bytes()
    budget = vmem // 8

    def step_bytes(tn, tm):
        rows = tn * tm
        inter = rows * (2 * d * 2        # prod / |diff| values (bf16)
                        + 2 * d * 2      # A scratch (bf16)
                        + h * 4          # s (f32)
                        + 4 * 4)         # f32 logits / sigmoid / mask temps
        io = (2 * tn * d0 * 2            # x1 tile, double-buffered (bf16)
              + 2 * tm * d0 * 2          # fragment chunk, double-buffered (bf16)
              + 2 * tm * tn * 2          # C tile, double-buffered (bf16)
              + d0 * d * 2               # Wp (bf16)
              + 2 * d * h * 2            # W1 (bf16)
              + tn * d * 2               # projected-receptor scratch (bf16)
              + 16 * tn * 4)             # masks + resident stat accumulators
        return inter + io

    tn_cands = [t for t in dict.fromkeys((n_pad, 1024, 512, 384, 256, 128))
                if t <= n_pad and n_pad % t == 0 and t % 128 == 0]
    tm_cands = [t for t in dict.fromkeys((m_pad, 512, 256, 128, 64, 32, 16, 8))
                if t <= m_pad and m_pad % t == 0 and t % 8 == 0]
    feasible = [(tn, tm) for tn in tn_cands for tm in tm_cands
                if step_bytes(tn, tm) <= budget]
    if feasible:
        # fewest grid steps first (rows), then the wider lane tile (less
        # fragment-projection recompute, lane-denser stores).
        tn, tm = max(feasible, key=lambda p: (p[0] * p[1], p[0]))
    else:
        tn, tm = 128, 8
    return tn, tm, step_bytes(tn, tm), vmem


def _plan_pool_tile(n_pad, m_pad):
    vmem = _vmem_capacity_bytes()
    budget = vmem // 8

    def step_bytes(tm):
        return (2 * tm * n_pad * 2       # C chunk, double-buffered (bf16)
                + 2 * tm * n_pad * 4     # f32 Q / mask temps
                + 4 * n_pad * 4)         # rho accumulator / output

    tm_cands = [t for t in dict.fromkeys((m_pad, 512, 256, 128, 64, 32, 16, 8))
                if t <= m_pad and m_pad % t == 0 and t % 8 == 0]
    for tm in tm_cands:
        if step_bytes(tm) <= budget:
            return tm, step_bytes(tm), vmem
    tm = tm_cands[-1]
    return tm, step_bytes(tm), vmem


def _vmem_limit(need, vmem):
    return int(min(0.8 * vmem, max(2 * need + (4 << 20), 32 << 20)))


# --------------------------------------------------------------------------
# Kernel 1: fused projection + contact path + pooling statistics.
#   grid = (B, N_pad//TN, M_pad//TM), dims ("parallel","parallel","arbitrary").
# --------------------------------------------------------------------------
def _contact_kernel(x1_ref, fr_ref, nmask_ref, wp_ref, bp_ref, w1_ref, b1_ref,
                    wc_ref, scal_ref, c_ref, ssum_ref, ssq_ref, e1_scr, a_scr):
    mc = pl.program_id(2)

    d = wp_ref.shape[1]
    h = w1_ref.shape[1]
    tm = fr_ref.shape[1]
    tn = x1_ref.shape[1]
    rows = tm * tn

    # -- per-(batch, N-tile) prologue: project receptor tile once, reset the
    # -- resident pooling-statistics accumulators.
    @pl.when(mc == 0)
    def _():
        e1 = jnp.dot(x1_ref[0], wp_ref[...], preferred_element_type=jnp.float32)
        e1_scr[...] = jnp.maximum(e1 + bp_ref[...], 0.0).astype(jnp.bfloat16)
        ssum_ref[...] = jnp.zeros_like(ssum_ref)
        ssq_ref[...] = jnp.zeros_like(ssq_ref)

    # -- project this fragment chunk (bf16 MXU operands, f32 accumulation) ----
    e2 = jnp.dot(fr_ref[0], wp_ref[...], preferred_element_type=jnp.float32)
    e2b = jnp.maximum(e2 + bp_ref[...], 0.0).astype(jnp.bfloat16)    # (TM, d)
    e1b = e1_scr[...]                                                # (TN, d)

    # -- A = [Z1*Z2 | |Z1-Z2|], rows ordered (m, n) -> N-last / lane-dense C.
    #    Slice-store the two K=128 halves into a preallocated VMEM scratch so a
    #    single K=2d MXU pass consumes them (no concatenate copy).
    zf = e2b[:, None, :]                                             # (TM, 1, d)
    zr = e1b[None, :, :]                                             # (1, TN, d)
    a_scr[:, :d] = (zf * zr).reshape(rows, d)
    a_scr[:, d:] = jnp.abs(zf - zr).reshape(rows, d)

    # -- Linear(2d, h) (+ folded BN1) in one K=2d pass, f32 accumulate; ReLU --
    s = jnp.dot(a_scr[...], w1_ref[...], preferred_element_type=jnp.float32)
    s = jnp.maximum(s + b1_ref[...], 0.0)                            # (rows, h)

    # -- 1x1 conv h->1 (+ folded BN2), numerically stable sigmoid -------------
    s3 = s.reshape(tm, tn, h)
    logits = jnp.sum(s3 * wc_ref[0], axis=-1) + scal_ref[0, 0]       # (TM, TN)
    z = jnp.exp(-jnp.abs(logits))                                    # in (0, 1]
    inv = pl.reciprocal(1.0 + z, approx=True)
    c = jnp.where(logits >= 0, inv, z * inv)

    # -- mask invalid receptor columns and padded fragment rows ---------------
    c = c * nmask_ref[0]
    row = (mc * tm + jax.lax.broadcasted_iota(jnp.int32, (tm, tn), 0)
           ).astype(jnp.float32)
    c = jnp.where(row < scal_ref[0, 1], c, 0.0)
    c_ref[0] = c.astype(c_ref.dtype)

    # -- pooling statistics: lane-preserving partial sums (VPU-dominant);
    # -- the final cross-lane reduce happens once in the wrapper.
    ssum_ref[0] = ssum_ref[0] + jnp.sum(c, axis=0, keepdims=True)
    ssq_ref[0] = ssq_ref[0] + jnp.sum(c * c, axis=0, keepdims=True)


def contact_map(x1_bf, fr_bf, nmask, wp_bf, bp, w1_bf, b1, wc, scal,
                *, tn, tm, vmem_limit):
    B, n_pad, d0 = x1_bf.shape
    m_pad = fr_bf.shape[1]
    d = wp_bf.shape[1]
    h = w1_bf.shape[1]
    n_t = n_pad // tn
    n_m = m_pad // tm

    grid_spec = pltpu.PrefetchScalarGridSpec(
        num_scalar_prefetch=0,
        grid=(B, n_t, n_m),
        in_specs=[
            pl.BlockSpec((1, tn, d0), lambda b, t, mc: (b, t, 0)),   # node attrs
            pl.BlockSpec((1, tm, d0), lambda b, t, mc: (b, mc, 0)),  # fragment chunk
            pl.BlockSpec((1, 1, tn), lambda b, t, mc: (b, 0, t)),    # receptor mask
            pl.BlockSpec((d0, d), lambda b, t, mc: (0, 0)),          # Wp (bf16)
            pl.BlockSpec((1, d), lambda b, t, mc: (0, 0)),           # bp
            pl.BlockSpec((2 * d, h), lambda b, t, mc: (0, 0)),       # W1 (bf16, BN1 folded)
            pl.BlockSpec((1, h), lambda b, t, mc: (0, 0)),           # b1
            pl.BlockSpec((1, h), lambda b, t, mc: (0, 0)),           # wc (BN2 folded)
            pl.BlockSpec(memory_space=pltpu.MemorySpace.SMEM),       # [cb, M_true]
        ],
        out_specs=(
            pl.BlockSpec((1, tm, tn), lambda b, t, mc: (b, mc, t)),  # C (bf16)
            pl.BlockSpec((1, 1, tn), lambda b, t, mc: (b, 0, t)),    # sum(C) partials
            pl.BlockSpec((1, 1, tn), lambda b, t, mc: (b, 0, t)),    # sum(C^2) partials
        ),
        scratch_shapes=[
            pltpu.VMEM((tn, d), jnp.bfloat16),            # projected receptor tile
            pltpu.VMEM((tm * tn, 2 * d), jnp.bfloat16),   # A = [Z1*Z2 | |Z1-Z2|]
        ],
    )
    out_shape = (
        jax.ShapeDtypeStruct((B, m_pad, n_pad), jnp.bfloat16),
        jax.ShapeDtypeStruct((B, 1, n_pad), jnp.float32),
        jax.ShapeDtypeStruct((B, 1, n_pad), jnp.float32),
    )
    return pl.pallas_call(
        _contact_kernel,
        out_shape=out_shape,
        grid_spec=grid_spec,
        compiler_params=pltpu.CompilerParams(
            dimension_semantics=("parallel", "parallel", "arbitrary"),
            vmem_limit_bytes=vmem_limit),
    )(x1_bf, fr_bf, nmask, wp_bf, bp, w1_bf, b1, wc, scal)


# --------------------------------------------------------------------------
# Kernel 2: InteractionPooling, tiled over M with a resident rho accumulator.
#   grid = (B, M_pad//TM), dims ("parallel", "arbitrary").
# --------------------------------------------------------------------------
def _pool_kernel(c_ref, scal_ref, o_ref):
    mc = pl.program_id(1)
    tm = c_ref.shape[1]

    @pl.when(mc == 0)
    def _():
        o_ref[...] = jnp.zeros_like(o_ref)

    thr = scal_ref[0, 0]
    cc = c_ref[0].astype(jnp.float32)                          # (TM, N_pad)
    q = jnp.maximum(cc - thr, 0.0)
    row = (mc * tm + jax.lax.broadcasted_iota(jnp.int32, q.shape, 0)
           ).astype(jnp.float32)
    q = jnp.where(row < scal_ref[0, 1], q, 0.0)                # drop padded M rows
    o_ref[0] = o_ref[0] + jnp.sum(q, axis=0, keepdims=True)    # resident rho accum

    @pl.when(mc == pl.num_programs(1) - 1)
    def _():
        rho = o_ref[0]                                         # (1, N_pad)
        n_true = scal_ref[0, 2]
        col = jax.lax.broadcasted_iota(jnp.int32, rho.shape, 1).astype(jnp.float32)
        rho_sum = jnp.sum(jnp.where(col < n_true, rho, 0.0), axis=-1, keepdims=True)
        rho = rho / (rho_sum / n_true + 1.0)                   # exact, once per batch
        o_ref[0] = 1.0 / (1.0 + jnp.exp(rho - 0.5))
    # TODO(synk): InteractionPooling defines nn.MaxPool1d but never uses it in
    # forward, so it is intentionally not implemented.


def interaction_pooling(C, scal, *, tm, vmem_limit):
    B, m_pad, n_pad = C.shape
    return pl.pallas_call(
        _pool_kernel,
        out_shape=jax.ShapeDtypeStruct((B, 1, n_pad), jnp.float32),
        grid_spec=pltpu.PrefetchScalarGridSpec(
            num_scalar_prefetch=0,
            grid=(B, m_pad // tm),
            in_specs=[
                pl.BlockSpec((1, tm, n_pad), lambda b, mc: (b, mc, 0)),
                pl.BlockSpec(memory_space=pltpu.MemorySpace.SMEM),  # [thr, M, N]
            ],
            out_specs=pl.BlockSpec((1, 1, n_pad), lambda b, mc: (b, 0, 0)),
        ),
        compiler_params=pltpu.CompilerParams(
            dimension_semantics=("parallel", "arbitrary"),
            vmem_limit_bytes=vmem_limit),
    )(C, scal)


# --------------------------------------------------------------------------
# Parameter init (deterministic, synthetic) + BatchNorm (eval) folding glue.
# --------------------------------------------------------------------------
def init_params(key, d0, d=128, h=32):
    ks = jax.random.split(key, 6)
    p = {}
    # projection_module: Linear(d0, d)
    p["wp"] = jax.random.normal(ks[0], (d0, d), jnp.float32) / jnp.sqrt(d0)
    p["bp"] = jax.random.normal(ks[1], (d,), jnp.float32) * 0.01
    # contact_module1: Linear(2d, h) + BatchNorm2d(h) (eval, running stats) folded
    w1 = jax.random.normal(ks[2], (2 * d, h), jnp.float32) / jnp.sqrt(2.0 * d)
    b1 = jax.random.normal(ks[3], (h,), jnp.float32) * 0.01
    bn1_w, bn1_b = jnp.ones((h,)), jnp.zeros((h,))
    bn1_rm, bn1_rv = jnp.zeros((h,)), jnp.ones((h,))
    s1 = bn1_w / jnp.sqrt(bn1_rv + _EPS)
    p["w1"] = w1 * s1[None, :]
    p["b1"] = b1 * s1 + (bn1_b - bn1_rm * s1)
    # contact_module2: Conv2d(h, 1, 1) + BatchNorm2d(1) (eval) folded
    wc = jax.random.normal(ks[4], (h,), jnp.float32) / jnp.sqrt(h)
    cb = jax.random.normal(ks[5], (1,), jnp.float32) * 0.01
    bn2_w, bn2_b = jnp.ones((1,)), jnp.zeros((1,))
    bn2_rm, bn2_rv = jnp.zeros((1,)), jnp.ones((1,))
    s2 = bn2_w / jnp.sqrt(bn2_rv + _EPS)
    p["wc"] = wc * s2[0]
    p["cb"] = (cb * s2 + (bn2_b - bn2_rm * s2)).reshape(1)
    # InteractionPooling gamma
    p["gamma"] = jnp.ones((1,), jnp.float32)
    return p


def dscript_forward(frag_emb, node_attr_padded, valid_mask, params):
    """frag_emb: (B, M, d0); node_attr_padded: (B, N, d0) zero-padded to the
    batch-max node count N; valid_mask: (B, N) float, 1.0 where node < nnodes."""
    B, M, d0 = frag_emb.shape
    N = node_attr_padded.shape[1]
    d = params["wp"].shape[1]
    h = params["w1"].shape[1]

    # Pad N / M for lane/sublane-aligned, unmasked vector stores; the padding
    # is masked away inside the kernels and sliced off at the end.
    n_pad = _round_up(N, 128)
    m_pad = _round_up(M, 8) if M <= 64 else _round_up(M, 64)
    tn, tm, need_c, vmem = _plan_contact_tiles(n_pad, m_pad, d0, d, h)

    x1 = jnp.pad(node_attr_padded,
                 ((0, 0), (0, n_pad - N), (0, 0))).astype(jnp.bfloat16)
    fr = jnp.pad(frag_emb, ((0, 0), (0, m_pad - M), (0, 0))).astype(jnp.bfloat16)
    nmask = jnp.pad(valid_mask.astype(jnp.float32),
                    ((0, 0), (0, n_pad - N))).reshape(B, 1, n_pad)
    scal_c = jnp.stack([params["cb"][0], jnp.float32(M)]).reshape(1, 2)

    C, ssum, ssq = contact_map(
        x1, fr, nmask,
        params["wp"].astype(jnp.bfloat16), params["bp"].reshape(1, d),
        params["w1"].astype(jnp.bfloat16), params["b1"].reshape(1, h),
        params["wc"].reshape(1, h), scal_c,
        tn=tn, tm=tm, vmem_limit=_vmem_limit(need_c, vmem))

    # Global mean / unbiased variance over the true (B, M, N) extent (padding
    # contributes exactly zero to the partial sums); matches torch.std()**2.
    total = jnp.float32(B * M * N)
    psum = jnp.sum(ssum)
    psq = jnp.sum(ssq)
    mean = psum / total
    var = (psq - total * mean * mean) / (total - 1.0)
    thr = mean + params["gamma"][0] * var

    tmp, need_p, _ = _plan_pool_tile(n_pad, m_pad)
    scal_p = jnp.stack([thr, jnp.float32(M), jnp.float32(N)]).reshape(1, 3)
    p = interaction_pooling(C, scal_p, tm=tmp,
                            vmem_limit=_vmem_limit(need_p, vmem))     # (B, 1, N_pad)
    return p[:, 0, :N]


# --------------------------------------------------------------------------
# Pure-JAX f32 reference of the PyTorch forward (eval mode) for a sanity check.
# --------------------------------------------------------------------------
def _reference_forward(frag_emb, node_attr, valid_mask, params):
    e1 = jax.nn.relu(node_attr @ params["wp"] + params["bp"])         # (B,N,d)
    e2 = jax.nn.relu(frag_emb @ params["wp"] + params["bp"])          # (B,M,d)
    z1 = e1[:, :, None, :]                                            # (B,N,1,d)
    z2 = e2[:, None, :, :]                                            # (B,1,M,d)
    a = jnp.concatenate([z1 * z2, jnp.abs(z1 - z2)], axis=-1)         # (B,N,M,2d)
    s = jax.nn.relu(a @ params["w1"] + params["b1"])                  # (B,N,M,h)
    logits = jnp.einsum("bnmh,h->bnm", s, params["wc"]) + params["cb"][0]
    cmap = jax.nn.sigmoid(logits)
    C = jnp.transpose(cmap, (0, 2, 1)) * valid_mask[:, None, :]       # (B,M,N)
    mean = jnp.mean(C)
    var = jnp.var(C, ddof=1)
    Q = jax.nn.relu(C - mean - params["gamma"][0] * var)
    rho = jnp.sum(Q, axis=1)                                          # (B,N)
    rho = rho / (jnp.mean(rho, axis=1, keepdims=True) + 1.0)
    return 1.0 / (1.0 + jnp.exp(rho - 0.5))


if __name__ == "__main__":
    B, M, N_max, d0 = 2, 8, 16, 32   # batch, fragment len, max nodes, node feat dim
    D, H = 128, 32                   # module defaults d=128, h=32

    key = jax.random.PRNGKey(0)
    k_frag, k_nodes, k_params = jax.random.split(key, 3)

    frag_emb = jax.random.normal(k_frag, (B, M, d0), jnp.float32)
    # emulate G_rec batching: per-graph node counts + zero-padded node features
    nnodes = jnp.array([16, 11], dtype=jnp.int32)
    valid_mask = (jnp.arange(N_max)[None, :] < nnodes[:, None]).astype(jnp.float32)
    node_attr_padded = (jax.random.normal(k_nodes, (B, N_max, d0), jnp.float32)
                        * valid_mask[:, :, None])

    params = init_params(k_params, d0, d=D, h=H)

    fwd = jax.jit(dscript_forward)
    p = fwd(frag_emb, node_attr_padded, valid_mask, params)
    jax.block_until_ready(p)
    assert p.shape == (B, N_max), p.shape

    # sanity check against the pure-JAX f32 reference (bf16 storage / operands
    # and the approximate reciprocal account for the tolerance)
    p_ref = _reference_forward(frag_emb, node_attr_padded, valid_mask, params)
    err = float(jnp.max(jnp.abs(p - p_ref)))
    assert err < 5e-2, f"max |p - p_ref| = {err}"
    print("KERNEL_OK")
</pallas_src>

<mosaic_0001>
module attributes {stable_mosaic.version = 11 : i64} {
  func.func @_contact_kernel(%arg0: i32, %arg1: i32, %arg2: i32, %arg3: memref<1x128x32xbf16, #tpu.memory_space<vmem>>, %arg4: memref<1x8x32xbf16, #tpu.memory_space<vmem>>, %arg5: memref<1x1x128xf32, #tpu.memory_space<vmem>>, %arg6: memref<32x128xbf16, #tpu.memory_space<vmem>>, %arg7: memref<1x128xf32, #tpu.memory_space<vmem>>, %arg8: memref<256x32xbf16, #tpu.memory_space<vmem>>, %arg9: memref<1x32xf32, #tpu.memory_space<vmem>>, %arg10: memref<1x32xf32, #tpu.memory_space<vmem>>, %arg11: memref<1x2xf32, #tpu.memory_space<smem>>, %arg12: memref<1x8x128xbf16, #tpu.memory_space<vmem>>, %arg13: memref<1x1x128xf32, #tpu.memory_space<vmem>>, %arg14: memref<1x1x128xf32, #tpu.memory_space<vmem>>, %arg15: memref<128x128xbf16, #tpu.memory_space<vmem>>, %arg16: memref<1024x256xbf16, #tpu.memory_space<vmem>>) attributes {dimension_semantics = [#tpu.dimension_semantics<parallel>, #tpu.dimension_semantics<parallel>, #tpu.dimension_semantics<arbitrary>], iteration_bounds = array<i64: 2, 1, 1>, scalar_prefetch = 0 : i64, scratch_operands = 2 : i64, tpu.core_type = #tpu.core_type<tc>, window_params = [{transform_indices = @transform_0, window_bounds = array<i64: 1, 128, 32>}, {transform_indices = @transform_1, window_bounds = array<i64: 1, 8, 32>}, {transform_indices = @transform_2, window_bounds = array<i64: 1, 1, 128>}, {pipeline_mode = #tpu.pipeline_mode<synchronous>, transform_indices = @transform_3, window_bounds = array<i64: 32, 128>}, {pipeline_mode = #tpu.pipeline_mode<synchronous>, transform_indices = @transform_4, window_bounds = array<i64: 1, 128>}, {pipeline_mode = #tpu.pipeline_mode<synchronous>, transform_indices = @transform_5, window_bounds = array<i64: 256, 32>}, {pipeline_mode = #tpu.pipeline_mode<synchronous>, transform_indices = @transform_6, window_bounds = array<i64: 1, 32>}, {pipeline_mode = #tpu.pipeline_mode<synchronous>, transform_indices = @transform_7, window_bounds = array<i64: 1, 32>}, {transform_indices = @transform_8, window_bounds = array<i64: 1, 2>}, {transform_indices = @transform_9, window_bounds = array<i64: 1, 8, 128>}, {transform_indices = @transform_10, window_bounds = array<i64: 1, 1, 128>}, {transform_indices = @transform_11, window_bounds = array<i64: 1, 1, 128>}]} {
    %c0_i32 = arith.constant 0 : i32
    %0 = arith.cmpi eq, %arg2, %c0_i32 : i32
    %1 = arith.extui %0 : i1 to i32
    %c0_i32_0 = arith.constant 0 : i32
    %2 = arith.cmpi ne, %1, %c0_i32_0 : i32
    scf.if %2 {
      %c0_51 = arith.constant 0 : index
      %c0_52 = arith.constant 0 : index
      %c0_53 = arith.constant 0 : index
      %91 = vector.load %arg3[%c0_51, %c0_52, %c0_53] : memref<1x128x32xbf16, #tpu.memory_space<vmem>>, vector<1x128x32xbf16>
      %92 = vector.shape_cast %91 : vector<1x128x32xbf16> to vector<128x32xbf16>
      %c0_54 = arith.constant 0 : index
      %c0_55 = arith.constant 0 : index
      %93 = vector.load %arg6[%c0_54, %c0_55] : memref<32x128xbf16, #tpu.memory_space<vmem>>, vector<32x128xbf16>
      %cst_56 = arith.constant dense<0.000000e+00> : vector<128x128xf32>
      %94 = tpu.matmul %92, %93, %cst_56 {dimension_numbers = #tpu.dot_dimension_numbers<[1], [0], [0], [1], [0, 0, 1, 1], [], []>} : vector<128x32xbf16>, vector<32x128xbf16>, vector<128x128xf32> -> vector<128x128xf32>
      %c0_57 = arith.constant 0 : index
      %c0_58 = arith.constant 0 : index
      %95 = vector.load %arg7[%c0_57, %c0_58] : memref<1x128xf32, #tpu.memory_space<vmem>>, vector<1x128xf32>
      %96 = vector.broadcast %95 : vector<1x128xf32> to vector<128x128xf32>
      %97 = arith.addf %94, %96 : vector<128x128xf32>
      %cst_59 = arith.constant 0.000000e+00 : f32
      %98 = vector.broadcast %cst_59 : f32 to vector<128x128xf32>
      %99 = arith.maximumf %97, %98 : vector<128x128xf32>
      %100 = arith.truncf %99 : vector<128x128xf32> to vector<128x128xbf16>
      %c0_60 = arith.constant 0 : index
      %c0_61 = arith.constant 0 : index
      %101 = vector.load %arg15[%c0_60, %c0_61] : memref<128x128xbf16, #tpu.memory_space<vmem>>, vector<128x128xbf16>
      tpu.vector_store %arg15[%c0_60, %c0_61], %100 {strides = array<i32>} : memref<128x128xbf16, #tpu.memory_space<vmem>>, vector<128x128xbf16>,
      %cst_62 = arith.constant 0.000000e+00 : f32
      %102 = vector.broadcast %cst_62 : f32 to vector<1x1x128xf32>
      %c0_63 = arith.constant 0 : index
      %c0_64 = arith.constant 0 : index
      %c0_65 = arith.constant 0 : index
      %103 = vector.load %arg13[%c0_63, %c0_64, %c0_65] : memref<1x1x128xf32, #tpu.memory_space<vmem>>, vector<1x1x128xf32>
      tpu.vector_store %arg13[%c0_63, %c0_64, %c0_65], %102 {strides = array<i32>} : memref<1x1x128xf32, #tpu.memory_space<vmem>>, vector<1x1x128xf32>,
      %cst_66 = arith.constant 0.000000e+00 : f32
      %104 = vector.broadcast %cst_66 : f32 to vector<1x1x128xf32>
      %c0_67 = arith.constant 0 : index
      %c0_68 = arith.constant 0 : index
      %c0_69 = arith.constant 0 : index
      %105 = vector.load %arg14[%c0_67, %c0_68, %c0_69] : memref<1x1x128xf32, #tpu.memory_space<vmem>>, vector<1x1x128xf32>
      tpu.vector_store %arg14[%c0_67, %c0_68, %c0_69], %104 {strides = array<i32>} : memref<1x1x128xf32, #tpu.memory_space<vmem>>, vector<1x1x128xf32>,
    } else {
    }
    %c0 = arith.constant 0 : index
    %c0_1 = arith.constant 0 : index
    %c0_2 = arith.constant 0 : index
    %3 = vector.load %arg4[%c0, %c0_1, %c0_2] : memref<1x8x32xbf16, #tpu.memory_space<vmem>>, vector<1x8x32xbf16>
    %4 = vector.shape_cast %3 : vector<1x8x32xbf16> to vector<8x32xbf16>
    %c0_3 = arith.constant 0 : index
    %c0_4 = arith.constant 0 : index
    %5 = vector.load %arg6[%c0_3, %c0_4] : memref<32x128xbf16, #tpu.memory_space<vmem>>, vector<32x128xbf16>
    %cst = arith.constant dense<0.000000e+00> : vector<8x128xf32>
    %6 = tpu.matmul %4, %5, %cst {dimension_numbers = #tpu.dot_dimension_numbers<[1], [0], [0], [1], [0, 0, 1, 1], [], []>} : vector<8x32xbf16>, vector<32x128xbf16>, vector<8x128xf32> -> vector<8x128xf32>
    %c0_5 = arith.constant 0 : index
    %c0_6 = arith.constant 0 : index
    %7 = vector.load %arg7[%c0_5, %c0_6] : memref<1x128xf32, #tpu.memory_space<vmem>>, vector<1x128xf32>
    %8 = vector.broadcast %7 : vector<1x128xf32> to vector<8x128xf32>
    %9 = arith.addf %6, %8 : vector<8x128xf32>
    %cst_7 = arith.constant 0.000000e+00 : f32
    %10 = vector.broadcast %cst_7 : f32 to vector<8x128xf32>
    %11 = arith.maximumf %9, %10 : vector<8x128xf32>
    %12 = arith.truncf %11 : vector<8x128xf32> to vector<8x128xbf16>
    %c0_8 = arith.constant 0 : index
    %c0_9 = arith.constant 0 : index
    %13 = vector.load %arg15[%c0_8, %c0_9] : memref<128x128xbf16, #tpu.memory_space<vmem>>, vector<128x128xbf16>
    %14 = vector.shape_cast %12 : vector<8x128xbf16> to vector<8x1x128xbf16>
    %15 = vector.shape_cast %13 : vector<128x128xbf16> to vector<1x128x128xbf16>
    %16 = vector.broadcast %14 : vector<8x1x128xbf16> to vector<8x128x128xbf16>
    %17 = vector.broadcast %15 : vector<1x128x128xbf16> to vector<8x128x128xbf16>
    %18 = arith.mulf %16, %17 : vector<8x128x128xbf16>
    %19 = vector.shape_cast %18 : vector<8x128x128xbf16> to vector<1024x128xbf16>
    %c0_10 = arith.constant 0 : index
    %c0_11 = arith.constant 0 : index
    %20 = vector.load %arg16[%c0_10, %c0_11] : memref<1024x256xbf16, #tpu.memory_space<vmem>>, vector<1024x128xbf16>
    tpu.vector_store %arg16[%c0_10, %c0_11], %19 {strides = array<i32>} : memref<1024x256xbf16, #tpu.memory_space<vmem>>, vector<1024x128xbf16>,
    %21 = vector.broadcast %14 : vector<8x1x128xbf16> to vector<8x128x128xbf16>
    %22 = vector.broadcast %15 : vector<1x128x128xbf16> to vector<8x128x128xbf16>
    %23 = arith.subf %21, %22 : vector<8x128x128xbf16>
    %24 = math.absf %23 : vector<8x128x128xbf16>
    %25 = vector.shape_cast %24 : vector<8x128x128xbf16> to vector<1024x128xbf16>
    %c0_12 = arith.constant 0 : index
    %c128 = arith.constant 128 : index
    %26 = vector.load %arg16[%c0_12, %c128] : memref<1024x256xbf16, #tpu.memory_space<vmem>>, vector<1024x128xbf16>
    tpu.vector_store %arg16[%c0_12, %c128], %25 {strides = array<i32>} : memref<1024x256xbf16, #tpu.memory_space<vmem>>, vector<1024x128xbf16>,
    %c0_13 = arith.constant 0 : index
    %c0_14 = arith.constant 0 : index
    %27 = vector.load %arg16[%c0_13, %c0_14] : memref<1024x256xbf16, #tpu.memory_space<vmem>>, vector<1024x256xbf16>
    %c0_15 = arith.constant 0 : index
    %c0_16 = arith.constant 0 : index
    %28 = vector.load %arg8[%c0_15, %c0_16] : memref<256x32xbf16, #tpu.memory_space<vmem>>, vector<256x32xbf16>
    %cst_17 = arith.constant dense<0.000000e+00> : vector<1024x32xf32>
    %29 = tpu.matmul %27, %28, %cst_17 {dimension_numbers = #tpu.dot_dimension_numbers<[1], [0], [0], [1], [0, 0, 1, 1], [], []>} : vector<1024x256xbf16>, vector<256x32xbf16>, vector<1024x32xf32> -> vector<1024x32xf32>
    %c0_18 = arith.constant 0 : index
    %c0_19 = arith.constant 0 : index
    %30 = vector.load %arg9[%c0_18, %c0_19] : memref<1x32xf32, #tpu.memory_space<vmem>>, vector<1x32xf32>
    %31 = vector.broadcast %30 : vector<1x32xf32> to vector<1024x32xf32>
    %32 = arith.addf %29, %31 : vector<1024x32xf32>
    %cst_20 = arith.constant 0.000000e+00 : f32
    %33 = vector.broadcast %cst_20 : f32 to vector<1024x32xf32>
    %34 = arith.maximumf %32, %33 : vector<1024x32xf32>
    %35 = vector.shape_cast %34 : vector<1024x32xf32> to vector<8x128x32xf32>
    %c0_21 = arith.constant 0 : index
    %c0_22 = arith.constant 0 : index
    %36 = vector.load %arg10[%c0_21, %c0_22] : memref<1x32xf32, #tpu.memory_space<vmem>>, vector<1x32xf32>
    %37 = vector.shape_cast %36 : vector<1x32xf32> to vector<32xf32>
    %38 = vector.shape_cast %37 : vector<32xf32> to vector<1x1x32xf32>
    %39 = vector.broadcast %38 : vector<1x1x32xf32> to vector<8x128x32xf32>
    %40 = arith.mulf %35, %39 : vector<8x128x32xf32>
    %cst_23 = arith.constant dense<0.000000e+00> : vector<8x128xf32>
    %41 = vector.multi_reduction <add>, %40, %cst_23 [2] : vector<8x128x32xf32> to vector<8x128xf32>
    %c0_24 = arith.constant 0 : index
    %c0_25 = arith.constant 0 : index
    %42 = memref.load %arg11[%c0_24, %c0_25] : memref<1x2xf32, #tpu.memory_space<smem>>
    %43 = vector.broadcast %42 : f32 to vector<8x128xf32>
    %44 = arith.addf %41, %43 : vector<8x128xf32>
    %45 = math.absf %44 : vector<8x128xf32>
    %cst_26 = arith.constant 0.000000e+00 : f32
    %46 = vector.broadcast %cst_26 : f32 to vector<8x128xf32>
    %47 = arith.subf %46, %45 : vector<8x128xf32>
    %48 = math.exp %47 : vector<8x128xf32>
    %cst_27 = arith.constant 1.000000e+00 : f32
    %49 = vector.broadcast %cst_27 : f32 to vector<8x128xf32>
    %50 = arith.addf %49, %48 : vector<8x128xf32>
    %51 = tpu.reciprocal %50 {approx = true} : vector<8x128xf32> -> vector<8x128xf32>
    %cst_28 = arith.constant 0.000000e+00 : f32
    %52 = vector.broadcast %cst_28 : f32 to vector<8x128xf32>
    %53 = arith.cmpf oge, %44, %52 : vector<8x128xf32>
    %54 = arith.mulf %48, %51 : vector<8x128xf32>
    %55 = arith.select %53, %51, %54 : vector<8x128xi1>, vector<8x128xf32>
    %c0_29 = arith.constant 0 : index
    %c0_30 = arith.constant 0 : index
    %c0_31 = arith.constant 0 : index
    %56 = vector.load %arg5[%c0_29, %c0_30, %c0_31] : memref<1x1x128xf32, #tpu.memory_space<vmem>>, vector<1x1x128xf32>
    %57 = vector.shape_cast %56 : vector<1x1x128xf32> to vector<1x128xf32>
    %58 = vector.broadcast %57 : vector<1x128xf32> to vector<8x128xf32>
    %59 = arith.mulf %55, %58 : vector<8x128xf32>
    %c8_i32 = arith.constant 8 : i32
    %60 = arith.muli %arg2, %c8_i32 : i32
    %61 = tpu.iota {dimensions = array<i32: 0>} : vector<8x128xi32>
    %62 = vector.broadcast %60 : i32 to vector<8x128xi32>
    %63 = arith.addi %62, %61 : vector<8x128xi32>
    %64 = arith.sitofp %63 : vector<8x128xi32> to vector<8x128xf32>
    %c0_32 = arith.constant 0 : index
    %c1 = arith.constant 1 : index
    %65 = memref.load %arg11[%c0_32, %c1] : memref<1x2xf32, #tpu.memory_space<smem>>
    %66 = vector.broadcast %65 : f32 to vector<8x128xf32>
    %67 = arith.cmpf olt, %64, %66 : vector<8x128xf32>
    %cst_33 = arith.constant 0.000000e+00 : f32
    %68 = vector.broadcast %cst_33 : f32 to vector<8x128xf32>
    %69 = arith.select %67, %59, %68 : vector<8x128xi1>, vector<8x128xf32>
    %70 = arith.truncf %69 : vector<8x128xf32> to vector<8x128xbf16>
    %c0_34 = arith.constant 0 : index
    %c0_35 = arith.constant 0 : index
    %c0_36 = arith.constant 0 : index
    %71 = vector.load %arg12[%c0_34, %c0_35, %c0_36] : memref<1x8x128xbf16, #tpu.memory_space<vmem>>, vector<1x8x128xbf16>
    %72 = vector.shape_cast %71 : vector<1x8x128xbf16> to vector<8x128xbf16>
    %73 = vector.shape_cast %70 : vector<8x128xbf16> to vector<1x8x128xbf16>
    tpu.vector_store %arg12[%c0_34, %c0_35, %c0_36], %73 {strides = array<i32>} : memref<1x8x128xbf16, #tpu.memory_space<vmem>>, vector<1x8x128xbf16>,
    %c0_37 = arith.constant 0 : index
    %c0_38 = arith.constant 0 : index
    %c0_39 = arith.constant 0 : index
    %74 = vector.load %arg13[%c0_37, %c0_38, %c0_39] : memref<1x1x128xf32, #tpu.memory_space<vmem>>, vector<1x1x128xf32>
    %75 = vector.shape_cast %74 : vector<1x1x128xf32> to vector<1x128xf32>
    %cst_40 = arith.constant dense<0.000000e+00> : vector<128xf32>
    %76 = vector.multi_reduction <add>, %69, %cst_40 [0] : vector<8x128xf32> to vector<128xf32>
    %77 = vector.shape_cast %76 : vector<128xf32> to vector<1x128xf32>
    %78 = arith.addf %75, %77 : vector<1x128xf32>
    %c0_41 = arith.constant 0 : index
    %c0_42 = arith.constant 0 : index
    %c0_43 = arith.constant 0 : index
    %79 = vector.load %arg13[%c0_41, %c0_42, %c0_43] : memref<1x1x128xf32, #tpu.memory_space<vmem>>, vector<1x1x128xf32>
    %80 = vector.shape_cast %79 : vector<1x1x128xf32> to vector<1x128xf32>
    %81 = vector.shape_cast %78 : vector<1x128xf32> to vector<1x1x128xf32>
    tpu.vector_store %arg13[%c0_41, %c0_42, %c0_43], %81 {strides = array<i32>} : memref<1x1x128xf32, #tpu.memory_space<vmem>>, vector<1x1x128xf32>,
    %c0_44 = arith.constant 0 : index
    %c0_45 = arith.constant 0 : index
    %c0_46 = arith.constant 0 : index
    %82 = vector.load %arg14[%c0_44, %c0_45, %c0_46] : memref<1x1x128xf32, #tpu.memory_space<vmem>>, vector<1x1x128xf32>
    %83 = vector.shape_cast %82 : vector<1x1x128xf32> to vector<1x128xf32>
    %84 = arith.mulf %69, %69 : vector<8x128xf32>
    %cst_47 = arith.constant dense<0.000000e+00> : vector<128xf32>
    %85 = vector.multi_reduction <add>, %84, %cst_47 [0] : vector<8x128xf32> to vector<128xf32>
    %86 = vector.shape_cast %85 : vector<128xf32> to vector<1x128xf32>
    %87 = arith.addf %83, %86 : vector<1x128xf32>
    %c0_48 = arith.constant 0 : index
    %c0_49 = arith.constant 0 : index
    %c0_50 = arith.constant 0 : index
    %88 = vector.load %arg14[%c0_48, %c0_49, %c0_50] : memref<1x1x128xf32, #tpu.memory_space<vmem>>, vector<1x1x128xf32>
    %89 = vector.shape_cast %88 : vector<1x1x128xf32> to vector<1x128xf32>
    %90 = vector.shape_cast %87 : vector<1x128xf32> to vector<1x1x128xf32>
    tpu.vector_store %arg14[%c0_48, %c0_49, %c0_50], %90 {strides = array<i32>} : memref<1x1x128xf32, #tpu.memory_space<vmem>>, vector<1x1x128xf32>,
    return
  }
  func.func @transform_0(%arg0: i32, %arg1: i32, %arg2: i32) -> (i32, i32, i32) {
    %c0_i32 = arith.constant 0 : i32
    %c0_i32_0 = arith.constant 0 : i32
    return %arg0, %arg1, %c0_i32 : i32, i32, i32
  }
  func.func @transform_1(%arg0: i32, %arg1: i32, %arg2: i32) -> (i32, i32, i32) {
    %c0_i32 = arith.constant 0 : i32
    %c0_i32_0 = arith.constant 0 : i32
    return %arg0, %arg2, %c0_i32 : i32, i32, i32
  }
  func.func @transform_2(%arg0: i32, %arg1: i32, %arg2: i32) -> (i32, i32, i32) {
    %c0_i32 = arith.constant 0 : i32
    %c0_i32_0 = arith.constant 0 : i32
    return %arg0, %c0_i32, %arg1 : i32, i32, i32
  }
  func.func @transform_3(%arg0: i32, %arg1: i32, %arg2: i32) -> (i32, i32) {
    %c0_i32 = arith.constant 0 : i32
    %c0_i32_0 = arith.constant 0 : i32
    %c0_i32_1 = arith.constant 0 : i32
    return %c0_i32, %c0_i32_0 : i32, i32
  }
  func.func @transform_4(%arg0: i32, %arg1: i32, %arg2: i32) -> (i32, i32) {
    %c0_i32 = arith.constant 0 : i32
    %c0_i32_0 = arith.constant 0 : i32
    %c0_i32_1 = arith.constant 0 : i32
    return %c0_i32, %c0_i32_0 : i32, i32
  }
  func.func @transform_5(%arg0: i32, %arg1: i32, %arg2: i32) -> (i32, i32) {
    %c0_i32 = arith.constant 0 : i32
    %c0_i32_0 = arith.constant 0 : i32
    %c0_i32_1 = arith.constant 0 : i32
    return %c0_i32, %c0_i32_0 : i32, i32
  }
  func.func @transform_6(%arg0: i32, %arg1: i32, %arg2: i32) -> (i32, i32) {
    %c0_i32 = arith.constant 0 : i32
    %c0_i32_0 = arith.constant 0 : i32
    %c0_i32_1 = arith.constant 0 : i32
    return %c0_i32, %c0_i32_0 : i32, i32
  }
  func.func @transform_7(%arg0: i32, %arg1: i32, %arg2: i32) -> (i32, i32) {
    %c0_i32 = arith.constant 0 : i32
    %c0_i32_0 = arith.constant 0 : i32
    %c0_i32_1 = arith.constant 0 : i32
    return %c0_i32, %c0_i32_0 : i32, i32
  }
  func.func @transform_8(%arg0: i32, %arg1: i32, %arg2: i32) -> (i32, i32) {
    %c0_i32 = arith.constant 0 : i32
    %c0_i32_0 = arith.constant 0 : i32
    %c0_i32_1 = arith.constant 0 : i32
    return %c0_i32, %c0_i32_0 : i32, i32
  }
  func.func @transform_9(%arg0: i32, %arg1: i32, %arg2: i32) -> (i32, i32, i32) {
    %c0_i32 = arith.constant 0 : i32
    return %arg0, %arg2, %arg1 : i32, i32, i32
  }
  func.func @transform_10(%arg0: i32, %arg1: i32, %arg2: i32) -> (i32, i32, i32) {
    %c0_i32 = arith.constant 0 : i32
    %c0_i32_0 = arith.constant 0 : i32
    return %arg0, %c0_i32, %arg1 : i32, i32, i32
  }
  func.func @transform_11(%arg0: i32, %arg1: i32, %arg2: i32) -> (i32, i32, i32) {
    %c0_i32 = arith.constant 0 : i32
    %c0_i32_0 = arith.constant 0 : i32
    return %arg0, %c0_i32, %arg1 : i32, i32, i32
  }
}

module attributes {stable_mosaic.version = 11 : i64} {
  func.func @_pool_kernel(%arg0: i32, %arg1: i32, %arg2: memref<1x8x128xbf16, #tpu.memory_space<vmem>>, %arg3: memref<1x3xf32, #tpu.memory_space<smem>>, %arg4: memref<1x1x128xf32, #tpu.memory_space<vmem>>) attributes {dimension_semantics = [#tpu.dimension_semantics<parallel>, #tpu.dimension_semantics<arbitrary>], iteration_bounds = array<i64: 2, 1>, scalar_prefetch = 0 : i64, scratch_operands = 0 : i64, tpu.core_type = #tpu.core_type<tc>, window_params = [{transform_indices = @transform_0, window_bounds = array<i64: 1, 8, 128>}, {transform_indices = @transform_1, window_bounds = array<i64: 1, 3>}, {transform_indices = @transform_2, window_bounds = array<i64: 1, 1, 128>}]} {
    %c0_i32 = arith.constant 0 : i32
    %0 = arith.cmpi eq, %arg1, %c0_i32 : i32
    %1 = arith.extui %0 : i1 to i32
    %c0_i32_0 = arith.constant 0 : i32
    %2 = arith.cmpi ne, %1, %c0_i32_0 : i32
    scf.if %2 {
      %cst_16 = arith.constant 0.000000e+00 : f32
      %32 = vector.broadcast %cst_16 : f32 to vector<1x1x128xf32>
      %c0_17 = arith.constant 0 : index
      %c0_18 = arith.constant 0 : index
      %c0_19 = arith.constant 0 : index
      %33 = vector.load %arg4[%c0_17, %c0_18, %c0_19] : memref<1x1x128xf32, #tpu.memory_space<vmem>>, vector<1x1x128xf32>
      tpu.vector_store %arg4[%c0_17, %c0_18, %c0_19], %32 {strides = array<i32>} : memref<1x1x128xf32, #tpu.memory_space<vmem>>, vector<1x1x128xf32>,
    } else {
    }
    %c0 = arith.constant 0 : index
    %c0_1 = arith.constant 0 : index
    %3 = memref.load %arg3[%c0, %c0_1] : memref<1x3xf32, #tpu.memory_space<smem>>
    %c0_2 = arith.constant 0 : index
    %c0_3 = arith.constant 0 : index
    %c0_4 = arith.constant 0 : index
    %4 = vector.load %arg2[%c0_2, %c0_3, %c0_4] : memref<1x8x128xbf16, #tpu.memory_space<vmem>>, vector<1x8x128xbf16>
    %5 = vector.shape_cast %4 : vector<1x8x128xbf16> to vector<8x128xbf16>
    %6 = arith.extf %5 : vector<8x128xbf16> to vector<8x128xf32>
    %7 = vector.broadcast %3 : f32 to vector<8x128xf32>
    %8 = arith.subf %6, %7 : vector<8x128xf32>
    %cst = arith.constant 0.000000e+00 : f32
    %9 = vector.broadcast %cst : f32 to vector<8x128xf32>
    %10 = arith.maximumf %8, %9 : vector<8x128xf32>
    %c8_i32 = arith.constant 8 : i32
    %11 = arith.muli %arg1, %c8_i32 : i32
    %12 = tpu.iota {dimensions = array<i32: 0>} : vector<8x128xi32>
    %13 = vector.broadcast %11 : i32 to vector<8x128xi32>
    %14 = arith.addi %13, %12 : vector<8x128xi32>
    %15 = arith.sitofp %14 : vector<8x128xi32> to vector<8x128xf32>
    %c0_5 = arith.constant 0 : index
    %c1 = arith.constant 1 : index
    %16 = memref.load %arg3[%c0_5, %c1] : memref<1x3xf32, #tpu.memory_space<smem>>
    %17 = vector.broadcast %16 : f32 to vector<8x128xf32>
    %18 = arith.cmpf olt, %15, %17 : vector<8x128xf32>
    %cst_6 = arith.constant 0.000000e+00 : f32
    %19 = vector.broadcast %cst_6 : f32 to vector<8x128xf32>
    %20 = arith.select %18, %10, %19 : vector<8x128xi1>, vector<8x128xf32>
    %c0_7 = arith.constant 0 : index
    %c0_8 = arith.constant 0 : index
    %c0_9 = arith.constant 0 : index
    %21 = vector.load %arg4[%c0_7, %c0_8, %c0_9] : memref<1x1x128xf32, #tpu.memory_space<vmem>>, vector<1x1x128xf32>
    %22 = vector.shape_cast %21 : vector<1x1x128xf32> to vector<1x128xf32>
    %cst_10 = arith.constant dense<0.000000e+00> : vector<128xf32>
    %23 = vector.multi_reduction <add>, %20, %cst_10 [0] : vector<8x128xf32> to vector<128xf32>
    %24 = vector.shape_cast %23 : vector<128xf32> to vector<1x128xf32>
    %25 = arith.addf %22, %24 : vector<1x128xf32>
    %c0_11 = arith.constant 0 : index
    %c0_12 = arith.constant 0 : index
    %c0_13 = arith.constant 0 : index
    %26 = vector.load %arg4[%c0_11, %c0_12, %c0_13] : memref<1x1x128xf32, #tpu.memory_space<vmem>>, vector<1x1x128xf32>
    %27 = vector.shape_cast %26 : vector<1x1x128xf32> to vector<1x128xf32>
    %28 = vector.shape_cast %25 : vector<1x128xf32> to vector<1x1x128xf32>
    tpu.vector_store %arg4[%c0_11, %c0_12, %c0_13], %28 {strides = array<i32>} : memref<1x1x128xf32, #tpu.memory_space<vmem>>, vector<1x1x128xf32>,
    %c0_i32_14 = arith.constant 0 : i32
    %29 = arith.cmpi eq, %arg1, %c0_i32_14 : i32
    %30 = arith.extui %29 : i1 to i32
    %c0_i32_15 = arith.constant 0 : i32
    %31 = arith.cmpi ne, %30, %c0_i32_15 : i32
    scf.if %31 {
      %c0_16 = arith.constant 0 : index
      %c0_17 = arith.constant 0 : index
      %c0_18 = arith.constant 0 : index
      %32 = vector.load %arg4[%c0_16, %c0_17, %c0_18] : memref<1x1x128xf32, #tpu.memory_space<vmem>>, vector<1x1x128xf32>
      %33 = vector.shape_cast %32 : vector<1x1x128xf32> to vector<1x128xf32>
      %c0_19 = arith.constant 0 : index
      %c2 = arith.constant 2 : index
      %34 = memref.load %arg3[%c0_19, %c2] : memref<1x3xf32, #tpu.memory_space<smem>>
      %35 = tpu.iota {dimensions = array<i32: 1>} : vector<1x128xi32>
      %36 = arith.sitofp %35 : vector<1x128xi32> to vector<1x128xf32>
      %37 = vector.broadcast %34 : f32 to vector<1x128xf32>
      %38 = arith.cmpf olt, %36, %37 : vector<1x128xf32>
      %cst_20 = arith.constant 0.000000e+00 : f32
      %39 = vector.broadcast %cst_20 : f32 to vector<1x128xf32>
      %40 = arith.select %38, %33, %39 : vector<1x128xi1>, vector<1x128xf32>
      %cst_21 = arith.constant dense<0.000000e+00> : vector<1xf32>
      %41 = vector.multi_reduction <add>, %40, %cst_21 [1] : vector<1x128xf32> to vector<1xf32>
      %42 = vector.shape_cast %41 : vector<1xf32> to vector<1x1xf32>
      %43 = vector.broadcast %34 : f32 to vector<1x1xf32>
      %44 = arith.divf %42, %43 : vector<1x1xf32>
      %cst_22 = arith.constant 1.000000e+00 : f32
      %45 = vector.broadcast %cst_22 : f32 to vector<1x1xf32>
      %46 = arith.addf %44, %45 : vector<1x1xf32>
      %47 = vector.broadcast %46 : vector<1x1xf32> to vector<1x128xf32>
      %48 = arith.divf %33, %47 : vector<1x128xf32>
      %cst_23 = arith.constant 5.000000e-01 : f32
      %49 = vector.broadcast %cst_23 : f32 to vector<1x128xf32>
      %50 = arith.subf %48, %49 : vector<1x128xf32>
      %51 = math.exp %50 : vector<1x128xf32>
      %cst_24 = arith.constant 1.000000e+00 : f32
      %52 = vector.broadcast %cst_24 : f32 to vector<1x128xf32>
      %53 = arith.addf %52, %51 : vector<1x128xf32>
      %cst_25 = arith.constant 1.000000e+00 : f32
      %54 = vector.broadcast %cst_25 : f32 to vector<1x128xf32>
      %55 = arith.divf %54, %53 : vector<1x128xf32>
      %c0_26 = arith.constant 0 : index
      %c0_27 = arith.constant 0 : index
      %c0_28 = arith.constant 0 : index
      %56 = vector.load %arg4[%c0_26, %c0_27, %c0_28] : memref<1x1x128xf32, #tpu.memory_space<vmem>>, vector<1x1x128xf32>
      %57 = vector.shape_cast %56 : vector<1x1x128xf32> to vector<1x128xf32>
      %58 = vector.shape_cast %55 : vector<1x128xf32> to vector<1x1x128xf32>
      tpu.vector_store %arg4[%c0_26, %c0_27, %c0_28], %58 {strides = array<i32>} : memref<1x1x128xf32, #tpu.memory_space<vmem>>, vector<1x1x128xf32>,
    } else {
    }
    return
  }
  func.func @transform_0(%arg0: i32, %arg1: i32) -> (i32, i32, i32) {
    %c0_i32 = arith.constant 0 : i32
    %c0_i32_0 = arith.constant 0 : i32
    return %arg0, %arg1, %c0_i32 : i32, i32, i32
  }
  func.func @transform_1(%arg0: i32, %arg1: i32) -> (i32, i32) {
    %c0_i32 = arith.constant 0 : i32
    %c0_i32_0 = arith.constant 0 : i32
    %c0_i32_1 = arith.constant 0 : i32
    return %c0_i32, %c0_i32_0 : i32, i32
  }
  func.func @transform_2(%arg0: i32, %arg1: i32) -> (i32, i32, i32) {
    %c0_i32 = arith.constant 0 : i32
    %c0_i32_0 = arith.constant 0 : i32
    %c0_i32_1 = arith.constant 0 : i32
    return %arg0, %c0_i32, %c0_i32_0 : i32, i32, i32
  }
}

</mosaic_0001>

<llo_original>
// kernel: dscript_forward.3
$region0: #{dscript_forward.3}
  #allocation0 [shape = 'u32[]', space=smem, size = 0x4, offset = 0x4, fixed_abs, tag = 'smem constant byte address 0x4 - core index']
  #allocation1 [shape = 'u32[144,128]{1,0:T(1,128)}', space=vmem, size = 0x12000, scoped, tag = 'internal scratch']
  %s0 = inlined_call_operand.vmem [shape: bf16[2,8,128], index: 0, kind: input, shape index: {}]
  %s1 = inlined_call_operand.vmem [shape: f32[1,3], index: 1, kind: input, shape index: {}]
  %s2 = inlined_call_operand.hbm [shape: f32[2,1,128], index: 2, kind: output, shape index: {}]
  %s3 = sld [smem:[#allocation0]]
  $region53: #{dscript_forward.3} parent=0
    _
  %s5 = ssub.s32 1, %s3
  %s6 = scalar_select 0, %s5, %s3
  $region1: #{dscript_forward.3} parent=0
    #allocation2 [shape = 'u8[512]{0}', space=smem, size = 0x200, scoped, tag = 'input window, operand 1, single buffered']
    #allocation3 [shape = 's32[2]{0}', space=sflag, size = 0x8, scoped, tag = 'scoped memory for dscript_forward.3']
    #allocation4 [shape = 's32[2]{0}', space=sflag, size = 0x8, scoped, tag = 'scoped memory for dscript_forward.3']
    #allocation5 [shape = 'u8[1024]{0}', space=vmem, size = 0x400, scoped, tag = 'output window, operand 0']
    %7 = vsyncpa [#allocation4], 0
    %8 = vsyncpa [#allocation3], 0
    %s9 = scalar_lea.sflag [#allocation3], 1
    %10 = vsyncpa %s9, 0
    loop: start=0, step=1, limit=4
    $region2: #{dscript_forward.3} parent=1 // loop_pre_header
      _
    $region3: #{dscript_forward.3} parent=1 // loop_header
      %s12 = sphi 0, %s16
      %p13 = scmp.ge.s32.totalorder %s12, 4
      %s19 = sphi 0, %s31
      %s20 = sphi 0, %s27
      %s21 = sphi 0, %s19
      %s22 = sphi 0, %s20
      %s23 = sphi 0, %s21
      %s24 = sphi 0, %s22
      %s36 = sphi 0, %s38
      %s39 = sphi 0, %s36
      %s40 = sphi 0, %s39
      %s56 = sphi 0, %s40
      %s60 = sphi 0, %s60
      %s62 = sphi 0, %s60
      %s63 = sphi 0, %s62
      %s77 = sphi 0, %s63
      %s83 = sphi 0, %s85
      %s86 = sphi 0, %s83
      %s87 = sphi 0, %s86
      %s103 = sphi 0, %s87
    $region4: #{dscript_forward.3} parent=1 // loop_header_branch
      %15 = sbr.rel (%p13) target = $region8
    $region5: #{dscript_forward.3} parent=1 // loop_body
      %s17 = ssub.s32 %s12, 1
      %s18 = ssub.s32 %s12, 2
      %s25 = sadd.s32 1, %s20
      %p26 = scmp.ge.s32.totalorder %s25, 1
      %s27 = scalar_select %p26, 0, %s25
      %s28 = sadd.s32 1, %s19
      %s29 = scalar_select %p26, %s28, %s19
      %p30 = scmp.ge.s32.totalorder %s29, 2
      %s31 = scalar_select %p30, 0, %s29
      %s32 = ssub.s32 %s19, %s31
      %s33 = ssub.s32 %s20, %s27
      %s34 = sor.u32 %s32, %s33
      %p35 = scmp.eq.s32.totalorder %s34, 0
      %s37 = sadd.s32 %s36, 1
      %s38 = scalar_select %p35, %s36, %s37
      %p41 = pneg %p35
      %p42 = scmp.eq.s32.totalorder %s12, 1
      %p43 = por %p41, %p42
      %p44 = scmp.ne.s32.totalorder %s36, %s39
      %p45 = scmp.eq.s32.totalorder %s12, 0
      %p46 = por %p44, %p45
      %p47 = scmp.ne.s32.totalorder %s36, %s39
      %p48 = scmp.eq.s32.totalorder %s17, 1
      %p49 = por %p47, %p48
      %p50 = scmp.ne.s32.totalorder %s39, %s40
      %p51 = scmp.eq.s32.totalorder %s17, 0
      %p52 = por %p50, %p51
      %p53 = scmp.ne.s32.totalorder %s39, %s40
      %p54 = scmp.eq.s32.totalorder %s18, 1
      %p55 = por %p53, %p54
      %p57 = scmp.ne.s32.totalorder %s40, %s56
      %p58 = scmp.eq.s32.totalorder %s18, 0
      %p59 = por %p57, %p58
      %s61 = sadd.s32 %s60, 1
      %p64 = scmp.eq.s32.totalorder %s12, 1
      %p65 = scmp.ne.s32.totalorder %s60, %s62
      %p66 = scmp.eq.s32.totalorder %s12, 0
      %p67 = por %p65, %p66
      %p68 = scmp.ne.s32.totalorder %s60, %s62
      %p69 = scmp.eq.s32.totalorder %s17, 1
      %p70 = por %p68, %p69
      %p71 = scmp.ne.s32.totalorder %s62, %s63
      %p72 = scmp.eq.s32.totalorder %s17, 0
      %p73 = por %p71, %p72
      %p74 = scmp.ne.s32.totalorder %s62, %s63
      %p75 = scmp.eq.s32.totalorder %s18, 1
      %p76 = por %p74, %p75
      %p78 = scmp.ne.s32.totalorder %s63, %s77
      %p79 = scmp.eq.s32.totalorder %s18, 0
      %p80 = por %p78, %p79
      %s81 = ssub.s32 %s19, %s31
      %p82 = scmp.eq.s32.totalorder %s81, 0
      %s84 = sadd.s32 %s83, 1
      %s85 = scalar_select %p82, %s83, %s84
      %p88 = pneg %p82
      %p89 = scmp.eq.s32.totalorder %s12, 1
      %p90 = por %p88, %p89
      %p91 = scmp.ne.s32.totalorder %s83, %s86
      %p92 = scmp.eq.s32.totalorder %s12, 0
      %p93 = por %p91, %p92
      %p94 = scmp.ne.s32.totalorder %s83, %s86
      %p95 = scmp.eq.s32.totalorder %s17, 1
      %p96 = por %p94, %p95
      %p97 = scmp.ne.s32.totalorder %s86, %s87
      %p98 = scmp.eq.s32.totalorder %s17, 0
      %p99 = por %p97, %p98
      %p100 = scmp.ne.s32.totalorder %s86, %s87
      %p101 = scmp.eq.s32.totalorder %s18, 1
      %p102 = por %p100, %p101
      %p104 = scmp.ne.s32.totalorder %s87, %s103
      %p105 = scmp.eq.s32.totalorder %s18, 0
      %p106 = por %p104, %p105
      %p107 = scmp.le.s32.totalorder 1, %s12
      %p108 = scmp.lt.s32.totalorder %s12, 3
      %p109 = pnand %p107, %p108
      %p110 = pneg %p109
      // Predicated region
      $region9: #{dscript_forward.3} parent=5 // pred_check
        _
      $region10: #{dscript_forward.3} parent=5 // pred_check_branch
        %112 = sbr.rel (%p109) target = $region12
      $region11: #{dscript_forward.3} parent=5 // pred_region
        %s113 = ssub.s32 %s12, 1
        // Predicated region
        $region13: #{dscript_forward.3} parent=11 // pred_check
          %p114 = pneg %p73
        $region14: #{dscript_forward.3} parent=11 // pred_check_branch
          %116 = sbr.rel (%p114) target = $region16
        $region15: #{dscript_forward.3} parent=11 // pred_region
          %s118 = ssub.s32 16, 16
          %119 = vsyncadd [#allocation4], %s118
          %s121 = sshll.u32 %s1, 4
          %s122 = int_to_ptr.vmem [resolvable:$true] %s121
          %124 = dma.vmem_to_smem %s122, 16, [#allocation2], [#allocation4]
        $region16: #{dscript_forward.3} parent=11 // pred_fallthru
          _
      $region12: #{dscript_forward.3} parent=5 // pred_fallthru
        _
      %p125 = scmp.lt.s32.totalorder %s12, 2
      // Predicated region
      $region17: #{dscript_forward.3} parent=5 // pred_check
        %p126 = pneg %p125
      $region18: #{dscript_forward.3} parent=5 // pred_check_branch
        %128 = sbr.rel (%p126) target = $region20
      $region19: #{dscript_forward.3} parent=5 // pred_region
        // Predicated region
        $region21: #{dscript_forward.3} parent=19 // pred_check
          %p129 = pneg %p46
        $region22: #{dscript_forward.3} parent=19 // pred_check_branch
          %131 = sbr.rel (%p129) target = $region24
        $region23: #{dscript_forward.3} parent=19 // pred_region
          %p132 = scmp.lt.s32.totalorder %s19, 1
          %s133 = scalar_select %p132, %s19, 1
          %p134 = scmp.lt.s32.totalorder %s20, 0
          %s135 = scalar_select %p134, %s20, 0
          %s136 = sadd.s32 %s135, %s133
          %s137 = smul.addr %s136, 4
          %s138 = scalar_lea.vmem %s0, %s137
        $region24: #{dscript_forward.3} parent=19 // pred_fallthru
          _
      $region20: #{dscript_forward.3} parent=5 // pred_fallthru
        _
      %p139 = scmp.le.s32.totalorder 1, %s12
      %p140 = scmp.lt.s32.totalorder %s12, 3
      %p141 = pnand %p139, %p140
      %p142 = pneg %p141
      // Predicated region
      $region25: #{dscript_forward.3} parent=5 // pred_check
        _
      $region26: #{dscript_forward.3} parent=5 // pred_check_branch
        %144 = sbr.rel (%p141) target = $region28
      $region27: #{dscript_forward.3} parent=5 // pred_region
        %s145 = ssub.s32 %s12, 1
        // Predicated region
        $region29: #{dscript_forward.3} parent=27 // pred_check
          %p146 = pneg %p73
        $region30: #{dscript_forward.3} parent=27 // pred_check_branch
          %148 = sbr.rel (%p146) target = $region32
        $region31: #{dscript_forward.3} parent=27 // pred_region
          %149 = dma.done [#allocation4], 16
        $region32: #{dscript_forward.3} parent=27 // pred_fallthru
          _
        %150 = sfence
        %p151 = scmp.lt.s32.totalorder %s21, 1
        %s152 = scalar_select %p151, %s21, 1
        %p153 = scmp.lt.s32.totalorder %s22, 0
        %s154 = scalar_select %p153, %s22, 0
        %s155 = sadd.s32 %s154, %s152
        %s156 = smul.addr %s155, 4
        %s157 = scalar_lea.vmem %s0, %s156
        %p158 = pneg %p52
        %p159 = pneg %p49
        %p160 = pneg %p73
        %p161 = pneg %p70
        %p162 = pneg %p99
        %p163 = pneg %p96
        %s164 = sand.u32 %s86, 1
        %s165 = scalar_lea.sflag [#allocation3], %s164
        %s166 = sand.u32 %s86, 1
        %s167 = scalar_lea.vmem [#allocation5], %s166
        %p168 = scmp.lt.s32.totalorder %s21, 1
        %s169 = scalar_select %p168, %s21, 1
        %p170 = scmp.lt.s32.totalorder %s22, 0
        %s171 = scalar_select %p170, %s22, 0
        %s172 = sadd.s32 %s171, %s169
        %s173 = smul.addr %s172, 4
        %s174 = scalar_lea.vmem %s0, %s173
        %p175 = scmp.eq.s32.totalorder %s22, 0
        // Predicated region
        $region33: #{dscript_forward.3} parent=27 // pred_check
          %p176 = pneg %p175
        $region34: #{dscript_forward.3} parent=27 // pred_check_branch
          %178 = sbr.rel (%p176) target = $region36
        $region35: #{dscript_forward.3} parent=27 // pred_region
          %179 = vst [vmem:[%s167] sm:$0x1] 0.0
        $region36: #{dscript_forward.3} parent=27 // pred_fallthru
          _
        %s180 = sld [smem:[#allocation2]]
        %v181 = vld [vmem:[%s174] sm:$0xf]
        %v182 = vunpack.c.l.bf16 %v181
        %v183 = vstv %s180
        %v184 = vsub.f32 %v182, %v183
        %v185 = vmax.f32 %v184, 0.0
        %s186 = smul.u32 %s22, 8
        %v187 = vlaneseq
        %v188 = vshrl.u32 %v187, 7
        %v189 = vstv %s186
        %v190 = vadd.s32 %v189, %v188
        %v191 = vcvt.s32.f32 %v190
        %s192 = sld [smem:[#allocation2 + $0x1]]
        %v193 = vstv %s192
        %vm194 = vcmp.lt.f32.partialorder %v191, %v193
        %v195 = vsel %vm194, %v185, 0.0
        %v196 = vld [vmem:[%s167] sm:$0x1]
        %v197 = vrot.slane %v195, 4
        %v198 = vadd.f32 %v195, %v197
        %v199 = vrot.slane %v198, 2
        %v200 = vadd.f32 %v198, %v199
        %v201 = vrot.slane %v200, 1
        %v202 = vadd.f32 %v200, %v201
        %v203 = vadd.f32 %v196, %v202
        %204 = vst [vmem:[%s167] sm:$0x1] %v203
        // Predicated region
        $region37: #{dscript_forward.3} parent=27 // pred_check
          %p205 = pneg %p175
        $region38: #{dscript_forward.3} parent=27 // pred_check_branch
          %207 = sbr.rel (%p205) target = $region40
        $region39: #{dscript_forward.3} parent=27 // pred_region
          %v208 = vld [vmem:[%s167] sm:$0x1]
          %s209 = sld [smem:[#allocation2 + $0x2]]
          %v210 = vlaneseq
          %v211 = vand.u32 %v210, 127
          %v212 = vcvt.s32.f32 %v211
          %v213 = vstv %s209
          %vm214 = vcmp.lt.f32.partialorder %v212, %v213
          %v215 = vsel %vm214, %v208, 0.0
          %vm216 = vcmask 1040384
          %v217 = vsel %vm216, %v215, 0.0
          %218 = vadd.xlane.f32.xlu0 %v217
          %v219 = vpop.xlane.xlu0 %218
          %v220 = vrcp.pop %v213
          %v221 = vmul.f32 %v219, %v220
          %v222 = vadd.f32 %v221, 1.0
          %v223 = vrcp.pop %v222
          %v224 = vmul.f32 %v208, %v223
          %v225 = vsub.f32 %v224, 0.5
          %v226 = vmul.f32 %v225, 1.442695
          %v227 = vpow.pop %v226
          %v228 = vadd.f32 %v227, 1.0
          %v229 = vrcp.pop %v228
          %v230 = vmul.f32 1.0, %v229
          %231 = vst [vmem:[%s167] sm:$0x1] %v230
        $region40: #{dscript_forward.3} parent=27 // pred_fallthru
          _
        %s232 = sand.u32 %s86, 1
        %s233 = scalar_lea.sflag [#allocation3], %s232
        %s234 = sand.u32 %s86, 1
        %s235 = scalar_lea.vmem [#allocation5], %s234
        // Predicated region
        $region41: #{dscript_forward.3} parent=27 // pred_check
          %p236 = pneg %p96
        $region42: #{dscript_forward.3} parent=27 // pred_check_branch
          %238 = sbr.rel (%p236) target = $region44
        $region43: #{dscript_forward.3} parent=27 // pred_region
          %s240 = ssub.s32 16, 16
          %241 = vsyncadd %s233, %s240
          %s242 = smul.addr %s21, 16
          %s243 = scalar_lea.hbm %s2, %s242
          %s245 = sshll.u32 %s235, 4
          %s246 = int_to_ptr.vmem [resolvable:$true] %s245
          %248 = dma.vmem_to_hbm [thread:$0]  %s246, 16, %s243, %s233
        $region44: #{dscript_forward.3} parent=27 // pred_fallthru
          _
      $region28: #{dscript_forward.3} parent=5 // pred_fallthru
        _
      %p249 = scmp.le.s32.totalorder 2, %s12
      // Predicated region
      $region45: #{dscript_forward.3} parent=5 // pred_check
        %p250 = pneg %p249
      $region46: #{dscript_forward.3} parent=5 // pred_check_branch
        %252 = sbr.rel (%p250) target = $region48
      $region47: #{dscript_forward.3} parent=5 // pred_region
        %s253 = ssub.s32 %s12, 2
        // Predicated region
        $region49: #{dscript_forward.3} parent=47 // pred_check
          %p254 = pneg %p102
        $region50: #{dscript_forward.3} parent=47 // pred_check_branch
          %256 = sbr.rel (%p254) target = $region52
        $region51: #{dscript_forward.3} parent=47 // pred_region
          %s257 = sand.u32 %s87, 1
          %s258 = scalar_lea.sflag [#allocation3], %s257
          %s259 = sand.u32 %s87, 1
          %s260 = scalar_lea.vmem [#allocation5], %s259
          %261 = dma.done %s258, 16
        $region52: #{dscript_forward.3} parent=47 // pred_fallthru
          _
      $region48: #{dscript_forward.3} parent=5 // pred_fallthru
        _
    $region6: #{dscript_forward.3} parent=1 // loop_footer
      %s16 = sadd.s32 1, %s12
    $region7: #{dscript_forward.3} parent=1 // loop_footer_branch
      %11 = sbr.rel target = $region3
    $region8: #{dscript_forward.3} parent=1 // loop_exit
      _
    %262 = vsyncpa [#allocation3], 1
    %s263 = scalar_lea.sflag [#allocation3], 1
    %264 = vsyncpa %s263, 1
    %265 = vsyncpa [#allocation4], 1
    %s266 = scalar_lea.sflag [#allocation4], 1
    %267 = vsyncpa %s266, 1

// kernel: dscript_forward.2
$region0: #{dscript_forward.2}
  #allocation0 [shape = 'u32[]', space=smem, size = 0x4, offset = 0x4, fixed_abs, tag = 'smem constant byte address 0x4 - core index']
  #allocation1 [shape = 'u32[144,128]{1,0:T(1,128)}', space=vmem, size = 0x12000, scoped, tag = 'internal scratch']
  #allocation2 [shape = 'bf16[128,128]{1,0:T(8,128)(2,1)}', space=vmem, size = 0x8000, scoped, tag = 'scratch operand']
  #allocation3 [shape = 'bf16[1024,256]{1,0:T(8,128)(2,1)}', space=vmem, size = 0x80000, scoped, tag = 'scratch operand']
  %s0 = inlined_call_operand.vmem [shape: bf16[2,128,32], index: 0, kind: input, shape index: {}]
  %s1 = inlined_call_operand.vmem [shape: bf16[2,8,32], index: 1, kind: input, shape index: {}]
  %s2 = inlined_call_operand.vmem [shape: f32[2,1,128], index: 2, kind: input, shape index: {}]
  %s3 = inlined_call_operand.vmem [shape: bf16[32,128], index: 3, kind: input, shape index: {}]
  %s4 = inlined_call_operand.vmem [shape: f32[1,128], index: 4, kind: input, shape index: {}]
  %s5 = inlined_call_operand.vmem [shape: bf16[256,32], index: 5, kind: input, shape index: {}]
  %s6 = inlined_call_operand.vmem [shape: f32[1,32], index: 6, kind: input, shape index: {}]
  %s7 = inlined_call_operand.vmem [shape: f32[1,32], index: 7, kind: input, shape index: {}]
  %s8 = inlined_call_operand.vmem [shape: f32[1,2], index: 8, kind: input, shape index: {}]
  %s9 = inlined_call_operand.vmem [shape: bf16[2,8,128], index: 9, kind: output, shape index: {0}]
  %s10 = inlined_call_operand.vmem [shape: f32[2,1,128], index: 10, kind: output, shape index: {1}]
  %s11 = inlined_call_operand.vmem [shape: f32[2,1,128], index: 11, kind: output, shape index: {2}]
  %12 = xla_tuple %s9, %s10, %s11
  %s13 = sld [smem:[#allocation0]]
  $region93: #{dscript_forward.2} parent=0
    _
  %s15 = ssub.s32 1, %s13
  %s16 = scalar_select 0, %s15, %s13
  $region1: #{dscript_forward.2} parent=0
    #allocation4 [shape = 'u8[512]{0}', space=smem, size = 0x200, scoped, tag = 'input window, operand 8, single buffered']
    #allocation5 [shape = 's32[2]{0}', space=sflag, size = 0x8, scoped, tag = 'scoped memory for dscript_forward.2']
    %17 = vsyncpa [#allocation5], 0
    loop: start=0, step=1, limit=4
    $region2: #{dscript_forward.2} parent=1 // loop_pre_header
      _
    $region3: #{dscript_forward.2} parent=1 // loop_header
      %s19 = sphi 0, %s23
      %p20 = scmp.ge.s32.totalorder %s19, 4
      %s26 = sphi 0, %s45
      %s27 = sphi 0, %s41
      %s28 = sphi 0, %s37
      %s29 = sphi 0, %s26
      %s30 = sphi 0, %s27
      %s31 = sphi 0, %s28
      %s32 = sphi 0, %s29
      %s33 = sphi 0, %s30
      %s34 = sphi 0, %s31
      %s50 = sphi 0, %s52
      %s53 = sphi 0, %s50
      %s54 = sphi 0, %s53
      %s70 = sphi 0, %s54
      %s78 = sphi 0, %s80
      %s81 = sphi 0, %s78
      %s82 = sphi 0, %s81
      %s98 = sphi 0, %s82
      %s106 = sphi 0, %s108
      %s109 = sphi 0, %s106
      %s110 = sphi 0, %s109
      %s126 = sphi 0, %s110
      %s130 = sphi 0, %s130
      %s132 = sphi 0, %s130
      %s133 = sphi 0, %s132
      %s147 = sphi 0, %s133
      %s151 = sphi 0, %s151
      %s153 = sphi 0, %s151
      %s154 = sphi 0, %s153
      %s168 = sphi 0, %s154
      %s172 = sphi 0, %s172
      %s174 = sphi 0, %s172
      %s175 = sphi 0, %s174
      %s189 = sphi 0, %s175
      %s193 = sphi 0, %s193
      %s195 = sphi 0, %s193
      %s196 = sphi 0, %s195
      %s210 = sphi 0, %s196
      %s214 = sphi 0, %s214
      %s216 = sphi 0, %s214
      %s217 = sphi 0, %s216
      %s231 = sphi 0, %s217
      %s235 = sphi 0, %s235
      %s237 = sphi 0, %s235
      %s238 = sphi 0, %s237
      %s252 = sphi 0, %s238
      %s262 = sphi 0, %s264
      %s265 = sphi 0, %s262
      %s266 = sphi 0, %s265
      %s282 = sphi 0, %s266
      %s290 = sphi 0, %s292
      %s293 = sphi 0, %s290
      %s294 = sphi 0, %s293
      %s310 = sphi 0, %s294
      %s318 = sphi 0, %s320
      %s321 = sphi 0, %s318
      %s322 = sphi 0, %s321
      %s338 = sphi 0, %s322
    $region4: #{dscript_forward.2} parent=1 // loop_header_branch
      %22 = sbr.rel (%p20) target = $region8
    $region5: #{dscript_forward.2} parent=1 // loop_body
      %s24 = ssub.s32 %s19, 1
      %s25 = ssub.s32 %s19, 2
      %s35 = sadd.s32 1, %s28
      %p36 = scmp.ge.s32.totalorder %s35, 1
      %s37 = scalar_select %p36, 0, %s35
      %s38 = sadd.s32 1, %s27
      %s39 = scalar_select %p36, %s38, %s27
      %p40 = scmp.ge.s32.totalorder %s39, 1
      %s41 = scalar_select %p40, 0, %s39
      %s42 = sadd.s32 1, %s26
      %s43 = scalar_select %p40, %s42, %s26
      %p44 = scmp.ge.s32.totalorder %s43, 2
      %s45 = scalar_select %p44, 0, %s43
      %s46 = ssub.s32 %s26, %s45
      %s47 = ssub.s32 %s27, %s41
      %s48 = sor.u32 %s46, %s47
      %p49 = scmp.eq.s32.totalorder %s48, 0
      %s51 = sadd.s32 %s50, 1
      %s52 = scalar_select %p49, %s50, %s51
      %p55 = pneg %p49
      %p56 = scmp.eq.s32.totalorder %s19, 1
      %p57 = por %p55, %p56
      %p58 = scmp.ne.s32.totalorder %s50, %s53
      %p59 = scmp.eq.s32.totalorder %s19, 0
      %p60 = por %p58, %p59
      %p61 = scmp.ne.s32.totalorder %s50, %s53
      %p62 = scmp.eq.s32.totalorder %s24, 1
      %p63 = por %p61, %p62
      %p64 = scmp.ne.s32.totalorder %s53, %s54
      %p65 = scmp.eq.s32.totalorder %s24, 0
      %p66 = por %p64, %p65
      %p67 = scmp.ne.s32.totalorder %s53, %s54
      %p68 = scmp.eq.s32.totalorder %s25, 1
      %p69 = por %p67, %p68
      %p71 = scmp.ne.s32.totalorder %s54, %s70
      %p72 = scmp.eq.s32.totalorder %s25, 0
      %p73 = por %p71, %p72
      %s74 = ssub.s32 %s26, %s45
      %s75 = ssub.s32 %s28, %s37
      %s76 = sor.u32 %s74, %s75
      %p77 = scmp.eq.s32.totalorder %s76, 0
      %s79 = sadd.s32 %s78, 1
      %s80 = scalar_select %p77, %s78, %s79
      %p83 = pneg %p77
      %p84 = scmp.eq.s32.totalorder %s19, 1
      %p85 = por %p83, %p84
      %p86 = scmp.ne.s32.totalorder %s78, %s81
      %p87 = scmp.eq.s32.totalorder %s19, 0
      %p88 = por %p86, %p87
      %p89 = scmp.ne.s32.totalorder %s78, %s81
      %p90 = scmp.eq.s32.totalorder %s24, 1
      %p91 = por %p89, %p90
      %p92 = scmp.ne.s32.totalorder %s81, %s82
      %p93 = scmp.eq.s32.totalorder %s24, 0
      %p94 = por %p92, %p93
      %p95 = scmp.ne.s32.totalorder %s81, %s82
      %p96 = scmp.eq.s32.totalorder %s25, 1
      %p97 = por %p95, %p96
      %p99 = scmp.ne.s32.totalorder %s82, %s98
      %p100 = scmp.eq.s32.totalorder %s25, 0
      %p101 = por %p99, %p100
      %s102 = ssub.s32 %s26, %s45
      %s103 = ssub.s32 %s27, %s41
      %s104 = sor.u32 %s102, %s103
      %p105 = scmp.eq.s32.totalorder %s104, 0
      %s107 = sadd.s32 %s106, 1
      %s108 = scalar_select %p105, %s106, %s107
      %p111 = pneg %p105
      %p112 = scmp.eq.s32.totalorder %s19, 1
      %p113 = por %p111, %p112
      %p114 = scmp.ne.s32.totalorder %s106, %s109
      %p115 = scmp.eq.s32.totalorder %s19, 0
      %p116 = por %p114, %p115
      %p117 = scmp.ne.s32.totalorder %s106, %s109
      %p118 = scmp.eq.s32.totalorder %s24, 1
      %p119 = por %p117, %p118
      %p120 = scmp.ne.s32.totalorder %s109, %s110
      %p121 = scmp.eq.s32.totalorder %s24, 0
      %p122 = por %p120, %p121
      %p123 = scmp.ne.s32.totalorder %s109, %s110
      %p124 = scmp.eq.s32.totalorder %s25, 1
      %p125 = por %p123, %p124
      %p127 = scmp.ne.s32.totalorder %s110, %s126
      %p128 = scmp.eq.s32.totalorder %s25, 0
      %p129 = por %p127, %p128
      %s131 = sadd.s32 %s130, 1
      %p134 = scmp.eq.s32.totalorder %s19, 1
      %p135 = scmp.ne.s32.totalorder %s130, %s132
      %p136 = scmp.eq.s32.totalorder %s19, 0
      %p137 = por %p135, %p136
      %p138 = scmp.ne.s32.totalorder %s130, %s132
      %p139 = scmp.eq.s32.totalorder %s24, 1
      %p140 = por %p138, %p139
      %p141 = scmp.ne.s32.totalorder %s132, %s133
      %p142 = scmp.eq.s32.totalorder %s24, 0
      %p143 = por %p141, %p142
      %p144 = scmp.ne.s32.totalorder %s132, %s133
      %p145 = scmp.eq.s32.totalorder %s25, 1
      %p146 = por %p144, %p145
      %p148 = scmp.ne.s32.totalorder %s133, %s147
      %p149 = scmp.eq.s32.totalorder %s25, 0
      %p150 = por %p148, %p149
      %s152 = sadd.s32 %s151, 1
      %p155 = scmp.eq.s32.totalorder %s19, 1
      %p156 = scmp.ne.s32.totalorder %s151, %s153
      %p157 = scmp.eq.s32.totalorder %s19, 0
      %p158 = por %p156, %p157
      %p159 = scmp.ne.s32.totalorder %s151, %s153
      %p160 = scmp.eq.s32.totalorder %s24, 1
      %p161 = por %p159, %p160
      %p162 = scmp.ne.s32.totalorder %s153, %s154
      %p163 = scmp.eq.s32.totalorder %s24, 0
      %p164 = por %p162, %p163
      %p165 = scmp.ne.s32.totalorder %s153, %s154
      %p166 = scmp.eq.s32.totalorder %s25, 1
      %p167 = por %p165, %p166
      %p169 = scmp.ne.s32.totalorder %s154, %s168
      %p170 = scmp.eq.s32.totalorder %s25, 0
      %p171 = por %p169, %p170
      %s173 = sadd.s32 %s172, 1
      %p176 = scmp.eq.s32.totalorder %s19, 1
      %p177 = scmp.ne.s32.totalorder %s172, %s174
      %p178 = scmp.eq.s32.totalorder %s19, 0
      %p179 = por %p177, %p178
      %p180 = scmp.ne.s32.totalorder %s172, %s174
      %p181 = scmp.eq.s32.totalorder %s24, 1
      %p182 = por %p180, %p181
      %p183 = scmp.ne.s32.totalorder %s174, %s175
      %p184 = scmp.eq.s32.totalorder %s24, 0
      %p185 = por %p183, %p184
      %p186 = scmp.ne.s32.totalorder %s174, %s175
      %p187 = scmp.eq.s32.totalorder %s25, 1
      %p188 = por %p186, %p187
      %p190 = scmp.ne.s32.totalorder %s175, %s189
      %p191 = scmp.eq.s32.totalorder %s25, 0
      %p192 = por %p190, %p191
      %s194 = sadd.s32 %s193, 1
      %p197 = scmp.eq.s32.totalorder %s19, 1
      %p198 = scmp.ne.s32.totalorder %s193, %s195
      %p199 = scmp.eq.s32.totalorder %s19, 0
      %p200 = por %p198, %p199
      %p201 = scmp.ne.s32.totalorder %s193, %s195
      %p202 = scmp.eq.s32.totalorder %s24, 1
      %p203 = por %p201, %p202
      %p204 = scmp.ne.s32.totalorder %s195, %s196
      %p205 = scmp.eq.s32.totalorder %s24, 0
      %p206 = por %p204, %p205
      %p207 = scmp.ne.s32.totalorder %s195, %s196
      %p208 = scmp.eq.s32.totalorder %s25, 1
      %p209 = por %p207, %p208
      %p211 = scmp.ne.s32.totalorder %s196, %s210
      %p212 = scmp.eq.s32.totalorder %s25, 0
      %p213 = por %p211, %p212
      %s215 = sadd.s32 %s214, 1
      %p218 = scmp.eq.s32.totalorder %s19, 1
      %p219 = scmp.ne.s32.totalorder %s214, %s216
      %p220 = scmp.eq.s32.totalorder %s19, 0
      %p221 = por %p219, %p220
      %p222 = scmp.ne.s32.totalorder %s214, %s216
      %p223 = scmp.eq.s32.totalorder %s24, 1
      %p224 = por %p222, %p223
      %p225 = scmp.ne.s32.totalorder %s216, %s217
      %p226 = scmp.eq.s32.totalorder %s24, 0
      %p227 = por %p225, %p226
      %p228 = scmp.ne.s32.totalorder %s216, %s217
      %p229 = scmp.eq.s32.totalorder %s25, 1
      %p230 = por %p228, %p229
      %p232 = scmp.ne.s32.totalorder %s217, %s231
      %p233 = scmp.eq.s32.totalorder %s25, 0
      %p234 = por %p232, %p233
      %s236 = sadd.s32 %s235, 1
      %p239 = scmp.eq.s32.totalorder %s19, 1
      %p240 = scmp.ne.s32.totalorder %s235, %s237
      %p241 = scmp.eq.s32.totalorder %s19, 0
      %p242 = por %p240, %p241
      %p243 = scmp.ne.s32.totalorder %s235, %s237
      %p244 = scmp.eq.s32.totalorder %s24, 1
      %p245 = por %p243, %p244
      %p246 = scmp.ne.s32.totalorder %s237, %s238
      %p247 = scmp.eq.s32.totalorder %s24, 0
      %p248 = por %p246, %p247
      %p249 = scmp.ne.s32.totalorder %s237, %s238
      %p250 = scmp.eq.s32.totalorder %s25, 1
      %p251 = por %p249, %p250
      %p253 = scmp.ne.s32.totalorder %s238, %s252
      %p254 = scmp.eq.s32.totalorder %s25, 0
      %p255 = por %p253, %p254
      %s256 = ssub.s32 %s26, %s45
      %s257 = ssub.s32 %s28, %s37
      %s258 = sor.u32 %s256, %s257
      %s259 = ssub.s32 %s27, %s41
      %s260 = sor.u32 %s258, %s259
      %p261 = scmp.eq.s32.totalorder %s260, 0
      %s263 = sadd.s32 %s262, 1
      %s264 = scalar_select %p261, %s262, %s263
      %p267 = pneg %p261
      %p268 = scmp.eq.s32.totalorder %s19, 1
      %p269 = por %p267, %p268
      %p270 = scmp.ne.s32.totalorder %s262, %s265
      %p271 = scmp.eq.s32.totalorder %s19, 0
      %p272 = por %p270, %p271
      %p273 = scmp.ne.s32.totalorder %s262, %s265
      %p274 = scmp.eq.s32.totalorder %s24, 1
      %p275 = por %p273, %p274
      %p276 = scmp.ne.s32.totalorder %s265, %s266
      %p277 = scmp.eq.s32.totalorder %s24, 0
      %p278 = por %p276, %p277
      %p279 = scmp.ne.s32.totalorder %s265, %s266
      %p280 = scmp.eq.s32.totalorder %s25, 1
      %p281 = por %p279, %p280
      %p283 = scmp.ne.s32.totalorder %s266, %s282
      %p284 = scmp.eq.s32.totalorder %s25, 0
      %p285 = por %p283, %p284
      %s286 = ssub.s32 %s26, %s45
      %s287 = ssub.s32 %s27, %s41
      %s288 = sor.u32 %s286, %s287
      %p289 = scmp.eq.s32.totalorder %s288, 0
      %s291 = sadd.s32 %s290, 1
      %s292 = scalar_select %p289, %s290, %s291
      %p295 = pneg %p289
      %p296 = scmp.eq.s32.totalorder %s19, 1
      %p297 = por %p295, %p296
      %p298 = scmp.ne.s32.totalorder %s290, %s293
      %p299 = scmp.eq.s32.totalorder %s19, 0
      %p300 = por %p298, %p299
      %p301 = scmp.ne.s32.totalorder %s290, %s293
      %p302 = scmp.eq.s32.totalorder %s24, 1
      %p303 = por %p301, %p302
      %p304 = scmp.ne.s32.totalorder %s293, %s294
      %p305 = scmp.eq.s32.totalorder %s24, 0
      %p306 = por %p304, %p305
      %p307 = scmp.ne.s32.totalorder %s293, %s294
      %p308 = scmp.eq.s32.totalorder %s25, 1
      %p309 = por %p307, %p308
      %p311 = scmp.ne.s32.totalorder %s294, %s310
      %p312 = scmp.eq.s32.totalorder %s25, 0
      %p313 = por %p311, %p312
      %s314 = ssub.s32 %s26, %s45
      %s315 = ssub.s32 %s27, %s41
      %s316 = sor.u32 %s314, %s315
      %p317 = scmp.eq.s32.totalorder %s316, 0
      %s319 = sadd.s32 %s318, 1
      %s320 = scalar_select %p317, %s318, %s319
      %p323 = pneg %p317
      %p324 = scmp.eq.s32.totalorder %s19, 1
      %p325 = por %p323, %p324
      %p326 = scmp.ne.s32.totalorder %s318, %s321
      %p327 = scmp.eq.s32.totalorder %s19, 0
      %p328 = por %p326, %p327
      %p329 = scmp.ne.s32.totalorder %s318, %s321
      %p330 = scmp.eq.s32.totalorder %s24, 1
      %p331 = por %p329, %p330
      %p332 = scmp.ne.s32.totalorder %s321, %s322
      %p333 = scmp.eq.s32.totalorder %s24, 0
      %p334 = por %p332, %p333
      %p335 = scmp.ne.s32.totalorder %s321, %s322
      %p336 = scmp.eq.s32.totalorder %s25, 1
      %p337 = por %p335, %p336
      %p339 = scmp.ne.s32.totalorder %s322, %s338
      %p340 = scmp.eq.s32.totalorder %s25, 0
      %p341 = por %p339, %p340
      %p342 = scmp.le.s32.totalorder 1, %s19
      %p343 = scmp.lt.s32.totalorder %s19, 3
      %p344 = pnand %p342, %p343
      %p345 = pneg %p344
      // Predicated region
      $region9: #{dscript_forward.2} parent=5 // pred_check
        _
      $region10: #{dscript_forward.2} parent=5 // pred_check_branch
        %347 = sbr.rel (%p344) target = $region12
      $region11: #{dscript_forward.2} parent=5 // pred_region
        %s348 = ssub.s32 %s19, 1
        // Predicated region
        $region13: #{dscript_forward.2} parent=11 // pred_check
          %p349 = pneg %p143
        $region14: #{dscript_forward.2} parent=11 // pred_check_branch
          %351 = sbr.rel (%p349) target = $region16
        $region15: #{dscript_forward.2} parent=11 // pred_region
          _
        $region16: #{dscript_forward.2} parent=11 // pred_fallthru
          _
        // Predicated region
        $region17: #{dscript_forward.2} parent=11 // pred_check
          %p352 = pneg %p164
        $region18: #{dscript_forward.2} parent=11 // pred_check_branch
          %354 = sbr.rel (%p352) target = $region20
        $region19: #{dscript_forward.2} parent=11 // pred_region
          _
        $region20: #{dscript_forward.2} parent=11 // pred_fallthru
          _
        // Predicated region
        $region21: #{dscript_forward.2} parent=11 // pred_check
          %p355 = pneg %p185
        $region22: #{dscript_forward.2} parent=11 // pred_check_branch
          %357 = sbr.rel (%p355) target = $region24
        $region23: #{dscript_forward.2} parent=11 // pred_region
          _
        $region24: #{dscript_forward.2} parent=11 // pred_fallthru
          _
        // Predicated region
        $region25: #{dscript_forward.2} parent=11 // pred_check
          %p358 = pneg %p206
        $region26: #{dscript_forward.2} parent=11 // pred_check_branch
          %360 = sbr.rel (%p358) target = $region28
        $region27: #{dscript_forward.2} parent=11 // pred_region
          _
        $region28: #{dscript_forward.2} parent=11 // pred_fallthru
          _
        // Predicated region
        $region29: #{dscript_forward.2} parent=11 // pred_check
          %p361 = pneg %p227
        $region30: #{dscript_forward.2} parent=11 // pred_check_branch
          %363 = sbr.rel (%p361) target = $region32
        $region31: #{dscript_forward.2} parent=11 // pred_region
          _
        $region32: #{dscript_forward.2} parent=11 // pred_fallthru
          _
        // Predicated region
        $region33: #{dscript_forward.2} parent=11 // pred_check
          %p364 = pneg %p248
        $region34: #{dscript_forward.2} parent=11 // pred_check_branch
          %366 = sbr.rel (%p364) target = $region36
        $region35: #{dscript_forward.2} parent=11 // pred_region
          %s368 = ssub.s32 16, 16
          %369 = vsyncadd [#allocation5], %s368
          %s371 = sshll.u32 %s8, 4
          %s372 = int_to_ptr.vmem [resolvable:$true] %s371
          %374 = dma.vmem_to_smem %s372, 16, [#allocation4], [#allocation5]
        $region36: #{dscript_forward.2} parent=11 // pred_fallthru
          _
      $region12: #{dscript_forward.2} parent=5 // pred_fallthru
        _
      %p375 = scmp.lt.s32.totalorder %s19, 2
      // Predicated region
      $region37: #{dscript_forward.2} parent=5 // pred_check
        %p376 = pneg %p375
      $region38: #{dscript_forward.2} parent=5 // pred_check_branch
        %378 = sbr.rel (%p376) target = $region40
      $region39: #{dscript_forward.2} parent=5 // pred_region
        // Predicated region
        $region41: #{dscript_forward.2} parent=39 // pred_check
          %p379 = pneg %p60
        $region42: #{dscript_forward.2} parent=39 // pred_check_branch
          %381 = sbr.rel (%p379) target = $region44
        $region43: #{dscript_forward.2} parent=39 // pred_region
          %s382 = smul.u32 16, %s27
          %p383 = scmp.lt.s32.totalorder %s26, 1
          %s384 = scalar_select %p383, %s26, 1
          %p385 = scmp.lt.s32.totalorder %s382, 15
          %s386 = scalar_select %p385, %s382, 15
          %s387 = smul.addr %s384, 16
          %s388 = sadd.s32 %s386, %s387
          %s389 = smul.addr %s388, 4
          %s390 = scalar_lea.vmem %s0, %s389
          %s391 = smul.u32 16, %s27
        $region44: #{dscript_forward.2} parent=39 // pred_fallthru
          _
        // Predicated region
        $region45: #{dscript_forward.2} parent=39 // pred_check
          %p392 = pneg %p88
        $region46: #{dscript_forward.2} parent=39 // pred_check_branch
          %394 = sbr.rel (%p392) target = $region48
        $region47: #{dscript_forward.2} parent=39 // pred_region
          %p395 = scmp.lt.s32.totalorder %s26, 1
          %s396 = scalar_select %p395, %s26, 1
          %p397 = scmp.lt.s32.totalorder %s28, 0
          %s398 = scalar_select %p397, %s28, 0
          %s399 = sadd.s32 %s398, %s396
          %s400 = smul.addr %s399, 4
          %s401 = scalar_lea.vmem %s1, %s400
        $region48: #{dscript_forward.2} parent=39 // pred_fallthru
          _
        // Predicated region
        $region49: #{dscript_forward.2} parent=39 // pred_check
          %p402 = pneg %p116
        $region50: #{dscript_forward.2} parent=39 // pred_check_branch
          %404 = sbr.rel (%p402) target = $region52
        $region51: #{dscript_forward.2} parent=39 // pred_region
          %p405 = scmp.lt.s32.totalorder %s26, 1
          %s406 = scalar_select %p405, %s26, 1
          %p407 = scmp.lt.s32.totalorder %s27, 0
          %s408 = scalar_select %p407, %s27, 0
          %s409 = sadd.s32 %s408, %s406
          %s410 = scalar_lea.vmem %s2, %s409
        $region52: #{dscript_forward.2} parent=39 // pred_fallthru
          _
      $region40: #{dscript_forward.2} parent=5 // pred_fallthru
        _
      %p411 = scmp.le.s32.totalorder 1, %s19
      %p412 = scmp.lt.s32.totalorder %s19, 3
      %p413 = pnand %p411, %p412
      %p414 = pneg %p413
      // Predicated region
      $region53: #{dscript_forward.2} parent=5 // pred_check
        _
      $region54: #{dscript_forward.2} parent=5 // pred_check_branch
        %416 = sbr.rel (%p413) target = $region56
      $region55: #{dscript_forward.2} parent=5 // pred_region
        %s417 = ssub.s32 %s19, 1
        // Predicated region
        $region57: #{dscript_forward.2} parent=55 // pred_check
          %p418 = pneg %p248
        $region58: #{dscript_forward.2} parent=55 // pred_check_branch
          %420 = sbr.rel (%p418) target = $region60
        $region59: #{dscript_forward.2} parent=55 // pred_region
          %421 = dma.done [#allocation5], 16
        $region60: #{dscript_forward.2} parent=55 // pred_fallthru
          _
        %422 = sfence
        %s423 = smul.u32 16, %s30
        %p424 = scmp.lt.s32.totalorder %s29, 1
        %s425 = scalar_select %p424, %s29, 1
        %p426 = scmp.lt.s32.totalorder %s423, 15
        %s427 = scalar_select %p426, %s423, 15
        %s428 = smul.addr %s425, 16
        %s429 = sadd.s32 %s427, %s428
        %s430 = smul.addr %s429, 4
        %s431 = scalar_lea.vmem %s0, %s430
        %p432 = pneg %p66
        %p433 = pneg %p63
        %p434 = scmp.lt.s32.totalorder %s29, 1
        %s435 = scalar_select %p434, %s29, 1
        %p436 = scmp.lt.s32.totalorder %s31, 0
        %s437 = scalar_select %p436, %s31, 0
        %s438 = sadd.s32 %s437, %s435
        %s439 = smul.addr %s438, 4
        %s440 = scalar_lea.vmem %s1, %s439
        %p441 = pneg %p94
        %p442 = pneg %p91
        %p443 = scmp.lt.s32.totalorder %s29, 1
        %s444 = scalar_select %p443, %s29, 1
        %p445 = scmp.lt.s32.totalorder %s30, 0
        %s446 = scalar_select %p445, %s30, 0
        %s447 = sadd.s32 %s446, %s444
        %s448 = scalar_lea.vmem %s2, %s447
        %p449 = pneg %p122
        %p450 = pneg %p119
        %p451 = pneg %p143
        %p452 = pneg %p140
        %p453 = pneg %p164
        %p454 = pneg %p161
        %p455 = pneg %p185
        %p456 = pneg %p182
        %p457 = pneg %p206
        %p458 = pneg %p203
        %p459 = pneg %p227
        %p460 = pneg %p224
        %p461 = pneg %p248
        %p462 = pneg %p245
        %p463 = pneg %p278
        %p464 = pneg %p275
        %p465 = scmp.lt.s32.totalorder %s29, 1
        %s466 = scalar_select %p465, %s29, 1
        %p467 = scmp.lt.s32.totalorder %s31, 0
        %s468 = scalar_select %p467, %s31, 0
        %p469 = scmp.lt.s32.totalorder %s30, 0
        %s470 = scalar_select %p469, %s30, 0
        %s471 = sadd.s32 %s470, %s468
        %s472 = sadd.s32 %s471, %s466
        %s473 = smul.addr %s472, 4
        %s474 = scalar_lea.vmem %s9, %s473
        %p475 = pneg %p306
        %p476 = pneg %p303
        %p477 = scmp.lt.s32.totalorder %s29, 1
        %s478 = scalar_select %p477, %s29, 1
        %p479 = scmp.lt.s32.totalorder %s30, 0
        %s480 = scalar_select %p479, %s30, 0
        %s481 = sadd.s32 %s480, %s478
        %s482 = scalar_lea.vmem %s10, %s481
        %p483 = pneg %p334
        %p484 = pneg %p331
        %p485 = scmp.lt.s32.totalorder %s29, 1
        %s486 = scalar_select %p485, %s29, 1
        %p487 = scmp.lt.s32.totalorder %s30, 0
        %s488 = scalar_select %p487, %s30, 0
        %s489 = sadd.s32 %s488, %s486
        %s490 = scalar_lea.vmem %s11, %s489
        %s491 = smul.u32 16, %s30
        %p492 = scmp.lt.s32.totalorder %s29, 1
        %s493 = scalar_select %p492, %s29, 1
        %p494 = scmp.lt.s32.totalorder %s491, 15
        %s495 = scalar_select %p494, %s491, 15
        %s496 = smul.addr %s493, 16
        %s497 = sadd.s32 %s495, %s496
        %s498 = smul.addr %s497, 4
        %s499 = scalar_lea.vmem %s0, %s498
        %s500 = smul.u32 16, %s30
        %p501 = scmp.lt.s32.totalorder %s29, 1
        %s502 = scalar_select %p501, %s29, 1
        %p503 = scmp.lt.s32.totalorder %s31, 0
        %s504 = scalar_select %p503, %s31, 0
        %s505 = sadd.s32 %s504, %s502
        %s506 = smul.addr %s505, 4
        %s507 = scalar_lea.vmem %s1, %s506
        %p508 = scmp.lt.s32.totalorder %s29, 1
        %s509 = scalar_select %p508, %s29, 1
        %p510 = scmp.lt.s32.totalorder %s30, 0
        %s511 = scalar_select %p510, %s30, 0
        %s512 = sadd.s32 %s511, %s509
        %s513 = scalar_lea.vmem %s2, %s512
        %p514 = scmp.lt.s32.totalorder %s29, 1
        %s515 = scalar_select %p514, %s29, 1
        %p516 = scmp.lt.s32.totalorder %s31, 0
        %s517 = scalar_select %p516, %s31, 0
        %p518 = scmp.lt.s32.totalorder %s30, 0
        %s519 = scalar_select %p518, %s30, 0
        %s520 = sadd.s32 %s519, %s517
        %s521 = sadd.s32 %s520, %s515
        %s522 = smul.addr %s521, 4
        %s523 = scalar_lea.vmem %s9, %s522
        %p524 = scmp.lt.s32.totalorder %s29, 1
        %s525 = scalar_select %p524, %s29, 1
        %p526 = scmp.lt.s32.totalorder %s30, 0
        %s527 = scalar_select %p526, %s30, 0
        %s528 = sadd.s32 %s527, %s525
        %s529 = scalar_lea.vmem %s10, %s528
        %p530 = scmp.lt.s32.totalorder %s29, 1
        %s531 = scalar_select %p530, %s29, 1
        %p532 = scmp.lt.s32.totalorder %s30, 0
        %s533 = scalar_select %p532, %s30, 0
        %s534 = sadd.s32 %s533, %s531
        %s535 = scalar_lea.vmem %s11, %s534
        %p537 = scmp.eq.s32.totalorder %s31, 0
        // Predicated region
        $region61: #{dscript_forward.2} parent=55 // pred_check
          %p538 = pneg %p537
        $region62: #{dscript_forward.2} parent=55 // pred_check_branch
          %540 = sbr.rel (%p538) target = $region64
        $region63: #{dscript_forward.2} parent=55 // pred_region
          %v541 = vld [vmem:[%s499] sm:$0xf]
          %v542 = vld [vmem:[%s499 + $0x4] sm:$0xf]
          %v543 = vld [vmem:[%s499 + $0x8] sm:$0xf]
          %v544 = vld [vmem:[%s499 + $0xc] sm:$0xf]
          %v545 = vld [vmem:[%s499 + $0x10] sm:$0xf]
          %v546 = vld [vmem:[%s499 + $0x14] sm:$0xf]
          %v547 = vld [vmem:[%s499 + $0x18] sm:$0xf]
          %v548 = vld [vmem:[%s499 + $0x1c] sm:$0xf]
          %v549 = vld [vmem:[%s499 + $0x20] sm:$0xf]
          %v550 = vld [vmem:[%s499 + $0x24] sm:$0xf]
          %v551 = vld [vmem:[%s499 + $0x28] sm:$0xf]
          %v552 = vld [vmem:[%s499 + $0x2c] sm:$0xf]
          %v553 = vld [vmem:[%s499 + $0x30] sm:$0xf]
          %v554 = vld [vmem:[%s499 + $0x34] sm:$0xf]
          %v555 = vld [vmem:[%s499 + $0x38] sm:$0xf]
          %v556 = vld [vmem:[%s499 + $0x3c] sm:$0xf]
          %v557 = vld [vmem:[%s3] sm:$0xf]
          %v558 = vld [vmem:[%s3 + $0x4] sm:$0xf]
          %v559 = vld [vmem:[%s3 + $0x8] sm:$0xf]
          %v560 = vld [vmem:[%s3 + $0xc] sm:$0xf]
          %v561 = vld [vmem:[%s4] sm:$0x1]
          %v563 = vlaneseq
          %v564 = vshrl.u32 %v563, 7
          %v565 = vsub.s32 0, %v564
          %v566 = vrot.slane %v561, %v565
          %v584 = vunpack.c.l.b16 %v541
          %v585 = vunpack.c.l.b16 %v542
          %v586 = vunpack.c.l.b16 %v543
          %v587 = vunpack.c.l.b16 %v544
          %v588 = vunpack.c.l.b16 %v545
          %v589 = vunpack.c.l.b16 %v546
          %v590 = vunpack.c.l.b16 %v547
          %v591 = vunpack.c.l.b16 %v548
          %v592 = vunpack.c.l.b16 %v549
          %v593 = vunpack.c.l.b16 %v550
          %v594 = vunpack.c.l.b16 %v551
          %v595 = vunpack.c.l.b16 %v552
          %v596 = vunpack.c.l.b16 %v553
          %v597 = vunpack.c.l.b16 %v554
          %v598 = vunpack.c.l.b16 %v555
          %v599 = vunpack.c.l.b16 %v556
          %v600 = vpack.c.b16 %v585, %v584
          %v601 = vpack.c.b16 %v587, %v586
          %v602 = vpack.c.b16 %v589, %v588
          %v603 = vpack.c.b16 %v591, %v590
          %v604 = vpack.c.b16 %v593, %v592
          %v605 = vpack.c.b16 %v595, %v594
          %v606 = vpack.c.b16 %v597, %v596
          %v607 = vpack.c.b16 %v599, %v598
          %v612 = vunpack.c.l.b16 %v557
          %v613 = vunpack.c.l.b16 %v558
          %v614 = vunpack.c.l.b16 %v559
          %v615 = vunpack.c.l.b16 %v560
          %v616 = vpack.c.b16 %v613, %v612
          %v617 = vpack.c.b16 %v615, %v614
          %vm620 = vcmask 261120
          %v622 = vsel %vm620, %v600, 0
          %v625 = vsel %vm620, %v601, 0
          %v628 = vsel %vm620, %v602, 0
          %v631 = vsel %vm620, %v603, 0
          %v634 = vsel %vm620, %v604, 0
          %v637 = vsel %vm620, %v605, 0
          %v640 = vsel %vm620, %v606, 0
          %v643 = vsel %vm620, %v607, 0
          %645 = vmatprep.subr.bf16.mxu0 0
          %646 = vmatpush1.bf16.msra.mxu0 0
          %647 = vmatprep.subr.bf16.mxu0 0
          %648 = vmatpush1.bf16.msra.mxu0 0
          %649 = vmatprep.subr.bf16.mxu0 0
          %650 = vmatpush1.bf16.msra.mxu0 0
          %651 = vmatprep.subr.bf16.mxu0 0
          %652 = vmatpush1.bf16.msra.mxu0 0
          %653 = vmatprep.subr.bf16.mxu0 0
          %654 = vmatpush1.bf16.msra.mxu0 0
          %655 = vmatprep.subr.bf16.mxu0 0
          %656 = vmatpush1.bf16.msra.mxu0 0
          %657 = vmatprep.subr.bf16.mxu0 0
          %658 = vmatpush1.bf16.msra.mxu0 %v617
          %659 = vmatprep.subr.bf16.mxu0 0
          %660 = vmatpush1.bf16.msra.mxu0 %v616
          %661 = vmatprep.subr.bf16.mxu0 0
          %662 = vmatpush2.bf16.msra.mxu0 0
          %663 = vmatprep.subr.bf16.mxu0 0
          %664 = vmatpush2.bf16.msra.mxu0 0
          %665 = vmatprep.subr.bf16.mxu0 0
          %666 = vmatpush2.bf16.msra.mxu0 0
          %667 = vmatprep.subr.bf16.mxu0 0
          %668 = vmatpush2.bf16.msra.mxu0 0
          %669 = vmatprep.subr.bf16.mxu0 0
          %670 = vmatpush2.bf16.msra.mxu0 0
          %671 = vmatprep.subr.bf16.mxu0 0
          %672 = vmatpush2.bf16.msra.mxu0 0
          %673 = vmatprep.subr.bf16.mxu0 0
          %674 = vmatpush2.bf16.msra.mxu0 0
          %675 = vmatprep.subr.bf16.mxu0 0
          %676 = vmatpush2.bf16.msra.mxu0 0
          %677 = vmatprep.mubr.bf16.mxu0 0
          %678 = vmatmul.mubr.bf16.gmra.mxu0 %v622
          %v679 = vpop.f32.mrf.mxu0
          %v680 = vadd.f32 %v566, %v679
          %v681 = vpop.f32.mrf.mxu0
          %v682 = vpop.f32.mrf.mxu0
          %v683 = vadd.f32 %v566, %v682
          %v684 = vpop.f32.mrf.mxu0
          %685 = vmatprep.mubr.bf16.mxu0 0
          %686 = vmatmul.mubr.bf16.gmra.mxu0 %v625
          %v687 = vpop.f32.mrf.mxu0
          %v688 = vadd.f32 %v566, %v687
          %v689 = vpop.f32.mrf.mxu0
          %v690 = vpop.f32.mrf.mxu0
          %v691 = vadd.f32 %v566, %v690
          %v692 = vpop.f32.mrf.mxu0
          %693 = vmatprep.mubr.bf16.mxu0 0
          %694 = vmatmul.mubr.bf16.gmra.mxu0 %v628
          %v695 = vpop.f32.mrf.mxu0
          %v696 = vadd.f32 %v566, %v695
          %v697 = vpop.f32.mrf.mxu0
          %v698 = vpop.f32.mrf.mxu0
          %v699 = vadd.f32 %v566, %v698
          %v700 = vpop.f32.mrf.mxu0
          %701 = vmatprep.mubr.bf16.mxu0 0
          %702 = vmatmul.mubr.bf16.gmra.mxu0 %v631
          %v703 = vpop.f32.mrf.mxu0
          %v704 = vadd.f32 %v566, %v703
          %v705 = vpop.f32.mrf.mxu0
          %v706 = vpop.f32.mrf.mxu0
          %v707 = vadd.f32 %v566, %v706
          %v708 = vpop.f32.mrf.mxu0
          %709 = vmatprep.mubr.bf16.mxu0 0
          %710 = vmatmul.mubr.bf16.gmra.mxu0 %v634
          %v711 = vpop.f32.mrf.mxu0
          %v712 = vadd.f32 %v566, %v711
          %v713 = vpop.f32.mrf.mxu0
          %v714 = vpop.f32.mrf.mxu0
          %v715 = vadd.f32 %v566, %v714
          %v716 = vpop.f32.mrf.mxu0
          %717 = vmatprep.mubr.bf16.mxu0 0
          %718 = vmatmul.mubr.bf16.gmra.mxu0 %v637
          %v719 = vpop.f32.mrf.mxu0
          %v720 = vadd.f32 %v566, %v719
          %v721 = vpop.f32.mrf.mxu0
          %v722 = vpop.f32.mrf.mxu0
          %v723 = vadd.f32 %v566, %v722
          %v724 = vpop.f32.mrf.mxu0
          %725 = vmatprep.mubr.bf16.mxu0 0
          %726 = vmatmul.mubr.bf16.gmra.mxu0 %v640
          %v727 = vpop.f32.mrf.mxu0
          %v728 = vadd.f32 %v566, %v727
          %v729 = vpop.f32.mrf.mxu0
          %v730 = vpop.f32.mrf.mxu0
          %v731 = vadd.f32 %v566, %v730
          %v732 = vpop.f32.mrf.mxu0
          %733 = vmatprep.mubr.bf16.mxu0 0
          %734 = vmatmul.mubr.bf16.gmra.mxu0 %v643
          %v735 = vpop.f32.mrf.mxu0
          %v736 = vadd.f32 %v566, %v735
          %v737 = vpop.f32.mrf.mxu0
          %v738 = vpop.f32.mrf.mxu0
          %v739 = vadd.f32 %v566, %v738
          %v740 = vpop.f32.mrf.mxu0
          %741 = vdwg.mxu0
          %v742 = vmax.f32 %v680, 0.0
          %v743 = vmax.f32 %v683, 0.0
          %v744 = vmax.f32 %v688, 0.0
          %v745 = vmax.f32 %v691, 0.0
          %v746 = vmax.f32 %v696, 0.0
          %v747 = vmax.f32 %v699, 0.0
          %v748 = vmax.f32 %v704, 0.0
          %v749 = vmax.f32 %v707, 0.0
          %v750 = vmax.f32 %v712, 0.0
          %v751 = vmax.f32 %v715, 0.0
          %v752 = vmax.f32 %v720, 0.0
          %v753 = vmax.f32 %v723, 0.0
          %v754 = vmax.f32 %v728, 0.0
          %v755 = vmax.f32 %v731, 0.0
          %v756 = vmax.f32 %v736, 0.0
          %v757 = vmax.f32 %v739, 0.0
          %v758 = vpack.c.bf16 %v743, %v742
          %v759 = vpack.c.bf16 %v745, %v744
          %v760 = vpack.c.bf16 %v747, %v746
          %v761 = vpack.c.bf16 %v749, %v748
          %v762 = vpack.c.bf16 %v751, %v750
          %v763 = vpack.c.bf16 %v753, %v752
          %v764 = vpack.c.bf16 %v755, %v754
          %v765 = vpack.c.bf16 %v757, %v756
          %v774 = vunpack.c.l.b16 %v758
          %v775 = vunpack.c.h.b16 %v758
          %v776 = vunpack.c.l.b16 %v759
          %v777 = vunpack.c.h.b16 %v759
          %v778 = vunpack.c.l.b16 %v760
          %v779 = vunpack.c.h.b16 %v760
          %v780 = vunpack.c.l.b16 %v761
          %v781 = vunpack.c.h.b16 %v761
          %v782 = vunpack.c.l.b16 %v762
          %v783 = vunpack.c.h.b16 %v762
          %v784 = vunpack.c.l.b16 %v763
          %v785 = vunpack.c.h.b16 %v763
          %v786 = vunpack.c.l.b16 %v764
          %v787 = vunpack.c.h.b16 %v764
          %v788 = vunpack.c.l.b16 %v765
          %v789 = vunpack.c.h.b16 %v765
          %v790 = vpack.c.b16 %v774, %v774
          %v791 = vpack.c.b16 %v775, %v775
          %v792 = vpack.c.b16 %v776, %v776
          %v793 = vpack.c.b16 %v777, %v777
          %v794 = vpack.c.b16 %v778, %v778
          %v795 = vpack.c.b16 %v779, %v779
          %v796 = vpack.c.b16 %v780, %v780
          %v797 = vpack.c.b16 %v781, %v781
          %v798 = vpack.c.b16 %v782, %v782
          %v799 = vpack.c.b16 %v783, %v783
          %v800 = vpack.c.b16 %v784, %v784
          %v801 = vpack.c.b16 %v785, %v785
          %v802 = vpack.c.b16 %v786, %v786
          %v803 = vpack.c.b16 %v787, %v787
          %v804 = vpack.c.b16 %v788, %v788
          %v805 = vpack.c.b16 %v789, %v789
          %822 = vst [vmem:[#allocation2] sm:$0xf] %v790
          %823 = vst [vmem:[#allocation2 + $0x4] sm:$0xf] %v791
          %824 = vst [vmem:[#allocation2 + $0x8] sm:$0xf] %v792
          %825 = vst [vmem:[#allocation2 + $0xc] sm:$0xf] %v793
          %826 = vst [vmem:[#allocation2 + $0x10] sm:$0xf] %v794
          %827 = vst [vmem:[#allocation2 + $0x14] sm:$0xf] %v795
          %828 = vst [vmem:[#allocation2 + $0x18] sm:$0xf] %v796
          %829 = vst [vmem:[#allocation2 + $0x1c] sm:$0xf] %v797
          %830 = vst [vmem:[#allocation2 + $0x20] sm:$0xf] %v798
          %831 = vst [vmem:[#allocation2 + $0x24] sm:$0xf] %v799
          %832 = vst [vmem:[#allocation2 + $0x28] sm:$0xf] %v800
          %833 = vst [vmem:[#allocation2 + $0x2c] sm:$0xf] %v801
          %834 = vst [vmem:[#allocation2 + $0x30] sm:$0xf] %v802
          %835 = vst [vmem:[#allocation2 + $0x34] sm:$0xf] %v803
          %836 = vst [vmem:[#allocation2 + $0x38] sm:$0xf] %v804
          %837 = vst [vmem:[#allocation2 + $0x3c] sm:$0xf] %v805
          %838 = vst [vmem:[%s529] sm:$0x1] 0.0
          %839 = vst [vmem:[%s535] sm:$0x1] 0.0
        $region64: #{dscript_forward.2} parent=55 // pred_fallthru
          _
        %v840 = vld [vmem:[%s507] sm:$0xf]
        %v841 = vld [vmem:[%s3] sm:$0xf]
        %v842 = vld [vmem:[%s3 + $0x4] sm:$0xf]
        %v843 = vld [vmem:[%s3 + $0x8] sm:$0xf]
        %v844 = vld [vmem:[%s3 + $0xc] sm:$0xf]
        %v845 = vld [vmem:[%s4] sm:$0x1]
        %v847 = vlaneseq
        %v848 = vshrl.u32 %v847, 7
        %v849 = vsub.s32 0, %v848
        %v850 = vrot.slane %v845, %v849
        %v856 = vunpack.c.l.b16 %v841
        %v857 = vunpack.c.l.b16 %v842
        %v858 = vunpack.c.l.b16 %v843
        %v859 = vunpack.c.l.b16 %v844
        %v860 = vpack.c.b16 %v857, %v856
        %v861 = vpack.c.b16 %v859, %v858
        %vm864 = vcmask 261120
        %v866 = vsel %vm864, %v840, 0
        %868 = vmatprep.subr.bf16.mxu0 0
        %869 = vmatpush1.bf16.msra.mxu0 0
        %870 = vmatprep.subr.bf16.mxu0 0
        %871 = vmatpush1.bf16.msra.mxu0 0
        %872 = vmatprep.subr.bf16.mxu0 0
        %873 = vmatpush1.bf16.msra.mxu0 0
        %874 = vmatprep.subr.bf16.mxu0 0
        %875 = vmatpush1.bf16.msra.mxu0 0
        %876 = vmatprep.subr.bf16.mxu0 0
        %877 = vmatpush1.bf16.msra.mxu0 0
        %878 = vmatprep.subr.bf16.mxu0 0
        %879 = vmatpush1.bf16.msra.mxu0 0
        %880 = vmatprep.subr.bf16.mxu0 0
        %881 = vmatpush1.bf16.msra.mxu0 %v861
        %882 = vmatprep.subr.bf16.mxu0 0
        %883 = vmatpush1.bf16.msra.mxu0 %v860
        %884 = vmatprep.subr.bf16.mxu0 0
        %885 = vmatpush2.bf16.msra.mxu0 0
        %886 = vmatprep.subr.bf16.mxu0 0
        %887 = vmatpush2.bf16.msra.mxu0 0
        %888 = vmatprep.subr.bf16.mxu0 0
        %889 = vmatpush2.bf16.msra.mxu0 0
        %890 = vmatprep.subr.bf16.mxu0 0
        %891 = vmatpush2.bf16.msra.mxu0 0
        %892 = vmatprep.subr.bf16.mxu0 0
        %893 = vmatpush2.bf16.msra.mxu0 0
        %894 = vmatprep.subr.bf16.mxu0 0
        %895 = vmatpush2.bf16.msra.mxu0 0
        %896 = vmatprep.subr.bf16.mxu0 0
        %897 = vmatpush2.bf16.msra.mxu0 0
        %898 = vmatprep.subr.bf16.mxu0 0
        %899 = vmatpush2.bf16.msra.mxu0 0
        %900 = vmatprep.mubr.bf16.mxu0 0
        %901 = vmatmul.mubr.bf16.gmra.mxu0 %v866
        %v902 = vpop.f32.mrf.mxu0
        %v903 = vadd.f32 %v850, %v902
        %v904 = vpop.f32.mrf.mxu0
        %v905 = vpop.f32.mrf.mxu0
        %v906 = vpop.f32.mrf.mxu0
        %907 = vdwg.mxu0
        %v908 = vmax.f32 %v903, 0.0
        %v909 = vpack.c.bf16 %v908, %v908
        %v910 = vld [vmem:[#allocation2] sm:$0xf]
        %v911 = vld [vmem:[#allocation2 + $0x4] sm:$0xf]
        %v912 = vld [vmem:[#allocation2 + $0x8] sm:$0xf]
        %v913 = vld [vmem:[#allocation2 + $0xc] sm:$0xf]
        %v914 = vld [vmem:[#allocation2 + $0x10] sm:$0xf]
        %v915 = vld [vmem:[#allocation2 + $0x14] sm:$0xf]
        %v916 = vld [vmem:[#allocation2 + $0x18] sm:$0xf]
        %v917 = vld [vmem:[#allocation2 + $0x1c] sm:$0xf]
        %v918 = vld [vmem:[#allocation2 + $0x20] sm:$0xf]
        %v919 = vld [vmem:[#allocation2 + $0x24] sm:$0xf]
        %v920 = vld [vmem:[#allocation2 + $0x28] sm:$0xf]
        %v921 = vld [vmem:[#allocation2 + $0x2c] sm:$0xf]
        %v922 = vld [vmem:[#allocation2 + $0x30] sm:$0xf]
        %v923 = vld [vmem:[#allocation2 + $0x34] sm:$0xf]
        %v924 = vld [vmem:[#allocation2 + $0x38] sm:$0xf]
        %v925 = vld [vmem:[#allocation2 + $0x3c] sm:$0xf]
        %v928 = vunpack.c.l.s4 1966171168
        %v929 = vunpack.c.0.s8 %v928
        %v930 = vlaneseq
        %v931 = vshrl.u32 %v930, 7
        %v932 = vsub.s32 %v929, %v931
        %v933 = vrot.slane %v909, %v932
        %v934 = vcombine.high %v933, %v933
        %v936 = vunpack.c.l.s4 1966171168
        %v937 = vunpack.c.0.s8 %v936
        %v938 = vlaneseq
        %v939 = vshrl.u32 %v938, 7
        %v940 = vsub.s32 %v937, %v939
        %v941 = vrot.slane %v933, %v940
        %v943 = vunpack.c.l.s4 1966171168
        %v944 = vunpack.c.0.s8 %v943
        %v945 = vlaneseq
        %v946 = vshrl.u32 %v945, 7
        %v947 = vsub.s32 %v944, %v946
        %v948 = vrot.slane %v934, %v947
        %v949 = vcombine.high %v941, %v941
        %v950 = vcombine.high %v948, %v948
        %v951 = vunpack.i.l.s16 %v941
        %v952 = vunpack.i.h.s16 %v941
        %v953 = vunpack.i.l.s16 %v948
        %v954 = vunpack.i.h.s16 %v948
        %v955 = vunpack.i.l.s16 %v949
        %v956 = vunpack.i.h.s16 %v949
        %v957 = vunpack.i.l.s16 %v950
        %v958 = vunpack.i.h.s16 %v950
        %v959 = vpack.i.b16 %v951, %v951
        %v960 = vpack.i.b16 %v952, %v952
        %v961 = vpack.i.b16 %v953, %v953
        %v962 = vpack.i.b16 %v954, %v954
        %v963 = vpack.i.b16 %v955, %v955
        %v964 = vpack.i.b16 %v956, %v956
        %v965 = vpack.i.b16 %v957, %v957
        %v966 = vpack.i.b16 %v958, %v958
        %v967 = vlaneseq
        %v968 = vshrl.u32 %v967, 7
        %v969 = vsub.s32 0, %v968
        %v970 = vrot.slane %v959, %v969
        %v971 = vlaneseq
        %v972 = vshrl.u32 %v971, 7
        %v973 = vsub.s32 0, %v972
        %v974 = vrot.slane %v960, %v973
        %v975 = vlaneseq
        %v976 = vshrl.u32 %v975, 7
        %v977 = vsub.s32 0, %v976
        %v978 = vrot.slane %v961, %v977
        %v979 = vlaneseq
        %v980 = vshrl.u32 %v979, 7
        %v981 = vsub.s32 0, %v980
        %v982 = vrot.slane %v962, %v981
        %v983 = vlaneseq
        %v984 = vshrl.u32 %v983, 7
        %v985 = vsub.s32 0, %v984
        %v986 = vrot.slane %v963, %v985
        %v987 = vlaneseq
        %v988 = vshrl.u32 %v987, 7
        %v989 = vsub.s32 0, %v988
        %v990 = vrot.slane %v964, %v989
        %v991 = vlaneseq
        %v992 = vshrl.u32 %v991, 7
        %v993 = vsub.s32 0, %v992
        %v994 = vrot.slane %v965, %v993
        %v995 = vlaneseq
        %v996 = vshrl.u32 %v995, 7
        %v997 = vsub.s32 0, %v996
        %v998 = vrot.slane %v966, %v997
        %v1000 = vpack.i.b16 %v970, %v970
        %v1002 = vlaneseq
        %v1003 = vshrl.u32 %v1002, 7
        %v1004 = vsub.s32 0, %v1003
        %v1005 = vrot.slane %v1000, %v1004
        %v1007 = vpack.i.b16 %v974, %v974
        %v1009 = vlaneseq
        %v1010 = vshrl.u32 %v1009, 7
        %v1011 = vsub.s32 0, %v1010
        %v1012 = vrot.slane %v1007, %v1011
        %v1014 = vpack.i.b16 %v978, %v978
        %v1016 = vlaneseq
        %v1017 = vshrl.u32 %v1016, 7
        %v1018 = vsub.s32 0, %v1017
        %v1019 = vrot.slane %v1014, %v1018
        %v1021 = vpack.i.b16 %v982, %v982
        %v1023 = vlaneseq
        %v1024 = vshrl.u32 %v1023, 7
        %v1025 = vsub.s32 0, %v1024
        %v1026 = vrot.slane %v1021, %v1025
        %v1028 = vpack.i.b16 %v986, %v986
        %v1030 = vlaneseq
        %v1031 = vshrl.u32 %v1030, 7
        %v1032 = vsub.s32 0, %v1031
        %v1033 = vrot.slane %v1028, %v1032
        %v1035 = vpack.i.b16 %v990, %v990
        %v1037 = vlaneseq
        %v1038 = vshrl.u32 %v1037, 7
        %v1039 = vsub.s32 0, %v1038
        %v1040 = vrot.slane %v1035, %v1039
        %v1042 = vpack.i.b16 %v994, %v994
        %v1044 = vlaneseq
        %v1045 = vshrl.u32 %v1044, 7
        %v1046 = vsub.s32 0, %v1045
        %v1047 = vrot.slane %v1042, %v1046
        %v1049 = vpack.i.b16 %v998, %v998
        %v1051 = vlaneseq
        %v1052 = vshrl.u32 %v1051, 7
        %v1053 = vsub.s32 0, %v1052
        %v1054 = vrot.slane %v1049, %v1053
        %v1071 = vunpack.c.l.b16 %v910
        %v1072 = vunpack.c.l.b16 %v911
        %v1073 = vunpack.c.l.b16 %v912
        %v1074 = vunpack.c.l.b16 %v913
        %v1075 = vunpack.c.l.b16 %v914
        %v1076 = vunpack.c.l.b16 %v915
        %v1077 = vunpack.c.l.b16 %v916
        %v1078 = vunpack.c.l.b16 %v917
        %v1079 = vunpack.c.l.b16 %v918
        %v1080 = vunpack.c.l.b16 %v919
        %v1081 = vunpack.c.l.b16 %v920
        %v1082 = vunpack.c.l.b16 %v921
        %v1083 = vunpack.c.l.b16 %v922
        %v1084 = vunpack.c.l.b16 %v923
        %v1085 = vunpack.c.l.b16 %v924
        %v1086 = vunpack.c.l.b16 %v925
        %v1087 = vpack.c.b16 %v1072, %v1071
        %v1088 = vpack.c.b16 %v1074, %v1073
        %v1089 = vpack.c.b16 %v1076, %v1075
        %v1090 = vpack.c.b16 %v1078, %v1077
        %v1091 = vpack.c.b16 %v1080, %v1079
        %v1092 = vpack.c.b16 %v1082, %v1081
        %v1093 = vpack.c.b16 %v1084, %v1083
        %v1094 = vpack.c.b16 %v1086, %v1085
        %v1103 = vmul.bf16 %v1005, %v1087
        %v1104 = vmul.bf16 %v1005, %v1088
        %v1105 = vmul.bf16 %v1005, %v1089
        %v1106 = vmul.bf16 %v1005, %v1090
        %v1107 = vmul.bf16 %v1005, %v1091
        %v1108 = vmul.bf16 %v1005, %v1092
        %v1109 = vmul.bf16 %v1005, %v1093
        %v1110 = vmul.bf16 %v1005, %v1094
        %v1111 = vmul.bf16 %v1012, %v1087
        %v1112 = vmul.bf16 %v1012, %v1088
        %v1113 = vmul.bf16 %v1012, %v1089
        %v1114 = vmul.bf16 %v1012, %v1090
        %v1115 = vmul.bf16 %v1012, %v1091
        %v1116 = vmul.bf16 %v1012, %v1092
        %v1117 = vmul.bf16 %v1012, %v1093
        %v1118 = vmul.bf16 %v1012, %v1094
        %v1119 = vmul.bf16 %v1019, %v1087
        %v1120 = vmul.bf16 %v1019, %v1088
        %v1121 = vmul.bf16 %v1019, %v1089
        %v1122 = vmul.bf16 %v1019, %v1090
        %v1123 = vmul.bf16 %v1019, %v1091
        %v1124 = vmul.bf16 %v1019, %v1092
        %v1125 = vmul.bf16 %v1019, %v1093
        %v1126 = vmul.bf16 %v1019, %v1094
        %v1127 = vmul.bf16 %v1026, %v1087
        %v1128 = vmul.bf16 %v1026, %v1088
        %v1129 = vmul.bf16 %v1026, %v1089
        %v1130 = vmul.bf16 %v1026, %v1090
        %v1131 = vmul.bf16 %v1026, %v1091
        %v1132 = vmul.bf16 %v1026, %v1092
        %v1133 = vmul.bf16 %v1026, %v1093
        %v1134 = vmul.bf16 %v1026, %v1094
        %v1135 = vmul.bf16 %v1033, %v1087
        %v1136 = vmul.bf16 %v1033, %v1088
        %v1137 = vmul.bf16 %v1033, %v1089
        %v1138 = vmul.bf16 %v1033, %v1090
        %v1139 = vmul.bf16 %v1033, %v1091
        %v1140 = vmul.bf16 %v1033, %v1092
        %v1141 = vmul.bf16 %v1033, %v1093
        %v1142 = vmul.bf16 %v1033, %v1094
        %v1143 = vmul.bf16 %v1040, %v1087
        %v1144 = vmul.bf16 %v1040, %v1088
        %v1145 = vmul.bf16 %v1040, %v1089
        %v1146 = vmul.bf16 %v1040, %v1090
        %v1147 = vmul.bf16 %v1040, %v1091
        %v1148 = vmul.bf16 %v1040, %v1092
        %v1149 = vmul.bf16 %v1040, %v1093
        %v1150 = vmul.bf16 %v1040, %v1094
        %v1151 = vmul.bf16 %v1047, %v1087
        %v1152 = vmul.bf16 %v1047, %v1088
        %v1153 = vmul.bf16 %v1047, %v1089
        %v1154 = vmul.bf16 %v1047, %v1090
        %v1155 = vmul.bf16 %v1047, %v1091
        %v1156 = vmul.bf16 %v1047, %v1092
        %v1157 = vmul.bf16 %v1047, %v1093
        %v1158 = vmul.bf16 %v1047, %v1094
        %v1159 = vmul.bf16 %v1054, %v1087
        %v1160 = vmul.bf16 %v1054, %v1088
        %v1161 = vmul.bf16 %v1054, %v1089
        %v1162 = vmul.bf16 %v1054, %v1090
        %v1163 = vmul.bf16 %v1054, %v1091
        %v1164 = vmul.bf16 %v1054, %v1092
        %v1165 = vmul.bf16 %v1054, %v1093
        %v1166 = vmul.bf16 %v1054, %v1094
        %v1231 = vunpack.c.l.b16 %v1103
        %v1232 = vunpack.c.h.b16 %v1103
        %v1233 = vunpack.c.l.b16 %v1104
        %v1234 = vunpack.c.h.b16 %v1104
        %v1235 = vunpack.c.l.b16 %v1105
        %v1236 = vunpack.c.h.b16 %v1105
        %v1237 = vunpack.c.l.b16 %v1106
        %v1238 = vunpack.c.h.b16 %v1106
        %v1239 = vunpack.c.l.b16 %v1107
        %v1240 = vunpack.c.h.b16 %v1107
        %v1241 = vunpack.c.l.b16 %v1108
        %v1242 = vunpack.c.h.b16 %v1108
        %v1243 = vunpack.c.l.b16 %v1109
        %v1244 = vunpack.c.h.b16 %v1109
        %v1245 = vunpack.c.l.b16 %v1110
        %v1246 = vunpack.c.h.b16 %v1110
        %v1247 = vunpack.c.l.b16 %v1111
        %v1248 = vunpack.c.h.b16 %v1111
        %v1249 = vunpack.c.l.b16 %v1112
        %v1250 = vunpack.c.h.b16 %v1112
        %v1251 = vunpack.c.l.b16 %v1113
        %v1252 = vunpack.c.h.b16 %v1113
        %v1253 = vunpack.c.l.b16 %v1114
        %v1254 = vunpack.c.h.b16 %v1114
        %v1255 = vunpack.c.l.b16 %v1115
        %v1256 = vunpack.c.h.b16 %v1115
        %v1257 = vunpack.c.l.b16 %v1116
        %v1258 = vunpack.c.h.b16 %v1116
        %v1259 = vunpack.c.l.b16 %v1117
        %v1260 = vunpack.c.h.b16 %v1117
        %v1261 = vunpack.c.l.b16 %v1118
        %v1262 = vunpack.c.h.b16 %v1118
        %v1263 = vunpack.c.l.b16 %v1119
        %v1264 = vunpack.c.h.b16 %v1119
        %v1265 = vunpack.c.l.b16 %v1120
        %v1266 = vunpack.c.h.b16 %v1120
        %v1267 = vunpack.c.l.b16 %v1121
        %v1268 = vunpack.c.h.b16 %v1121
        %v1269 = vunpack.c.l.b16 %v1122
        %v1270 = vunpack.c.h.b16 %v1122
        %v1271 = vunpack.c.l.b16 %v1123
        %v1272 = vunpack.c.h.b16 %v1123
        %v1273 = vunpack.c.l.b16 %v1124
        %v1274 = vunpack.c.h.b16 %v1124
        %v1275 = vunpack.c.l.b16 %v1125
        %v1276 = vunpack.c.h.b16 %v1125
        %v1277 = vunpack.c.l.b16 %v1126
        %v1278 = vunpack.c.h.b16 %v1126
        %v1279 = vunpack.c.l.b16 %v1127
        %v1280 = vunpack.c.h.b16 %v1127
        %v1281 = vunpack.c.l.b16 %v1128
        %v1282 = vunpack.c.h.b16 %v1128
        %v1283 = vunpack.c.l.b16 %v1129
        %v1284 = vunpack.c.h.b16 %v1129
        %v1285 = vunpack.c.l.b16 %v1130
        %v1286 = vunpack.c.h.b16 %v1130
        %v1287 = vunpack.c.l.b16 %v1131
        %v1288 = vunpack.c.h.b16 %v1131
        %v1289 = vunpack.c.l.b16 %v1132
        %v1290 = vunpack.c.h.b16 %v1132
        %v1291 = vunpack.c.l.b16 %v1133
        %v1292 = vunpack.c.h.b16 %v1133
        %v1293 = vunpack.c.l.b16 %v1134
        %v1294 = vunpack.c.h.b16 %v1134
        %v1295 = vunpack.c.l.b16 %v1135
        %v1296 = vunpack.c.h.b16 %v1135
        %v1297 = vunpack.c.l.b16 %v1136
        %v1298 = vunpack.c.h.b16 %v1136
        %v1299 = vunpack.c.l.b16 %v1137
        %v1300 = vunpack.c.h.b16 %v1137
        %v1301 = vunpack.c.l.b16 %v1138
        %v1302 = vunpack.c.h.b16 %v1138
        %v1303 = vunpack.c.l.b16 %v1139
        %v1304 = vunpack.c.h.b16 %v1139
        %v1305 = vunpack.c.l.b16 %v1140
        %v1306 = vunpack.c.h.b16 %v1140
        %v1307 = vunpack.c.l.b16 %v1141
        %v1308 = vunpack.c.h.b16 %v1141
        %v1309 = vunpack.c.l.b16 %v1142
        %v1310 = vunpack.c.h.b16 %v1142
        %v1311 = vunpack.c.l.b16 %v1143
        %v1312 = vunpack.c.h.b16 %v1143
        %v1313 = vunpack.c.l.b16 %v1144
        %v1314 = vunpack.c.h.b16 %v1144
        %v1315 = vunpack.c.l.b16 %v1145
        %v1316 = vunpack.c.h.b16 %v1145
        %v1317 = vunpack.c.l.b16 %v1146
        %v1318 = vunpack.c.h.b16 %v1146
        %v1319 = vunpack.c.l.b16 %v1147
        %v1320 = vunpack.c.h.b16 %v1147
        %v1321 = vunpack.c.l.b16 %v1148
        %v1322 = vunpack.c.h.b16 %v1148
        %v1323 = vunpack.c.l.b16 %v1149
        %v1324 = vunpack.c.h.b16 %v1149
        %v1325 = vunpack.c.l.b16 %v1150
        %v1326 = vunpack.c.h.b16 %v1150
        %v1327 = vunpack.c.l.b16 %v1151
        %v1328 = vunpack.c.h.b16 %v1151
        %v1329 = vunpack.c.l.b16 %v1152
        %v1330 = vunpack.c.h.b16 %v1152
        %v1331 = vunpack.c.l.b16 %v1153
        %v1332 = vunpack.c.h.b16 %v1153
        %v1333 = vunpack.c.l.b16 %v1154
        %v1334 = vunpack.c.h.b16 %v1154
        %v1335 = vunpack.c.l.b16 %v1155
        %v1336 = vunpack.c.h.b16 %v1155
        %v1337 = vunpack.c.l.b16 %v1156
        %v1338 = vunpack.c.h.b16 %v1156
        %v1339 = vunpack.c.l.b16 %v1157
        %v1340 = vunpack.c.h.b16 %v1157
        %v1341 = vunpack.c.l.b16 %v1158
        %v1342 = vunpack.c.h.b16 %v1158
        %v1343 = vunpack.c.l.b16 %v1159
        %v1344 = vunpack.c.h.b16 %v1159
        %v1345 = vunpack.c.l.b16 %v1160
        %v1346 = vunpack.c.h.b16 %v1160
        %v1347 = vunpack.c.l.b16 %v1161
        %v1348 = vunpack.c.h.b16 %v1161
        %v1349 = vunpack.c.l.b16 %v1162
        %v1350 = vunpack.c.h.b16 %v1162
        %v1351 = vunpack.c.l.b16 %v1163
        %v1352 = vunpack.c.h.b16 %v1163
        %v1353 = vunpack.c.l.b16 %v1164
        %v1354 = vunpack.c.h.b16 %v1164
        %v1355 = vunpack.c.l.b16 %v1165
        %v1356 = vunpack.c.h.b16 %v1165
        %v1357 = vunpack.c.l.b16 %v1166
        %v1358 = vunpack.c.h.b16 %v1166
        %v1359 = vpack.c.b16 %v1231, %v1231
        %v1360 = vpack.c.b16 %v1232, %v1232
        %v1361 = vpack.c.b16 %v1233, %v1233
        %v1362 = vpack.c.b16 %v1234, %v1234
        %v1363 = vpack.c.b16 %v1235, %v1235
        %v1364 = vpack.c.b16 %v1236, %v1236
        %v1365 = vpack.c.b16 %v1237, %v1237
        %v1366 = vpack.c.b16 %v1238, %v1238
        %v1367 = vpack.c.b16 %v1239, %v1239
        %v1368 = vpack.c.b16 %v1240, %v1240
        %v1369 = vpack.c.b16 %v1241, %v1241
        %v1370 = vpack.c.b16 %v1242, %v1242
        %v1371 = vpack.c.b16 %v1243, %v1243
        %v1372 = vpack.c.b16 %v1244, %v1244
        %v1373 = vpack.c.b16 %v1245, %v1245
        %v1374 = vpack.c.b16 %v1246, %v1246
        %v1375 = vpack.c.b16 %v1247, %v1247
        %v1376 = vpack.c.b16 %v1248, %v1248
        %v1377 = vpack.c.b16 %v1249, %v1249
        %v1378 = vpack.c.b16 %v1250, %v1250
        %v1379 = vpack.c.b16 %v1251, %v1251
        %v1380 = vpack.c.b16 %v1252, %v1252
        %v1381 = vpack.c.b16 %v1253, %v1253
        %v1382 = vpack.c.b16 %v1254, %v1254
        %v1383 = vpack.c.b16 %v1255, %v1255
        %v1384 = vpack.c.b16 %v1256, %v1256
        %v1385 = vpack.c.b16 %v1257, %v1257
        %v1386 = vpack.c.b16 %v1258, %v1258
        %v1387 = vpack.c.b16 %v1259, %v1259
        %v1388 = vpack.c.b16 %v1260, %v1260
        %v1389 = vpack.c.b16 %v1261, %v1261
        %v1390 = vpack.c.b16 %v1262, %v1262
        %v1391 = vpack.c.b16 %v1263, %v1263
        %v1392 = vpack.c.b16 %v1264, %v1264
        %v1393 = vpack.c.b16 %v1265, %v1265
        %v1394 = vpack.c.b16 %v1266, %v1266
        %v1395 = vpack.c.b16 %v1267, %v1267
        %v1396 = vpack.c.b16 %v1268, %v1268
        %v1397 = vpack.c.b16 %v1269, %v1269
        %v1398 = vpack.c.b16 %v1270, %v1270
        %v1399 = vpack.c.b16 %v1271, %v1271
        %v1400 = vpack.c.b16 %v1272, %v1272
        %v1401 = vpack.c.b16 %v1273, %v1273
        %v1402 = vpack.c.b16 %v1274, %v1274
        %v1403 = vpack.c.b16 %v1275, %v1275
        %v1404 = vpack.c.b16 %v1276, %v1276
        %v1405 = vpack.c.b16 %v1277, %v1277
        %v1406 = vpack.c.b16 %v1278, %v1278
        %v1407 = vpack.c.b16 %v1279, %v1279
        %v1408 = vpack.c.b16 %v1280, %v1280
        %v1409 = vpack.c.b16 %v1281, %v1281
        %v1410 = vpack.c.b16 %v1282, %v1282
        %v1411 = vpack.c.b16 %v1283, %v1283
        %v1412 = vpack.c.b16 %v1284, %v1284
        %v1413 = vpack.c.b16 %v1285, %v1285
        %v1414 = vpack.c.b16 %v1286, %v1286
        %v1415 = vpack.c.b16 %v1287, %v1287
        %v1416 = vpack.c.b16 %v1288, %v1288
        %v1417 = vpack.c.b16 %v1289, %v1289
        %v1418 = vpack.c.b16 %v1290, %v1290
        %v1419 = vpack.c.b16 %v1291, %v1291
        %v1420 = vpack.c.b16 %v1292, %v1292
        %v1421 = vpack.c.b16 %v1293, %v1293
        %v1422 = vpack.c.b16 %v1294, %v1294
        %v1423 = vpack.c.b16 %v1295, %v1295
        %v1424 = vpack.c.b16 %v1296, %v1296
        %v1425 = vpack.c.b16 %v1297, %v1297
        %v1426 = vpack.c.b16 %v1298, %v1298
        %v1427 = vpack.c.b16 %v1299, %v1299
        %v1428 = vpack.c.b16 %v1300, %v1300
        %v1429 = vpack.c.b16 %v1301, %v1301
        %v1430 = vpack.c.b16 %v1302, %v1302
        %v1431 = vpack.c.b16 %v1303, %v1303
        %v1432 = vpack.c.b16 %v1304, %v1304
        %v1433 = vpack.c.b16 %v1305, %v1305
        %v1434 = vpack.c.b16 %v1306, %v1306
        %v1435 = vpack.c.b16 %v1307, %v1307
        %v1436 = vpack.c.b16 %v1308, %v1308
        %v1437 = vpack.c.b16 %v1309, %v1309
        %v1438 = vpack.c.b16 %v1310, %v1310
        %v1439 = vpack.c.b16 %v1311, %v1311
        %v1440 = vpack.c.b16 %v1312, %v1312
        %v1441 = vpack.c.b16 %v1313, %v1313
        %v1442 = vpack.c.b16 %v1314, %v1314
        %v1443 = vpack.c.b16 %v1315, %v1315
        %v1444 = vpack.c.b16 %v1316, %v1316
        %v1445 = vpack.c.b16 %v1317, %v1317
        %v1446 = vpack.c.b16 %v1318, %v1318
        %v1447 = vpack.c.b16 %v1319, %v1319
        %v1448 = vpack.c.b16 %v1320, %v1320
        %v1449 = vpack.c.b16 %v1321, %v1321
        %v1450 = vpack.c.b16 %v1322, %v1322
        %v1451 = vpack.c.b16 %v1323, %v1323
        %v1452 = vpack.c.b16 %v1324, %v1324
        %v1453 = vpack.c.b16 %v1325, %v1325
        %v1454 = vpack.c.b16 %v1326, %v1326
        %v1455 = vpack.c.b16 %v1327, %v1327
        %v1456 = vpack.c.b16 %v1328, %v1328
        %v1457 = vpack.c.b16 %v1329, %v1329
        %v1458 = vpack.c.b16 %v1330, %v1330
        %v1459 = vpack.c.b16 %v1331, %v1331
        %v1460 = vpack.c.b16 %v1332, %v1332
        %v1461 = vpack.c.b16 %v1333, %v1333
        %v1462 = vpack.c.b16 %v1334, %v1334
        %v1463 = vpack.c.b16 %v1335, %v1335
        %v1464 = vpack.c.b16 %v1336, %v1336
        %v1465 = vpack.c.b16 %v1337, %v1337
        %v1466 = vpack.c.b16 %v1338, %v1338
        %v1467 = vpack.c.b16 %v1339, %v1339
        %v1468 = vpack.c.b16 %v1340, %v1340
        %v1469 = vpack.c.b16 %v1341, %v1341
        %v1470 = vpack.c.b16 %v1342, %v1342
        %v1471 = vpack.c.b16 %v1343, %v1343
        %v1472 = vpack.c.b16 %v1344, %v1344
        %v1473 = vpack.c.b16 %v1345, %v1345
        %v1474 = vpack.c.b16 %v1346, %v1346
        %v1475 = vpack.c.b16 %v1347, %v1347
        %v1476 = vpack.c.b16 %v1348, %v1348
        %v1477 = vpack.c.b16 %v1349, %v1349
        %v1478 = vpack.c.b16 %v1350, %v1350
        %v1479 = vpack.c.b16 %v1351, %v1351
        %v1480 = vpack.c.b16 %v1352, %v1352
        %v1481 = vpack.c.b16 %v1353, %v1353
        %v1482 = vpack.c.b16 %v1354, %v1354
        %v1483 = vpack.c.b16 %v1355, %v1355
        %v1484 = vpack.c.b16 %v1356, %v1356
        %v1485 = vpack.c.b16 %v1357, %v1357
        %v1486 = vpack.c.b16 %v1358, %v1358
        %1615 = vst [vmem:[#allocation3] sm:$0xf] %v1359
        %1616 = vst [vmem:[#allocation3 + $0x8] sm:$0xf] %v1360
        %1617 = vst [vmem:[#allocation3 + $0x10] sm:$0xf] %v1361
        %1618 = vst [vmem:[#allocation3 + $0x18] sm:$0xf] %v1362
        %1619 = vst [vmem:[#allocation3 + $0x20] sm:$0xf] %v1363
        %1620 = vst [vmem:[#allocation3 + $0x28] sm:$0xf] %v1364
        %1621 = vst [vmem:[#allocation3 + $0x30] sm:$0xf] %v1365
        %1622 = vst [vmem:[#allocation3 + $0x38] sm:$0xf] %v1366
        %1623 = vst [vmem:[#allocation3 + $0x40] sm:$0xf] %v1367
        %1624 = vst [vmem:[#allocation3 + $0x48] sm:$0xf] %v1368
        %1625 = vst [vmem:[#allocation3 + $0x50] sm:$0xf] %v1369
        %1626 = vst [vmem:[#allocation3 + $0x58] sm:$0xf] %v1370
        %1627 = vst [vmem:[#allocation3 + $0x60] sm:$0xf] %v1371
        %1628 = vst [vmem:[#allocation3 + $0x68] sm:$0xf] %v1372
        %1629 = vst [vmem:[#allocation3 + $0x70] sm:$0xf] %v1373
        %1630 = vst [vmem:[#allocation3 + $0x78] sm:$0xf] %v1374
        %1631 = vst [vmem:[#allocation3 + $0x80] sm:$0xf] %v1375
        %1632 = vst [vmem:[#allocation3 + $0x88] sm:$0xf] %v1376
        %1633 = vst [vmem:[#allocation3 + $0x90] sm:$0xf] %v1377
        %1634 = vst [vmem:[#allocation3 + $0x98] sm:$0xf] %v1378
        %1635 = vst [vmem:[#allocation3 + $0xa0] sm:$0xf] %v1379
        %1636 = vst [vmem:[#allocation3 + $0xa8] sm:$0xf] %v1380
        %1637 = vst [vmem:[#allocation3 + $0xb0] sm:$0xf] %v1381
        %1638 = vst [vmem:[#allocation3 + $0xb8] sm:$0xf] %v1382
        %1639 = vst [vmem:[#allocation3 + $0xc0] sm:$0xf] %v1383
        %1640 = vst [vmem:[#allocation3 + $0xc8] sm:$0xf] %v1384
        %1641 = vst [vmem:[#allocation3 + $0xd0] sm:$0xf] %v1385
        %1642 = vst [vmem:[#allocation3 + $0xd8] sm:$0xf] %v1386
        %1643 = vst [vmem:[#allocation3 + $0xe0] sm:$0xf] %v1387
        %1644 = vst [vmem:[#allocation3 + $0xe8] sm:$0xf] %v1388
        %1645 = vst [vmem:[#allocation3 + $0xf0] sm:$0xf] %v1389
        %1646 = vst [vmem:[#allocation3 + $0xf8] sm:$0xf] %v1390
        %1647 = vst [vmem:[#allocation3 + $0x100] sm:$0xf] %v1391
        %1648 = vst [vmem:[#allocation3 + $0x108] sm:$0xf] %v1392
        %1649 = vst [vmem:[#allocation3 + $0x110] sm:$0xf] %v1393
        %1650 = vst [vmem:[#allocation3 + $0x118] sm:$0xf] %v1394
        %1651 = vst [vmem:[#allocation3 + $0x120] sm:$0xf] %v1395
        %1652 = vst [vmem:[#allocation3 + $0x128] sm:$0xf] %v1396
        %1653 = vst [vmem:[#allocation3 + $0x130] sm:$0xf] %v1397
        %1654 = vst [vmem:[#allocation3 + $0x138] sm:$0xf] %v1398
        %1655 = vst [vmem:[#allocation3 + $0x140] sm:$0xf] %v1399
        %1656 = vst [vmem:[#allocation3 + $0x148] sm:$0xf] %v1400
        %1657 = vst [vmem:[#allocation3 + $0x150] sm:$0xf] %v1401
        %1658 = vst [vmem:[#allocation3 + $0x158] sm:$0xf] %v1402
        %1659 = vst [vmem:[#allocation3 + $0x160] sm:$0xf] %v1403
        %1660 = vst [vmem:[#allocation3 + $0x168] sm:$0xf] %v1404
        %1661 = vst [vmem:[#allocation3 + $0x170] sm:$0xf] %v1405
        %1662 = vst [vmem:[#allocation3 + $0x178] sm:$0xf] %v1406
        %1663 = vst [vmem:[#allocation3 + $0x180] sm:$0xf] %v1407
        %1664 = vst [vmem:[#allocation3 + $0x188] sm:$0xf] %v1408
        %1665 = vst [vmem:[#allocation3 + $0x190] sm:$0xf] %v1409
        %1666 = vst [vmem:[#allocation3 + $0x198] sm:$0xf] %v1410
        %1667 = vst [vmem:[#allocation3 + $0x1a0] sm:$0xf] %v1411
        %1668 = vst [vmem:[#allocation3 + $0x1a8] sm:$0xf] %v1412
        %1669 = vst [vmem:[#allocation3 + $0x1b0] sm:$0xf] %v1413
        %1670 = vst [vmem:[#allocation3 + $0x1b8] sm:$0xf] %v1414
        %1671 = vst [vmem:[#allocation3 + $0x1c0] sm:$0xf] %v1415
        %1672 = vst [vmem:[#allocation3 + $0x1c8] sm:$0xf] %v1416
        %1673 = vst [vmem:[#allocation3 + $0x1d0] sm:$0xf] %v1417
        %1674 = vst [vmem:[#allocation3 + $0x1d8] sm:$0xf] %v1418
        %1675 = vst [vmem:[#allocation3 + $0x1e0] sm:$0xf] %v1419
        %1676 = vst [vmem:[#allocation3 + $0x1e8] sm:$0xf] %v1420
        %1677 = vst [vmem:[#allocation3 + $0x1f0] sm:$0xf] %v1421
        %1678 = vst [vmem:[#allocation3 + $0x1f8] sm:$0xf] %v1422
        %1679 = vst [vmem:[#allocation3 + $0x200] sm:$0xf] %v1423
        %1680 = vst [vmem:[#allocation3 + $0x208] sm:$0xf] %v1424
        %1681 = vst [vmem:[#allocation3 + $0x210] sm:$0xf] %v1425
        %1682 = vst [vmem:[#allocation3 + $0x218] sm:$0xf] %v1426
        %1683 = vst [vmem:[#allocation3 + $0x220] sm:$0xf] %v1427
        %1684 = vst [vmem:[#allocation3 + $0x228] sm:$0xf] %v1428
        %1685 = vst [vmem:[#allocation3 + $0x230] sm:$0xf] %v1429
        %1686 = vst [vmem:[#allocation3 + $0x238] sm:$0xf] %v1430
        %1687 = vst [vmem:[#allocation3 + $0x240] sm:$0xf] %v1431
        %1688 = vst [vmem:[#allocation3 + $0x248] sm:$0xf] %v1432
        %1689 = vst [vmem:[#allocation3 + $0x250] sm:$0xf] %v1433
        %1690 = vst [vmem:[#allocation3 + $0x258] sm:$0xf] %v1434
        %1691 = vst [vmem:[#allocation3 + $0x260] sm:$0xf] %v1435
        %1692 = vst [vmem:[#allocation3 + $0x268] sm:$0xf] %v1436
        %1693 = vst [vmem:[#allocation3 + $0x270] sm:$0xf] %v1437
        %1694 = vst [vmem:[#allocation3 + $0x278] sm:$0xf] %v1438
        %1695 = vst [vmem:[#allocation3 + $0x280] sm:$0xf] %v1439
        %1696 = vst [vmem:[#allocation3 + $0x288] sm:$0xf] %v1440
        %1697 = vst [vmem:[#allocation3 + $0x290] sm:$0xf] %v1441
        %1698 = vst [vmem:[#allocation3 + $0x298] sm:$0xf] %v1442
        %1699 = vst [vmem:[#allocation3 + $0x2a0] sm:$0xf] %v1443
        %1700 = vst [vmem:[#allocation3 + $0x2a8] sm:$0xf] %v1444
        %1701 = vst [vmem:[#allocation3 + $0x2b0] sm:$0xf] %v1445
        %1702 = vst [vmem:[#allocation3 + $0x2b8] sm:$0xf] %v1446
        %1703 = vst [vmem:[#allocation3 + $0x2c0] sm:$0xf] %v1447
        %1704 = vst [vmem:[#allocation3 + $0x2c8] sm:$0xf] %v1448
        %1705 = vst [vmem:[#allocation3 + $0x2d0] sm:$0xf] %v1449
        %1706 = vst [vmem:[#allocation3 + $0x2d8] sm:$0xf] %v1450
        %1707 = vst [vmem:[#allocation3 + $0x2e0] sm:$0xf] %v1451
        %1708 = vst [vmem:[#allocation3 + $0x2e8] sm:$0xf] %v1452
        %1709 = vst [vmem:[#allocation3 + $0x2f0] sm:$0xf] %v1453
        %1710 = vst [vmem:[#allocation3 + $0x2f8] sm:$0xf] %v1454
        %1711 = vst [vmem:[#allocation3 + $0x300] sm:$0xf] %v1455
        %1712 = vst [vmem:[#allocation3 + $0x308] sm:$0xf] %v1456
        %1713 = vst [vmem:[#allocation3 + $0x310] sm:$0xf] %v1457
        %1714 = vst [vmem:[#allocation3 + $0x318] sm:$0xf] %v1458
        %1715 = vst [vmem:[#allocation3 + $0x320] sm:$0xf] %v1459
        %1716 = vst [vmem:[#allocation3 + $0x328] sm:$0xf] %v1460
        %1717 = vst [vmem:[#allocation3 + $0x330] sm:$0xf] %v1461
        %1718 = vst [vmem:[#allocation3 + $0x338] sm:$0xf] %v1462
        %1719 = vst [vmem:[#allocation3 + $0x340] sm:$0xf] %v1463
        %1720 = vst [vmem:[#allocation3 + $0x348] sm:$0xf] %v1464
        %1721 = vst [vmem:[#allocation3 + $0x350] sm:$0xf] %v1465
        %1722 = vst [vmem:[#allocation3 + $0x358] sm:$0xf] %v1466
        %1723 = vst [vmem:[#allocation3 + $0x360] sm:$0xf] %v1467
        %1724 = vst [vmem:[#allocation3 + $0x368] sm:$0xf] %v1468
        %1725 = vst [vmem:[#allocation3 + $0x370] sm:$0xf] %v1469
        %1726 = vst [vmem:[#allocation3 + $0x378] sm:$0xf] %v1470
        %1727 = vst [vmem:[#allocation3 + $0x380] sm:$0xf] %v1471
        %1728 = vst [vmem:[#allocation3 + $0x388] sm:$0xf] %v1472
        %1729 = vst [vmem:[#allocation3 + $0x390] sm:$0xf] %v1473
        %1730 = vst [vmem:[#allocation3 + $0x398] sm:$0xf] %v1474
        %1731 = vst [vmem:[#allocation3 + $0x3a0] sm:$0xf] %v1475
        %1732 = vst [vmem:[#allocation3 + $0x3a8] sm:$0xf] %v1476
        %1733 = vst [vmem:[#allocation3 + $0x3b0] sm:$0xf] %v1477
        %1734 = vst [vmem:[#allocation3 + $0x3b8] sm:$0xf] %v1478
        %1735 = vst [vmem:[#allocation3 + $0x3c0] sm:$0xf] %v1479
        %1736 = vst [vmem:[#allocation3 + $0x3c8] sm:$0xf] %v1480
        %1737 = vst [vmem:[#allocation3 + $0x3d0] sm:$0xf] %v1481
        %1738 = vst [vmem:[#allocation3 + $0x3d8] sm:$0xf] %v1482
        %1739 = vst [vmem:[#allocation3 + $0x3e0] sm:$0xf] %v1483
        %1740 = vst [vmem:[#allocation3 + $0x3e8] sm:$0xf] %v1484
        %1741 = vst [vmem:[#allocation3 + $0x3f0] sm:$0xf] %v1485
        %1742 = vst [vmem:[#allocation3 + $0x3f8] sm:$0xf] %v1486
        %v1743 = vsub.bf16 %v1005, %v1087
        %v1744 = vsub.bf16 %v1005, %v1088
        %v1745 = vsub.bf16 %v1005, %v1089
        %v1746 = vsub.bf16 %v1005, %v1090
        %v1747 = vsub.bf16 %v1005, %v1091
        %v1748 = vsub.bf16 %v1005, %v1092
        %v1749 = vsub.bf16 %v1005, %v1093
        %v1750 = vsub.bf16 %v1005, %v1094
        %v1751 = vsub.bf16 %v1012, %v1087
        %v1752 = vsub.bf16 %v1012, %v1088
        %v1753 = vsub.bf16 %v1012, %v1089
        %v1754 = vsub.bf16 %v1012, %v1090
        %v1755 = vsub.bf16 %v1012, %v1091
        %v1756 = vsub.bf16 %v1012, %v1092
        %v1757 = vsub.bf16 %v1012, %v1093
        %v1758 = vsub.bf16 %v1012, %v1094
        %v1759 = vsub.bf16 %v1019, %v1087
        %v1760 = vsub.bf16 %v1019, %v1088
        %v1761 = vsub.bf16 %v1019, %v1089
        %v1762 = vsub.bf16 %v1019, %v1090
        %v1763 = vsub.bf16 %v1019, %v1091
        %v1764 = vsub.bf16 %v1019, %v1092
        %v1765 = vsub.bf16 %v1019, %v1093
        %v1766 = vsub.bf16 %v1019, %v1094
        %v1767 = vsub.bf16 %v1026, %v1087
        %v1768 = vsub.bf16 %v1026, %v1088
        %v1769 = vsub.bf16 %v1026, %v1089
        %v1770 = vsub.bf16 %v1026, %v1090
        %v1771 = vsub.bf16 %v1026, %v1091
        %v1772 = vsub.bf16 %v1026, %v1092
        %v1773 = vsub.bf16 %v1026, %v1093
        %v1774 = vsub.bf16 %v1026, %v1094
        %v1775 = vsub.bf16 %v1033, %v1087
        %v1776 = vsub.bf16 %v1033, %v1088
        %v1777 = vsub.bf16 %v1033, %v1089
        %v1778 = vsub.bf16 %v1033, %v1090
        %v1779 = vsub.bf16 %v1033, %v1091
        %v1780 = vsub.bf16 %v1033, %v1092
        %v1781 = vsub.bf16 %v1033, %v1093
        %v1782 = vsub.bf16 %v1033, %v1094
        %v1783 = vsub.bf16 %v1040, %v1087
        %v1784 = vsub.bf16 %v1040, %v1088
        %v1785 = vsub.bf16 %v1040, %v1089
        %v1786 = vsub.bf16 %v1040, %v1090
        %v1787 = vsub.bf16 %v1040, %v1091
        %v1788 = vsub.bf16 %v1040, %v1092
        %v1789 = vsub.bf16 %v1040, %v1093
        %v1790 = vsub.bf16 %v1040, %v1094
        %v1791 = vsub.bf16 %v1047, %v1087
        %v1792 = vsub.bf16 %v1047, %v1088
        %v1793 = vsub.bf16 %v1047, %v1089
        %v1794 = vsub.bf16 %v1047, %v1090
        %v1795 = vsub.bf16 %v1047, %v1091
        %v1796 = vsub.bf16 %v1047, %v1092
        %v1797 = vsub.bf16 %v1047, %v1093
        %v1798 = vsub.bf16 %v1047, %v1094
        %v1799 = vsub.bf16 %v1054, %v1087
        %v1800 = vsub.bf16 %v1054, %v1088
        %v1801 = vsub.bf16 %v1054, %v1089
        %v1802 = vsub.bf16 %v1054, %v1090
        %v1803 = vsub.bf16 %v1054, %v1091
        %v1804 = vsub.bf16 %v1054, %v1092
        %v1805 = vsub.bf16 %v1054, %v1093
        %v1806 = vsub.bf16 %v1054, %v1094
        %v1807 = vand.u32 2147450879, %v1743
        %v1808 = vand.u32 2147450879, %v1744
        %v1809 = vand.u32 2147450879, %v1745
        %v1810 = vand.u32 2147450879, %v1746
        %v1811 = vand.u32 2147450879, %v1747
        %v1812 = vand.u32 2147450879, %v1748
        %v1813 = vand.u32 2147450879, %v1749
        %v1814 = vand.u32 2147450879, %v1750
        %v1815 = vand.u32 2147450879, %v1751
        %v1816 = vand.u32 2147450879, %v1752
        %v1817 = vand.u32 2147450879, %v1753
        %v1818 = vand.u32 2147450879, %v1754
        %v1819 = vand.u32 2147450879, %v1755
        %v1820 = vand.u32 2147450879, %v1756
        %v1821 = vand.u32 2147450879, %v1757
        %v1822 = vand.u32 2147450879, %v1758
        %v1823 = vand.u32 2147450879, %v1759
        %v1824 = vand.u32 2147450879, %v1760
        %v1825 = vand.u32 2147450879, %v1761
        %v1826 = vand.u32 2147450879, %v1762
        %v1827 = vand.u32 2147450879, %v1763
        %v1828 = vand.u32 2147450879, %v1764
        %v1829 = vand.u32 2147450879, %v1765
        %v1830 = vand.u32 2147450879, %v1766
        %v1831 = vand.u32 2147450879, %v1767
        %v1832 = vand.u32 2147450879, %v1768
        %v1833 = vand.u32 2147450879, %v1769
        %v1834 = vand.u32 2147450879, %v1770
        %v1835 = vand.u32 2147450879, %v1771
        %v1836 = vand.u32 2147450879, %v1772
        %v1837 = vand.u32 2147450879, %v1773
        %v1838 = vand.u32 2147450879, %v1774
        %v1839 = vand.u32 2147450879, %v1775
        %v1840 = vand.u32 2147450879, %v1776
        %v1841 = vand.u32 2147450879, %v1777
        %v1842 = vand.u32 2147450879, %v1778
        %v1843 = vand.u32 2147450879, %v1779
        %v1844 = vand.u32 2147450879, %v1780
        %v1845 = vand.u32 2147450879, %v1781
        %v1846 = vand.u32 2147450879, %v1782
        %v1847 = vand.u32 2147450879, %v1783
        %v1848 = vand.u32 2147450879, %v1784
        %v1849 = vand.u32 2147450879, %v1785
        %v1850 = vand.u32 2147450879, %v1786
        %v1851 = vand.u32 2147450879, %v1787
        %v1852 = vand.u32 2147450879, %v1788
        %v1853 = vand.u32 2147450879, %v1789
        %v1854 = vand.u32 2147450879, %v1790
        %v1855 = vand.u32 2147450879, %v1791
        %v1856 = vand.u32 2147450879, %v1792
        %v1857 = vand.u32 2147450879, %v1793
        %v1858 = vand.u32 2147450879, %v1794
        %v1859 = vand.u32 2147450879, %v1795
        %v1860 = vand.u32 2147450879, %v1796
        %v1861 = vand.u32 2147450879, %v1797
        %v1862 = vand.u32 2147450879, %v1798
        %v1863 = vand.u32 2147450879, %v1799
        %v1864 = vand.u32 2147450879, %v1800
        %v1865 = vand.u32 2147450879, %v1801
        %v1866 = vand.u32 2147450879, %v1802
        %v1867 = vand.u32 2147450879, %v1803
        %v1868 = vand.u32 2147450879, %v1804
        %v1869 = vand.u32 2147450879, %v1805
        %v1870 = vand.u32 2147450879, %v1806
        %v1935 = vunpack.c.l.b16 %v1807
        %v1936 = vunpack.c.h.b16 %v1807
        %v1937 = vunpack.c.l.b16 %v1808
        %v1938 = vunpack.c.h.b16 %v1808
        %v1939 = vunpack.c.l.b16 %v1809
        %v1940 = vunpack.c.h.b16 %v1809
        %v1941 = vunpack.c.l.b16 %v1810
        %v1942 = vunpack.c.h.b16 %v1810
        %v1943 = vunpack.c.l.b16 %v1811
        %v1944 = vunpack.c.h.b16 %v1811
        %v1945 = vunpack.c.l.b16 %v1812
        %v1946 = vunpack.c.h.b16 %v1812
        %v1947 = vunpack.c.l.b16 %v1813
        %v1948 = vunpack.c.h.b16 %v1813
        %v1949 = vunpack.c.l.b16 %v1814
        %v1950 = vunpack.c.h.b16 %v1814
        %v1951 = vunpack.c.l.b16 %v1815
        %v1952 = vunpack.c.h.b16 %v1815
        %v1953 = vunpack.c.l.b16 %v1816
        %v1954 = vunpack.c.h.b16 %v1816
        %v1955 = vunpack.c.l.b16 %v1817
        %v1956 = vunpack.c.h.b16 %v1817
        %v1957 = vunpack.c.l.b16 %v1818
        %v1958 = vunpack.c.h.b16 %v1818
        %v1959 = vunpack.c.l.b16 %v1819
        %v1960 = vunpack.c.h.b16 %v1819
        %v1961 = vunpack.c.l.b16 %v1820
        %v1962 = vunpack.c.h.b16 %v1820
        %v1963 = vunpack.c.l.b16 %v1821
        %v1964 = vunpack.c.h.b16 %v1821
        %v1965 = vunpack.c.l.b16 %v1822
        %v1966 = vunpack.c.h.b16 %v1822
        %v1967 = vunpack.c.l.b16 %v1823
        %v1968 = vunpack.c.h.b16 %v1823
        %v1969 = vunpack.c.l.b16 %v1824
        %v1970 = vunpack.c.h.b16 %v1824
        %v1971 = vunpack.c.l.b16 %v1825
        %v1972 = vunpack.c.h.b16 %v1825
        %v1973 = vunpack.c.l.b16 %v1826
        %v1974 = vunpack.c.h.b16 %v1826
        %v1975 = vunpack.c.l.b16 %v1827
        %v1976 = vunpack.c.h.b16 %v1827
        %v1977 = vunpack.c.l.b16 %v1828
        %v1978 = vunpack.c.h.b16 %v1828
        %v1979 = vunpack.c.l.b16 %v1829
        %v1980 = vunpack.c.h.b16 %v1829
        %v1981 = vunpack.c.l.b16 %v1830
        %v1982 = vunpack.c.h.b16 %v1830
        %v1983 = vunpack.c.l.b16 %v1831
        %v1984 = vunpack.c.h.b16 %v1831
        %v1985 = vunpack.c.l.b16 %v1832
        %v1986 = vunpack.c.h.b16 %v1832
        %v1987 = vunpack.c.l.b16 %v1833
        %v1988 = vunpack.c.h.b16 %v1833
        %v1989 = vunpack.c.l.b16 %v1834
        %v1990 = vunpack.c.h.b16 %v1834
        %v1991 = vunpack.c.l.b16 %v1835
        %v1992 = vunpack.c.h.b16 %v1835
        %v1993 = vunpack.c.l.b16 %v1836
        %v1994 = vunpack.c.h.b16 %v1836
        %v1995 = vunpack.c.l.b16 %v1837
        %v1996 = vunpack.c.h.b16 %v1837
        %v1997 = vunpack.c.l.b16 %v1838
        %v1998 = vunpack.c.h.b16 %v1838
        %v1999 = vunpack.c.l.b16 %v1839
        %v2000 = vunpack.c.h.b16 %v1839
        %v2001 = vunpack.c.l.b16 %v1840
        %v2002 = vunpack.c.h.b16 %v1840
        %v2003 = vunpack.c.l.b16 %v1841
        %v2004 = vunpack.c.h.b16 %v1841
        %v2005 = vunpack.c.l.b16 %v1842
        %v2006 = vunpack.c.h.b16 %v1842
        %v2007 = vunpack.c.l.b16 %v1843
        %v2008 = vunpack.c.h.b16 %v1843
        %v2009 = vunpack.c.l.b16 %v1844
        %v2010 = vunpack.c.h.b16 %v1844
        %v2011 = vunpack.c.l.b16 %v1845
        %v2012 = vunpack.c.h.b16 %v1845
        %v2013 = vunpack.c.l.b16 %v1846
        %v2014 = vunpack.c.h.b16 %v1846
        %v2015 = vunpack.c.l.b16 %v1847
        %v2016 = vunpack.c.h.b16 %v1847
        %v2017 = vunpack.c.l.b16 %v1848
        %v2018 = vunpack.c.h.b16 %v1848
        %v2019 = vunpack.c.l.b16 %v1849
        %v2020 = vunpack.c.h.b16 %v1849
        %v2021 = vunpack.c.l.b16 %v1850
        %v2022 = vunpack.c.h.b16 %v1850
        %v2023 = vunpack.c.l.b16 %v1851
        %v2024 = vunpack.c.h.b16 %v1851
        %v2025 = vunpack.c.l.b16 %v1852
        %v2026 = vunpack.c.h.b16 %v1852
        %v2027 = vunpack.c.l.b16 %v1853
        %v2028 = vunpack.c.h.b16 %v1853
        %v2029 = vunpack.c.l.b16 %v1854
        %v2030 = vunpack.c.h.b16 %v1854
        %v2031 = vunpack.c.l.b16 %v1855
        %v2032 = vunpack.c.h.b16 %v1855
        %v2033 = vunpack.c.l.b16 %v1856
        %v2034 = vunpack.c.h.b16 %v1856
        %v2035 = vunpack.c.l.b16 %v1857
        %v2036 = vunpack.c.h.b16 %v1857
        %v2037 = vunpack.c.l.b16 %v1858
        %v2038 = vunpack.c.h.b16 %v1858
        %v2039 = vunpack.c.l.b16 %v1859
        %v2040 = vunpack.c.h.b16 %v1859
        %v2041 = vunpack.c.l.b16 %v1860
        %v2042 = vunpack.c.h.b16 %v1860
        %v2043 = vunpack.c.l.b16 %v1861
        %v2044 = vunpack.c.h.b16 %v1861
        %v2045 = vunpack.c.l.b16 %v1862
        %v2046 = vunpack.c.h.b16 %v1862
        %v2047 = vunpack.c.l.b16 %v1863
        %v2048 = vunpack.c.h.b16 %v1863
        %v2049 = vunpack.c.l.b16 %v1864
        %v2050 = vunpack.c.h.b16 %v1864
        %v2051 = vunpack.c.l.b16 %v1865
        %v2052 = vunpack.c.h.b16 %v1865
        %v2053 = vunpack.c.l.b16 %v1866
        %v2054 = vunpack.c.h.b16 %v1866
        %v2055 = vunpack.c.l.b16 %v1867
        %v2056 = vunpack.c.h.b16 %v1867
        %v2057 = vunpack.c.l.b16 %v1868
        %v2058 = vunpack.c.h.b16 %v1868
        %v2059 = vunpack.c.l.b16 %v1869
        %v2060 = vunpack.c.h.b16 %v1869
        %v2061 = vunpack.c.l.b16 %v1870
        %v2062 = vunpack.c.h.b16 %v1870
        %v2063 = vpack.c.b16 %v1935, %v1935
        %v2064 = vpack.c.b16 %v1936, %v1936
        %v2065 = vpack.c.b16 %v1937, %v1937
        %v2066 = vpack.c.b16 %v1938, %v1938
        %v2067 = vpack.c.b16 %v1939, %v1939
        %v2068 = vpack.c.b16 %v1940, %v1940
        %v2069 = vpack.c.b16 %v1941, %v1941
        %v2070 = vpack.c.b16 %v1942, %v1942
        %v2071 = vpack.c.b16 %v1943, %v1943
        %v2072 = vpack.c.b16 %v1944, %v1944
        %v2073 = vpack.c.b16 %v1945, %v1945
        %v2074 = vpack.c.b16 %v1946, %v1946
        %v2075 = vpack.c.b16 %v1947, %v1947
        %v2076 = vpack.c.b16 %v1948, %v1948
        %v2077 = vpack.c.b16 %v1949, %v1949
        %v2078 = vpack.c.b16 %v1950, %v1950
        %v2079 = vpack.c.b16 %v1951, %v1951
        %v2080 = vpack.c.b16 %v1952, %v1952
        %v2081 = vpack.c.b16 %v1953, %v1953
        %v2082 = vpack.c.b16 %v1954, %v1954
        %v2083 = vpack.c.b16 %v1955, %v1955
        %v2084 = vpack.c.b16 %v1956, %v1956
        %v2085 = vpack.c.b16 %v1957, %v1957
        %v2086 = vpack.c.b16 %v1958, %v1958
        %v2087 = vpack.c.b16 %v1959, %v1959
        %v2088 = vpack.c.b16 %v1960, %v1960
        %v2089 = vpack.c.b16 %v1961, %v1961
        %v2090 = vpack.c.b16 %v1962, %v1962
        %v2091 = vpack.c.b16 %v1963, %v1963
        %v2092 = vpack.c.b16 %v1964, %v1964
        %v2093 = vpack.c.b16 %v1965, %v1965
        %v2094 = vpack.c.b16 %v1966, %v1966
        %v2095 = vpack.c.b16 %v1967, %v1967
        %v2096 = vpack.c.b16 %v1968, %v1968
        %v2097 = vpack.c.b16 %v1969, %v1969
        %v2098 = vpack.c.b16 %v1970, %v1970
        %v2099 = vpack.c.b16 %v1971, %v1971
        %v2100 = vpack.c.b16 %v1972, %v1972
        %v2101 = vpack.c.b16 %v1973, %v1973
        %v2102 = vpack.c.b16 %v1974, %v1974
        %v2103 = vpack.c.b16 %v1975, %v1975
        %v2104 = vpack.c.b16 %v1976, %v1976
        %v2105 = vpack.c.b16 %v1977, %v1977
        %v2106 = vpack.c.b16 %v1978, %v1978
        %v2107 = vpack.c.b16 %v1979, %v1979
        %v2108 = vpack.c.b16 %v1980, %v1980
        %v2109 = vpack.c.b16 %v1981, %v1981
        %v2110 = vpack.c.b16 %v1982, %v1982
        %v2111 = vpack.c.b16 %v1983, %v1983
        %v2112 = vpack.c.b16 %v1984, %v1984
        %v2113 = vpack.c.b16 %v1985, %v1985
        %v2114 = vpack.c.b16 %v1986, %v1986
        %v2115 = vpack.c.b16 %v1987, %v1987
        %v2116 = vpack.c.b16 %v1988, %v1988
        %v2117 = vpack.c.b16 %v1989, %v1989
        %v2118 = vpack.c.b16 %v1990, %v1990
        %v2119 = vpack.c.b16 %v1991, %v1991
        %v2120 = vpack.c.b16 %v1992, %v1992
        %v2121 = vpack.c.b16 %v1993, %v1993
        %v2122 = vpack.c.b16 %v1994, %v1994
        %v2123 = vpack.c.b16 %v1995, %v1995
        %v2124 = vpack.c.b16 %v1996, %v1996
        %v2125 = vpack.c.b16 %v1997, %v1997
        %v2126 = vpack.c.b16 %v1998, %v1998
        %v2127 = vpack.c.b16 %v1999, %v1999
        %v2128 = vpack.c.b16 %v2000, %v2000
        %v2129 = vpack.c.b16 %v2001, %v2001
        %v2130 = vpack.c.b16 %v2002, %v2002
        %v2131 = vpack.c.b16 %v2003, %v2003
        %v2132 = vpack.c.b16 %v2004, %v2004
        %v2133 = vpack.c.b16 %v2005, %v2005
        %v2134 = vpack.c.b16 %v2006, %v2006
        %v2135 = vpack.c.b16 %v2007, %v2007
        %v2136 = vpack.c.b16 %v2008, %v2008
        %v2137 = vpack.c.b16 %v2009, %v2009
        %v2138 = vpack.c.b16 %v2010, %v2010
        %v2139 = vpack.c.b16 %v2011, %v2011
        %v2140 = vpack.c.b16 %v2012, %v2012
        %v2141 = vpack.c.b16 %v2013, %v2013
        %v2142 = vpack.c.b16 %v2014, %v2014
        %v2143 = vpack.c.b16 %v2015, %v2015
        %v2144 = vpack.c.b16 %v2016, %v2016
        %v2145 = vpack.c.b16 %v2017, %v2017
        %v2146 = vpack.c.b16 %v2018, %v2018
        %v2147 = vpack.c.b16 %v2019, %v2019
        %v2148 = vpack.c.b16 %v2020, %v2020
        %v2149 = vpack.c.b16 %v2021, %v2021
        %v2150 = vpack.c.b16 %v2022, %v2022
        %v2151 = vpack.c.b16 %v2023, %v2023
        %v2152 = vpack.c.b16 %v2024, %v2024
        %v2153 = vpack.c.b16 %v2025, %v2025
        %v2154 = vpack.c.b16 %v2026, %v2026
        %v2155 = vpack.c.b16 %v2027, %v2027
        %v2156 = vpack.c.b16 %v2028, %v2028
        %v2157 = vpack.c.b16 %v2029, %v2029
        %v2158 = vpack.c.b16 %v2030, %v2030
        %v2159 = vpack.c.b16 %v2031, %v2031
        %v2160 = vpack.c.b16 %v2032, %v2032
        %v2161 = vpack.c.b16 %v2033, %v2033
        %v2162 = vpack.c.b16 %v2034, %v2034
        %v2163 = vpack.c.b16 %v2035, %v2035
        %v2164 = vpack.c.b16 %v2036, %v2036
        %v2165 = vpack.c.b16 %v2037, %v2037
        %v2166 = vpack.c.b16 %v2038, %v2038
        %v2167 = vpack.c.b16 %v2039, %v2039
        %v2168 = vpack.c.b16 %v2040, %v2040
        %v2169 = vpack.c.b16 %v2041, %v2041
        %v2170 = vpack.c.b16 %v2042, %v2042
        %v2171 = vpack.c.b16 %v2043, %v2043
        %v2172 = vpack.c.b16 %v2044, %v2044
        %v2173 = vpack.c.b16 %v2045, %v2045
        %v2174 = vpack.c.b16 %v2046, %v2046
        %v2175 = vpack.c.b16 %v2047, %v2047
        %v2176 = vpack.c.b16 %v2048, %v2048
        %v2177 = vpack.c.b16 %v2049, %v2049
        %v2178 = vpack.c.b16 %v2050, %v2050
        %v2179 = vpack.c.b16 %v2051, %v2051
        %v2180 = vpack.c.b16 %v2052, %v2052
        %v2181 = vpack.c.b16 %v2053, %v2053
        %v2182 = vpack.c.b16 %v2054, %v2054
        %v2183 = vpack.c.b16 %v2055, %v2055
        %v2184 = vpack.c.b16 %v2056, %v2056
        %v2185 = vpack.c.b16 %v2057, %v2057
        %v2186 = vpack.c.b16 %v2058, %v2058
        %v2187 = vpack.c.b16 %v2059, %v2059
        %v2188 = vpack.c.b16 %v2060, %v2060
        %v2189 = vpack.c.b16 %v2061, %v2061
        %v2190 = vpack.c.b16 %v2062, %v2062
        %2319 = vst [vmem:[#allocation3 + $0x4] sm:$0xf] %v2063
        %2320 = vst [vmem:[#allocation3 + $0xc] sm:$0xf] %v2064
        %2321 = vst [vmem:[#allocation3 + $0x14] sm:$0xf] %v2065
        %2322 = vst [vmem:[#allocation3 + $0x1c] sm:$0xf] %v2066
        %2323 = vst [vmem:[#allocation3 + $0x24] sm:$0xf] %v2067
        %2324 = vst [vmem:[#allocation3 + $0x2c] sm:$0xf] %v2068
        %2325 = vst [vmem:[#allocation3 + $0x34] sm:$0xf] %v2069
        %2326 = vst [vmem:[#allocation3 + $0x3c] sm:$0xf] %v2070
        %2327 = vst [vmem:[#allocation3 + $0x44] sm:$0xf] %v2071
        %2328 = vst [vmem:[#allocation3 + $0x4c] sm:$0xf] %v2072
        %2329 = vst [vmem:[#allocation3 + $0x54] sm:$0xf] %v2073
        %2330 = vst [vmem:[#allocation3 + $0x5c] sm:$0xf] %v2074
        %2331 = vst [vmem:[#allocation3 + $0x64] sm:$0xf] %v2075
        %2332 = vst [vmem:[#allocation3 + $0x6c] sm:$0xf] %v2076
        %2333 = vst [vmem:[#allocation3 + $0x74] sm:$0xf] %v2077
        %2334 = vst [vmem:[#allocation3 + $0x7c] sm:$0xf] %v2078
        %2335 = vst [vmem:[#allocation3 + $0x84] sm:$0xf] %v2079
        %2336 = vst [vmem:[#allocation3 + $0x8c] sm:$0xf] %v2080
        %2337 = vst [vmem:[#allocation3 + $0x94] sm:$0xf] %v2081
        %2338 = vst [vmem:[#allocation3 + $0x9c] sm:$0xf] %v2082
        %2339 = vst [vmem:[#allocation3 + $0xa4] sm:$0xf] %v2083
        %2340 = vst [vmem:[#allocation3 + $0xac] sm:$0xf] %v2084
        %2341 = vst [vmem:[#allocation3 + $0xb4] sm:$0xf] %v2085
        %2342 = vst [vmem:[#allocation3 + $0xbc] sm:$0xf] %v2086
        %2343 = vst [vmem:[#allocation3 + $0xc4] sm:$0xf] %v2087
        %2344 = vst [vmem:[#allocation3 + $0xcc] sm:$0xf] %v2088
        %2345 = vst [vmem:[#allocation3 + $0xd4] sm:$0xf] %v2089
        %2346 = vst [vmem:[#allocation3 + $0xdc] sm:$0xf] %v2090
        %2347 = vst [vmem:[#allocation3 + $0xe4] sm:$0xf] %v2091
        %2348 = vst [vmem:[#allocation3 + $0xec] sm:$0xf] %v2092
        %2349 = vst [vmem:[#allocation3 + $0xf4] sm:$0xf] %v2093
        %2350 = vst [vmem:[#allocation3 + $0xfc] sm:$0xf] %v2094
        %2351 = vst [vmem:[#allocation3 + $0x104] sm:$0xf] %v2095
        %2352 = vst [vmem:[#allocation3 + $0x10c] sm:$0xf] %v2096
        %2353 = vst [vmem:[#allocation3 + $0x114] sm:$0xf] %v2097
        %2354 = vst [vmem:[#allocation3 + $0x11c] sm:$0xf] %v2098
        %2355 = vst [vmem:[#allocation3 + $0x124] sm:$0xf] %v2099
        %2356 = vst [vmem:[#allocation3 + $0x12c] sm:$0xf] %v2100
        %2357 = vst [vmem:[#allocation3 + $0x134] sm:$0xf] %v2101
        %2358 = vst [vmem:[#allocation3 + $0x13c] sm:$0xf] %v2102
        %2359 = vst [vmem:[#allocation3 + $0x144] sm:$0xf] %v2103
        %2360 = vst [vmem:[#allocation3 + $0x14c] sm:$0xf] %v2104
        %2361 = vst [vmem:[#allocation3 + $0x154] sm:$0xf] %v2105
        %2362 = vst [vmem:[#allocation3 + $0x15c] sm:$0xf] %v2106
        %2363 = vst [vmem:[#allocation3 + $0x164] sm:$0xf] %v2107
        %2364 = vst [vmem:[#allocation3 + $0x16c] sm:$0xf] %v2108
        %2365 = vst [vmem:[#allocation3 + $0x174] sm:$0xf] %v2109
        %2366 = vst [vmem:[#allocation3 + $0x17c] sm:$0xf] %v2110
        %2367 = vst [vmem:[#allocation3 + $0x184] sm:$0xf] %v2111
        %2368 = vst [vmem:[#allocation3 + $0x18c] sm:$0xf] %v2112
        %2369 = vst [vmem:[#allocation3 + $0x194] sm:$0xf] %v2113
        %2370 = vst [vmem:[#allocation3 + $0x19c] sm:$0xf] %v2114
        %2371 = vst [vmem:[#allocation3 + $0x1a4] sm:$0xf] %v2115
        %2372 = vst [vmem:[#allocation3 + $0x1ac] sm:$0xf] %v2116
        %2373 = vst [vmem:[#allocation3 + $0x1b4] sm:$0xf] %v2117
        %2374 = vst [vmem:[#allocation3 + $0x1bc] sm:$0xf] %v2118
        %2375 = vst [vmem:[#allocation3 + $0x1c4] sm:$0xf] %v2119
        %2376 = vst [vmem:[#allocation3 + $0x1cc] sm:$0xf] %v2120
        %2377 = vst [vmem:[#allocation3 + $0x1d4] sm:$0xf] %v2121
        %2378 = vst [vmem:[#allocation3 + $0x1dc] sm:$0xf] %v2122
        %2379 = vst [vmem:[#allocation3 + $0x1e4] sm:$0xf] %v2123
        %2380 = vst [vmem:[#allocation3 + $0x1ec] sm:$0xf] %v2124
        %2381 = vst [vmem:[#allocation3 + $0x1f4] sm:$0xf] %v2125
        %2382 = vst [vmem:[#allocation3 + $0x1fc] sm:$0xf] %v2126
        %2383 = vst [vmem:[#allocation3 + $0x204] sm:$0xf] %v2127
        %2384 = vst [vmem:[#allocation3 + $0x20c] sm:$0xf] %v2128
        %2385 = vst [vmem:[#allocation3 + $0x214] sm:$0xf] %v2129
        %2386 = vst [vmem:[#allocation3 + $0x21c] sm:$0xf] %v2130
        %2387 = vst [vmem:[#allocation3 + $0x224] sm:$0xf] %v2131
        %2388 = vst [vmem:[#allocation3 + $0x22c] sm:$0xf] %v2132
        %2389 = vst [vmem:[#allocation3 + $0x234] sm:$0xf] %v2133
        %2390 = vst [vmem:[#allocation3 + $0x23c] sm:$0xf] %v2134
        %2391 = vst [vmem:[#allocation3 + $0x244] sm:$0xf] %v2135
        %2392 = vst [vmem:[#allocation3 + $0x24c] sm:$0xf] %v2136
        %2393 = vst [vmem:[#allocation3 + $0x254] sm:$0xf] %v2137
        %2394 = vst [vmem:[#allocation3 + $0x25c] sm:$0xf] %v2138
        %2395 = vst [vmem:[#allocation3 + $0x264] sm:$0xf] %v2139
        %2396 = vst [vmem:[#allocation3 + $0x26c] sm:$0xf] %v2140
        %2397 = vst [vmem:[#allocation3 + $0x274] sm:$0xf] %v2141
        %2398 = vst [vmem:[#allocation3 + $0x27c] sm:$0xf] %v2142
        %2399 = vst [vmem:[#allocation3 + $0x284] sm:$0xf] %v2143
        %2400 = vst [vmem:[#allocation3 + $0x28c] sm:$0xf] %v2144
        %2401 = vst [vmem:[#allocation3 + $0x294] sm:$0xf] %v2145
        %2402 = vst [vmem:[#allocation3 + $0x29c] sm:$0xf] %v2146
        %2403 = vst [vmem:[#allocation3 + $0x2a4] sm:$0xf] %v2147
        %2404 = vst [vmem:[#allocation3 + $0x2ac] sm:$0xf] %v2148
        %2405 = vst [vmem:[#allocation3 + $0x2b4] sm:$0xf] %v2149
        %2406 = vst [vmem:[#allocation3 + $0x2bc] sm:$0xf] %v2150
        %2407 = vst [vmem:[#allocation3 + $0x2c4] sm:$0xf] %v2151
        %2408 = vst [vmem:[#allocation3 + $0x2cc] sm:$0xf] %v2152
        %2409 = vst [vmem:[#allocation3 + $0x2d4] sm:$0xf] %v2153
        %2410 = vst [vmem:[#allocation3 + $0x2dc] sm:$0xf] %v2154
        %2411 = vst [vmem:[#allocation3 + $0x2e4] sm:$0xf] %v2155
        %2412 = vst [vmem:[#allocation3 + $0x2ec] sm:$0xf] %v2156
        %2413 = vst [vmem:[#allocation3 + $0x2f4] sm:$0xf] %v2157
        %2414 = vst [vmem:[#allocation3 + $0x2fc] sm:$0xf] %v2158
        %2415 = vst [vmem:[#allocation3 + $0x304] sm:$0xf] %v2159
        %2416 = vst [vmem:[#allocation3 + $0x30c] sm:$0xf] %v2160
        %2417 = vst [vmem:[#allocation3 + $0x314] sm:$0xf] %v2161
        %2418 = vst [vmem:[#allocation3 + $0x31c] sm:$0xf] %v2162
        %2419 = vst [vmem:[#allocation3 + $0x324] sm:$0xf] %v2163
        %2420 = vst [vmem:[#allocation3 + $0x32c] sm:$0xf] %v2164
        %2421 = vst [vmem:[#allocation3 + $0x334] sm:$0xf] %v2165
        %2422 = vst [vmem:[#allocation3 + $0x33c] sm:$0xf] %v2166
        %2423 = vst [vmem:[#allocation3 + $0x344] sm:$0xf] %v2167
        %2424 = vst [vmem:[#allocation3 + $0x34c] sm:$0xf] %v2168
        %2425 = vst [vmem:[#allocation3 + $0x354] sm:$0xf] %v2169
        %2426 = vst [vmem:[#allocation3 + $0x35c] sm:$0xf] %v2170
        %2427 = vst [vmem:[#allocation3 + $0x364] sm:$0xf] %v2171
        %2428 = vst [vmem:[#allocation3 + $0x36c] sm:$0xf] %v2172
        %2429 = vst [vmem:[#allocation3 + $0x374] sm:$0xf] %v2173
        %2430 = vst [vmem:[#allocation3 + $0x37c] sm:$0xf] %v2174
        %2431 = vst [vmem:[#allocation3 + $0x384] sm:$0xf] %v2175
        %2432 = vst [vmem:[#allocation3 + $0x38c] sm:$0xf] %v2176
        %2433 = vst [vmem:[#allocation3 + $0x394] sm:$0xf] %v2177
        %2434 = vst [vmem:[#allocation3 + $0x39c] sm:$0xf] %v2178
        %2435 = vst [vmem:[#allocation3 + $0x3a4] sm:$0xf] %v2179
        %2436 = vst [vmem:[#allocation3 + $0x3ac] sm:$0xf] %v2180
        %2437 = vst [vmem:[#allocation3 + $0x3b4] sm:$0xf] %v2181
        %2438 = vst [vmem:[#allocation3 + $0x3bc] sm:$0xf] %v2182
        %2439 = vst [vmem:[#allocation3 + $0x3c4] sm:$0xf] %v2183
        %2440 = vst [vmem:[#allocation3 + $0x3cc] sm:$0xf] %v2184
        %2441 = vst [vmem:[#allocation3 + $0x3d4] sm:$0xf] %v2185
        %2442 = vst [vmem:[#allocation3 + $0x3dc] sm:$0xf] %v2186
        %2443 = vst [vmem:[#allocation3 + $0x3e4] sm:$0xf] %v2187
        %2444 = vst [vmem:[#allocation3 + $0x3ec] sm:$0xf] %v2188
        %2445 = vst [vmem:[#allocation3 + $0x3f4] sm:$0xf] %v2189
        %2446 = vst [vmem:[#allocation3 + $0x3fc] sm:$0xf] %v2190
        %v2447 = vld [vmem:[#allocation3] sm:$0xff]
        %v2448 = vld [vmem:[#allocation3 + $0x8] sm:$0xff]
        %v2449 = vld [vmem:[#allocation3 + $0x10] sm:$0xff]
        %v2450 = vld [vmem:[#allocation3 + $0x18] sm:$0xff]
        %v2451 = vld [vmem:[#allocation3 + $0x20] sm:$0xff]
        %v2452 = vld [vmem:[#allocation3 + $0x28] sm:$0xff]
        %v2453 = vld [vmem:[#allocation3 + $0x30] sm:$0xff]
        %v2454 = vld [vmem:[#allocation3 + $0x38] sm:$0xff]
        %v2455 = vld [vmem:[#allocation3 + $0x40] sm:$0xff]
        %v2456 = vld [vmem:[#allocation3 + $0x48] sm:$0xff]
        %v2457 = vld [vmem:[#allocation3 + $0x50] sm:$0xff]
        %v2458 = vld [vmem:[#allocation3 + $0x58] sm:$0xff]
        %v2459 = vld [vmem:[#allocation3 + $0x60] sm:$0xff]
        %v2460 = vld [vmem:[#allocation3 + $0x68] sm:$0xff]
        %v2461 = vld [vmem:[#allocation3 + $0x70] sm:$0xff]
        %v2462 = vld [vmem:[#allocation3 + $0x78] sm:$0xff]
        %v2463 = vld [vmem:[#allocation3 + $0x80] sm:$0xff]
        %v2464 = vld [vmem:[#allocation3 + $0x88] sm:$0xff]
        %v2465 = vld [vmem:[#allocation3 + $0x90] sm:$0xff]
        %v2466 = vld [vmem:[#allocation3 + $0x98] sm:$0xff]
        %v2467 = vld [vmem:[#allocation3 + $0xa0] sm:$0xff]
        %v2468 = vld [vmem:[#allocation3 + $0xa8] sm:$0xff]
        %v2469 = vld [vmem:[#allocation3 + $0xb0] sm:$0xff]
        %v2470 = vld [vmem:[#allocation3 + $0xb8] sm:$0xff]
        %v2471 = vld [vmem:[#allocation3 + $0xc0] sm:$0xff]
        %v2472 = vld [vmem:[#allocation3 + $0xc8] sm:$0xff]
        %v2473 = vld [vmem:[#allocation3 + $0xd0] sm:$0xff]
        %v2474 = vld [vmem:[#allocation3 + $0xd8] sm:$0xff]
        %v2475 = vld [vmem:[#allocation3 + $0xe0] sm:$0xff]
        %v2476 = vld [vmem:[#allocation3 + $0xe8] sm:$0xff]
        %v2477 = vld [vmem:[#allocation3 + $0xf0] sm:$0xff]
        %v2478 = vld [vmem:[#allocation3 + $0xf8] sm:$0xff]
        %v2479 = vld [vmem:[#allocation3 + $0x100] sm:$0xff]
        %v2480 = vld [vmem:[#allocation3 + $0x108] sm:$0xff]
        %v2481 = vld [vmem:[#allocation3 + $0x110] sm:$0xff]
        %v2482 = vld [vmem:[#allocation3 + $0x118] sm:$0xff]
        %v2483 = vld [vmem:[#allocation3 + $0x120] sm:$0xff]
        %v2484 = vld [vmem:[#allocation3 + $0x128] sm:$0xff]
        %v2485 = vld [vmem:[#allocation3 + $0x130] sm:$0xff]
        %v2486 = vld [vmem:[#allocation3 + $0x138] sm:$0xff]
        %v2487 = vld [vmem:[#allocation3 + $0x140] sm:$0xff]
        %v2488 = vld [vmem:[#allocation3 + $0x148] sm:$0xff]
        %v2489 = vld [vmem:[#allocation3 + $0x150] sm:$0xff]
        %v2490 = vld [vmem:[#allocation3 + $0x158] sm:$0xff]
        %v2491 = vld [vmem:[#allocation3 + $0x160] sm:$0xff]
        %v2492 = vld [vmem:[#allocation3 + $0x168] sm:$0xff]
        %v2493 = vld [vmem:[#allocation3 + $0x170] sm:$0xff]
        %v2494 = vld [vmem:[#allocation3 + $0x178] sm:$0xff]
        %v2495 = vld [vmem:[#allocation3 + $0x180] sm:$0xff]
        %v2496 = vld [vmem:[#allocation3 + $0x188] sm:$0xff]
        %v2497 = vld [vmem:[#allocation3 + $0x190] sm:$0xff]
        %v2498 = vld [vmem:[#allocation3 + $0x198] sm:$0xff]
        %v2499 = vld [vmem:[#allocation3 + $0x1a0] sm:$0xff]
        %v2500 = vld [vmem:[#allocation3 + $0x1a8] sm:$0xff]
        %v2501 = vld [vmem:[#allocation3 + $0x1b0] sm:$0xff]
        %v2502 = vld [vmem:[#allocation3 + $0x1b8] sm:$0xff]
        %v2503 = vld [vmem:[#allocation3 + $0x1c0] sm:$0xff]
        %v2504 = vld [vmem:[#allocation3 + $0x1c8] sm:$0xff]
        %v2505 = vld [vmem:[#allocation3 + $0x1d0] sm:$0xff]
        %v2506 = vld [vmem:[#allocation3 + $0x1d8] sm:$0xff]
        %v2507 = vld [vmem:[#allocation3 + $0x1e0] sm:$0xff]
        %v2508 = vld [vmem:[#allocation3 + $0x1e8] sm:$0xff]
        %v2509 = vld [vmem:[#allocation3 + $0x1f0] sm:$0xff]
        %v2510 = vld [vmem:[#allocation3 + $0x1f8] sm:$0xff]
        %v2511 = vld [vmem:[#allocation3 + $0x200] sm:$0xff]
        %v2512 = vld [vmem:[#allocation3 + $0x208] sm:$0xff]
        %v2513 = vld [vmem:[#allocation3 + $0x210] sm:$0xff]
        %v2514 = vld [vmem:[#allocation3 + $0x218] sm:$0xff]
        %v2515 = vld [vmem:[#allocation3 + $0x220] sm:$0xff]
        %v2516 = vld [vmem:[#allocation3 + $0x228] sm:$0xff]
        %v2517 = vld [vmem:[#allocation3 + $0x230] sm:$0xff]
        %v2518 = vld [vmem:[#allocation3 + $0x238] sm:$0xff]
        %v2519 = vld [vmem:[#allocation3 + $0x240] sm:$0xff]
        %v2520 = vld [vmem:[#allocation3 + $0x248] sm:$0xff]
        %v2521 = vld [vmem:[#allocation3 + $0x250] sm:$0xff]
        %v2522 = vld [vmem:[#allocation3 + $0x258] sm:$0xff]
        %v2523 = vld [vmem:[#allocation3 + $0x260] sm:$0xff]
        %v2524 = vld [vmem:[#allocation3 + $0x268] sm:$0xff]
        %v2525 = vld [vmem:[#allocation3 + $0x270] sm:$0xff]
        %v2526 = vld [vmem:[#allocation3 + $0x278] sm:$0xff]
        %v2527 = vld [vmem:[#allocation3 + $0x280] sm:$0xff]
        %v2528 = vld [vmem:[#allocation3 + $0x288] sm:$0xff]
        %v2529 = vld [vmem:[#allocation3 + $0x290] sm:$0xff]
        %v2530 = vld [vmem:[#allocation3 + $0x298] sm:$0xff]
        %v2531 = vld [vmem:[#allocation3 + $0x2a0] sm:$0xff]
        %v2532 = vld [vmem:[#allocation3 + $0x2a8] sm:$0xff]
        %v2533 = vld [vmem:[#allocation3 + $0x2b0] sm:$0xff]
        %v2534 = vld [vmem:[#allocation3 + $0x2b8] sm:$0xff]
        %v2535 = vld [vmem:[#allocation3 + $0x2c0] sm:$0xff]
        %v2536 = vld [vmem:[#allocation3 + $0x2c8] sm:$0xff]
        %v2537 = vld [vmem:[#allocation3 + $0x2d0] sm:$0xff]
        %v2538 = vld [vmem:[#allocation3 + $0x2d8] sm:$0xff]
        %v2539 = vld [vmem:[#allocation3 + $0x2e0] sm:$0xff]
        %v2540 = vld [vmem:[#allocation3 + $0x2e8] sm:$0xff]
        %v2541 = vld [vmem:[#allocation3 + $0x2f0] sm:$0xff]
        %v2542 = vld [vmem:[#allocation3 + $0x2f8] sm:$0xff]
        %v2543 = vld [vmem:[#allocation3 + $0x300] sm:$0xff]
        %v2544 = vld [vmem:[#allocation3 + $0x308] sm:$0xff]
        %v2545 = vld [vmem:[#allocation3 + $0x310] sm:$0xff]
        %v2546 = vld [vmem:[#allocation3 + $0x318] sm:$0xff]
        %v2547 = vld [vmem:[#allocation3 + $0x320] sm:$0xff]
        %v2548 = vld [vmem:[#allocation3 + $0x328] sm:$0xff]
        %v2549 = vld [vmem:[#allocation3 + $0x330] sm:$0xff]
        %v2550 = vld [vmem:[#allocation3 + $0x338] sm:$0xff]
        %v2551 = vld [vmem:[#allocation3 + $0x340] sm:$0xff]
        %v2552 = vld [vmem:[#allocation3 + $0x348] sm:$0xff]
        %v2553 = vld [vmem:[#allocation3 + $0x350] sm:$0xff]
        %v2554 = vld [vmem:[#allocation3 + $0x358] sm:$0xff]
        %v2555 = vld [vmem:[#allocation3 + $0x360] sm:$0xff]
        %v2556 = vld [vmem:[#allocation3 + $0x368] sm:$0xff]
        %v2557 = vld [vmem:[#allocation3 + $0x370] sm:$0xff]
        %v2558 = vld [vmem:[#allocation3 + $0x378] sm:$0xff]
        %v2559 = vld [vmem:[#allocation3 + $0x380] sm:$0xff]
        %v2560 = vld [vmem:[#allocation3 + $0x388] sm:$0xff]
        %v2561 = vld [vmem:[#allocation3 + $0x390] sm:$0xff]
        %v2562 = vld [vmem:[#allocation3 + $0x398] sm:$0xff]
        %v2563 = vld [vmem:[#allocation3 + $0x3a0] sm:$0xff]
        %v2564 = vld [vmem:[#allocation3 + $0x3a8] sm:$0xff]
        %v2565 = vld [vmem:[#allocation3 + $0x3b0] sm:$0xff]
        %v2566 = vld [vmem:[#allocation3 + $0x3b8] sm:$0xff]
        %v2567 = vld [vmem:[#allocation3 + $0x3c0] sm:$0xff]
        %v2568 = vld [vmem:[#allocation3 + $0x3c8] sm:$0xff]
        %v2569 = vld [vmem:[#allocation3 + $0x3d0] sm:$0xff]
        %v2570 = vld [vmem:[#allocation3 + $0x3d8] sm:$0xff]
        %v2571 = vld [vmem:[#allocation3 + $0x3e0] sm:$0xff]
        %v2572 = vld [vmem:[#allocation3 + $0x3e8] sm:$0xff]
        %v2573 = vld [vmem:[#allocation3 + $0x3f0] sm:$0xff]
        %v2574 = vld [vmem:[#allocation3 + $0x3f8] sm:$0xff]
        %v2575 = vld [vmem:[%s5] sm:$0xf]
        %v2576 = vld [vmem:[%s5 + $0x4] sm:$0xf]
        %v2577 = vld [vmem:[%s5 + $0x8] sm:$0xf]
        %v2578 = vld [vmem:[%s5 + $0xc] sm:$0xf]
        %v2579 = vld [vmem:[%s5 + $0x10] sm:$0xf]
        %v2580 = vld [vmem:[%s5 + $0x14] sm:$0xf]
        %v2581 = vld [vmem:[%s5 + $0x18] sm:$0xf]
        %v2582 = vld [vmem:[%s5 + $0x1c] sm:$0xf]
        %v2583 = vld [vmem:[%s5 + $0x20] sm:$0xf]
        %v2584 = vld [vmem:[%s5 + $0x24] sm:$0xf]
        %v2585 = vld [vmem:[%s5 + $0x28] sm:$0xf]
        %v2586 = vld [vmem:[%s5 + $0x2c] sm:$0xf]
        %v2587 = vld [vmem:[%s5 + $0x30] sm:$0xf]
        %v2588 = vld [vmem:[%s5 + $0x34] sm:$0xf]
        %v2589 = vld [vmem:[%s5 + $0x38] sm:$0xf]
        %v2590 = vld [vmem:[%s5 + $0x3c] sm:$0xf]
        %v2591 = vld [vmem:[%s5 + $0x40] sm:$0xf]
        %v2592 = vld [vmem:[%s5 + $0x44] sm:$0xf]
        %v2593 = vld [vmem:[%s5 + $0x48] sm:$0xf]
        %v2594 = vld [vmem:[%s5 + $0x4c] sm:$0xf]
        %v2595 = vld [vmem:[%s5 + $0x50] sm:$0xf]
        %v2596 = vld [vmem:[%s5 + $0x54] sm:$0xf]
        %v2597 = vld [vmem:[%s5 + $0x58] sm:$0xf]
        %v2598 = vld [vmem:[%s5 + $0x5c] sm:$0xf]
        %v2599 = vld [vmem:[%s5 + $0x60] sm:$0xf]
        %v2600 = vld [vmem:[%s5 + $0x64] sm:$0xf]
        %v2601 = vld [vmem:[%s5 + $0x68] sm:$0xf]
        %v2602 = vld [vmem:[%s5 + $0x6c] sm:$0xf]
        %v2603 = vld [vmem:[%s5 + $0x70] sm:$0xf]
        %v2604 = vld [vmem:[%s5 + $0x74] sm:$0xf]
        %v2605 = vld [vmem:[%s5 + $0x78] sm:$0xf]
        %v2606 = vld [vmem:[%s5 + $0x7c] sm:$0xf]
        %v2607 = vld [vmem:[%s6] sm:$0x1]
        %v2609 = vlaneseq
        %v2610 = vshrl.u32 %v2609, 7
        %v2611 = vsub.s32 0, %v2610
        %v2612 = vrot.slane %v2607, %v2611
        %v2742 = vunpack.c.l.b16 %v2447
        %v2743 = vunpack.c.h.b16 %v2447
        %v2744 = vunpack.c.l.b16 %v2448
        %v2745 = vunpack.c.h.b16 %v2448
        %v2746 = vunpack.c.l.b16 %v2449
        %v2747 = vunpack.c.h.b16 %v2449
        %v2748 = vunpack.c.l.b16 %v2450
        %v2749 = vunpack.c.h.b16 %v2450
        %v2750 = vunpack.c.l.b16 %v2451
        %v2751 = vunpack.c.h.b16 %v2451
        %v2752 = vunpack.c.l.b16 %v2452
        %v2753 = vunpack.c.h.b16 %v2452
        %v2754 = vunpack.c.l.b16 %v2453
        %v2755 = vunpack.c.h.b16 %v2453
        %v2756 = vunpack.c.l.b16 %v2454
        %v2757 = vunpack.c.h.b16 %v2454
        %v2758 = vunpack.c.l.b16 %v2455
        %v2759 = vunpack.c.h.b16 %v2455
        %v2760 = vunpack.c.l.b16 %v2456
        %v2761 = vunpack.c.h.b16 %v2456
        %v2762 = vunpack.c.l.b16 %v2457
        %v2763 = vunpack.c.h.b16 %v2457
        %v2764 = vunpack.c.l.b16 %v2458
        %v2765 = vunpack.c.h.b16 %v2458
        %v2766 = vunpack.c.l.b16 %v2459
        %v2767 = vunpack.c.h.b16 %v2459
        %v2768 = vunpack.c.l.b16 %v2460
        %v2769 = vunpack.c.h.b16 %v2460
        %v2770 = vunpack.c.l.b16 %v2461
        %v2771 = vunpack.c.h.b16 %v2461
        %v2772 = vunpack.c.l.b16 %v2462
        %v2773 = vunpack.c.h.b16 %v2462
        %v2774 = vunpack.c.l.b16 %v2463
        %v2775 = vunpack.c.h.b16 %v2463
        %v2776 = vunpack.c.l.b16 %v2464
        %v2777 = vunpack.c.h.b16 %v2464
        %v2778 = vunpack.c.l.b16 %v2465
        %v2779 = vunpack.c.h.b16 %v2465
        %v2780 = vunpack.c.l.b16 %v2466
        %v2781 = vunpack.c.h.b16 %v2466
        %v2782 = vunpack.c.l.b16 %v2467
        %v2783 = vunpack.c.h.b16 %v2467
        %v2784 = vunpack.c.l.b16 %v2468
        %v2785 = vunpack.c.h.b16 %v2468
        %v2786 = vunpack.c.l.b16 %v2469
        %v2787 = vunpack.c.h.b16 %v2469
        %v2788 = vunpack.c.l.b16 %v2470
        %v2789 = vunpack.c.h.b16 %v2470
        %v2790 = vunpack.c.l.b16 %v2471
        %v2791 = vunpack.c.h.b16 %v2471
        %v2792 = vunpack.c.l.b16 %v2472
        %v2793 = vunpack.c.h.b16 %v2472
        %v2794 = vunpack.c.l.b16 %v2473
        %v2795 = vunpack.c.h.b16 %v2473
        %v2796 = vunpack.c.l.b16 %v2474
        %v2797 = vunpack.c.h.b16 %v2474
        %v2798 = vunpack.c.l.b16 %v2475
        %v2799 = vunpack.c.h.b16 %v2475
        %v2800 = vunpack.c.l.b16 %v2476
        %v2801 = vunpack.c.h.b16 %v2476
        %v2802 = vunpack.c.l.b16 %v2477
        %v2803 = vunpack.c.h.b16 %v2477
        %v2804 = vunpack.c.l.b16 %v2478
        %v2805 = vunpack.c.h.b16 %v2478
        %v2806 = vunpack.c.l.b16 %v2479
        %v2807 = vunpack.c.h.b16 %v2479
        %v2808 = vunpack.c.l.b16 %v2480
        %v2809 = vunpack.c.h.b16 %v2480
        %v2810 = vunpack.c.l.b16 %v2481
        %v2811 = vunpack.c.h.b16 %v2481
        %v2812 = vunpack.c.l.b16 %v2482
        %v2813 = vunpack.c.h.b16 %v2482
        %v2814 = vunpack.c.l.b16 %v2483
        %v2815 = vunpack.c.h.b16 %v2483
        %v2816 = vunpack.c.l.b16 %v2484
        %v2817 = vunpack.c.h.b16 %v2484
        %v2818 = vunpack.c.l.b16 %v2485
        %v2819 = vunpack.c.h.b16 %v2485
        %v2820 = vunpack.c.l.b16 %v2486
        %v2821 = vunpack.c.h.b16 %v2486
        %v2822 = vunpack.c.l.b16 %v2487
        %v2823 = vunpack.c.h.b16 %v2487
        %v2824 = vunpack.c.l.b16 %v2488
        %v2825 = vunpack.c.h.b16 %v2488
        %v2826 = vunpack.c.l.b16 %v2489
        %v2827 = vunpack.c.h.b16 %v2489
        %v2828 = vunpack.c.l.b16 %v2490
        %v2829 = vunpack.c.h.b16 %v2490
        %v2830 = vunpack.c.l.b16 %v2491
        %v2831 = vunpack.c.h.b16 %v2491
        %v2832 = vunpack.c.l.b16 %v2492
        %v2833 = vunpack.c.h.b16 %v2492
        %v2834 = vunpack.c.l.b16 %v2493
        %v2835 = vunpack.c.h.b16 %v2493
        %v2836 = vunpack.c.l.b16 %v2494
        %v2837 = vunpack.c.h.b16 %v2494
        %v2838 = vunpack.c.l.b16 %v2495
        %v2839 = vunpack.c.h.b16 %v2495
        %v2840 = vunpack.c.l.b16 %v2496
        %v2841 = vunpack.c.h.b16 %v2496
        %v2842 = vunpack.c.l.b16 %v2497
        %v2843 = vunpack.c.h.b16 %v2497
        %v2844 = vunpack.c.l.b16 %v2498
        %v2845 = vunpack.c.h.b16 %v2498
        %v2846 = vunpack.c.l.b16 %v2499
        %v2847 = vunpack.c.h.b16 %v2499
        %v2848 = vunpack.c.l.b16 %v2500
        %v2849 = vunpack.c.h.b16 %v2500
        %v2850 = vunpack.c.l.b16 %v2501
        %v2851 = vunpack.c.h.b16 %v2501
        %v2852 = vunpack.c.l.b16 %v2502
        %v2853 = vunpack.c.h.b16 %v2502
        %v2854 = vunpack.c.l.b16 %v2503
        %v2855 = vunpack.c.h.b16 %v2503
        %v2856 = vunpack.c.l.b16 %v2504
        %v2857 = vunpack.c.h.b16 %v2504
        %v2858 = vunpack.c.l.b16 %v2505
        %v2859 = vunpack.c.h.b16 %v2505
        %v2860 = vunpack.c.l.b16 %v2506
        %v2861 = vunpack.c.h.b16 %v2506
        %v2862 = vunpack.c.l.b16 %v2507
        %v2863 = vunpack.c.h.b16 %v2507
        %v2864 = vunpack.c.l.b16 %v2508
        %v2865 = vunpack.c.h.b16 %v2508
        %v2866 = vunpack.c.l.b16 %v2509
        %v2867 = vunpack.c.h.b16 %v2509
        %v2868 = vunpack.c.l.b16 %v2510
        %v2869 = vunpack.c.h.b16 %v2510
        %v2870 = vunpack.c.l.b16 %v2511
        %v2871 = vunpack.c.h.b16 %v2511
        %v2872 = vunpack.c.l.b16 %v2512
        %v2873 = vunpack.c.h.b16 %v2512
        %v2874 = vunpack.c.l.b16 %v2513
        %v2875 = vunpack.c.h.b16 %v2513
        %v2876 = vunpack.c.l.b16 %v2514
        %v2877 = vunpack.c.h.b16 %v2514
        %v2878 = vunpack.c.l.b16 %v2515
        %v2879 = vunpack.c.h.b16 %v2515
        %v2880 = vunpack.c.l.b16 %v2516
        %v2881 = vunpack.c.h.b16 %v2516
        %v2882 = vunpack.c.l.b16 %v2517
        %v2883 = vunpack.c.h.b16 %v2517
        %v2884 = vunpack.c.l.b16 %v2518
        %v2885 = vunpack.c.h.b16 %v2518
        %v2886 = vunpack.c.l.b16 %v2519
        %v2887 = vunpack.c.h.b16 %v2519
        %v2888 = vunpack.c.l.b16 %v2520
        %v2889 = vunpack.c.h.b16 %v2520
        %v2890 = vunpack.c.l.b16 %v2521
        %v2891 = vunpack.c.h.b16 %v2521
        %v2892 = vunpack.c.l.b16 %v2522
        %v2893 = vunpack.c.h.b16 %v2522
        %v2894 = vunpack.c.l.b16 %v2523
        %v2895 = vunpack.c.h.b16 %v2523
        %v2896 = vunpack.c.l.b16 %v2524
        %v2897 = vunpack.c.h.b16 %v2524
        %v2898 = vunpack.c.l.b16 %v2525
        %v2899 = vunpack.c.h.b16 %v2525
        %v2900 = vunpack.c.l.b16 %v2526
        %v2901 = vunpack.c.h.b16 %v2526
        %v2902 = vunpack.c.l.b16 %v2527
        %v2903 = vunpack.c.h.b16 %v2527
        %v2904 = vunpack.c.l.b16 %v2528
        %v2905 = vunpack.c.h.b16 %v2528
        %v2906 = vunpack.c.l.b16 %v2529
        %v2907 = vunpack.c.h.b16 %v2529
        %v2908 = vunpack.c.l.b16 %v2530
        %v2909 = vunpack.c.h.b16 %v2530
        %v2910 = vunpack.c.l.b16 %v2531
        %v2911 = vunpack.c.h.b16 %v2531
        %v2912 = vunpack.c.l.b16 %v2532
        %v2913 = vunpack.c.h.b16 %v2532
        %v2914 = vunpack.c.l.b16 %v2533
        %v2915 = vunpack.c.h.b16 %v2533
        %v2916 = vunpack.c.l.b16 %v2534
        %v2917 = vunpack.c.h.b16 %v2534
        %v2918 = vunpack.c.l.b16 %v2535
        %v2919 = vunpack.c.h.b16 %v2535
        %v2920 = vunpack.c.l.b16 %v2536
        %v2921 = vunpack.c.h.b16 %v2536
        %v2922 = vunpack.c.l.b16 %v2537
        %v2923 = vunpack.c.h.b16 %v2537
        %v2924 = vunpack.c.l.b16 %v2538
        %v2925 = vunpack.c.h.b16 %v2538
        %v2926 = vunpack.c.l.b16 %v2539
        %v2927 = vunpack.c.h.b16 %v2539
        %v2928 = vunpack.c.l.b16 %v2540
        %v2929 = vunpack.c.h.b16 %v2540
        %v2930 = vunpack.c.l.b16 %v2541
        %v2931 = vunpack.c.h.b16 %v2541
        %v2932 = vunpack.c.l.b16 %v2542
        %v2933 = vunpack.c.h.b16 %v2542
        %v2934 = vunpack.c.l.b16 %v2543
        %v2935 = vunpack.c.h.b16 %v2543
        %v2936 = vunpack.c.l.b16 %v2544
        %v2937 = vunpack.c.h.b16 %v2544
        %v2938 = vunpack.c.l.b16 %v2545
        %v2939 = vunpack.c.h.b16 %v2545
        %v2940 = vunpack.c.l.b16 %v2546
        %v2941 = vunpack.c.h.b16 %v2546
        %v2942 = vunpack.c.l.b16 %v2547
        %v2943 = vunpack.c.h.b16 %v2547
        %v2944 = vunpack.c.l.b16 %v2548
        %v2945 = vunpack.c.h.b16 %v2548
        %v2946 = vunpack.c.l.b16 %v2549
        %v2947 = vunpack.c.h.b16 %v2549
        %v2948 = vunpack.c.l.b16 %v2550
        %v2949 = vunpack.c.h.b16 %v2550
        %v2950 = vunpack.c.l.b16 %v2551
        %v2951 = vunpack.c.h.b16 %v2551
        %v2952 = vunpack.c.l.b16 %v2552
        %v2953 = vunpack.c.h.b16 %v2552
        %v2954 = vunpack.c.l.b16 %v2553
        %v2955 = vunpack.c.h.b16 %v2553
        %v2956 = vunpack.c.l.b16 %v2554
        %v2957 = vunpack.c.h.b16 %v2554
        %v2958 = vunpack.c.l.b16 %v2555
        %v2959 = vunpack.c.h.b16 %v2555
        %v2960 = vunpack.c.l.b16 %v2556
        %v2961 = vunpack.c.h.b16 %v2556
        %v2962 = vunpack.c.l.b16 %v2557
        %v2963 = vunpack.c.h.b16 %v2557
        %v2964 = vunpack.c.l.b16 %v2558
        %v2965 = vunpack.c.h.b16 %v2558
        %v2966 = vunpack.c.l.b16 %v2559
        %v2967 = vunpack.c.h.b16 %v2559
        %v2968 = vunpack.c.l.b16 %v2560
        %v2969 = vunpack.c.h.b16 %v2560
        %v2970 = vunpack.c.l.b16 %v2561
        %v2971 = vunpack.c.h.b16 %v2561
        %v2972 = vunpack.c.l.b16 %v2562
        %v2973 = vunpack.c.h.b16 %v2562
        %v2974 = vunpack.c.l.b16 %v2563
        %v2975 = vunpack.c.h.b16 %v2563
        %v2976 = vunpack.c.l.b16 %v2564
        %v2977 = vunpack.c.h.b16 %v2564
        %v2978 = vunpack.c.l.b16 %v2565
        %v2979 = vunpack.c.h.b16 %v2565
        %v2980 = vunpack.c.l.b16 %v2566
        %v2981 = vunpack.c.h.b16 %v2566
        %v2982 = vunpack.c.l.b16 %v2567
        %v2983 = vunpack.c.h.b16 %v2567
        %v2984 = vunpack.c.l.b16 %v2568
        %v2985 = vunpack.c.h.b16 %v2568
        %v2986 = vunpack.c.l.b16 %v2569
        %v2987 = vunpack.c.h.b16 %v2569
        %v2988 = vunpack.c.l.b16 %v2570
        %v2989 = vunpack.c.h.b16 %v2570
        %v2990 = vunpack.c.l.b16 %v2571
        %v2991 = vunpack.c.h.b16 %v2571
        %v2992 = vunpack.c.l.b16 %v2572
        %v2993 = vunpack.c.h.b16 %v2572
        %v2994 = vunpack.c.l.b16 %v2573
        %v2995 = vunpack.c.h.b16 %v2573
        %v2996 = vunpack.c.l.b16 %v2574
        %v2997 = vunpack.c.h.b16 %v2574
        %v2998 = vpack.c.b16 %v2744, %v2742
        %v2999 = vpack.c.b16 %v2745, %v2743
        %v3000 = vpack.c.b16 %v2748, %v2746
        %v3001 = vpack.c.b16 %v2749, %v2747
        %v3002 = vpack.c.b16 %v2752, %v2750
        %v3003 = vpack.c.b16 %v2753, %v2751
        %v3004 = vpack.c.b16 %v2756, %v2754
        %v3005 = vpack.c.b16 %v2757, %v2755
        %v3006 = vpack.c.b16 %v2760, %v2758
        %v3007 = vpack.c.b16 %v2761, %v2759
        %v3008 = vpack.c.b16 %v2764, %v2762
        %v3009 = vpack.c.b16 %v2765, %v2763
        %v3010 = vpack.c.b16 %v2768, %v2766
        %v3011 = vpack.c.b16 %v2769, %v2767
        %v3012 = vpack.c.b16 %v2772, %v2770
        %v3013 = vpack.c.b16 %v2773, %v2771
        %v3014 = vpack.c.b16 %v2776, %v2774
        %v3015 = vpack.c.b16 %v2777, %v2775
        %v3016 = vpack.c.b16 %v2780, %v2778
        %v3017 = vpack.c.b16 %v2781, %v2779
        %v3018 = vpack.c.b16 %v2784, %v2782
        %v3019 = vpack.c.b16 %v2785, %v2783
        %v3020 = vpack.c.b16 %v2788, %v2786
        %v3021 = vpack.c.b16 %v2789, %v2787
        %v3022 = vpack.c.b16 %v2792, %v2790
        %v3023 = vpack.c.b16 %v2793, %v2791
        %v3024 = vpack.c.b16 %v2796, %v2794
        %v3025 = vpack.c.b16 %v2797, %v2795
        %v3026 = vpack.c.b16 %v2800, %v2798
        %v3027 = vpack.c.b16 %v2801, %v2799
        %v3028 = vpack.c.b16 %v2804, %v2802
        %v3029 = vpack.c.b16 %v2805, %v2803
        %v3030 = vpack.c.b16 %v2808, %v2806
        %v3031 = vpack.c.b16 %v2809, %v2807
        %v3032 = vpack.c.b16 %v2812, %v2810
        %v3033 = vpack.c.b16 %v2813, %v2811
        %v3034 = vpack.c.b16 %v2816, %v2814
        %v3035 = vpack.c.b16 %v2817, %v2815
        %v3036 = vpack.c.b16 %v2820, %v2818
        %v3037 = vpack.c.b16 %v2821, %v2819
        %v3038 = vpack.c.b16 %v2824, %v2822
        %v3039 = vpack.c.b16 %v2825, %v2823
        %v3040 = vpack.c.b16 %v2828, %v2826
        %v3041 = vpack.c.b16 %v2829, %v2827
        %v3042 = vpack.c.b16 %v2832, %v2830
        %v3043 = vpack.c.b16 %v2833, %v2831
        %v3044 = vpack.c.b16 %v2836, %v2834
        %v3045 = vpack.c.b16 %v2837, %v2835
        %v3046 = vpack.c.b16 %v2840, %v2838
        %v3047 = vpack.c.b16 %v2841, %v2839
        %v3048 = vpack.c.b16 %v2844, %v2842
        %v3049 = vpack.c.b16 %v2845, %v2843
        %v3050 = vpack.c.b16 %v2848, %v2846
        %v3051 = vpack.c.b16 %v2849, %v2847
        %v3052 = vpack.c.b16 %v2852, %v2850
        %v3053 = vpack.c.b16 %v2853, %v2851
        %v3054 = vpack.c.b16 %v2856, %v2854
        %v3055 = vpack.c.b16 %v2857, %v2855
        %v3056 = vpack.c.b16 %v2860, %v2858
        %v3057 = vpack.c.b16 %v2861, %v2859
        %v3058 = vpack.c.b16 %v2864, %v2862
        %v3059 = vpack.c.b16 %v2865, %v2863
        %v3060 = vpack.c.b16 %v2868, %v2866
        %v3061 = vpack.c.b16 %v2869, %v2867
        %v3062 = vpack.c.b16 %v2872, %v2870
        %v3063 = vpack.c.b16 %v2873, %v2871
        %v3064 = vpack.c.b16 %v2876, %v2874
        %v3065 = vpack.c.b16 %v2877, %v2875
        %v3066 = vpack.c.b16 %v2880, %v2878
        %v3067 = vpack.c.b16 %v2881, %v2879
        %v3068 = vpack.c.b16 %v2884, %v2882
        %v3069 = vpack.c.b16 %v2885, %v2883
        %v3070 = vpack.c.b16 %v2888, %v2886
        %v3071 = vpack.c.b16 %v2889, %v2887
        %v3072 = vpack.c.b16 %v2892, %v2890
        %v3073 = vpack.c.b16 %v2893, %v2891
        %v3074 = vpack.c.b16 %v2896, %v2894
        %v3075 = vpack.c.b16 %v2897, %v2895
        %v3076 = vpack.c.b16 %v2900, %v2898
        %v3077 = vpack.c.b16 %v2901, %v2899
        %v3078 = vpack.c.b16 %v2904, %v2902
        %v3079 = vpack.c.b16 %v2905, %v2903
        %v3080 = vpack.c.b16 %v2908, %v2906
        %v3081 = vpack.c.b16 %v2909, %v2907
        %v3082 = vpack.c.b16 %v2912, %v2910
        %v3083 = vpack.c.b16 %v2913, %v2911
        %v3084 = vpack.c.b16 %v2916, %v2914
        %v3085 = vpack.c.b16 %v2917, %v2915
        %v3086 = vpack.c.b16 %v2920, %v2918
        %v3087 = vpack.c.b16 %v2921, %v2919
        %v3088 = vpack.c.b16 %v2924, %v2922
        %v3089 = vpack.c.b16 %v2925, %v2923
        %v3090 = vpack.c.b16 %v2928, %v2926
        %v3091 = vpack.c.b16 %v2929, %v2927
        %v3092 = vpack.c.b16 %v2932, %v2930
        %v3093 = vpack.c.b16 %v2933, %v2931
        %v3094 = vpack.c.b16 %v2936, %v2934
        %v3095 = vpack.c.b16 %v2937, %v2935
        %v3096 = vpack.c.b16 %v2940, %v2938
        %v3097 = vpack.c.b16 %v2941, %v2939
        %v3098 = vpack.c.b16 %v2944, %v2942
        %v3099 = vpack.c.b16 %v2945, %v2943
        %v3100 = vpack.c.b16 %v2948, %v2946
        %v3101 = vpack.c.b16 %v2949, %v2947
        %v3102 = vpack.c.b16 %v2952, %v2950
        %v3103 = vpack.c.b16 %v2953, %v2951
        %v3104 = vpack.c.b16 %v2956, %v2954
        %v3105 = vpack.c.b16 %v2957, %v2955
        %v3106 = vpack.c.b16 %v2960, %v2958
        %v3107 = vpack.c.b16 %v2961, %v2959
        %v3108 = vpack.c.b16 %v2964, %v2962
        %v3109 = vpack.c.b16 %v2965, %v2963
        %v3110 = vpack.c.b16 %v2968, %v2966
        %v3111 = vpack.c.b16 %v2969, %v2967
        %v3112 = vpack.c.b16 %v2972, %v2970
        %v3113 = vpack.c.b16 %v2973, %v2971
        %v3114 = vpack.c.b16 %v2976, %v2974
        %v3115 = vpack.c.b16 %v2977, %v2975
        %v3116 = vpack.c.b16 %v2980, %v2978
        %v3117 = vpack.c.b16 %v2981, %v2979
        %v3118 = vpack.c.b16 %v2984, %v2982
        %v3119 = vpack.c.b16 %v2985, %v2983
        %v3120 = vpack.c.b16 %v2988, %v2986
        %v3121 = vpack.c.b16 %v2989, %v2987
        %v3122 = vpack.c.b16 %v2992, %v2990
        %v3123 = vpack.c.b16 %v2993, %v2991
        %v3124 = vpack.c.b16 %v2996, %v2994
        %v3125 = vpack.c.b16 %v2997, %v2995
        %v3286 = vunpack.c.l.b16 %v2575
        %v3287 = vunpack.c.l.b16 %v2576
        %v3288 = vunpack.c.l.b16 %v2577
        %v3289 = vunpack.c.l.b16 %v2578
        %v3290 = vunpack.c.l.b16 %v2579
        %v3291 = vunpack.c.l.b16 %v2580
        %v3292 = vunpack.c.l.b16 %v2581
        %v3293 = vunpack.c.l.b16 %v2582
        %v3294 = vunpack.c.l.b16 %v2583
        %v3295 = vunpack.c.l.b16 %v2584
        %v3296 = vunpack.c.l.b16 %v2585
        %v3297 = vunpack.c.l.b16 %v2586
        %v3298 = vunpack.c.l.b16 %v2587
        %v3299 = vunpack.c.l.b16 %v2588
        %v3300 = vunpack.c.l.b16 %v2589
        %v3301 = vunpack.c.l.b16 %v2590
        %v3302 = vunpack.c.l.b16 %v2591
        %v3303 = vunpack.c.l.b16 %v2592
        %v3304 = vunpack.c.l.b16 %v2593
        %v3305 = vunpack.c.l.b16 %v2594
        %v3306 = vunpack.c.l.b16 %v2595
        %v3307 = vunpack.c.l.b16 %v2596
        %v3308 = vunpack.c.l.b16 %v2597
        %v3309 = vunpack.c.l.b16 %v2598
        %v3310 = vunpack.c.l.b16 %v2599
        %v3311 = vunpack.c.l.b16 %v2600
        %v3312 = vunpack.c.l.b16 %v2601
        %v3313 = vunpack.c.l.b16 %v2602
        %v3314 = vunpack.c.l.b16 %v2603
        %v3315 = vunpack.c.l.b16 %v2604
        %v3316 = vunpack.c.l.b16 %v2605
        %v3317 = vunpack.c.l.b16 %v2606
        %v3318 = vpack.c.b16 %v3287, %v3286
        %v3319 = vpack.c.b16 %v3289, %v3288
        %v3320 = vpack.c.b16 %v3291, %v3290
        %v3321 = vpack.c.b16 %v3293, %v3292
        %v3322 = vpack.c.b16 %v3295, %v3294
        %v3323 = vpack.c.b16 %v3297, %v3296
        %v3324 = vpack.c.b16 %v3299, %v3298
        %v3325 = vpack.c.b16 %v3301, %v3300
        %v3326 = vpack.c.b16 %v3303, %v3302
        %v3327 = vpack.c.b16 %v3305, %v3304
        %v3328 = vpack.c.b16 %v3307, %v3306
        %v3329 = vpack.c.b16 %v3309, %v3308
        %v3330 = vpack.c.b16 %v3311, %v3310
        %v3331 = vpack.c.b16 %v3313, %v3312
        %v3332 = vpack.c.b16 %v3315, %v3314
        %v3333 = vpack.c.b16 %v3317, %v3316
        %3350 = vmatprep.subr.bf16.mxu0 0
        %3351 = vmatpush1.bf16.msra.mxu0 %v3325
        %3352 = vmatprep.subr.bf16.mxu0 0
        %3353 = vmatpush1.bf16.msra.mxu0 %v3324
        %3354 = vmatprep.subr.bf16.mxu0 0
        %3355 = vmatpush1.bf16.msra.mxu0 %v3323
        %3356 = vmatprep.subr.bf16.mxu0 0
        %3357 = vmatpush1.bf16.msra.mxu0 %v3322
        %3358 = vmatprep.subr.bf16.mxu0 0
        %3359 = vmatpush1.bf16.msra.mxu0 %v3321
        %3360 = vmatprep.subr.bf16.mxu0 0
        %3361 = vmatpush1.bf16.msra.mxu0 %v3320
        %3362 = vmatprep.subr.bf16.mxu0 0
        %3363 = vmatpush1.bf16.msra.mxu0 %v3319
        %3364 = vmatprep.subr.bf16.mxu0 0
        %3365 = vmatpush1.bf16.msra.mxu0 %v3318
        %3366 = vmatprep.subr.bf16.mxu0 0
        %3367 = vmatpush2.bf16.msra.mxu0 %v3333
        %3368 = vmatprep.subr.bf16.mxu0 0
        %3369 = vmatpush2.bf16.msra.mxu0 %v3332
        %3370 = vmatprep.subr.bf16.mxu0 0
        %3371 = vmatpush2.bf16.msra.mxu0 %v3331
        %3372 = vmatprep.subr.bf16.mxu0 0
        %3373 = vmatpush2.bf16.msra.mxu0 %v3330
        %3374 = vmatprep.subr.bf16.mxu0 0
        %3375 = vmatpush2.bf16.msra.mxu0 %v3329
        %3376 = vmatprep.subr.bf16.mxu0 0
        %3377 = vmatpush2.bf16.msra.mxu0 %v3328
        %3378 = vmatprep.subr.bf16.mxu0 0
        %3379 = vmatpush2.bf16.msra.mxu0 %v3327
        %3380 = vmatprep.subr.bf16.mxu0 0
        %3381 = vmatpush2.bf16.msra.mxu0 %v3326
        %3382 = vmatprep.mubr.bf16.mxu0 %v2999
        %3383 = vmatmul.mubr.bf16.gmra.mxu0 %v2998
        %v3384 = vpop.f32.mrf.mxu0
        %v3385 = vadd.f32 %v2612, %v3384
        %v3386 = vpop.f32.mrf.mxu0
        %v3387 = vpop.f32.mrf.mxu0
        %v3388 = vadd.f32 %v2612, %v3387
        %v3389 = vpop.f32.mrf.mxu0
        %3390 = vmatprep.mubr.bf16.mxu0 %v3001
        %3391 = vmatmul.mubr.bf16.gmra.mxu0 %v3000
        %v3392 = vpop.f32.mrf.mxu0
        %v3393 = vadd.f32 %v2612, %v3392
        %v3394 = vpop.f32.mrf.mxu0
        %v3395 = vpop.f32.mrf.mxu0
        %v3396 = vadd.f32 %v2612, %v3395
        %v3397 = vpop.f32.mrf.mxu0
        %3398 = vmatprep.mubr.bf16.mxu0 %v3003
        %3399 = vmatmul.mubr.bf16.gmra.mxu0 %v3002
        %v3400 = vpop.f32.mrf.mxu0
        %v3401 = vadd.f32 %v2612, %v3400
        %v3402 = vpop.f32.mrf.mxu0
        %v3403 = vpop.f32.mrf.mxu0
        %v3404 = vadd.f32 %v2612, %v3403
        %v3405 = vpop.f32.mrf.mxu0
        %3406 = vmatprep.mubr.bf16.mxu0 %v3005
        %3407 = vmatmul.mubr.bf16.gmra.mxu0 %v3004
        %v3408 = vpop.f32.mrf.mxu0
        %v3409 = vadd.f32 %v2612, %v3408
        %v3410 = vpop.f32.mrf.mxu0
        %v3411 = vpop.f32.mrf.mxu0
        %v3412 = vadd.f32 %v2612, %v3411
        %v3413 = vpop.f32.mrf.mxu0
        %3414 = vmatprep.mubr.bf16.mxu0 %v3007
        %3415 = vmatmul.mubr.bf16.gmra.mxu0 %v3006
        %v3416 = vpop.f32.mrf.mxu0
        %v3417 = vadd.f32 %v2612, %v3416
        %v3418 = vpop.f32.mrf.mxu0
        %v3419 = vpop.f32.mrf.mxu0
        %v3420 = vadd.f32 %v2612, %v3419
        %v3421 = vpop.f32.mrf.mxu0
        %3422 = vmatprep.mubr.bf16.mxu0 %v3009
        %3423 = vmatmul.mubr.bf16.gmra.mxu0 %v3008
        %v3424 = vpop.f32.mrf.mxu0
        %v3425 = vadd.f32 %v2612, %v3424
        %v3426 = vpop.f32.mrf.mxu0
        %v3427 = vpop.f32.mrf.mxu0
        %v3428 = vadd.f32 %v2612, %v3427
        %v3429 = vpop.f32.mrf.mxu0
        %3430 = vmatprep.mubr.bf16.mxu0 %v3011
        %3431 = vmatmul.mubr.bf16.gmra.mxu0 %v3010
        %v3432 = vpop.f32.mrf.mxu0
        %v3433 = vadd.f32 %v2612, %v3432
        %v3434 = vpop.f32.mrf.mxu0
        %v3435 = vpop.f32.mrf.mxu0
        %v3436 = vadd.f32 %v2612, %v3435
        %v3437 = vpop.f32.mrf.mxu0
        %3438 = vmatprep.mubr.bf16.mxu0 %v3013
        %3439 = vmatmul.mubr.bf16.gmra.mxu0 %v3012
        %v3440 = vpop.f32.mrf.mxu0
        %v3441 = vadd.f32 %v2612, %v3440
        %v3442 = vpop.f32.mrf.mxu0
        %v3443 = vpop.f32.mrf.mxu0
        %v3444 = vadd.f32 %v2612, %v3443
        %v3445 = vpop.f32.mrf.mxu0
        %3446 = vmatprep.mubr.bf16.mxu0 %v3015
        %3447 = vmatmul.mubr.bf16.gmra.mxu0 %v3014
        %v3448 = vpop.f32.mrf.mxu0
        %v3449 = vadd.f32 %v2612, %v3448
        %v3450 = vpop.f32.mrf.mxu0
        %v3451 = vpop.f32.mrf.mxu0
        %v3452 = vadd.f32 %v2612, %v3451
        %v3453 = vpop.f32.mrf.mxu0
        %3454 = vmatprep.mubr.bf16.mxu0 %v3017
        %3455 = vmatmul.mubr.bf16.gmra.mxu0 %v3016
        %v3456 = vpop.f32.mrf.mxu0
        %v3457 = vadd.f32 %v2612, %v3456
        %v3458 = vpop.f32.mrf.mxu0
        %v3459 = vpop.f32.mrf.mxu0
        %v3460 = vadd.f32 %v2612, %v3459
        %v3461 = vpop.f32.mrf.mxu0
        %3462 = vmatprep.mubr.bf16.mxu0 %v3019
        %3463 = vmatmul.mubr.bf16.gmra.mxu0 %v3018
        %v3464 = vpop.f32.mrf.mxu0
        %v3465 = vadd.f32 %v2612, %v3464
        %v3466 = vpop.f32.mrf.mxu0
        %v3467 = vpop.f32.mrf.mxu0
        %v3468 = vadd.f32 %v2612, %v3467
        %v3469 = vpop.f32.mrf.mxu0
        %3470 = vmatprep.mubr.bf16.mxu0 %v3021
        %3471 = vmatmul.mubr.bf16.gmra.mxu0 %v3020
        %v3472 = vpop.f32.mrf.mxu0
        %v3473 = vadd.f32 %v2612, %v3472
        %v3474 = vpop.f32.mrf.mxu0
        %v3475 = vpop.f32.mrf.mxu0
        %v3476 = vadd.f32 %v2612, %v3475
        %v3477 = vpop.f32.mrf.mxu0
        %3478 = vmatprep.mubr.bf16.mxu0 %v3023
        %3479 = vmatmul.mubr.bf16.gmra.mxu0 %v3022
        %v3480 = vpop.f32.mrf.mxu0
        %v3481 = vadd.f32 %v2612, %v3480
        %v3482 = vpop.f32.mrf.mxu0
        %v3483 = vpop.f32.mrf.mxu0
        %v3484 = vadd.f32 %v2612, %v3483
        %v3485 = vpop.f32.mrf.mxu0
        %3486 = vmatprep.mubr.bf16.mxu0 %v3025
        %3487 = vmatmul.mubr.bf16.gmra.mxu0 %v3024
        %v3488 = vpop.f32.mrf.mxu0
        %v3489 = vadd.f32 %v2612, %v3488
        %v3490 = vpop.f32.mrf.mxu0
        %v3491 = vpop.f32.mrf.mxu0
        %v3492 = vadd.f32 %v2612, %v3491
        %v3493 = vpop.f32.mrf.mxu0
        %3494 = vmatprep.mubr.bf16.mxu0 %v3027
        %3495 = vmatmul.mubr.bf16.gmra.mxu0 %v3026
        %v3496 = vpop.f32.mrf.mxu0
        %v3497 = vadd.f32 %v2612, %v3496
        %v3498 = vpop.f32.mrf.mxu0
        %v3499 = vpop.f32.mrf.mxu0
        %v3500 = vadd.f32 %v2612, %v3499
        %v3501 = vpop.f32.mrf.mxu0
        %3502 = vmatprep.mubr.bf16.mxu0 %v3029
        %3503 = vmatmul.mubr.bf16.gmra.mxu0 %v3028
        %v3504 = vpop.f32.mrf.mxu0
        %v3505 = vadd.f32 %v2612, %v3504
        %v3506 = vpop.f32.mrf.mxu0
        %v3507 = vpop.f32.mrf.mxu0
        %v3508 = vadd.f32 %v2612, %v3507
        %v3509 = vpop.f32.mrf.mxu0
        %3510 = vmatprep.mubr.bf16.mxu0 %v3031
        %3511 = vmatmul.mubr.bf16.gmra.mxu0 %v3030
        %v3512 = vpop.f32.mrf.mxu0
        %v3513 = vadd.f32 %v2612, %v3512
        %v3514 = vpop.f32.mrf.mxu0
        %v3515 = vpop.f32.mrf.mxu0
        %v3516 = vadd.f32 %v2612, %v3515
        %v3517 = vpop.f32.mrf.mxu0
        %3518 = vmatprep.mubr.bf16.mxu0 %v3033
        %3519 = vmatmul.mubr.bf16.gmra.mxu0 %v3032
        %v3520 = vpop.f32.mrf.mxu0
        %v3521 = vadd.f32 %v2612, %v3520
        %v3522 = vpop.f32.mrf.mxu0
        %v3523 = vpop.f32.mrf.mxu0
        %v3524 = vadd.f32 %v2612, %v3523
        %v3525 = vpop.f32.mrf.mxu0
        %3526 = vmatprep.mubr.bf16.mxu0 %v3035
        %3527 = vmatmul.mubr.bf16.gmra.mxu0 %v3034
        %v3528 = vpop.f32.mrf.mxu0
        %v3529 = vadd.f32 %v2612, %v3528
        %v3530 = vpop.f32.mrf.mxu0
        %v3531 = vpop.f32.mrf.mxu0
        %v3532 = vadd.f32 %v2612, %v3531
        %v3533 = vpop.f32.mrf.mxu0
        %3534 = vmatprep.mubr.bf16.mxu0 %v3037
        %3535 = vmatmul.mubr.bf16.gmra.mxu0 %v3036
        %v3536 = vpop.f32.mrf.mxu0
        %v3537 = vadd.f32 %v2612, %v3536
        %v3538 = vpop.f32.mrf.mxu0
        %v3539 = vpop.f32.mrf.mxu0
        %v3540 = vadd.f32 %v2612, %v3539
        %v3541 = vpop.f32.mrf.mxu0
        %3542 = vmatprep.mubr.bf16.mxu0 %v3039
        %3543 = vmatmul.mubr.bf16.gmra.mxu0 %v3038
        %v3544 = vpop.f32.mrf.mxu0
        %v3545 = vadd.f32 %v2612, %v3544
        %v3546 = vpop.f32.mrf.mxu0
        %v3547 = vpop.f32.mrf.mxu0
        %v3548 = vadd.f32 %v2612, %v3547
        %v3549 = vpop.f32.mrf.mxu0
        %3550 = vmatprep.mubr.bf16.mxu0 %v3041
        %3551 = vmatmul.mubr.bf16.gmra.mxu0 %v3040
        %v3552 = vpop.f32.mrf.mxu0
        %v3553 = vadd.f32 %v2612, %v3552
        %v3554 = vpop.f32.mrf.mxu0
        %v3555 = vpop.f32.mrf.mxu0
        %v3556 = vadd.f32 %v2612, %v3555
        %v3557 = vpop.f32.mrf.mxu0
        %3558 = vmatprep.mubr.bf16.mxu0 %v3043
        %3559 = vmatmul.mubr.bf16.gmra.mxu0 %v3042
        %v3560 = vpop.f32.mrf.mxu0
        %v3561 = vadd.f32 %v2612, %v3560
        %v3562 = vpop.f32.mrf.mxu0
        %v3563 = vpop.f32.mrf.mxu0
        %v3564 = vadd.f32 %v2612, %v3563
        %v3565 = vpop.f32.mrf.mxu0
        %3566 = vmatprep.mubr.bf16.mxu0 %v3045
        %3567 = vmatmul.mubr.bf16.gmra.mxu0 %v3044
        %v3568 = vpop.f32.mrf.mxu0
        %v3569 = vadd.f32 %v2612, %v3568
        %v3570 = vpop.f32.mrf.mxu0
        %v3571 = vpop.f32.mrf.mxu0
        %v3572 = vadd.f32 %v2612, %v3571
        %v3573 = vpop.f32.mrf.mxu0
        %3574 = vmatprep.mubr.bf16.mxu0 %v3047
        %3575 = vmatmul.mubr.bf16.gmra.mxu0 %v3046
        %v3576 = vpop.f32.mrf.mxu0
        %v3577 = vadd.f32 %v2612, %v3576
        %v3578 = vpop.f32.mrf.mxu0
        %v3579 = vpop.f32.mrf.mxu0
        %v3580 = vadd.f32 %v2612, %v3579
        %v3581 = vpop.f32.mrf.mxu0
        %3582 = vmatprep.mubr.bf16.mxu0 %v3049
        %3583 = vmatmul.mubr.bf16.gmra.mxu0 %v3048
        %v3584 = vpop.f32.mrf.mxu0
        %v3585 = vadd.f32 %v2612, %v3584
        %v3586 = vpop.f32.mrf.mxu0
        %v3587 = vpop.f32.mrf.mxu0
        %v3588 = vadd.f32 %v2612, %v3587
        %v3589 = vpop.f32.mrf.mxu0
        %3590 = vmatprep.mubr.bf16.mxu0 %v3051
        %3591 = vmatmul.mubr.bf16.gmra.mxu0 %v3050
        %v3592 = vpop.f32.mrf.mxu0
        %v3593 = vadd.f32 %v2612, %v3592
        %v3594 = vpop.f32.mrf.mxu0
        %v3595 = vpop.f32.mrf.mxu0
        %v3596 = vadd.f32 %v2612, %v3595
        %v3597 = vpop.f32.mrf.mxu0
        %3598 = vmatprep.mubr.bf16.mxu0 %v3053
        %3599 = vmatmul.mubr.bf16.gmra.mxu0 %v3052
        %v3600 = vpop.f32.mrf.mxu0
        %v3601 = vadd.f32 %v2612, %v3600
        %v3602 = vpop.f32.mrf.mxu0
        %v3603 = vpop.f32.mrf.mxu0
        %v3604 = vadd.f32 %v2612, %v3603
        %v3605 = vpop.f32.mrf.mxu0
        %3606 = vmatprep.mubr.bf16.mxu0 %v3055
        %3607 = vmatmul.mubr.bf16.gmra.mxu0 %v3054
        %v3608 = vpop.f32.mrf.mxu0
        %v3609 = vadd.f32 %v2612, %v3608
        %v3610 = vpop.f32.mrf.mxu0
        %v3611 = vpop.f32.mrf.mxu0
        %v3612 = vadd.f32 %v2612, %v3611
        %v3613 = vpop.f32.mrf.mxu0
        %3614 = vmatprep.mubr.bf16.mxu0 %v3057
        %3615 = vmatmul.mubr.bf16.gmra.mxu0 %v3056
        %v3616 = vpop.f32.mrf.mxu0
        %v3617 = vadd.f32 %v2612, %v3616
        %v3618 = vpop.f32.mrf.mxu0
        %v3619 = vpop.f32.mrf.mxu0
        %v3620 = vadd.f32 %v2612, %v3619
        %v3621 = vpop.f32.mrf.mxu0
        %3622 = vmatprep.mubr.bf16.mxu0 %v3059
        %3623 = vmatmul.mubr.bf16.gmra.mxu0 %v3058
        %v3624 = vpop.f32.mrf.mxu0
        %v3625 = vadd.f32 %v2612, %v3624
        %v3626 = vpop.f32.mrf.mxu0
        %v3627 = vpop.f32.mrf.mxu0
        %v3628 = vadd.f32 %v2612, %v3627
        %v3629 = vpop.f32.mrf.mxu0
        %3630 = vmatprep.mubr.bf16.mxu0 %v3061
        %3631 = vmatmul.mubr.bf16.gmra.mxu0 %v3060
        %v3632 = vpop.f32.mrf.mxu0
        %v3633 = vadd.f32 %v2612, %v3632
        %v3634 = vpop.f32.mrf.mxu0
        %v3635 = vpop.f32.mrf.mxu0
        %v3636 = vadd.f32 %v2612, %v3635
        %v3637 = vpop.f32.mrf.mxu0
        %3638 = vmatprep.mubr.bf16.mxu0 %v3063
        %3639 = vmatmul.mubr.bf16.gmra.mxu0 %v3062
        %v3640 = vpop.f32.mrf.mxu0
        %v3641 = vadd.f32 %v2612, %v3640
        %v3642 = vpop.f32.mrf.mxu0
        %v3643 = vpop.f32.mrf.mxu0
        %v3644 = vadd.f32 %v2612, %v3643
        %v3645 = vpop.f32.mrf.mxu0
        %3646 = vmatprep.mubr.bf16.mxu0 %v3065
        %3647 = vmatmul.mubr.bf16.gmra.mxu0 %v3064
        %v3648 = vpop.f32.mrf.mxu0
        %v3649 = vadd.f32 %v2612, %v3648
        %v3650 = vpop.f32.mrf.mxu0
        %v3651 = vpop.f32.mrf.mxu0
        %v3652 = vadd.f32 %v2612, %v3651
        %v3653 = vpop.f32.mrf.mxu0
        %3654 = vmatprep.mubr.bf16.mxu0 %v3067
        %3655 = vmatmul.mubr.bf16.gmra.mxu0 %v3066
        %v3656 = vpop.f32.mrf.mxu0
        %v3657 = vadd.f32 %v2612, %v3656
        %v3658 = vpop.f32.mrf.mxu0
        %v3659 = vpop.f32.mrf.mxu0
        %v3660 = vadd.f32 %v2612, %v3659
        %v3661 = vpop.f32.mrf.mxu0
        %3662 = vmatprep.mubr.bf16.mxu0 %v3069
        %3663 = vmatmul.mubr.bf16.gmra.mxu0 %v3068
        %v3664 = vpop.f32.mrf.mxu0
        %v3665 = vadd.f32 %v2612, %v3664
        %v3666 = vpop.f32.mrf.mxu0
        %v3667 = vpop.f32.mrf.mxu0
        %v3668 = vadd.f32 %v2612, %v3667
        %v3669 = vpop.f32.mrf.mxu0
        %3670 = vmatprep.mubr.bf16.mxu0 %v3071
        %3671 = vmatmul.mubr.bf16.gmra.mxu0 %v3070
        %v3672 = vpop.f32.mrf.mxu0
        %v3673 = vadd.f32 %v2612, %v3672
        %v3674 = vpop.f32.mrf.mxu0
        %v3675 = vpop.f32.mrf.mxu0
        %v3676 = vadd.f32 %v2612, %v3675
        %v3677 = vpop.f32.mrf.mxu0
        %3678 = vmatprep.mubr.bf16.mxu0 %v3073
        %3679 = vmatmul.mubr.bf16.gmra.mxu0 %v3072
        %v3680 = vpop.f32.mrf.mxu0
        %v3681 = vadd.f32 %v2612, %v3680
        %v3682 = vpop.f32.mrf.mxu0
        %v3683 = vpop.f32.mrf.mxu0
        %v3684 = vadd.f32 %v2612, %v3683
        %v3685 = vpop.f32.mrf.mxu0
        %3686 = vmatprep.mubr.bf16.mxu0 %v3075
        %3687 = vmatmul.mubr.bf16.gmra.mxu0 %v3074
        %v3688 = vpop.f32.mrf.mxu0
        %v3689 = vadd.f32 %v2612, %v3688
        %v3690 = vpop.f32.mrf.mxu0
        %v3691 = vpop.f32.mrf.mxu0
        %v3692 = vadd.f32 %v2612, %v3691
        %v3693 = vpop.f32.mrf.mxu0
        %3694 = vmatprep.mubr.bf16.mxu0 %v3077
        %3695 = vmatmul.mubr.bf16.gmra.mxu0 %v3076
        %v3696 = vpop.f32.mrf.mxu0
        %v3697 = vadd.f32 %v2612, %v3696
        %v3698 = vpop.f32.mrf.mxu0
        %v3699 = vpop.f32.mrf.mxu0
        %v3700 = vadd.f32 %v2612, %v3699
        %v3701 = vpop.f32.mrf.mxu0
        %3702 = vmatprep.mubr.bf16.mxu0 %v3079
        %3703 = vmatmul.mubr.bf16.gmra.mxu0 %v3078
        %v3704 = vpop.f32.mrf.mxu0
        %v3705 = vadd.f32 %v2612, %v3704
        %v3706 = vpop.f32.mrf.mxu0
        %v3707 = vpop.f32.mrf.mxu0
        %v3708 = vadd.f32 %v2612, %v3707
        %v3709 = vpop.f32.mrf.mxu0
        %3710 = vmatprep.mubr.bf16.mxu0 %v3081
        %3711 = vmatmul.mubr.bf16.gmra.mxu0 %v3080
        %v3712 = vpop.f32.mrf.mxu0
        %v3713 = vadd.f32 %v2612, %v3712
        %v3714 = vpop.f32.mrf.mxu0
        %v3715 = vpop.f32.mrf.mxu0
        %v3716 = vadd.f32 %v2612, %v3715
        %v3717 = vpop.f32.mrf.mxu0
        %3718 = vmatprep.mubr.bf16.mxu0 %v3083
        %3719 = vmatmul.mubr.bf16.gmra.mxu0 %v3082
        %v3720 = vpop.f32.mrf.mxu0
        %v3721 = vadd.f32 %v2612, %v3720
        %v3722 = vpop.f32.mrf.mxu0
        %v3723 = vpop.f32.mrf.mxu0
        %v3724 = vadd.f32 %v2612, %v3723
        %v3725 = vpop.f32.mrf.mxu0
        %3726 = vmatprep.mubr.bf16.mxu0 %v3085
        %3727 = vmatmul.mubr.bf16.gmra.mxu0 %v3084
        %v3728 = vpop.f32.mrf.mxu0
        %v3729 = vadd.f32 %v2612, %v3728
        %v3730 = vpop.f32.mrf.mxu0
        %v3731 = vpop.f32.mrf.mxu0
        %v3732 = vadd.f32 %v2612, %v3731
        %v3733 = vpop.f32.mrf.mxu0
        %3734 = vmatprep.mubr.bf16.mxu0 %v3087
        %3735 = vmatmul.mubr.bf16.gmra.mxu0 %v3086
        %v3736 = vpop.f32.mrf.mxu0
        %v3737 = vadd.f32 %v2612, %v3736
        %v3738 = vpop.f32.mrf.mxu0
        %v3739 = vpop.f32.mrf.mxu0
        %v3740 = vadd.f32 %v2612, %v3739
        %v3741 = vpop.f32.mrf.mxu0
        %3742 = vmatprep.mubr.bf16.mxu0 %v3089
        %3743 = vmatmul.mubr.bf16.gmra.mxu0 %v3088
        %v3744 = vpop.f32.mrf.mxu0
        %v3745 = vadd.f32 %v2612, %v3744
        %v3746 = vpop.f32.mrf.mxu0
        %v3747 = vpop.f32.mrf.mxu0
        %v3748 = vadd.f32 %v2612, %v3747
        %v3749 = vpop.f32.mrf.mxu0
        %3750 = vmatprep.mubr.bf16.mxu0 %v3091
        %3751 = vmatmul.mubr.bf16.gmra.mxu0 %v3090
        %v3752 = vpop.f32.mrf.mxu0
        %v3753 = vadd.f32 %v2612, %v3752
        %v3754 = vpop.f32.mrf.mxu0
        %v3755 = vpop.f32.mrf.mxu0
        %v3756 = vadd.f32 %v2612, %v3755
        %v3757 = vpop.f32.mrf.mxu0
        %3758 = vmatprep.mubr.bf16.mxu0 %v3093
        %3759 = vmatmul.mubr.bf16.gmra.mxu0 %v3092
        %v3760 = vpop.f32.mrf.mxu0
        %v3761 = vadd.f32 %v2612, %v3760
        %v3762 = vpop.f32.mrf.mxu0
        %v3763 = vpop.f32.mrf.mxu0
        %v3764 = vadd.f32 %v2612, %v3763
        %v3765 = vpop.f32.mrf.mxu0
        %3766 = vmatprep.mubr.bf16.mxu0 %v3095
        %3767 = vmatmul.mubr.bf16.gmra.mxu0 %v3094
        %v3768 = vpop.f32.mrf.mxu0
        %v3769 = vadd.f32 %v2612, %v3768
        %v3770 = vpop.f32.mrf.mxu0
        %v3771 = vpop.f32.mrf.mxu0
        %v3772 = vadd.f32 %v2612, %v3771
        %v3773 = vpop.f32.mrf.mxu0
        %3774 = vmatprep.mubr.bf16.mxu0 %v3097
        %3775 = vmatmul.mubr.bf16.gmra.mxu0 %v3096
        %v3776 = vpop.f32.mrf.mxu0
        %v3777 = vadd.f32 %v2612, %v3776
        %v3778 = vpop.f32.mrf.mxu0
        %v3779 = vpop.f32.mrf.mxu0
        %v3780 = vadd.f32 %v2612, %v3779
        %v3781 = vpop.f32.mrf.mxu0
        %3782 = vmatprep.mubr.bf16.mxu0 %v3099
        %3783 = vmatmul.mubr.bf16.gmra.mxu0 %v3098
        %v3784 = vpop.f32.mrf.mxu0
        %v3785 = vadd.f32 %v2612, %v3784
        %v3786 = vpop.f32.mrf.mxu0
        %v3787 = vpop.f32.mrf.mxu0
        %v3788 = vadd.f32 %v2612, %v3787
        %v3789 = vpop.f32.mrf.mxu0
        %3790 = vmatprep.mubr.bf16.mxu0 %v3101
        %3791 = vmatmul.mubr.bf16.gmra.mxu0 %v3100
        %v3792 = vpop.f32.mrf.mxu0
        %v3793 = vadd.f32 %v2612, %v3792
        %v3794 = vpop.f32.mrf.mxu0
        %v3795 = vpop.f32.mrf.mxu0
        %v3796 = vadd.f32 %v2612, %v3795
        %v3797 = vpop.f32.mrf.mxu0
        %3798 = vmatprep.mubr.bf16.mxu0 %v3103
        %3799 = vmatmul.mubr.bf16.gmra.mxu0 %v3102
        %v3800 = vpop.f32.mrf.mxu0
        %v3801 = vadd.f32 %v2612, %v3800
        %v3802 = vpop.f32.mrf.mxu0
        %v3803 = vpop.f32.mrf.mxu0
        %v3804 = vadd.f32 %v2612, %v3803
        %v3805 = vpop.f32.mrf.mxu0
        %3806 = vmatprep.mubr.bf16.mxu0 %v3105
        %3807 = vmatmul.mubr.bf16.gmra.mxu0 %v3104
        %v3808 = vpop.f32.mrf.mxu0
        %v3809 = vadd.f32 %v2612, %v3808
        %v3810 = vpop.f32.mrf.mxu0
        %v3811 = vpop.f32.mrf.mxu0
        %v3812 = vadd.f32 %v2612, %v3811
        %v3813 = vpop.f32.mrf.mxu0
        %3814 = vmatprep.mubr.bf16.mxu0 %v3107
        %3815 = vmatmul.mubr.bf16.gmra.mxu0 %v3106
        %v3816 = vpop.f32.mrf.mxu0
        %v3817 = vadd.f32 %v2612, %v3816
        %v3818 = vpop.f32.mrf.mxu0
        %v3819 = vpop.f32.mrf.mxu0
        %v3820 = vadd.f32 %v2612, %v3819
        %v3821 = vpop.f32.mrf.mxu0
        %3822 = vmatprep.mubr.bf16.mxu0 %v3109
        %3823 = vmatmul.mubr.bf16.gmra.mxu0 %v3108
        %v3824 = vpop.f32.mrf.mxu0
        %v3825 = vadd.f32 %v2612, %v3824
        %v3826 = vpop.f32.mrf.mxu0
        %v3827 = vpop.f32.mrf.mxu0
        %v3828 = vadd.f32 %v2612, %v3827
        %v3829 = vpop.f32.mrf.mxu0
        %3830 = vmatprep.mubr.bf16.mxu0 %v3111
        %3831 = vmatmul.mubr.bf16.gmra.mxu0 %v3110
        %v3832 = vpop.f32.mrf.mxu0
        %v3833 = vadd.f32 %v2612, %v3832
        %v3834 = vpop.f32.mrf.mxu0
        %v3835 = vpop.f32.mrf.mxu0
        %v3836 = vadd.f32 %v2612, %v3835
        %v3837 = vpop.f32.mrf.mxu0
        %3838 = vmatprep.mubr.bf16.mxu0 %v3113
        %3839 = vmatmul.mubr.bf16.gmra.mxu0 %v3112
        %v3840 = vpop.f32.mrf.mxu0
        %v3841 = vadd.f32 %v2612, %v3840
        %v3842 = vpop.f32.mrf.mxu0
        %v3843 = vpop.f32.mrf.mxu0
        %v3844 = vadd.f32 %v2612, %v3843
        %v3845 = vpop.f32.mrf.mxu0
        %3846 = vmatprep.mubr.bf16.mxu0 %v3115
        %3847 = vmatmul.mubr.bf16.gmra.mxu0 %v3114
        %v3848 = vpop.f32.mrf.mxu0
        %v3849 = vadd.f32 %v2612, %v3848
        %v3850 = vpop.f32.mrf.mxu0
        %v3851 = vpop.f32.mrf.mxu0
        %v3852 = vadd.f32 %v2612, %v3851
        %v3853 = vpop.f32.mrf.mxu0
        %3854 = vmatprep.mubr.bf16.mxu0 %v3117
        %3855 = vmatmul.mubr.bf16.gmra.mxu0 %v3116
        %v3856 = vpop.f32.mrf.mxu0
        %v3857 = vadd.f32 %v2612, %v3856
        %v3858 = vpop.f32.mrf.mxu0
        %v3859 = vpop.f32.mrf.mxu0
        %v3860 = vadd.f32 %v2612, %v3859
        %v3861 = vpop.f32.mrf.mxu0
        %3862 = vmatprep.mubr.bf16.mxu0 %v3119
        %3863 = vmatmul.mubr.bf16.gmra.mxu0 %v3118
        %v3864 = vpop.f32.mrf.mxu0
        %v3865 = vadd.f32 %v2612, %v3864
        %v3866 = vpop.f32.mrf.mxu0
        %v3867 = vpop.f32.mrf.mxu0
        %v3868 = vadd.f32 %v2612, %v3867
        %v3869 = vpop.f32.mrf.mxu0
        %3870 = vmatprep.mubr.bf16.mxu0 %v3121
        %3871 = vmatmul.mubr.bf16.gmra.mxu0 %v3120
        %v3872 = vpop.f32.mrf.mxu0
        %v3873 = vadd.f32 %v2612, %v3872
        %v3874 = vpop.f32.mrf.mxu0
        %v3875 = vpop.f32.mrf.mxu0
        %v3876 = vadd.f32 %v2612, %v3875
        %v3877 = vpop.f32.mrf.mxu0
        %3878 = vmatprep.mubr.bf16.mxu0 %v3123
        %3879 = vmatmul.mubr.bf16.gmra.mxu0 %v3122
        %v3880 = vpop.f32.mrf.mxu0
        %v3881 = vadd.f32 %v2612, %v3880
        %v3882 = vpop.f32.mrf.mxu0
        %v3883 = vpop.f32.mrf.mxu0
        %v3884 = vadd.f32 %v2612, %v3883
        %v3885 = vpop.f32.mrf.mxu0
        %3886 = vmatprep.mubr.bf16.mxu0 %v3125
        %3887 = vmatmul.mubr.bf16.gmra.mxu0 %v3124
        %v3888 = vpop.f32.mrf.mxu0
        %v3889 = vadd.f32 %v2612, %v3888
        %v3890 = vpop.f32.mrf.mxu0
        %v3891 = vpop.f32.mrf.mxu0
        %v3892 = vadd.f32 %v2612, %v3891
        %v3893 = vpop.f32.mrf.mxu0
        %3894 = vdwg.mxu0
        %v3895 = vmax.f32 %v3385, 0.0
        %v3896 = vmax.f32 %v3388, 0.0
        %v3897 = vmax.f32 %v3393, 0.0
        %v3898 = vmax.f32 %v3396, 0.0
        %v3899 = vmax.f32 %v3401, 0.0
        %v3900 = vmax.f32 %v3404, 0.0
        %v3901 = vmax.f32 %v3409, 0.0
        %v3902 = vmax.f32 %v3412, 0.0
        %v3903 = vmax.f32 %v3417, 0.0
        %v3904 = vmax.f32 %v3420, 0.0
        %v3905 = vmax.f32 %v3425, 0.0
        %v3906 = vmax.f32 %v3428, 0.0
        %v3907 = vmax.f32 %v3433, 0.0
        %v3908 = vmax.f32 %v3436, 0.0
        %v3909 = vmax.f32 %v3441, 0.0
        %v3910 = vmax.f32 %v3444, 0.0
        %v3911 = vmax.f32 %v3449, 0.0
        %v3912 = vmax.f32 %v3452, 0.0
        %v3913 = vmax.f32 %v3457, 0.0
        %v3914 = vmax.f32 %v3460, 0.0
        %v3915 = vmax.f32 %v3465, 0.0
        %v3916 = vmax.f32 %v3468, 0.0
        %v3917 = vmax.f32 %v3473, 0.0
        %v3918 = vmax.f32 %v3476, 0.0
        %v3919 = vmax.f32 %v3481, 0.0
        %v3920 = vmax.f32 %v3484, 0.0
        %v3921 = vmax.f32 %v3489, 0.0
        %v3922 = vmax.f32 %v3492, 0.0
        %v3923 = vmax.f32 %v3497, 0.0
        %v3924 = vmax.f32 %v3500, 0.0
        %v3925 = vmax.f32 %v3505, 0.0
        %v3926 = vmax.f32 %v3508, 0.0
        %v3927 = vmax.f32 %v3513, 0.0
        %v3928 = vmax.f32 %v3516, 0.0
        %v3929 = vmax.f32 %v3521, 0.0
        %v3930 = vmax.f32 %v3524, 0.0
        %v3931 = vmax.f32 %v3529, 0.0
        %v3932 = vmax.f32 %v3532, 0.0
        %v3933 = vmax.f32 %v3537, 0.0
        %v3934 = vmax.f32 %v3540, 0.0
        %v3935 = vmax.f32 %v3545, 0.0
        %v3936 = vmax.f32 %v3548, 0.0
        %v3937 = vmax.f32 %v3553, 0.0
        %v3938 = vmax.f32 %v3556, 0.0
        %v3939 = vmax.f32 %v3561, 0.0
        %v3940 = vmax.f32 %v3564, 0.0
        %v3941 = vmax.f32 %v3569, 0.0
        %v3942 = vmax.f32 %v3572, 0.0
        %v3943 = vmax.f32 %v3577, 0.0
        %v3944 = vmax.f32 %v3580, 0.0
        %v3945 = vmax.f32 %v3585, 0.0
        %v3946 = vmax.f32 %v3588, 0.0
        %v3947 = vmax.f32 %v3593, 0.0
        %v3948 = vmax.f32 %v3596, 0.0
        %v3949 = vmax.f32 %v3601, 0.0
        %v3950 = vmax.f32 %v3604, 0.0
        %v3951 = vmax.f32 %v3609, 0.0
        %v3952 = vmax.f32 %v3612, 0.0
        %v3953 = vmax.f32 %v3617, 0.0
        %v3954 = vmax.f32 %v3620, 0.0
        %v3955 = vmax.f32 %v3625, 0.0
        %v3956 = vmax.f32 %v3628, 0.0
        %v3957 = vmax.f32 %v3633, 0.0
        %v3958 = vmax.f32 %v3636, 0.0
        %v3959 = vmax.f32 %v3641, 0.0
        %v3960 = vmax.f32 %v3644, 0.0
        %v3961 = vmax.f32 %v3649, 0.0
        %v3962 = vmax.f32 %v3652, 0.0
        %v3963 = vmax.f32 %v3657, 0.0
        %v3964 = vmax.f32 %v3660, 0.0
        %v3965 = vmax.f32 %v3665, 0.0
        %v3966 = vmax.f32 %v3668, 0.0
        %v3967 = vmax.f32 %v3673, 0.0
        %v3968 = vmax.f32 %v3676, 0.0
        %v3969 = vmax.f32 %v3681, 0.0
        %v3970 = vmax.f32 %v3684, 0.0
        %v3971 = vmax.f32 %v3689, 0.0
        %v3972 = vmax.f32 %v3692, 0.0
        %v3973 = vmax.f32 %v3697, 0.0
        %v3974 = vmax.f32 %v3700, 0.0
        %v3975 = vmax.f32 %v3705, 0.0
        %v3976 = vmax.f32 %v3708, 0.0
        %v3977 = vmax.f32 %v3713, 0.0
        %v3978 = vmax.f32 %v3716, 0.0
        %v3979 = vmax.f32 %v3721, 0.0
        %v3980 = vmax.f32 %v3724, 0.0
        %v3981 = vmax.f32 %v3729, 0.0
        %v3982 = vmax.f32 %v3732, 0.0
        %v3983 = vmax.f32 %v3737, 0.0
        %v3984 = vmax.f32 %v3740, 0.0
        %v3985 = vmax.f32 %v3745, 0.0
        %v3986 = vmax.f32 %v3748, 0.0
        %v3987 = vmax.f32 %v3753, 0.0
        %v3988 = vmax.f32 %v3756, 0.0
        %v3989 = vmax.f32 %v3761, 0.0
        %v3990 = vmax.f32 %v3764, 0.0
        %v3991 = vmax.f32 %v3769, 0.0
        %v3992 = vmax.f32 %v3772, 0.0
        %v3993 = vmax.f32 %v3777, 0.0
        %v3994 = vmax.f32 %v3780, 0.0
        %v3995 = vmax.f32 %v3785, 0.0
        %v3996 = vmax.f32 %v3788, 0.0
        %v3997 = vmax.f32 %v3793, 0.0
        %v3998 = vmax.f32 %v3796, 0.0
        %v3999 = vmax.f32 %v3801, 0.0
        %v4000 = vmax.f32 %v3804, 0.0
        %v4001 = vmax.f32 %v3809, 0.0
        %v4002 = vmax.f32 %v3812, 0.0
        %v4003 = vmax.f32 %v3817, 0.0
        %v4004 = vmax.f32 %v3820, 0.0
        %v4005 = vmax.f32 %v3825, 0.0
        %v4006 = vmax.f32 %v3828, 0.0
        %v4007 = vmax.f32 %v3833, 0.0
        %v4008 = vmax.f32 %v3836, 0.0
        %v4009 = vmax.f32 %v3841, 0.0
        %v4010 = vmax.f32 %v3844, 0.0
        %v4011 = vmax.f32 %v3849, 0.0
        %v4012 = vmax.f32 %v3852, 0.0
        %v4013 = vmax.f32 %v3857, 0.0
        %v4014 = vmax.f32 %v3860, 0.0
        %v4015 = vmax.f32 %v3865, 0.0
        %v4016 = vmax.f32 %v3868, 0.0
        %v4017 = vmax.f32 %v3873, 0.0
        %v4018 = vmax.f32 %v3876, 0.0
        %v4019 = vmax.f32 %v3881, 0.0
        %v4020 = vmax.f32 %v3884, 0.0
        %v4021 = vmax.f32 %v3889, 0.0
        %v4022 = vmax.f32 %v3892, 0.0
        %v4023 = vld [vmem:[%s7] sm:$0x1]
        %v4025 = vlaneseq
        %v4026 = vshrl.u32 %v4025, 7
        %v4027 = vsub.s32 0, %v4026
        %v4028 = vrot.slane %v4023, %v4027
        %v4030 = vmul.f32 %v3895, %v4028
        %v4031 = vmul.f32 %v3896, %v4028
        %v4032 = vmul.f32 %v3897, %v4028
        %v4033 = vmul.f32 %v3898, %v4028
        %v4034 = vmul.f32 %v3899, %v4028
        %v4035 = vmul.f32 %v3900, %v4028
        %v4036 = vmul.f32 %v3901, %v4028
        %v4037 = vmul.f32 %v3902, %v4028
        %v4038 = vmul.f32 %v3903, %v4028
        %v4039 = vmul.f32 %v3904, %v4028
        %v4040 = vmul.f32 %v3905, %v4028
        %v4041 = vmul.f32 %v3906, %v4028
        %v4042 = vmul.f32 %v3907, %v4028
        %v4043 = vmul.f32 %v3908, %v4028
        %v4044 = vmul.f32 %v3909, %v4028
        %v4045 = vmul.f32 %v3910, %v4028
        %v4046 = vmul.f32 %v3911, %v4028
        %v4047 = vmul.f32 %v3912, %v4028
        %v4048 = vmul.f32 %v3913, %v4028
        %v4049 = vmul.f32 %v3914, %v4028
        %v4050 = vmul.f32 %v3915, %v4028
        %v4051 = vmul.f32 %v3916, %v4028
        %v4052 = vmul.f32 %v3917, %v4028
        %v4053 = vmul.f32 %v3918, %v4028
        %v4054 = vmul.f32 %v3919, %v4028
        %v4055 = vmul.f32 %v3920, %v4028
        %v4056 = vmul.f32 %v3921, %v4028
        %v4057 = vmul.f32 %v3922, %v4028
        %v4058 = vmul.f32 %v3923, %v4028
        %v4059 = vmul.f32 %v3924, %v4028
        %v4060 = vmul.f32 %v3925, %v4028
        %v4061 = vmul.f32 %v3926, %v4028
        %v4062 = vmul.f32 %v3927, %v4028
        %v4063 = vmul.f32 %v3928, %v4028
        %v4064 = vmul.f32 %v3929, %v4028
        %v4065 = vmul.f32 %v3930, %v4028
        %v4066 = vmul.f32 %v3931, %v4028
        %v4067 = vmul.f32 %v3932, %v4028
        %v4068 = vmul.f32 %v3933, %v4028
        %v4069 = vmul.f32 %v3934, %v4028
        %v4070 = vmul.f32 %v3935, %v4028
        %v4071 = vmul.f32 %v3936, %v4028
        %v4072 = vmul.f32 %v3937, %v4028
        %v4073 = vmul.f32 %v3938, %v4028
        %v4074 = vmul.f32 %v3939, %v4028
        %v4075 = vmul.f32 %v3940, %v4028
        %v4076 = vmul.f32 %v3941, %v4028
        %v4077 = vmul.f32 %v3942, %v4028
        %v4078 = vmul.f32 %v3943, %v4028
        %v4079 = vmul.f32 %v3944, %v4028
        %v4080 = vmul.f32 %v3945, %v4028
        %v4081 = vmul.f32 %v3946, %v4028
        %v4082 = vmul.f32 %v3947, %v4028
        %v4083 = vmul.f32 %v3948, %v4028
        %v4084 = vmul.f32 %v3949, %v4028
        %v4085 = vmul.f32 %v3950, %v4028
        %v4086 = vmul.f32 %v3951, %v4028
        %v4087 = vmul.f32 %v3952, %v4028
        %v4088 = vmul.f32 %v3953, %v4028
        %v4089 = vmul.f32 %v3954, %v4028
        %v4090 = vmul.f32 %v3955, %v4028
        %v4091 = vmul.f32 %v3956, %v4028
        %v4092 = vmul.f32 %v3957, %v4028
        %v4093 = vmul.f32 %v3958, %v4028
        %v4094 = vmul.f32 %v3959, %v4028
        %v4095 = vmul.f32 %v3960, %v4028
        %v4096 = vmul.f32 %v3961, %v4028
        %v4097 = vmul.f32 %v3962, %v4028
        %v4098 = vmul.f32 %v3963, %v4028
        %v4099 = vmul.f32 %v3964, %v4028
        %v4100 = vmul.f32 %v3965, %v4028
        %v4101 = vmul.f32 %v3966, %v4028
        %v4102 = vmul.f32 %v3967, %v4028
        %v4103 = vmul.f32 %v3968, %v4028
        %v4104 = vmul.f32 %v3969, %v4028
        %v4105 = vmul.f32 %v3970, %v4028
        %v4106 = vmul.f32 %v3971, %v4028
        %v4107 = vmul.f32 %v3972, %v4028
        %v4108 = vmul.f32 %v3973, %v4028
        %v4109 = vmul.f32 %v3974, %v4028
        %v4110 = vmul.f32 %v3975, %v4028
        %v4111 = vmul.f32 %v3976, %v4028
        %v4112 = vmul.f32 %v3977, %v4028
        %v4113 = vmul.f32 %v3978, %v4028
        %v4114 = vmul.f32 %v3979, %v4028
        %v4115 = vmul.f32 %v3980, %v4028
        %v4116 = vmul.f32 %v3981, %v4028
        %v4117 = vmul.f32 %v3982, %v4028
        %v4118 = vmul.f32 %v3983, %v4028
        %v4119 = vmul.f32 %v3984, %v4028
        %v4120 = vmul.f32 %v3985, %v4028
        %v4121 = vmul.f32 %v3986, %v4028
        %v4122 = vmul.f32 %v3987, %v4028
        %v4123 = vmul.f32 %v3988, %v4028
        %v4124 = vmul.f32 %v3989, %v4028
        %v4125 = vmul.f32 %v3990, %v4028
        %v4126 = vmul.f32 %v3991, %v4028
        %v4127 = vmul.f32 %v3992, %v4028
        %v4128 = vmul.f32 %v3993, %v4028
        %v4129 = vmul.f32 %v3994, %v4028
        %v4130 = vmul.f32 %v3995, %v4028
        %v4131 = vmul.f32 %v3996, %v4028
        %v4132 = vmul.f32 %v3997, %v4028
        %v4133 = vmul.f32 %v3998, %v4028
        %v4134 = vmul.f32 %v3999, %v4028
        %v4135 = vmul.f32 %v4000, %v4028
        %v4136 = vmul.f32 %v4001, %v4028
        %v4137 = vmul.f32 %v4002, %v4028
        %v4138 = vmul.f32 %v4003, %v4028
        %v4139 = vmul.f32 %v4004, %v4028
        %v4140 = vmul.f32 %v4005, %v4028
        %v4141 = vmul.f32 %v4006, %v4028
        %v4142 = vmul.f32 %v4007, %v4028
        %v4143 = vmul.f32 %v4008, %v4028
        %v4144 = vmul.f32 %v4009, %v4028
        %v4145 = vmul.f32 %v4010, %v4028
        %v4146 = vmul.f32 %v4011, %v4028
        %v4147 = vmul.f32 %v4012, %v4028
        %v4148 = vmul.f32 %v4013, %v4028
        %v4149 = vmul.f32 %v4014, %v4028
        %v4150 = vmul.f32 %v4015, %v4028
        %v4151 = vmul.f32 %v4016, %v4028
        %v4152 = vmul.f32 %v4017, %v4028
        %v4153 = vmul.f32 %v4018, %v4028
        %v4154 = vmul.f32 %v4019, %v4028
        %v4155 = vmul.f32 %v4020, %v4028
        %v4156 = vmul.f32 %v4021, %v4028
        %v4157 = vmul.f32 %v4022, %v4028
        %v4158 = vsel %vm864, %v4030, 0.0
        %4159 = vadd.xlane.f32.xlu0 %v4158
        %v4160 = vpop.xlane.xlu0 %4159
        %v4161 = vsel %vm864, %v4031, 0.0
        %4162 = vadd.xlane.f32.xlu0 %v4161
        %v4163 = vpop.xlane.xlu0 %4162
        %v4164 = vsel %vm864, %v4032, 0.0
        %4165 = vadd.xlane.f32.xlu0 %v4164
        %v4166 = vpop.xlane.xlu0 %4165
        %v4167 = vsel %vm864, %v4033, 0.0
        %4168 = vadd.xlane.f32.xlu0 %v4167
        %v4169 = vpop.xlane.xlu0 %4168
        %v4170 = vsel %vm864, %v4034, 0.0
        %4171 = vadd.xlane.f32.xlu0 %v4170
        %v4172 = vpop.xlane.xlu0 %4171
        %v4173 = vsel %vm864, %v4035, 0.0
        %4174 = vadd.xlane.f32.xlu0 %v4173
        %v4175 = vpop.xlane.xlu0 %4174
        %v4176 = vsel %vm864, %v4036, 0.0
        %4177 = vadd.xlane.f32.xlu0 %v4176
        %v4178 = vpop.xlane.xlu0 %4177
        %v4179 = vsel %vm864, %v4037, 0.0
        %4180 = vadd.xlane.f32.xlu0 %v4179
        %v4181 = vpop.xlane.xlu0 %4180
        %v4182 = vsel %vm864, %v4038, 0.0
        %4183 = vadd.xlane.f32.xlu0 %v4182
        %v4184 = vpop.xlane.xlu0 %4183
        %v4185 = vsel %vm864, %v4039, 0.0
        %4186 = vadd.xlane.f32.xlu0 %v4185
        %v4187 = vpop.xlane.xlu0 %4186
        %v4188 = vsel %vm864, %v4040, 0.0
        %4189 = vadd.xlane.f32.xlu0 %v4188
        %v4190 = vpop.xlane.xlu0 %4189
        %v4191 = vsel %vm864, %v4041, 0.0
        %4192 = vadd.xlane.f32.xlu0 %v4191
        %v4193 = vpop.xlane.xlu0 %4192
        %v4194 = vsel %vm864, %v4042, 0.0
        %4195 = vadd.xlane.f32.xlu0 %v4194
        %v4196 = vpop.xlane.xlu0 %4195
        %v4197 = vsel %vm864, %v4043, 0.0
        %4198 = vadd.xlane.f32.xlu0 %v4197
        %v4199 = vpop.xlane.xlu0 %4198
        %v4200 = vsel %vm864, %v4044, 0.0
        %4201 = vadd.xlane.f32.xlu0 %v4200
        %v4202 = vpop.xlane.xlu0 %4201
        %v4203 = vsel %vm864, %v4045, 0.0
        %4204 = vadd.xlane.f32.xlu0 %v4203
        %v4205 = vpop.xlane.xlu0 %4204
        %v4206 = vsel %vm864, %v4046, 0.0
        %4207 = vadd.xlane.f32.xlu0 %v4206
        %v4208 = vpop.xlane.xlu0 %4207
        %v4209 = vsel %vm864, %v4047, 0.0
        %4210 = vadd.xlane.f32.xlu0 %v4209
        %v4211 = vpop.xlane.xlu0 %4210
        %v4212 = vsel %vm864, %v4048, 0.0
        %4213 = vadd.xlane.f32.xlu0 %v4212
        %v4214 = vpop.xlane.xlu0 %4213
        %v4215 = vsel %vm864, %v4049, 0.0
        %4216 = vadd.xlane.f32.xlu0 %v4215
        %v4217 = vpop.xlane.xlu0 %4216
        %v4218 = vsel %vm864, %v4050, 0.0
        %4219 = vadd.xlane.f32.xlu0 %v4218
        %v4220 = vpop.xlane.xlu0 %4219
        %v4221 = vsel %vm864, %v4051, 0.0
        %4222 = vadd.xlane.f32.xlu0 %v4221
        %v4223 = vpop.xlane.xlu0 %4222
        %v4224 = vsel %vm864, %v4052, 0.0
        %4225 = vadd.xlane.f32.xlu0 %v4224
        %v4226 = vpop.xlane.xlu0 %4225
        %v4227 = vsel %vm864, %v4053, 0.0
        %4228 = vadd.xlane.f32.xlu0 %v4227
        %v4229 = vpop.xlane.xlu0 %4228
        %v4230 = vsel %vm864, %v4054, 0.0
        %4231 = vadd.xlane.f32.xlu0 %v4230
        %v4232 = vpop.xlane.xlu0 %4231
        %v4233 = vsel %vm864, %v4055, 0.0
        %4234 = vadd.xlane.f32.xlu0 %v4233
        %v4235 = vpop.xlane.xlu0 %4234
        %v4236 = vsel %vm864, %v4056, 0.0
        %4237 = vadd.xlane.f32.xlu0 %v4236
        %v4238 = vpop.xlane.xlu0 %4237
        %v4239 = vsel %vm864, %v4057, 0.0
        %4240 = vadd.xlane.f32.xlu0 %v4239
        %v4241 = vpop.xlane.xlu0 %4240
        %v4242 = vsel %vm864, %v4058, 0.0
        %4243 = vadd.xlane.f32.xlu0 %v4242
        %v4244 = vpop.xlane.xlu0 %4243
        %v4245 = vsel %vm864, %v4059, 0.0
        %4246 = vadd.xlane.f32.xlu0 %v4245
        %v4247 = vpop.xlane.xlu0 %4246
        %v4248 = vsel %vm864, %v4060, 0.0
        %4249 = vadd.xlane.f32.xlu0 %v4248
        %v4250 = vpop.xlane.xlu0 %4249
        %v4251 = vsel %vm864, %v4061, 0.0
        %4252 = vadd.xlane.f32.xlu0 %v4251
        %v4253 = vpop.xlane.xlu0 %4252
        %v4254 = vsel %vm864, %v4062, 0.0
        %4255 = vadd.xlane.f32.xlu0 %v4254
        %v4256 = vpop.xlane.xlu0 %4255
        %v4257 = vsel %vm864, %v4063, 0.0
        %4258 = vadd.xlane.f32.xlu0 %v4257
        %v4259 = vpop.xlane.xlu0 %4258
        %v4260 = vsel %vm864, %v4064, 0.0
        %4261 = vadd.xlane.f32.xlu0 %v4260
        %v4262 = vpop.xlane.xlu0 %4261
        %v4263 = vsel %vm864, %v4065, 0.0
        %4264 = vadd.xlane.f32.xlu0 %v4263
        %v4265 = vpop.xlane.xlu0 %4264
        %v4266 = vsel %vm864, %v4066, 0.0
        %4267 = vadd.xlane.f32.xlu0 %v4266
        %v4268 = vpop.xlane.xlu0 %4267
        %v4269 = vsel %vm864, %v4067, 0.0
        %4270 = vadd.xlane.f32.xlu0 %v4269
        %v4271 = vpop.xlane.xlu0 %4270
        %v4272 = vsel %vm864, %v4068, 0.0
        %4273 = vadd.xlane.f32.xlu0 %v4272
        %v4274 = vpop.xlane.xlu0 %4273
        %v4275 = vsel %vm864, %v4069, 0.0
        %4276 = vadd.xlane.f32.xlu0 %v4275
        %v4277 = vpop.xlane.xlu0 %4276
        %v4278 = vsel %vm864, %v4070, 0.0
        %4279 = vadd.xlane.f32.xlu0 %v4278
        %v4280 = vpop.xlane.xlu0 %4279
        %v4281 = vsel %vm864, %v4071, 0.0
        %4282 = vadd.xlane.f32.xlu0 %v4281
        %v4283 = vpop.xlane.xlu0 %4282
        %v4284 = vsel %vm864, %v4072, 0.0
        %4285 = vadd.xlane.f32.xlu0 %v4284
        %v4286 = vpop.xlane.xlu0 %4285
        %v4287 = vsel %vm864, %v4073, 0.0
        %4288 = vadd.xlane.f32.xlu0 %v4287
        %v4289 = vpop.xlane.xlu0 %4288
        %v4290 = vsel %vm864, %v4074, 0.0
        %4291 = vadd.xlane.f32.xlu0 %v4290
        %v4292 = vpop.xlane.xlu0 %4291
        %v4293 = vsel %vm864, %v4075, 0.0
        %4294 = vadd.xlane.f32.xlu0 %v4293
        %v4295 = vpop.xlane.xlu0 %4294
        %v4296 = vsel %vm864, %v4076, 0.0
        %4297 = vadd.xlane.f32.xlu0 %v4296
        %v4298 = vpop.xlane.xlu0 %4297
        %v4299 = vsel %vm864, %v4077, 0.0
        %4300 = vadd.xlane.f32.xlu0 %v4299
        %v4301 = vpop.xlane.xlu0 %4300
        %v4302 = vsel %vm864, %v4078, 0.0
        %4303 = vadd.xlane.f32.xlu0 %v4302
        %v4304 = vpop.xlane.xlu0 %4303
        %v4305 = vsel %vm864, %v4079, 0.0
        %4306 = vadd.xlane.f32.xlu0 %v4305
        %v4307 = vpop.xlane.xlu0 %4306
        %v4308 = vsel %vm864, %v4080, 0.0
        %4309 = vadd.xlane.f32.xlu0 %v4308
        %v4310 = vpop.xlane.xlu0 %4309
        %v4311 = vsel %vm864, %v4081, 0.0
        %4312 = vadd.xlane.f32.xlu0 %v4311
        %v4313 = vpop.xlane.xlu0 %4312
        %v4314 = vsel %vm864, %v4082, 0.0
        %4315 = vadd.xlane.f32.xlu0 %v4314
        %v4316 = vpop.xlane.xlu0 %4315
        %v4317 = vsel %vm864, %v4083, 0.0
        %4318 = vadd.xlane.f32.xlu0 %v4317
        %v4319 = vpop.xlane.xlu0 %4318
        %v4320 = vsel %vm864, %v4084, 0.0
        %4321 = vadd.xlane.f32.xlu0 %v4320
        %v4322 = vpop.xlane.xlu0 %4321
        %v4323 = vsel %vm864, %v4085, 0.0
        %4324 = vadd.xlane.f32.xlu0 %v4323
        %v4325 = vpop.xlane.xlu0 %4324
        %v4326 = vsel %vm864, %v4086, 0.0
        %4327 = vadd.xlane.f32.xlu0 %v4326
        %v4328 = vpop.xlane.xlu0 %4327
        %v4329 = vsel %vm864, %v4087, 0.0
        %4330 = vadd.xlane.f32.xlu0 %v4329
        %v4331 = vpop.xlane.xlu0 %4330
        %v4332 = vsel %vm864, %v4088, 0.0
        %4333 = vadd.xlane.f32.xlu0 %v4332
        %v4334 = vpop.xlane.xlu0 %4333
        %v4335 = vsel %vm864, %v4089, 0.0
        %4336 = vadd.xlane.f32.xlu0 %v4335
        %v4337 = vpop.xlane.xlu0 %4336
        %v4338 = vsel %vm864, %v4090, 0.0
        %4339 = vadd.xlane.f32.xlu0 %v4338
        %v4340 = vpop.xlane.xlu0 %4339
        %v4341 = vsel %vm864, %v4091, 0.0
        %4342 = vadd.xlane.f32.xlu0 %v4341
        %v4343 = vpop.xlane.xlu0 %4342
        %v4344 = vsel %vm864, %v4092, 0.0
        %4345 = vadd.xlane.f32.xlu0 %v4344
        %v4346 = vpop.xlane.xlu0 %4345
        %v4347 = vsel %vm864, %v4093, 0.0
        %4348 = vadd.xlane.f32.xlu0 %v4347
        %v4349 = vpop.xlane.xlu0 %4348
        %v4350 = vsel %vm864, %v4094, 0.0
        %4351 = vadd.xlane.f32.xlu0 %v4350
        %v4352 = vpop.xlane.xlu0 %4351
        %v4353 = vsel %vm864, %v4095, 0.0
        %4354 = vadd.xlane.f32.xlu0 %v4353
        %v4355 = vpop.xlane.xlu0 %4354
        %v4356 = vsel %vm864, %v4096, 0.0
        %4357 = vadd.xlane.f32.xlu0 %v4356
        %v4358 = vpop.xlane.xlu0 %4357
        %v4359 = vsel %vm864, %v4097, 0.0
        %4360 = vadd.xlane.f32.xlu0 %v4359
        %v4361 = vpop.xlane.xlu0 %4360
        %v4362 = vsel %vm864, %v4098, 0.0
        %4363 = vadd.xlane.f32.xlu0 %v4362
        %v4364 = vpop.xlane.xlu0 %4363
        %v4365 = vsel %vm864, %v4099, 0.0
        %4366 = vadd.xlane.f32.xlu0 %v4365
        %v4367 = vpop.xlane.xlu0 %4366
        %v4368 = vsel %vm864, %v4100, 0.0
        %4369 = vadd.xlane.f32.xlu0 %v4368
        %v4370 = vpop.xlane.xlu0 %4369
        %v4371 = vsel %vm864, %v4101, 0.0
        %4372 = vadd.xlane.f32.xlu0 %v4371
        %v4373 = vpop.xlane.xlu0 %4372
        %v4374 = vsel %vm864, %v4102, 0.0
        %4375 = vadd.xlane.f32.xlu0 %v4374
        %v4376 = vpop.xlane.xlu0 %4375
        %v4377 = vsel %vm864, %v4103, 0.0
        %4378 = vadd.xlane.f32.xlu0 %v4377
        %v4379 = vpop.xlane.xlu0 %4378
        %v4380 = vsel %vm864, %v4104, 0.0
        %4381 = vadd.xlane.f32.xlu0 %v4380
        %v4382 = vpop.xlane.xlu0 %4381
        %v4383 = vsel %vm864, %v4105, 0.0
        %4384 = vadd.xlane.f32.xlu0 %v4383
        %v4385 = vpop.xlane.xlu0 %4384
        %v4386 = vsel %vm864, %v4106, 0.0
        %4387 = vadd.xlane.f32.xlu0 %v4386
        %v4388 = vpop.xlane.xlu0 %4387
        %v4389 = vsel %vm864, %v4107, 0.0
        %4390 = vadd.xlane.f32.xlu0 %v4389
        %v4391 = vpop.xlane.xlu0 %4390
        %v4392 = vsel %vm864, %v4108, 0.0
        %4393 = vadd.xlane.f32.xlu0 %v4392
        %v4394 = vpop.xlane.xlu0 %4393
        %v4395 = vsel %vm864, %v4109, 0.0
        %4396 = vadd.xlane.f32.xlu0 %v4395
        %v4397 = vpop.xlane.xlu0 %4396
        %v4398 = vsel %vm864, %v4110, 0.0
        %4399 = vadd.xlane.f32.xlu0 %v4398
        %v4400 = vpop.xlane.xlu0 %4399
        %v4401 = vsel %vm864, %v4111, 0.0
        %4402 = vadd.xlane.f32.xlu0 %v4401
        %v4403 = vpop.xlane.xlu0 %4402
        %v4404 = vsel %vm864, %v4112, 0.0
        %4405 = vadd.xlane.f32.xlu0 %v4404
        %v4406 = vpop.xlane.xlu0 %4405
        %v4407 = vsel %vm864, %v4113, 0.0
        %4408 = vadd.xlane.f32.xlu0 %v4407
        %v4409 = vpop.xlane.xlu0 %4408
        %v4410 = vsel %vm864, %v4114, 0.0
        %4411 = vadd.xlane.f32.xlu0 %v4410
        %v4412 = vpop.xlane.xlu0 %4411
        %v4413 = vsel %vm864, %v4115, 0.0
        %4414 = vadd.xlane.f32.xlu0 %v4413
        %v4415 = vpop.xlane.xlu0 %4414
        %v4416 = vsel %vm864, %v4116, 0.0
        %4417 = vadd.xlane.f32.xlu0 %v4416
        %v4418 = vpop.xlane.xlu0 %4417
        %v4419 = vsel %vm864, %v4117, 0.0
        %4420 = vadd.xlane.f32.xlu0 %v4419
        %v4421 = vpop.xlane.xlu0 %4420
        %v4422 = vsel %vm864, %v4118, 0.0
        %4423 = vadd.xlane.f32.xlu0 %v4422
        %v4424 = vpop.xlane.xlu0 %4423
        %v4425 = vsel %vm864, %v4119, 0.0
        %4426 = vadd.xlane.f32.xlu0 %v4425
        %v4427 = vpop.xlane.xlu0 %4426
        %v4428 = vsel %vm864, %v4120, 0.0
        %4429 = vadd.xlane.f32.xlu0 %v4428
        %v4430 = vpop.xlane.xlu0 %4429
        %v4431 = vsel %vm864, %v4121, 0.0
        %4432 = vadd.xlane.f32.xlu0 %v4431
        %v4433 = vpop.xlane.xlu0 %4432
        %v4434 = vsel %vm864, %v4122, 0.0
        %4435 = vadd.xlane.f32.xlu0 %v4434
        %v4436 = vpop.xlane.xlu0 %4435
        %v4437 = vsel %vm864, %v4123, 0.0
        %4438 = vadd.xlane.f32.xlu0 %v4437
        %v4439 = vpop.xlane.xlu0 %4438
        %v4440 = vsel %vm864, %v4124, 0.0
        %4441 = vadd.xlane.f32.xlu0 %v4440
        %v4442 = vpop.xlane.xlu0 %4441
        %v4443 = vsel %vm864, %v4125, 0.0
        %4444 = vadd.xlane.f32.xlu0 %v4443
        %v4445 = vpop.xlane.xlu0 %4444
        %v4446 = vsel %vm864, %v4126, 0.0
        %4447 = vadd.xlane.f32.xlu0 %v4446
        %v4448 = vpop.xlane.xlu0 %4447
        %v4449 = vsel %vm864, %v4127, 0.0
        %4450 = vadd.xlane.f32.xlu0 %v4449
        %v4451 = vpop.xlane.xlu0 %4450
        %v4452 = vsel %vm864, %v4128, 0.0
        %4453 = vadd.xlane.f32.xlu0 %v4452
        %v4454 = vpop.xlane.xlu0 %4453
        %v4455 = vsel %vm864, %v4129, 0.0
        %4456 = vadd.xlane.f32.xlu0 %v4455
        %v4457 = vpop.xlane.xlu0 %4456
        %v4458 = vsel %vm864, %v4130, 0.0
        %4459 = vadd.xlane.f32.xlu0 %v4458
        %v4460 = vpop.xlane.xlu0 %4459
        %v4461 = vsel %vm864, %v4131, 0.0
        %4462 = vadd.xlane.f32.xlu0 %v4461
        %v4463 = vpop.xlane.xlu0 %4462
        %v4464 = vsel %vm864, %v4132, 0.0
        %4465 = vadd.xlane.f32.xlu0 %v4464
        %v4466 = vpop.xlane.xlu0 %4465
        %v4467 = vsel %vm864, %v4133, 0.0
        %4468 = vadd.xlane.f32.xlu0 %v4467
        %v4469 = vpop.xlane.xlu0 %4468
        %v4470 = vsel %vm864, %v4134, 0.0
        %4471 = vadd.xlane.f32.xlu0 %v4470
        %v4472 = vpop.xlane.xlu0 %4471
        %v4473 = vsel %vm864, %v4135, 0.0
        %4474 = vadd.xlane.f32.xlu0 %v4473
        %v4475 = vpop.xlane.xlu0 %4474
        %v4476 = vsel %vm864, %v4136, 0.0
        %4477 = vadd.xlane.f32.xlu0 %v4476
        %v4478 = vpop.xlane.xlu0 %4477
        %v4479 = vsel %vm864, %v4137, 0.0
        %4480 = vadd.xlane.f32.xlu0 %v4479
        %v4481 = vpop.xlane.xlu0 %4480
        %v4482 = vsel %vm864, %v4138, 0.0
        %4483 = vadd.xlane.f32.xlu0 %v4482
        %v4484 = vpop.xlane.xlu0 %4483
        %v4485 = vsel %vm864, %v4139, 0.0
        %4486 = vadd.xlane.f32.xlu0 %v4485
        %v4487 = vpop.xlane.xlu0 %4486
        %v4488 = vsel %vm864, %v4140, 0.0
        %4489 = vadd.xlane.f32.xlu0 %v4488
        %v4490 = vpop.xlane.xlu0 %4489
        %v4491 = vsel %vm864, %v4141, 0.0
        %4492 = vadd.xlane.f32.xlu0 %v4491
        %v4493 = vpop.xlane.xlu0 %4492
        %v4494 = vsel %vm864, %v4142, 0.0
        %4495 = vadd.xlane.f32.xlu0 %v4494
        %v4496 = vpop.xlane.xlu0 %4495
        %v4497 = vsel %vm864, %v4143, 0.0
        %4498 = vadd.xlane.f32.xlu0 %v4497
        %v4499 = vpop.xlane.xlu0 %4498
        %v4500 = vsel %vm864, %v4144, 0.0
        %4501 = vadd.xlane.f32.xlu0 %v4500
        %v4502 = vpop.xlane.xlu0 %4501
        %v4503 = vsel %vm864, %v4145, 0.0
        %4504 = vadd.xlane.f32.xlu0 %v4503
        %v4505 = vpop.xlane.xlu0 %4504
        %v4506 = vsel %vm864, %v4146, 0.0
        %4507 = vadd.xlane.f32.xlu0 %v4506
        %v4508 = vpop.xlane.xlu0 %4507
        %v4509 = vsel %vm864, %v4147, 0.0
        %4510 = vadd.xlane.f32.xlu0 %v4509
        %v4511 = vpop.xlane.xlu0 %4510
        %v4512 = vsel %vm864, %v4148, 0.0
        %4513 = vadd.xlane.f32.xlu0 %v4512
        %v4514 = vpop.xlane.xlu0 %4513
        %v4515 = vsel %vm864, %v4149, 0.0
        %4516 = vadd.xlane.f32.xlu0 %v4515
        %v4517 = vpop.xlane.xlu0 %4516
        %v4518 = vsel %vm864, %v4150, 0.0
        %4519 = vadd.xlane.f32.xlu0 %v4518
        %v4520 = vpop.xlane.xlu0 %4519
        %v4521 = vsel %vm864, %v4151, 0.0
        %4522 = vadd.xlane.f32.xlu0 %v4521
        %v4523 = vpop.xlane.xlu0 %4522
        %v4524 = vsel %vm864, %v4152, 0.0
        %4525 = vadd.xlane.f32.xlu0 %v4524
        %v4526 = vpop.xlane.xlu0 %4525
        %v4527 = vsel %vm864, %v4153, 0.0
        %4528 = vadd.xlane.f32.xlu0 %v4527
        %v4529 = vpop.xlane.xlu0 %4528
        %v4530 = vsel %vm864, %v4154, 0.0
        %4531 = vadd.xlane.f32.xlu0 %v4530
        %v4532 = vpop.xlane.xlu0 %4531
        %v4533 = vsel %vm864, %v4155, 0.0
        %4534 = vadd.xlane.f32.xlu0 %v4533
        %v4535 = vpop.xlane.xlu0 %4534
        %v4536 = vsel %vm864, %v4156, 0.0
        %4537 = vadd.xlane.f32.xlu0 %v4536
        %v4538 = vpop.xlane.xlu0 %4537
        %v4539 = vsel %vm864, %v4157, 0.0
        %4540 = vadd.xlane.f32.xlu0 %v4539
        %v4541 = vpop.xlane.xlu0 %4540
        %s4542 = sld [smem:[#allocation4]]
        %v4543 = vstv %s4542
        %v4544 = vadd.f32 %v4160, %v4543
        %v4545 = vadd.f32 %v4163, %v4543
        %v4546 = vadd.f32 %v4166, %v4543
        %v4547 = vadd.f32 %v4169, %v4543
        %v4548 = vadd.f32 %v4172, %v4543
        %v4549 = vadd.f32 %v4175, %v4543
        %v4550 = vadd.f32 %v4178, %v4543
        %v4551 = vadd.f32 %v4181, %v4543
        %v4552 = vadd.f32 %v4184, %v4543
        %v4553 = vadd.f32 %v4187, %v4543
        %v4554 = vadd.f32 %v4190, %v4543
        %v4555 = vadd.f32 %v4193, %v4543
        %v4556 = vadd.f32 %v4196, %v4543
        %v4557 = vadd.f32 %v4199, %v4543
        %v4558 = vadd.f32 %v4202, %v4543
        %v4559 = vadd.f32 %v4205, %v4543
        %v4560 = vadd.f32 %v4208, %v4543
        %v4561 = vadd.f32 %v4211, %v4543
        %v4562 = vadd.f32 %v4214, %v4543
        %v4563 = vadd.f32 %v4217, %v4543
        %v4564 = vadd.f32 %v4220, %v4543
        %v4565 = vadd.f32 %v4223, %v4543
        %v4566 = vadd.f32 %v4226, %v4543
        %v4567 = vadd.f32 %v4229, %v4543
        %v4568 = vadd.f32 %v4232, %v4543
        %v4569 = vadd.f32 %v4235, %v4543
        %v4570 = vadd.f32 %v4238, %v4543
        %v4571 = vadd.f32 %v4241, %v4543
        %v4572 = vadd.f32 %v4244, %v4543
        %v4573 = vadd.f32 %v4247, %v4543
        %v4574 = vadd.f32 %v4250, %v4543
        %v4575 = vadd.f32 %v4253, %v4543
        %v4576 = vadd.f32 %v4256, %v4543
        %v4577 = vadd.f32 %v4259, %v4543
        %v4578 = vadd.f32 %v4262, %v4543
        %v4579 = vadd.f32 %v4265, %v4543
        %v4580 = vadd.f32 %v4268, %v4543
        %v4581 = vadd.f32 %v4271, %v4543
        %v4582 = vadd.f32 %v4274, %v4543
        %v4583 = vadd.f32 %v4277, %v4543
        %v4584 = vadd.f32 %v4280, %v4543
        %v4585 = vadd.f32 %v4283, %v4543
        %v4586 = vadd.f32 %v4286, %v4543
        %v4587 = vadd.f32 %v4289, %v4543
        %v4588 = vadd.f32 %v4292, %v4543
        %v4589 = vadd.f32 %v4295, %v4543
        %v4590 = vadd.f32 %v4298, %v4543
        %v4591 = vadd.f32 %v4301, %v4543
        %v4592 = vadd.f32 %v4304, %v4543
        %v4593 = vadd.f32 %v4307, %v4543
        %v4594 = vadd.f32 %v4310, %v4543
        %v4595 = vadd.f32 %v4313, %v4543
        %v4596 = vadd.f32 %v4316, %v4543
        %v4597 = vadd.f32 %v4319, %v4543
        %v4598 = vadd.f32 %v4322, %v4543
        %v4599 = vadd.f32 %v4325, %v4543
        %v4600 = vadd.f32 %v4328, %v4543
        %v4601 = vadd.f32 %v4331, %v4543
        %v4602 = vadd.f32 %v4334, %v4543
        %v4603 = vadd.f32 %v4337, %v4543
        %v4604 = vadd.f32 %v4340, %v4543
        %v4605 = vadd.f32 %v4343, %v4543
        %v4606 = vadd.f32 %v4346, %v4543
        %v4607 = vadd.f32 %v4349, %v4543
        %v4608 = vadd.f32 %v4352, %v4543
        %v4609 = vadd.f32 %v4355, %v4543
        %v4610 = vadd.f32 %v4358, %v4543
        %v4611 = vadd.f32 %v4361, %v4543
        %v4612 = vadd.f32 %v4364, %v4543
        %v4613 = vadd.f32 %v4367, %v4543
        %v4614 = vadd.f32 %v4370, %v4543
        %v4615 = vadd.f32 %v4373, %v4543
        %v4616 = vadd.f32 %v4376, %v4543
        %v4617 = vadd.f32 %v4379, %v4543
        %v4618 = vadd.f32 %v4382, %v4543
        %v4619 = vadd.f32 %v4385, %v4543
        %v4620 = vadd.f32 %v4388, %v4543
        %v4621 = vadd.f32 %v4391, %v4543
        %v4622 = vadd.f32 %v4394, %v4543
        %v4623 = vadd.f32 %v4397, %v4543
        %v4624 = vadd.f32 %v4400, %v4543
        %v4625 = vadd.f32 %v4403, %v4543
        %v4626 = vadd.f32 %v4406, %v4543
        %v4627 = vadd.f32 %v4409, %v4543
        %v4628 = vadd.f32 %v4412, %v4543
        %v4629 = vadd.f32 %v4415, %v4543
        %v4630 = vadd.f32 %v4418, %v4543
        %v4631 = vadd.f32 %v4421, %v4543
        %v4632 = vadd.f32 %v4424, %v4543
        %v4633 = vadd.f32 %v4427, %v4543
        %v4634 = vadd.f32 %v4430, %v4543
        %v4635 = vadd.f32 %v4433, %v4543
        %v4636 = vadd.f32 %v4436, %v4543
        %v4637 = vadd.f32 %v4439, %v4543
        %v4638 = vadd.f32 %v4442, %v4543
        %v4639 = vadd.f32 %v4445, %v4543
        %v4640 = vadd.f32 %v4448, %v4543
        %v4641 = vadd.f32 %v4451, %v4543
        %v4642 = vadd.f32 %v4454, %v4543
        %v4643 = vadd.f32 %v4457, %v4543
        %v4644 = vadd.f32 %v4460, %v4543
        %v4645 = vadd.f32 %v4463, %v4543
        %v4646 = vadd.f32 %v4466, %v4543
        %v4647 = vadd.f32 %v4469, %v4543
        %v4648 = vadd.f32 %v4472, %v4543
        %v4649 = vadd.f32 %v4475, %v4543
        %v4650 = vadd.f32 %v4478, %v4543
        %v4651 = vadd.f32 %v4481, %v4543
        %v4652 = vadd.f32 %v4484, %v4543
        %v4653 = vadd.f32 %v4487, %v4543
        %v4654 = vadd.f32 %v4490, %v4543
        %v4655 = vadd.f32 %v4493, %v4543
        %v4656 = vadd.f32 %v4496, %v4543
        %v4657 = vadd.f32 %v4499, %v4543
        %v4658 = vadd.f32 %v4502, %v4543
        %v4659 = vadd.f32 %v4505, %v4543
        %v4660 = vadd.f32 %v4508, %v4543
        %v4661 = vadd.f32 %v4511, %v4543
        %v4662 = vadd.f32 %v4514, %v4543
        %v4663 = vadd.f32 %v4517, %v4543
        %v4664 = vadd.f32 %v4520, %v4543
        %v4665 = vadd.f32 %v4523, %v4543
        %v4666 = vadd.f32 %v4526, %v4543
        %v4667 = vadd.f32 %v4529, %v4543
        %v4668 = vadd.f32 %v4532, %v4543
        %v4669 = vadd.f32 %v4535, %v4543
        %v4670 = vadd.f32 %v4538, %v4543
        %v4671 = vadd.f32 %v4541, %v4543
        %v4672 = vand.u32 2147483647, %v4544
        %v4673 = vand.u32 2147483647, %v4545
        %v4674 = vand.u32 2147483647, %v4546
        %v4675 = vand.u32 2147483647, %v4547
        %v4676 = vand.u32 2147483647, %v4548
        %v4677 = vand.u32 2147483647, %v4549
        %v4678 = vand.u32 2147483647, %v4550
        %v4679 = vand.u32 2147483647, %v4551
        %v4680 = vand.u32 2147483647, %v4552
        %v4681 = vand.u32 2147483647, %v4553
        %v4682 = vand.u32 2147483647, %v4554
        %v4683 = vand.u32 2147483647, %v4555
        %v4684 = vand.u32 2147483647, %v4556
        %v4685 = vand.u32 2147483647, %v4557
        %v4686 = vand.u32 2147483647, %v4558
        %v4687 = vand.u32 2147483647, %v4559
        %v4688 = vand.u32 2147483647, %v4560
        %v4689 = vand.u32 2147483647, %v4561
        %v4690 = vand.u32 2147483647, %v4562
        %v4691 = vand.u32 2147483647, %v4563
        %v4692 = vand.u32 2147483647, %v4564
        %v4693 = vand.u32 2147483647, %v4565
        %v4694 = vand.u32 2147483647, %v4566
        %v4695 = vand.u32 2147483647, %v4567
        %v4696 = vand.u32 2147483647, %v4568
        %v4697 = vand.u32 2147483647, %v4569
        %v4698 = vand.u32 2147483647, %v4570
        %v4699 = vand.u32 2147483647, %v4571
        %v4700 = vand.u32 2147483647, %v4572
        %v4701 = vand.u32 2147483647, %v4573
        %v4702 = vand.u32 2147483647, %v4574
        %v4703 = vand.u32 2147483647, %v4575
        %v4704 = vand.u32 2147483647, %v4576
        %v4705 = vand.u32 2147483647, %v4577
        %v4706 = vand.u32 2147483647, %v4578
        %v4707 = vand.u32 2147483647, %v4579
        %v4708 = vand.u32 2147483647, %v4580
        %v4709 = vand.u32 2147483647, %v4581
        %v4710 = vand.u32 2147483647, %v4582
        %v4711 = vand.u32 2147483647, %v4583
        %v4712 = vand.u32 2147483647, %v4584
        %v4713 = vand.u32 2147483647, %v4585
        %v4714 = vand.u32 2147483647, %v4586
        %v4715 = vand.u32 2147483647, %v4587
        %v4716 = vand.u32 2147483647, %v4588
        %v4717 = vand.u32 2147483647, %v4589
        %v4718 = vand.u32 2147483647, %v4590
        %v4719 = vand.u32 2147483647, %v4591
        %v4720 = vand.u32 2147483647, %v4592
        %v4721 = vand.u32 2147483647, %v4593
        %v4722 = vand.u32 2147483647, %v4594
        %v4723 = vand.u32 2147483647, %v4595
        %v4724 = vand.u32 2147483647, %v4596
        %v4725 = vand.u32 2147483647, %v4597
        %v4726 = vand.u32 2147483647, %v4598
        %v4727 = vand.u32 2147483647, %v4599
        %v4728 = vand.u32 2147483647, %v4600
        %v4729 = vand.u32 2147483647, %v4601
        %v4730 = vand.u32 2147483647, %v4602
        %v4731 = vand.u32 2147483647, %v4603
        %v4732 = vand.u32 2147483647, %v4604
        %v4733 = vand.u32 2147483647, %v4605
        %v4734 = vand.u32 2147483647, %v4606
        %v4735 = vand.u32 2147483647, %v4607
        %v4736 = vand.u32 2147483647, %v4608
        %v4737 = vand.u32 2147483647, %v4609
        %v4738 = vand.u32 2147483647, %v4610
        %v4739 = vand.u32 2147483647, %v4611
        %v4740 = vand.u32 2147483647, %v4612
        %v4741 = vand.u32 2147483647, %v4613
        %v4742 = vand.u32 2147483647, %v4614
        %v4743 = vand.u32 2147483647, %v4615
        %v4744 = vand.u32 2147483647, %v4616
        %v4745 = vand.u32 2147483647, %v4617
        %v4746 = vand.u32 2147483647, %v4618
        %v4747 = vand.u32 2147483647, %v4619
        %v4748 = vand.u32 2147483647, %v4620
        %v4749 = vand.u32 2147483647, %v4621
        %v4750 = vand.u32 2147483647, %v4622
        %v4751 = vand.u32 2147483647, %v4623
        %v4752 = vand.u32 2147483647, %v4624
        %v4753 = vand.u32 2147483647, %v4625
        %v4754 = vand.u32 2147483647, %v4626
        %v4755 = vand.u32 2147483647, %v4627
        %v4756 = vand.u32 2147483647, %v4628
        %v4757 = vand.u32 2147483647, %v4629
        %v4758 = vand.u32 2147483647, %v4630
        %v4759 = vand.u32 2147483647, %v4631
        %v4760 = vand.u32 2147483647, %v4632
        %v4761 = vand.u32 2147483647, %v4633
        %v4762 = vand.u32 2147483647, %v4634
        %v4763 = vand.u32 2147483647, %v4635
        %v4764 = vand.u32 2147483647, %v4636
        %v4765 = vand.u32 2147483647, %v4637
        %v4766 = vand.u32 2147483647, %v4638
        %v4767 = vand.u32 2147483647, %v4639
        %v4768 = vand.u32 2147483647, %v4640
        %v4769 = vand.u32 2147483647, %v4641
        %v4770 = vand.u32 2147483647, %v4642
        %v4771 = vand.u32 2147483647, %v4643
        %v4772 = vand.u32 2147483647, %v4644
        %v4773 = vand.u32 2147483647, %v4645
        %v4774 = vand.u32 2147483647, %v4646
        %v4775 = vand.u32 2147483647, %v4647
        %v4776 = vand.u32 2147483647, %v4648
        %v4777 = vand.u32 2147483647, %v4649
        %v4778 = vand.u32 2147483647, %v4650
        %v4779 = vand.u32 2147483647, %v4651
        %v4780 = vand.u32 2147483647, %v4652
        %v4781 = vand.u32 2147483647, %v4653
        %v4782 = vand.u32 2147483647, %v4654
        %v4783 = vand.u32 2147483647, %v4655
        %v4784 = vand.u32 2147483647, %v4656
        %v4785 = vand.u32 2147483647, %v4657
        %v4786 = vand.u32 2147483647, %v4658
        %v4787 = vand.u32 2147483647, %v4659
        %v4788 = vand.u32 2147483647, %v4660
        %v4789 = vand.u32 2147483647, %v4661
        %v4790 = vand.u32 2147483647, %v4662
        %v4791 = vand.u32 2147483647, %v4663
        %v4792 = vand.u32 2147483647, %v4664
        %v4793 = vand.u32 2147483647, %v4665
        %v4794 = vand.u32 2147483647, %v4666
        %v4795 = vand.u32 2147483647, %v4667
        %v4796 = vand.u32 2147483647, %v4668
        %v4797 = vand.u32 2147483647, %v4669
        %v4798 = vand.u32 2147483647, %v4670
        %v4799 = vand.u32 2147483647, %v4671
        %v4800 = vsub.f32 0.0, %v4672
        %v4801 = vsub.f32 0.0, %v4673
        %v4802 = vsub.f32 0.0, %v4674
        %v4803 = vsub.f32 0.0, %v4675
        %v4804 = vsub.f32 0.0, %v4676
        %v4805 = vsub.f32 0.0, %v4677
        %v4806 = vsub.f32 0.0, %v4678
        %v4807 = vsub.f32 0.0, %v4679
        %v4808 = vsub.f32 0.0, %v4680
        %v4809 = vsub.f32 0.0, %v4681
        %v4810 = vsub.f32 0.0, %v4682
        %v4811 = vsub.f32 0.0, %v4683
        %v4812 = vsub.f32 0.0, %v4684
        %v4813 = vsub.f32 0.0, %v4685
        %v4814 = vsub.f32 0.0, %v4686
        %v4815 = vsub.f32 0.0, %v4687
        %v4816 = vsub.f32 0.0, %v4688
        %v4817 = vsub.f32 0.0, %v4689
        %v4818 = vsub.f32 0.0, %v4690
        %v4819 = vsub.f32 0.0, %v4691
        %v4820 = vsub.f32 0.0, %v4692
        %v4821 = vsub.f32 0.0, %v4693
        %v4822 = vsub.f32 0.0, %v4694
        %v4823 = vsub.f32 0.0, %v4695
        %v4824 = vsub.f32 0.0, %v4696
        %v4825 = vsub.f32 0.0, %v4697
        %v4826 = vsub.f32 0.0, %v4698
        %v4827 = vsub.f32 0.0, %v4699
        %v4828 = vsub.f32 0.0, %v4700
        %v4829 = vsub.f32 0.0, %v4701
        %v4830 = vsub.f32 0.0, %v4702
        %v4831 = vsub.f32 0.0, %v4703
        %v4832 = vsub.f32 0.0, %v4704
        %v4833 = vsub.f32 0.0, %v4705
        %v4834 = vsub.f32 0.0, %v4706
        %v4835 = vsub.f32 0.0, %v4707
        %v4836 = vsub.f32 0.0, %v4708
        %v4837 = vsub.f32 0.0, %v4709
        %v4838 = vsub.f32 0.0, %v4710
        %v4839 = vsub.f32 0.0, %v4711
        %v4840 = vsub.f32 0.0, %v4712
        %v4841 = vsub.f32 0.0, %v4713
        %v4842 = vsub.f32 0.0, %v4714
        %v4843 = vsub.f32 0.0, %v4715
        %v4844 = vsub.f32 0.0, %v4716
        %v4845 = vsub.f32 0.0, %v4717
        %v4846 = vsub.f32 0.0, %v4718
        %v4847 = vsub.f32 0.0, %v4719
        %v4848 = vsub.f32 0.0, %v4720
        %v4849 = vsub.f32 0.0, %v4721
        %v4850 = vsub.f32 0.0, %v4722
        %v4851 = vsub.f32 0.0, %v4723
        %v4852 = vsub.f32 0.0, %v4724
        %v4853 = vsub.f32 0.0, %v4725
        %v4854 = vsub.f32 0.0, %v4726
        %v4855 = vsub.f32 0.0, %v4727
        %v4856 = vsub.f32 0.0, %v4728
        %v4857 = vsub.f32 0.0, %v4729
        %v4858 = vsub.f32 0.0, %v4730
        %v4859 = vsub.f32 0.0, %v4731
        %v4860 = vsub.f32 0.0, %v4732
        %v4861 = vsub.f32 0.0, %v4733
        %v4862 = vsub.f32 0.0, %v4734
        %v4863 = vsub.f32 0.0, %v4735
        %v4864 = vsub.f32 0.0, %v4736
        %v4865 = vsub.f32 0.0, %v4737
        %v4866 = vsub.f32 0.0, %v4738
        %v4867 = vsub.f32 0.0, %v4739
        %v4868 = vsub.f32 0.0, %v4740
        %v4869 = vsub.f32 0.0, %v4741
        %v4870 = vsub.f32 0.0, %v4742
        %v4871 = vsub.f32 0.0, %v4743
        %v4872 = vsub.f32 0.0, %v4744
        %v4873 = vsub.f32 0.0, %v4745
        %v4874 = vsub.f32 0.0, %v4746
        %v4875 = vsub.f32 0.0, %v4747
        %v4876 = vsub.f32 0.0, %v4748
        %v4877 = vsub.f32 0.0, %v4749
        %v4878 = vsub.f32 0.0, %v4750
        %v4879 = vsub.f32 0.0, %v4751
        %v4880 = vsub.f32 0.0, %v4752
        %v4881 = vsub.f32 0.0, %v4753
        %v4882 = vsub.f32 0.0, %v4754
        %v4883 = vsub.f32 0.0, %v4755
        %v4884 = vsub.f32 0.0, %v4756
        %v4885 = vsub.f32 0.0, %v4757
        %v4886 = vsub.f32 0.0, %v4758
        %v4887 = vsub.f32 0.0, %v4759
        %v4888 = vsub.f32 0.0, %v4760
        %v4889 = vsub.f32 0.0, %v4761
        %v4890 = vsub.f32 0.0, %v4762
        %v4891 = vsub.f32 0.0, %v4763
        %v4892 = vsub.f32 0.0, %v4764
        %v4893 = vsub.f32 0.0, %v4765
        %v4894 = vsub.f32 0.0, %v4766
        %v4895 = vsub.f32 0.0, %v4767
        %v4896 = vsub.f32 0.0, %v4768
        %v4897 = vsub.f32 0.0, %v4769
        %v4898 = vsub.f32 0.0, %v4770
        %v4899 = vsub.f32 0.0, %v4771
        %v4900 = vsub.f32 0.0, %v4772
        %v4901 = vsub.f32 0.0, %v4773
        %v4902 = vsub.f32 0.0, %v4774
        %v4903 = vsub.f32 0.0, %v4775
        %v4904 = vsub.f32 0.0, %v4776
        %v4905 = vsub.f32 0.0, %v4777
        %v4906 = vsub.f32 0.0, %v4778
        %v4907 = vsub.f32 0.0, %v4779
        %v4908 = vsub.f32 0.0, %v4780
        %v4909 = vsub.f32 0.0, %v4781
        %v4910 = vsub.f32 0.0, %v4782
        %v4911 = vsub.f32 0.0, %v4783
        %v4912 = vsub.f32 0.0, %v4784
        %v4913 = vsub.f32 0.0, %v4785
        %v4914 = vsub.f32 0.0, %v4786
        %v4915 = vsub.f32 0.0, %v4787
        %v4916 = vsub.f32 0.0, %v4788
        %v4917 = vsub.f32 0.0, %v4789
        %v4918 = vsub.f32 0.0, %v4790
        %v4919 = vsub.f32 0.0, %v4791
        %v4920 = vsub.f32 0.0, %v4792
        %v4921 = vsub.f32 0.0, %v4793
        %v4922 = vsub.f32 0.0, %v4794
        %v4923 = vsub.f32 0.0, %v4795
        %v4924 = vsub.f32 0.0, %v4796
        %v4925 = vsub.f32 0.0, %v4797
        %v4926 = vsub.f32 0.0, %v4798
        %v4927 = vsub.f32 0.0, %v4799
        %v4928 = vmul.f32 %v4800, 1.442695
        %v4929 = vpow.pop %v4928
        %v4930 = vmul.f32 %v4801, 1.442695
        %v4931 = vpow.pop %v4930
        %v4932 = vmul.f32 %v4802, 1.442695
        %v4933 = vpow.pop %v4932
        %v4934 = vmul.f32 %v4803, 1.442695
        %v4935 = vpow.pop %v4934
        %v4936 = vmul.f32 %v4804, 1.442695
        %v4937 = vpow.pop %v4936
        %v4938 = vmul.f32 %v4805, 1.442695
        %v4939 = vpow.pop %v4938
        %v4940 = vmul.f32 %v4806, 1.442695
        %v4941 = vpow.pop %v4940
        %v4942 = vmul.f32 %v4807, 1.442695
        %v4943 = vpow.pop %v4942
        %v4944 = vmul.f32 %v4808, 1.442695
        %v4945 = vpow.pop %v4944
        %v4946 = vmul.f32 %v4809, 1.442695
        %v4947 = vpow.pop %v4946
        %v4948 = vmul.f32 %v4810, 1.442695
        %v4949 = vpow.pop %v4948
        %v4950 = vmul.f32 %v4811, 1.442695
        %v4951 = vpow.pop %v4950
        %v4952 = vmul.f32 %v4812, 1.442695
        %v4953 = vpow.pop %v4952
        %v4954 = vmul.f32 %v4813, 1.442695
        %v4955 = vpow.pop %v4954
        %v4956 = vmul.f32 %v4814, 1.442695
        %v4957 = vpow.pop %v4956
        %v4958 = vmul.f32 %v4815, 1.442695
        %v4959 = vpow.pop %v4958
        %v4960 = vmul.f32 %v4816, 1.442695
        %v4961 = vpow.pop %v4960
        %v4962 = vmul.f32 %v4817, 1.442695
        %v4963 = vpow.pop %v4962
        %v4964 = vmul.f32 %v4818, 1.442695
        %v4965 = vpow.pop %v4964
        %v4966 = vmul.f32 %v4819, 1.442695
        %v4967 = vpow.pop %v4966
        %v4968 = vmul.f32 %v4820, 1.442695
        %v4969 = vpow.pop %v4968
        %v4970 = vmul.f32 %v4821, 1.442695
        %v4971 = vpow.pop %v4970
        %v4972 = vmul.f32 %v4822, 1.442695
        %v4973 = vpow.pop %v4972
        %v4974 = vmul.f32 %v4823, 1.442695
        %v4975 = vpow.pop %v4974
        %v4976 = vmul.f32 %v4824, 1.442695
        %v4977 = vpow.pop %v4976
        %v4978 = vmul.f32 %v4825, 1.442695
        %v4979 = vpow.pop %v4978
        %v4980 = vmul.f32 %v4826, 1.442695
        %v4981 = vpow.pop %v4980
        %v4982 = vmul.f32 %v4827, 1.442695
        %v4983 = vpow.pop %v4982
        %v4984 = vmul.f32 %v4828, 1.442695
        %v4985 = vpow.pop %v4984
        %v4986 = vmul.f32 %v4829, 1.442695
        %v4987 = vpow.pop %v4986
        %v4988 = vmul.f32 %v4830, 1.442695
        %v4989 = vpow.pop %v4988
        %v4990 = vmul.f32 %v4831, 1.442695
        %v4991 = vpow.pop %v4990
        %v4992 = vmul.f32 %v4832, 1.442695
        %v4993 = vpow.pop %v4992
        %v4994 = vmul.f32 %v4833, 1.442695
        %v4995 = vpow.pop %v4994
        %v4996 = vmul.f32 %v4834, 1.442695
        %v4997 = vpow.pop %v4996
        %v4998 = vmul.f32 %v4835, 1.442695
        %v4999 = vpow.pop %v4998
        %v5000 = vmul.f32 %v4836, 1.442695
        %v5001 = vpow.pop %v5000
        %v5002 = vmul.f32 %v4837, 1.442695
        %v5003 = vpow.pop %v5002
        %v5004 = vmul.f32 %v4838, 1.442695
        %v5005 = vpow.pop %v5004
        %v5006 = vmul.f32 %v4839, 1.442695
        %v5007 = vpow.pop %v5006
        %v5008 = vmul.f32 %v4840, 1.442695
        %v5009 = vpow.pop %v5008
        %v5010 = vmul.f32 %v4841, 1.442695
        %v5011 = vpow.pop %v5010
        %v5012 = vmul.f32 %v4842, 1.442695
        %v5013 = vpow.pop %v5012
        %v5014 = vmul.f32 %v4843, 1.442695
        %v5015 = vpow.pop %v5014
        %v5016 = vmul.f32 %v4844, 1.442695
        %v5017 = vpow.pop %v5016
        %v5018 = vmul.f32 %v4845, 1.442695
        %v5019 = vpow.pop %v5018
        %v5020 = vmul.f32 %v4846, 1.442695
        %v5021 = vpow.pop %v5020
        %v5022 = vmul.f32 %v4847, 1.442695
        %v5023 = vpow.pop %v5022
        %v5024 = vmul.f32 %v4848, 1.442695
        %v5025 = vpow.pop %v5024
        %v5026 = vmul.f32 %v4849, 1.442695
        %v5027 = vpow.pop %v5026
        %v5028 = vmul.f32 %v4850, 1.442695
        %v5029 = vpow.pop %v5028
        %v5030 = vmul.f32 %v4851, 1.442695
        %v5031 = vpow.pop %v5030
        %v5032 = vmul.f32 %v4852, 1.442695
        %v5033 = vpow.pop %v5032
        %v5034 = vmul.f32 %v4853, 1.442695
        %v5035 = vpow.pop %v5034
        %v5036 = vmul.f32 %v4854, 1.442695
        %v5037 = vpow.pop %v5036
        %v5038 = vmul.f32 %v4855, 1.442695
        %v5039 = vpow.pop %v5038
        %v5040 = vmul.f32 %v4856, 1.442695
        %v5041 = vpow.pop %v5040
        %v5042 = vmul.f32 %v4857, 1.442695
        %v5043 = vpow.pop %v5042
        %v5044 = vmul.f32 %v4858, 1.442695
        %v5045 = vpow.pop %v5044
        %v5046 = vmul.f32 %v4859, 1.442695
        %v5047 = vpow.pop %v5046
        %v5048 = vmul.f32 %v4860, 1.442695
        %v5049 = vpow.pop %v5048
        %v5050 = vmul.f32 %v4861, 1.442695
        %v5051 = vpow.pop %v5050
        %v5052 = vmul.f32 %v4862, 1.442695
        %v5053 = vpow.pop %v5052
        %v5054 = vmul.f32 %v4863, 1.442695
        %v5055 = vpow.pop %v5054
        %v5056 = vmul.f32 %v4864, 1.442695
        %v5057 = vpow.pop %v5056
        %v5058 = vmul.f32 %v4865, 1.442695
        %v5059 = vpow.pop %v5058
        %v5060 = vmul.f32 %v4866, 1.442695
        %v5061 = vpow.pop %v5060
        %v5062 = vmul.f32 %v4867, 1.442695
        %v5063 = vpow.pop %v5062
        %v5064 = vmul.f32 %v4868, 1.442695
        %v5065 = vpow.pop %v5064
        %v5066 = vmul.f32 %v4869, 1.442695
        %v5067 = vpow.pop %v5066
        %v5068 = vmul.f32 %v4870, 1.442695
        %v5069 = vpow.pop %v5068
        %v5070 = vmul.f32 %v4871, 1.442695
        %v5071 = vpow.pop %v5070
        %v5072 = vmul.f32 %v4872, 1.442695
        %v5073 = vpow.pop %v5072
        %v5074 = vmul.f32 %v4873, 1.442695
        %v5075 = vpow.pop %v5074
        %v5076 = vmul.f32 %v4874, 1.442695
        %v5077 = vpow.pop %v5076
        %v5078 = vmul.f32 %v4875, 1.442695
        %v5079 = vpow.pop %v5078
        %v5080 = vmul.f32 %v4876, 1.442695
        %v5081 = vpow.pop %v5080
        %v5082 = vmul.f32 %v4877, 1.442695
        %v5083 = vpow.pop %v5082
        %v5084 = vmul.f32 %v4878, 1.442695
        %v5085 = vpow.pop %v5084
        %v5086 = vmul.f32 %v4879, 1.442695
        %v5087 = vpow.pop %v5086
        %v5088 = vmul.f32 %v4880, 1.442695
        %v5089 = vpow.pop %v5088
        %v5090 = vmul.f32 %v4881, 1.442695
        %v5091 = vpow.pop %v5090
        %v5092 = vmul.f32 %v4882, 1.442695
        %v5093 = vpow.pop %v5092
        %v5094 = vmul.f32 %v4883, 1.442695
        %v5095 = vpow.pop %v5094
        %v5096 = vmul.f32 %v4884, 1.442695
        %v5097 = vpow.pop %v5096
        %v5098 = vmul.f32 %v4885, 1.442695
        %v5099 = vpow.pop %v5098
        %v5100 = vmul.f32 %v4886, 1.442695
        %v5101 = vpow.pop %v5100
        %v5102 = vmul.f32 %v4887, 1.442695
        %v5103 = vpow.pop %v5102
        %v5104 = vmul.f32 %v4888, 1.442695
        %v5105 = vpow.pop %v5104
        %v5106 = vmul.f32 %v4889, 1.442695
        %v5107 = vpow.pop %v5106
        %v5108 = vmul.f32 %v4890, 1.442695
        %v5109 = vpow.pop %v5108
        %v5110 = vmul.f32 %v4891, 1.442695
        %v5111 = vpow.pop %v5110
        %v5112 = vmul.f32 %v4892, 1.442695
        %v5113 = vpow.pop %v5112
        %v5114 = vmul.f32 %v4893, 1.442695
        %v5115 = vpow.pop %v5114
        %v5116 = vmul.f32 %v4894, 1.442695
        %v5117 = vpow.pop %v5116
        %v5118 = vmul.f32 %v4895, 1.442695
        %v5119 = vpow.pop %v5118
        %v5120 = vmul.f32 %v4896, 1.442695
        %v5121 = vpow.pop %v5120
        %v5122 = vmul.f32 %v4897, 1.442695
        %v5123 = vpow.pop %v5122
        %v5124 = vmul.f32 %v4898, 1.442695
        %v5125 = vpow.pop %v5124
        %v5126 = vmul.f32 %v4899, 1.442695
        %v5127 = vpow.pop %v5126
        %v5128 = vmul.f32 %v4900, 1.442695
        %v5129 = vpow.pop %v5128
        %v5130 = vmul.f32 %v4901, 1.442695
        %v5131 = vpow.pop %v5130
        %v5132 = vmul.f32 %v4902, 1.442695
        %v5133 = vpow.pop %v5132
        %v5134 = vmul.f32 %v4903, 1.442695
        %v5135 = vpow.pop %v5134
        %v5136 = vmul.f32 %v4904, 1.442695
        %v5137 = vpow.pop %v5136
        %v5138 = vmul.f32 %v4905, 1.442695
        %v5139 = vpow.pop %v5138
        %v5140 = vmul.f32 %v4906, 1.442695
        %v5141 = vpow.pop %v5140
        %v5142 = vmul.f32 %v4907, 1.442695
        %v5143 = vpow.pop %v5142
        %v5144 = vmul.f32 %v4908, 1.442695
        %v5145 = vpow.pop %v5144
        %v5146 = vmul.f32 %v4909, 1.442695
        %v5147 = vpow.pop %v5146
        %v5148 = vmul.f32 %v4910, 1.442695
        %v5149 = vpow.pop %v5148
        %v5150 = vmul.f32 %v4911, 1.442695
        %v5151 = vpow.pop %v5150
        %v5152 = vmul.f32 %v4912, 1.442695
        %v5153 = vpow.pop %v5152
        %v5154 = vmul.f32 %v4913, 1.442695
        %v5155 = vpow.pop %v5154
        %v5156 = vmul.f32 %v4914, 1.442695
        %v5157 = vpow.pop %v5156
        %v5158 = vmul.f32 %v4915, 1.442695
        %v5159 = vpow.pop %v5158
        %v5160 = vmul.f32 %v4916, 1.442695
        %v5161 = vpow.pop %v5160
        %v5162 = vmul.f32 %v4917, 1.442695
        %v5163 = vpow.pop %v5162
        %v5164 = vmul.f32 %v4918, 1.442695
        %v5165 = vpow.pop %v5164
        %v5166 = vmul.f32 %v4919, 1.442695
        %v5167 = vpow.pop %v5166
        %v5168 = vmul.f32 %v4920, 1.442695
        %v5169 = vpow.pop %v5168
        %v5170 = vmul.f32 %v4921, 1.442695
        %v5171 = vpow.pop %v5170
        %v5172 = vmul.f32 %v4922, 1.442695
        %v5173 = vpow.pop %v5172
        %v5174 = vmul.f32 %v4923, 1.442695
        %v5175 = vpow.pop %v5174
        %v5176 = vmul.f32 %v4924, 1.442695
        %v5177 = vpow.pop %v5176
        %v5178 = vmul.f32 %v4925, 1.442695
        %v5179 = vpow.pop %v5178
        %v5180 = vmul.f32 %v4926, 1.442695
        %v5181 = vpow.pop %v5180
        %v5182 = vmul.f32 %v4927, 1.442695
        %v5183 = vpow.pop %v5182
        %v5184 = vadd.f32 %v4929, 1.0
        %v5185 = vadd.f32 %v4931, 1.0
        %v5186 = vadd.f32 %v4933, 1.0
        %v5187 = vadd.f32 %v4935, 1.0
        %v5188 = vadd.f32 %v4937, 1.0
        %v5189 = vadd.f32 %v4939, 1.0
        %v5190 = vadd.f32 %v4941, 1.0
        %v5191 = vadd.f32 %v4943, 1.0
        %v5192 = vadd.f32 %v4945, 1.0
        %v5193 = vadd.f32 %v4947, 1.0
        %v5194 = vadd.f32 %v4949, 1.0
        %v5195 = vadd.f32 %v4951, 1.0
        %v5196 = vadd.f32 %v4953, 1.0
        %v5197 = vadd.f32 %v4955, 1.0
        %v5198 = vadd.f32 %v4957, 1.0
        %v5199 = vadd.f32 %v4959, 1.0
        %v5200 = vadd.f32 %v4961, 1.0
        %v5201 = vadd.f32 %v4963, 1.0
        %v5202 = vadd.f32 %v4965, 1.0
        %v5203 = vadd.f32 %v4967, 1.0
        %v5204 = vadd.f32 %v4969, 1.0
        %v5205 = vadd.f32 %v4971, 1.0
        %v5206 = vadd.f32 %v4973, 1.0
        %v5207 = vadd.f32 %v4975, 1.0
        %v5208 = vadd.f32 %v4977, 1.0
        %v5209 = vadd.f32 %v4979, 1.0
        %v5210 = vadd.f32 %v4981, 1.0
        %v5211 = vadd.f32 %v4983, 1.0
        %v5212 = vadd.f32 %v4985, 1.0
        %v5213 = vadd.f32 %v4987, 1.0
        %v5214 = vadd.f32 %v4989, 1.0
        %v5215 = vadd.f32 %v4991, 1.0
        %v5216 = vadd.f32 %v4993, 1.0
        %v5217 = vadd.f32 %v4995, 1.0
        %v5218 = vadd.f32 %v4997, 1.0
        %v5219 = vadd.f32 %v4999, 1.0
        %v5220 = vadd.f32 %v5001, 1.0
        %v5221 = vadd.f32 %v5003, 1.0
        %v5222 = vadd.f32 %v5005, 1.0
        %v5223 = vadd.f32 %v5007, 1.0
        %v5224 = vadd.f32 %v5009, 1.0
        %v5225 = vadd.f32 %v5011, 1.0
        %v5226 = vadd.f32 %v5013, 1.0
        %v5227 = vadd.f32 %v5015, 1.0
        %v5228 = vadd.f32 %v5017, 1.0
        %v5229 = vadd.f32 %v5019, 1.0
        %v5230 = vadd.f32 %v5021, 1.0
        %v5231 = vadd.f32 %v5023, 1.0
        %v5232 = vadd.f32 %v5025, 1.0
        %v5233 = vadd.f32 %v5027, 1.0
        %v5234 = vadd.f32 %v5029, 1.0
        %v5235 = vadd.f32 %v5031, 1.0
        %v5236 = vadd.f32 %v5033, 1.0
        %v5237 = vadd.f32 %v5035, 1.0
        %v5238 = vadd.f32 %v5037, 1.0
        %v5239 = vadd.f32 %v5039, 1.0
        %v5240 = vadd.f32 %v5041, 1.0
        %v5241 = vadd.f32 %v5043, 1.0
        %v5242 = vadd.f32 %v5045, 1.0
        %v5243 = vadd.f32 %v5047, 1.0
        %v5244 = vadd.f32 %v5049, 1.0
        %v5245 = vadd.f32 %v5051, 1.0
        %v5246 = vadd.f32 %v5053, 1.0
        %v5247 = vadd.f32 %v5055, 1.0
        %v5248 = vadd.f32 %v5057, 1.0
        %v5249 = vadd.f32 %v5059, 1.0
        %v5250 = vadd.f32 %v5061, 1.0
        %v5251 = vadd.f32 %v5063, 1.0
        %v5252 = vadd.f32 %v5065, 1.0
        %v5253 = vadd.f32 %v5067, 1.0
        %v5254 = vadd.f32 %v5069, 1.0
        %v5255 = vadd.f32 %v5071, 1.0
        %v5256 = vadd.f32 %v5073, 1.0
        %v5257 = vadd.f32 %v5075, 1.0
        %v5258 = vadd.f32 %v5077, 1.0
        %v5259 = vadd.f32 %v5079, 1.0
        %v5260 = vadd.f32 %v5081, 1.0
        %v5261 = vadd.f32 %v5083, 1.0
        %v5262 = vadd.f32 %v5085, 1.0
        %v5263 = vadd.f32 %v5087, 1.0
        %v5264 = vadd.f32 %v5089, 1.0
        %v5265 = vadd.f32 %v5091, 1.0
        %v5266 = vadd.f32 %v5093, 1.0
        %v5267 = vadd.f32 %v5095, 1.0
        %v5268 = vadd.f32 %v5097, 1.0
        %v5269 = vadd.f32 %v5099, 1.0
        %v5270 = vadd.f32 %v5101, 1.0
        %v5271 = vadd.f32 %v5103, 1.0
        %v5272 = vadd.f32 %v5105, 1.0
        %v5273 = vadd.f32 %v5107, 1.0
        %v5274 = vadd.f32 %v5109, 1.0
        %v5275 = vadd.f32 %v5111, 1.0
        %v5276 = vadd.f32 %v5113, 1.0
        %v5277 = vadd.f32 %v5115, 1.0
        %v5278 = vadd.f32 %v5117, 1.0
        %v5279 = vadd.f32 %v5119, 1.0
        %v5280 = vadd.f32 %v5121, 1.0
        %v5281 = vadd.f32 %v5123, 1.0
        %v5282 = vadd.f32 %v5125, 1.0
        %v5283 = vadd.f32 %v5127, 1.0
        %v5284 = vadd.f32 %v5129, 1.0
        %v5285 = vadd.f32 %v5131, 1.0
        %v5286 = vadd.f32 %v5133, 1.0
        %v5287 = vadd.f32 %v5135, 1.0
        %v5288 = vadd.f32 %v5137, 1.0
        %v5289 = vadd.f32 %v5139, 1.0
        %v5290 = vadd.f32 %v5141, 1.0
        %v5291 = vadd.f32 %v5143, 1.0
        %v5292 = vadd.f32 %v5145, 1.0
        %v5293 = vadd.f32 %v5147, 1.0
        %v5294 = vadd.f32 %v5149, 1.0
        %v5295 = vadd.f32 %v5151, 1.0
        %v5296 = vadd.f32 %v5153, 1.0
        %v5297 = vadd.f32 %v5155, 1.0
        %v5298 = vadd.f32 %v5157, 1.0
        %v5299 = vadd.f32 %v5159, 1.0
        %v5300 = vadd.f32 %v5161, 1.0
        %v5301 = vadd.f32 %v5163, 1.0
        %v5302 = vadd.f32 %v5165, 1.0
        %v5303 = vadd.f32 %v5167, 1.0
        %v5304 = vadd.f32 %v5169, 1.0
        %v5305 = vadd.f32 %v5171, 1.0
        %v5306 = vadd.f32 %v5173, 1.0
        %v5307 = vadd.f32 %v5175, 1.0
        %v5308 = vadd.f32 %v5177, 1.0
        %v5309 = vadd.f32 %v5179, 1.0
        %v5310 = vadd.f32 %v5181, 1.0
        %v5311 = vadd.f32 %v5183, 1.0
        %v5312 = vrcp.pop %v5184
        %v5313 = vrcp.pop %v5185
        %v5314 = vrcp.pop %v5186
        %v5315 = vrcp.pop %v5187
        %v5316 = vrcp.pop %v5188
        %v5317 = vrcp.pop %v5189
        %v5318 = vrcp.pop %v5190
        %v5319 = vrcp.pop %v5191
        %v5320 = vrcp.pop %v5192
        %v5321 = vrcp.pop %v5193
        %v5322 = vrcp.pop %v5194
        %v5323 = vrcp.pop %v5195
        %v5324 = vrcp.pop %v5196
        %v5325 = vrcp.pop %v5197
        %v5326 = vrcp.pop %v5198
        %v5327 = vrcp.pop %v5199
        %v5328 = vrcp.pop %v5200
        %v5329 = vrcp.pop %v5201
        %v5330 = vrcp.pop %v5202
        %v5331 = vrcp.pop %v5203
        %v5332 = vrcp.pop %v5204
        %v5333 = vrcp.pop %v5205
        %v5334 = vrcp.pop %v5206
        %v5335 = vrcp.pop %v5207
        %v5336 = vrcp.pop %v5208
        %v5337 = vrcp.pop %v5209
        %v5338 = vrcp.pop %v5210
        %v5339 = vrcp.pop %v5211
        %v5340 = vrcp.pop %v5212
        %v5341 = vrcp.pop %v5213
        %v5342 = vrcp.pop %v5214
        %v5343 = vrcp.pop %v5215
        %v5344 = vrcp.pop %v5216
        %v5345 = vrcp.pop %v5217
        %v5346 = vrcp.pop %v5218
        %v5347 = vrcp.pop %v5219
        %v5348 = vrcp.pop %v5220
        %v5349 = vrcp.pop %v5221
        %v5350 = vrcp.pop %v5222
        %v5351 = vrcp.pop %v5223
        %v5352 = vrcp.pop %v5224
        %v5353 = vrcp.pop %v5225
        %v5354 = vrcp.pop %v5226
        %v5355 = vrcp.pop %v5227
        %v5356 = vrcp.pop %v5228
        %v5357 = vrcp.pop %v5229
        %v5358 = vrcp.pop %v5230
        %v5359 = vrcp.pop %v5231
        %v5360 = vrcp.pop %v5232
        %v5361 = vrcp.pop %v5233
        %v5362 = vrcp.pop %v5234
        %v5363 = vrcp.pop %v5235
        %v5364 = vrcp.pop %v5236
        %v5365 = vrcp.pop %v5237
        %v5366 = vrcp.pop %v5238
        %v5367 = vrcp.pop %v5239
        %v5368 = vrcp.pop %v5240
        %v5369 = vrcp.pop %v5241
        %v5370 = vrcp.pop %v5242
        %v5371 = vrcp.pop %v5243
        %v5372 = vrcp.pop %v5244
        %v5373 = vrcp.pop %v5245
        %v5374 = vrcp.pop %v5246
        %v5375 = vrcp.pop %v5247
        %v5376 = vrcp.pop %v5248
        %v5377 = vrcp.pop %v5249
        %v5378 = vrcp.pop %v5250
        %v5379 = vrcp.pop %v5251
        %v5380 = vrcp.pop %v5252
        %v5381 = vrcp.pop %v5253
        %v5382 = vrcp.pop %v5254
        %v5383 = vrcp.pop %v5255
        %v5384 = vrcp.pop %v5256
        %v5385 = vrcp.pop %v5257
        %v5386 = vrcp.pop %v5258
        %v5387 = vrcp.pop %v5259
        %v5388 = vrcp.pop %v5260
        %v5389 = vrcp.pop %v5261
        %v5390 = vrcp.pop %v5262
        %v5391 = vrcp.pop %v5263
        %v5392 = vrcp.pop %v5264
        %v5393 = vrcp.pop %v5265
        %v5394 = vrcp.pop %v5266
        %v5395 = vrcp.pop %v5267
        %v5396 = vrcp.pop %v5268
        %v5397 = vrcp.pop %v5269
        %v5398 = vrcp.pop %v5270
        %v5399 = vrcp.pop %v5271
        %v5400 = vrcp.pop %v5272
        %v5401 = vrcp.pop %v5273
        %v5402 = vrcp.pop %v5274
        %v5403 = vrcp.pop %v5275
        %v5404 = vrcp.pop %v5276
        %v5405 = vrcp.pop %v5277
        %v5406 = vrcp.pop %v5278
        %v5407 = vrcp.pop %v5279
        %v5408 = vrcp.pop %v5280
        %v5409 = vrcp.pop %v5281
        %v5410 = vrcp.pop %v5282
        %v5411 = vrcp.pop %v5283
        %v5412 = vrcp.pop %v5284
        %v5413 = vrcp.pop %v5285
        %v5414 = vrcp.pop %v5286
        %v5415 = vrcp.pop %v5287
        %v5416 = vrcp.pop %v5288
        %v5417 = vrcp.pop %v5289
        %v5418 = vrcp.pop %v5290
        %v5419 = vrcp.pop %v5291
        %v5420 = vrcp.pop %v5292
        %v5421 = vrcp.pop %v5293
        %v5422 = vrcp.pop %v5294
        %v5423 = vrcp.pop %v5295
        %v5424 = vrcp.pop %v5296
        %v5425 = vrcp.pop %v5297
        %v5426 = vrcp.pop %v5298
        %v5427 = vrcp.pop %v5299
        %v5428 = vrcp.pop %v5300
        %v5429 = vrcp.pop %v5301
        %v5430 = vrcp.pop %v5302
        %v5431 = vrcp.pop %v5303
        %v5432 = vrcp.pop %v5304
        %v5433 = vrcp.pop %v5305
        %v5434 = vrcp.pop %v5306
        %v5435 = vrcp.pop %v5307
        %v5436 = vrcp.pop %v5308
        %v5437 = vrcp.pop %v5309
        %v5438 = vrcp.pop %v5310
        %v5439 = vrcp.pop %v5311
        %vm5440 = vcmp.ge.f32.partialorder %v4544, 0.0
        %vm5441 = vcmp.ge.f32.partialorder %v4545, 0.0
        %vm5442 = vcmp.ge.f32.partialorder %v4546, 0.0
        %vm5443 = vcmp.ge.f32.partialorder %v4547, 0.0
        %vm5444 = vcmp.ge.f32.partialorder %v4548, 0.0
        %vm5445 = vcmp.ge.f32.partialorder %v4549, 0.0
        %vm5446 = vcmp.ge.f32.partialorder %v4550, 0.0
        %vm5447 = vcmp.ge.f32.partialorder %v4551, 0.0
        %vm5448 = vcmp.ge.f32.partialorder %v4552, 0.0
        %vm5449 = vcmp.ge.f32.partialorder %v4553, 0.0
        %vm5450 = vcmp.ge.f32.partialorder %v4554, 0.0
        %vm5451 = vcmp.ge.f32.partialorder %v4555, 0.0
        %vm5452 = vcmp.ge.f32.partialorder %v4556, 0.0
        %vm5453 = vcmp.ge.f32.partialorder %v4557, 0.0
        %vm5454 = vcmp.ge.f32.partialorder %v4558, 0.0
        %vm5455 = vcmp.ge.f32.partialorder %v4559, 0.0
        %vm5456 = vcmp.ge.f32.partialorder %v4560, 0.0
        %vm5457 = vcmp.ge.f32.partialorder %v4561, 0.0
        %vm5458 = vcmp.ge.f32.partialorder %v4562, 0.0
        %vm5459 = vcmp.ge.f32.partialorder %v4563, 0.0
        %vm5460 = vcmp.ge.f32.partialorder %v4564, 0.0
        %vm5461 = vcmp.ge.f32.partialorder %v4565, 0.0
        %vm5462 = vcmp.ge.f32.partialorder %v4566, 0.0
        %vm5463 = vcmp.ge.f32.partialorder %v4567, 0.0
        %vm5464 = vcmp.ge.f32.partialorder %v4568, 0.0
        %vm5465 = vcmp.ge.f32.partialorder %v4569, 0.0
        %vm5466 = vcmp.ge.f32.partialorder %v4570, 0.0
        %vm5467 = vcmp.ge.f32.partialorder %v4571, 0.0
        %vm5468 = vcmp.ge.f32.partialorder %v4572, 0.0
        %vm5469 = vcmp.ge.f32.partialorder %v4573, 0.0
        %vm5470 = vcmp.ge.f32.partialorder %v4574, 0.0
        %vm5471 = vcmp.ge.f32.partialorder %v4575, 0.0
        %vm5472 = vcmp.ge.f32.partialorder %v4576, 0.0
        %vm5473 = vcmp.ge.f32.partialorder %v4577, 0.0
        %vm5474 = vcmp.ge.f32.partialorder %v4578, 0.0
        %vm5475 = vcmp.ge.f32.partialorder %v4579, 0.0
        %vm5476 = vcmp.ge.f32.partialorder %v4580, 0.0
        %vm5477 = vcmp.ge.f32.partialorder %v4581, 0.0
        %vm5478 = vcmp.ge.f32.partialorder %v4582, 0.0
        %vm5479 = vcmp.ge.f32.partialorder %v4583, 0.0
        %vm5480 = vcmp.ge.f32.partialorder %v4584, 0.0
        %vm5481 = vcmp.ge.f32.partialorder %v4585, 0.0
        %vm5482 = vcmp.ge.f32.partialorder %v4586, 0.0
        %vm5483 = vcmp.ge.f32.partialorder %v4587, 0.0
        %vm5484 = vcmp.ge.f32.partialorder %v4588, 0.0
        %vm5485 = vcmp.ge.f32.partialorder %v4589, 0.0
        %vm5486 = vcmp.ge.f32.partialorder %v4590, 0.0
        %vm5487 = vcmp.ge.f32.partialorder %v4591, 0.0
        %vm5488 = vcmp.ge.f32.partialorder %v4592, 0.0
        %vm5489 = vcmp.ge.f32.partialorder %v4593, 0.0
        %vm5490 = vcmp.ge.f32.partialorder %v4594, 0.0
        %vm5491 = vcmp.ge.f32.partialorder %v4595, 0.0
        %vm5492 = vcmp.ge.f32.partialorder %v4596, 0.0
        %vm5493 = vcmp.ge.f32.partialorder %v4597, 0.0
        %vm5494 = vcmp.ge.f32.partialorder %v4598, 0.0
        %vm5495 = vcmp.ge.f32.partialorder %v4599, 0.0
        %vm5496 = vcmp.ge.f32.partialorder %v4600, 0.0
        %vm5497 = vcmp.ge.f32.partialorder %v4601, 0.0
        %vm5498 = vcmp.ge.f32.partialorder %v4602, 0.0
        %vm5499 = vcmp.ge.f32.partialorder %v4603, 0.0
        %vm5500 = vcmp.ge.f32.partialorder %v4604, 0.0
        %vm5501 = vcmp.ge.f32.partialorder %v4605, 0.0
        %vm5502 = vcmp.ge.f32.partialorder %v4606, 0.0
        %vm5503 = vcmp.ge.f32.partialorder %v4607, 0.0
        %vm5504 = vcmp.ge.f32.partialorder %v4608, 0.0
        %vm5505 = vcmp.ge.f32.partialorder %v4609, 0.0
        %vm5506 = vcmp.ge.f32.partialorder %v4610, 0.0
        %vm5507 = vcmp.ge.f32.partialorder %v4611, 0.0
        %vm5508 = vcmp.ge.f32.partialorder %v4612, 0.0
        %vm5509 = vcmp.ge.f32.partialorder %v4613, 0.0
        %vm5510 = vcmp.ge.f32.partialorder %v4614, 0.0
        %vm5511 = vcmp.ge.f32.partialorder %v4615, 0.0
        %vm5512 = vcmp.ge.f32.partialorder %v4616, 0.0
        %vm5513 = vcmp.ge.f32.partialorder %v4617, 0.0
        %vm5514 = vcmp.ge.f32.partialorder %v4618, 0.0
        %vm5515 = vcmp.ge.f32.partialorder %v4619, 0.0
        %vm5516 = vcmp.ge.f32.partialorder %v4620, 0.0
        %vm5517 = vcmp.ge.f32.partialorder %v4621, 0.0
        %vm5518 = vcmp.ge.f32.partialorder %v4622, 0.0
        %vm5519 = vcmp.ge.f32.partialorder %v4623, 0.0
        %vm5520 = vcmp.ge.f32.partialorder %v4624, 0.0
        %vm5521 = vcmp.ge.f32.partialorder %v4625, 0.0
        %vm5522 = vcmp.ge.f32.partialorder %v4626, 0.0
        %vm5523 = vcmp.ge.f32.partialorder %v4627, 0.0
        %vm5524 = vcmp.ge.f32.partialorder %v4628, 0.0
        %vm5525 = vcmp.ge.f32.partialorder %v4629, 0.0
        %vm5526 = vcmp.ge.f32.partialorder %v4630, 0.0
        %vm5527 = vcmp.ge.f32.partialorder %v4631, 0.0
        %vm5528 = vcmp.ge.f32.partialorder %v4632, 0.0
        %vm5529 = vcmp.ge.f32.partialorder %v4633, 0.0
        %vm5530 = vcmp.ge.f32.partialorder %v4634, 0.0
        %vm5531 = vcmp.ge.f32.partialorder %v4635, 0.0
        %vm5532 = vcmp.ge.f32.partialorder %v4636, 0.0
        %vm5533 = vcmp.ge.f32.partialorder %v4637, 0.0
        %vm5534 = vcmp.ge.f32.partialorder %v4638, 0.0
        %vm5535 = vcmp.ge.f32.partialorder %v4639, 0.0
        %vm5536 = vcmp.ge.f32.partialorder %v4640, 0.0
        %vm5537 = vcmp.ge.f32.partialorder %v4641, 0.0
        %vm5538 = vcmp.ge.f32.partialorder %v4642, 0.0
        %vm5539 = vcmp.ge.f32.partialorder %v4643, 0.0
        %vm5540 = vcmp.ge.f32.partialorder %v4644, 0.0
        %vm5541 = vcmp.ge.f32.partialorder %v4645, 0.0
        %vm5542 = vcmp.ge.f32.partialorder %v4646, 0.0
        %vm5543 = vcmp.ge.f32.partialorder %v4647, 0.0
        %vm5544 = vcmp.ge.f32.partialorder %v4648, 0.0
        %vm5545 = vcmp.ge.f32.partialorder %v4649, 0.0
        %vm5546 = vcmp.ge.f32.partialorder %v4650, 0.0
        %vm5547 = vcmp.ge.f32.partialorder %v4651, 0.0
        %vm5548 = vcmp.ge.f32.partialorder %v4652, 0.0
        %vm5549 = vcmp.ge.f32.partialorder %v4653, 0.0
        %vm5550 = vcmp.ge.f32.partialorder %v4654, 0.0
        %vm5551 = vcmp.ge.f32.partialorder %v4655, 0.0
        %vm5552 = vcmp.ge.f32.partialorder %v4656, 0.0
        %vm5553 = vcmp.ge.f32.partialorder %v4657, 0.0
        %vm5554 = vcmp.ge.f32.partialorder %v4658, 0.0
        %vm5555 = vcmp.ge.f32.partialorder %v4659, 0.0
        %vm5556 = vcmp.ge.f32.partialorder %v4660, 0.0
        %vm5557 = vcmp.ge.f32.partialorder %v4661, 0.0
        %vm5558 = vcmp.ge.f32.partialorder %v4662, 0.0
        %vm5559 = vcmp.ge.f32.partialorder %v4663, 0.0
        %vm5560 = vcmp.ge.f32.partialorder %v4664, 0.0
        %vm5561 = vcmp.ge.f32.partialorder %v4665, 0.0
        %vm5562 = vcmp.ge.f32.partialorder %v4666, 0.0
        %vm5563 = vcmp.ge.f32.partialorder %v4667, 0.0
        %vm5564 = vcmp.ge.f32.partialorder %v4668, 0.0
        %vm5565 = vcmp.ge.f32.partialorder %v4669, 0.0
        %vm5566 = vcmp.ge.f32.partialorder %v4670, 0.0
        %vm5567 = vcmp.ge.f32.partialorder %v4671, 0.0
        %v5568 = vmul.f32 %v4929, %v5312
        %v5569 = vmul.f32 %v4931, %v5313
        %v5570 = vmul.f32 %v4933, %v5314
        %v5571 = vmul.f32 %v4935, %v5315
        %v5572 = vmul.f32 %v4937, %v5316
        %v5573 = vmul.f32 %v4939, %v5317
        %v5574 = vmul.f32 %v4941, %v5318
        %v5575 = vmul.f32 %v4943, %v5319
        %v5576 = vmul.f32 %v4945, %v5320
        %v5577 = vmul.f32 %v4947, %v5321
        %v5578 = vmul.f32 %v4949, %v5322
        %v5579 = vmul.f32 %v4951, %v5323
        %v5580 = vmul.f32 %v4953, %v5324
        %v5581 = vmul.f32 %v4955, %v5325
        %v5582 = vmul.f32 %v4957, %v5326
        %v5583 = vmul.f32 %v4959, %v5327
        %v5584 = vmul.f32 %v4961, %v5328
        %v5585 = vmul.f32 %v4963, %v5329
        %v5586 = vmul.f32 %v4965, %v5330
        %v5587 = vmul.f32 %v4967, %v5331
        %v5588 = vmul.f32 %v4969, %v5332
        %v5589 = vmul.f32 %v4971, %v5333
        %v5590 = vmul.f32 %v4973, %v5334
        %v5591 = vmul.f32 %v4975, %v5335
        %v5592 = vmul.f32 %v4977, %v5336
        %v5593 = vmul.f32 %v4979, %v5337
        %v5594 = vmul.f32 %v4981, %v5338
        %v5595 = vmul.f32 %v4983, %v5339
        %v5596 = vmul.f32 %v4985, %v5340
        %v5597 = vmul.f32 %v4987, %v5341
        %v5598 = vmul.f32 %v4989, %v5342
        %v5599 = vmul.f32 %v4991, %v5343
        %v5600 = vmul.f32 %v4993, %v5344
        %v5601 = vmul.f32 %v4995, %v5345
        %v5602 = vmul.f32 %v4997, %v5346
        %v5603 = vmul.f32 %v4999, %v5347
        %v5604 = vmul.f32 %v5001, %v5348
        %v5605 = vmul.f32 %v5003, %v5349
        %v5606 = vmul.f32 %v5005, %v5350
        %v5607 = vmul.f32 %v5007, %v5351
        %v5608 = vmul.f32 %v5009, %v5352
        %v5609 = vmul.f32 %v5011, %v5353
        %v5610 = vmul.f32 %v5013, %v5354
        %v5611 = vmul.f32 %v5015, %v5355
        %v5612 = vmul.f32 %v5017, %v5356
        %v5613 = vmul.f32 %v5019, %v5357
        %v5614 = vmul.f32 %v5021, %v5358
        %v5615 = vmul.f32 %v5023, %v5359
        %v5616 = vmul.f32 %v5025, %v5360
        %v5617 = vmul.f32 %v5027, %v5361
        %v5618 = vmul.f32 %v5029, %v5362
        %v5619 = vmul.f32 %v5031, %v5363
        %v5620 = vmul.f32 %v5033, %v5364
        %v5621 = vmul.f32 %v5035, %v5365
        %v5622 = vmul.f32 %v5037, %v5366
        %v5623 = vmul.f32 %v5039, %v5367
        %v5624 = vmul.f32 %v5041, %v5368
        %v5625 = vmul.f32 %v5043, %v5369
        %v5626 = vmul.f32 %v5045, %v5370
        %v5627 = vmul.f32 %v5047, %v5371
        %v5628 = vmul.f32 %v5049, %v5372
        %v5629 = vmul.f32 %v5051, %v5373
        %v5630 = vmul.f32 %v5053, %v5374
        %v5631 = vmul.f32 %v5055, %v5375
        %v5632 = vmul.f32 %v5057, %v5376
        %v5633 = vmul.f32 %v5059, %v5377
        %v5634 = vmul.f32 %v5061, %v5378
        %v5635 = vmul.f32 %v5063, %v5379
        %v5636 = vmul.f32 %v5065, %v5380
        %v5637 = vmul.f32 %v5067, %v5381
        %v5638 = vmul.f32 %v5069, %v5382
        %v5639 = vmul.f32 %v5071, %v5383
        %v5640 = vmul.f32 %v5073, %v5384
        %v5641 = vmul.f32 %v5075, %v5385
        %v5642 = vmul.f32 %v5077, %v5386
        %v5643 = vmul.f32 %v5079, %v5387
        %v5644 = vmul.f32 %v5081, %v5388
        %v5645 = vmul.f32 %v5083, %v5389
        %v5646 = vmul.f32 %v5085, %v5390
        %v5647 = vmul.f32 %v5087, %v5391
        %v5648 = vmul.f32 %v5089, %v5392
        %v5649 = vmul.f32 %v5091, %v5393
        %v5650 = vmul.f32 %v5093, %v5394
        %v5651 = vmul.f32 %v5095, %v5395
        %v5652 = vmul.f32 %v5097, %v5396
        %v5653 = vmul.f32 %v5099, %v5397
        %v5654 = vmul.f32 %v5101, %v5398
        %v5655 = vmul.f32 %v5103, %v5399
        %v5656 = vmul.f32 %v5105, %v5400
        %v5657 = vmul.f32 %v5107, %v5401
        %v5658 = vmul.f32 %v5109, %v5402
        %v5659 = vmul.f32 %v5111, %v5403
        %v5660 = vmul.f32 %v5113, %v5404
        %v5661 = vmul.f32 %v5115, %v5405
        %v5662 = vmul.f32 %v5117, %v5406
        %v5663 = vmul.f32 %v5119, %v5407
        %v5664 = vmul.f32 %v5121, %v5408
        %v5665 = vmul.f32 %v5123, %v5409
        %v5666 = vmul.f32 %v5125, %v5410
        %v5667 = vmul.f32 %v5127, %v5411
        %v5668 = vmul.f32 %v5129, %v5412
        %v5669 = vmul.f32 %v5131, %v5413
        %v5670 = vmul.f32 %v5133, %v5414
        %v5671 = vmul.f32 %v5135, %v5415
        %v5672 = vmul.f32 %v5137, %v5416
        %v5673 = vmul.f32 %v5139, %v5417
        %v5674 = vmul.f32 %v5141, %v5418
        %v5675 = vmul.f32 %v5143, %v5419
        %v5676 = vmul.f32 %v5145, %v5420
        %v5677 = vmul.f32 %v5147, %v5421
        %v5678 = vmul.f32 %v5149, %v5422
        %v5679 = vmul.f32 %v5151, %v5423
        %v5680 = vmul.f32 %v5153, %v5424
        %v5681 = vmul.f32 %v5155, %v5425
        %v5682 = vmul.f32 %v5157, %v5426
        %v5683 = vmul.f32 %v5159, %v5427
        %v5684 = vmul.f32 %v5161, %v5428
        %v5685 = vmul.f32 %v5163, %v5429
        %v5686 = vmul.f32 %v5165, %v5430
        %v5687 = vmul.f32 %v5167, %v5431
        %v5688 = vmul.f32 %v5169, %v5432
        %v5689 = vmul.f32 %v5171, %v5433
        %v5690 = vmul.f32 %v5173, %v5434
        %v5691 = vmul.f32 %v5175, %v5435
        %v5692 = vmul.f32 %v5177, %v5436
        %v5693 = vmul.f32 %v5179, %v5437
        %v5694 = vmul.f32 %v5181, %v5438
        %v5695 = vmul.f32 %v5183, %v5439
        %v5696 = vsel %vm5440, %v5312, %v5568
        %v5697 = vsel %vm5441, %v5313, %v5569
        %v5698 = vsel %vm5442, %v5314, %v5570
        %v5699 = vsel %vm5443, %v5315, %v5571
        %v5700 = vsel %vm5444, %v5316, %v5572
        %v5701 = vsel %vm5445, %v5317, %v5573
        %v5702 = vsel %vm5446, %v5318, %v5574
        %v5703 = vsel %vm5447, %v5319, %v5575
        %v5704 = vsel %vm5448, %v5320, %v5576
        %v5705 = vsel %vm5449, %v5321, %v5577
        %v5706 = vsel %vm5450, %v5322, %v5578
        %v5707 = vsel %vm5451, %v5323, %v5579
        %v5708 = vsel %vm5452, %v5324, %v5580
        %v5709 = vsel %vm5453, %v5325, %v5581
        %v5710 = vsel %vm5454, %v5326, %v5582
        %v5711 = vsel %vm5455, %v5327, %v5583
        %v5712 = vsel %vm5456, %v5328, %v5584
        %v5713 = vsel %vm5457, %v5329, %v5585
        %v5714 = vsel %vm5458, %v5330, %v5586
        %v5715 = vsel %vm5459, %v5331, %v5587
        %v5716 = vsel %vm5460, %v5332, %v5588
        %v5717 = vsel %vm5461, %v5333, %v5589
        %v5718 = vsel %vm5462, %v5334, %v5590
        %v5719 = vsel %vm5463, %v5335, %v5591
        %v5720 = vsel %vm5464, %v5336, %v5592
        %v5721 = vsel %vm5465, %v5337, %v5593
        %v5722 = vsel %vm5466, %v5338, %v5594
        %v5723 = vsel %vm5467, %v5339, %v5595
        %v5724 = vsel %vm5468, %v5340, %v5596
        %v5725 = vsel %vm5469, %v5341, %v5597
        %v5726 = vsel %vm5470, %v5342, %v5598
        %v5727 = vsel %vm5471, %v5343, %v5599
        %v5728 = vsel %vm5472, %v5344, %v5600
        %v5729 = vsel %vm5473, %v5345, %v5601
        %v5730 = vsel %vm5474, %v5346, %v5602
        %v5731 = vsel %vm5475, %v5347, %v5603
        %v5732 = vsel %vm5476, %v5348, %v5604
        %v5733 = vsel %vm5477, %v5349, %v5605
        %v5734 = vsel %vm5478, %v5350, %v5606
        %v5735 = vsel %vm5479, %v5351, %v5607
        %v5736 = vsel %vm5480, %v5352, %v5608
        %v5737 = vsel %vm5481, %v5353, %v5609
        %v5738 = vsel %vm5482, %v5354, %v5610
        %v5739 = vsel %vm5483, %v5355, %v5611
        %v5740 = vsel %vm5484, %v5356, %v5612
        %v5741 = vsel %vm5485, %v5357, %v5613
        %v5742 = vsel %vm5486, %v5358, %v5614
        %v5743 = vsel %vm5487, %v5359, %v5615
        %v5744 = vsel %vm5488, %v5360, %v5616
        %v5745 = vsel %vm5489, %v5361, %v5617
        %v5746 = vsel %vm5490, %v5362, %v5618
        %v5747 = vsel %vm5491, %v5363, %v5619
        %v5748 = vsel %vm5492, %v5364, %v5620
        %v5749 = vsel %vm5493, %v5365, %v5621
        %v5750 = vsel %vm5494, %v5366, %v5622
        %v5751 = vsel %vm5495, %v5367, %v5623
        %v5752 = vsel %vm5496, %v5368, %v5624
        %v5753 = vsel %vm5497, %v5369, %v5625
        %v5754 = vsel %vm5498, %v5370, %v5626
        %v5755 = vsel %vm5499, %v5371, %v5627
        %v5756 = vsel %vm5500, %v5372, %v5628
        %v5757 = vsel %vm5501, %v5373, %v5629
        %v5758 = vsel %vm5502, %v5374, %v5630
        %v5759 = vsel %vm5503, %v5375, %v5631
        %v5760 = vsel %vm5504, %v5376, %v5632
        %v5761 = vsel %vm5505, %v5377, %v5633
        %v5762 = vsel %vm5506, %v5378, %v5634
        %v5763 = vsel %vm5507, %v5379, %v5635
        %v5764 = vsel %vm5508, %v5380, %v5636
        %v5765 = vsel %vm5509, %v5381, %v5637
        %v5766 = vsel %vm5510, %v5382, %v5638
        %v5767 = vsel %vm5511, %v5383, %v5639
        %v5768 = vsel %vm5512, %v5384, %v5640
        %v5769 = vsel %vm5513, %v5385, %v5641
        %v5770 = vsel %vm5514, %v5386, %v5642
        %v5771 = vsel %vm5515, %v5387, %v5643
        %v5772 = vsel %vm5516, %v5388, %v5644
        %v5773 = vsel %vm5517, %v5389, %v5645
        %v5774 = vsel %vm5518, %v5390, %v5646
        %v5775 = vsel %vm5519, %v5391, %v5647
        %v5776 = vsel %vm5520, %v5392, %v5648
        %v5777 = vsel %vm5521, %v5393, %v5649
        %v5778 = vsel %vm5522, %v5394, %v5650
        %v5779 = vsel %vm5523, %v5395, %v5651
        %v5780 = vsel %vm5524, %v5396, %v5652
        %v5781 = vsel %vm5525, %v5397, %v5653
        %v5782 = vsel %vm5526, %v5398, %v5654
        %v5783 = vsel %vm5527, %v5399, %v5655
        %v5784 = vsel %vm5528, %v5400, %v5656
        %v5785 = vsel %vm5529, %v5401, %v5657
        %v5786 = vsel %vm5530, %v5402, %v5658
        %v5787 = vsel %vm5531, %v5403, %v5659
        %v5788 = vsel %vm5532, %v5404, %v5660
        %v5789 = vsel %vm5533, %v5405, %v5661
        %v5790 = vsel %vm5534, %v5406, %v5662
        %v5791 = vsel %vm5535, %v5407, %v5663
        %v5792 = vsel %vm5536, %v5408, %v5664
        %v5793 = vsel %vm5537, %v5409, %v5665
        %v5794 = vsel %vm5538, %v5410, %v5666
        %v5795 = vsel %vm5539, %v5411, %v5667
        %v5796 = vsel %vm5540, %v5412, %v5668
        %v5797 = vsel %vm5541, %v5413, %v5669
        %v5798 = vsel %vm5542, %v5414, %v5670
        %v5799 = vsel %vm5543, %v5415, %v5671
        %v5800 = vsel %vm5544, %v5416, %v5672
        %v5801 = vsel %vm5545, %v5417, %v5673
        %v5802 = vsel %vm5546, %v5418, %v5674
        %v5803 = vsel %vm5547, %v5419, %v5675
        %v5804 = vsel %vm5548, %v5420, %v5676
        %v5805 = vsel %vm5549, %v5421, %v5677
        %v5806 = vsel %vm5550, %v5422, %v5678
        %v5807 = vsel %vm5551, %v5423, %v5679
        %v5808 = vsel %vm5552, %v5424, %v5680
        %v5809 = vsel %vm5553, %v5425, %v5681
        %v5810 = vsel %vm5554, %v5426, %v5682
        %v5811 = vsel %vm5555, %v5427, %v5683
        %v5812 = vsel %vm5556, %v5428, %v5684
        %v5813 = vsel %vm5557, %v5429, %v5685
        %v5814 = vsel %vm5558, %v5430, %v5686
        %v5815 = vsel %vm5559, %v5431, %v5687
        %v5816 = vsel %vm5560, %v5432, %v5688
        %v5817 = vsel %vm5561, %v5433, %v5689
        %v5818 = vsel %vm5562, %v5434, %v5690
        %v5819 = vsel %vm5563, %v5435, %v5691
        %v5820 = vsel %vm5564, %v5436, %v5692
        %v5821 = vsel %vm5565, %v5437, %v5693
        %v5822 = vsel %vm5566, %v5438, %v5694
        %v5823 = vsel %vm5567, %v5439, %v5695
        %v5824 = vld [vmem:[%s513] sm:$0x1]
        %v5826 = vlaneseq
        %v5827 = vshrl.u32 %v5826, 7
        %v5828 = vsub.s32 0, %v5827
        %v5829 = vrot.slane %v5824, %v5828
        %5831 = vbcast.lane.b32.xlu0 %v5829, 256
        %v5832 = vpop.permute.xlu0 %5831
        %s5834 = sor.u32 256, 8
        %5835 = vbcast.lane.b32.xlu0 %v5829, %s5834
        %v5836 = vpop.permute.xlu0 %5835
        %s5838 = sor.u32 256, 16
        %5839 = vbcast.lane.b32.xlu0 %v5829, %s5838
        %v5840 = vpop.permute.xlu0 %5839
        %s5842 = sor.u32 256, 24
        %5843 = vbcast.lane.b32.xlu0 %v5829, %s5842
        %v5844 = vpop.permute.xlu0 %5843
        %s5846 = sor.u32 256, 32
        %5847 = vbcast.lane.b32.xlu0 %v5829, %s5846
        %v5848 = vpop.permute.xlu0 %5847
        %s5850 = sor.u32 256, 40
        %5851 = vbcast.lane.b32.xlu0 %v5829, %s5850
        %v5852 = vpop.permute.xlu0 %5851
        %s5854 = sor.u32 256, 48
        %5855 = vbcast.lane.b32.xlu0 %v5829, %s5854
        %v5856 = vpop.permute.xlu0 %5855
        %s5858 = sor.u32 256, 56
        %5859 = vbcast.lane.b32.xlu0 %v5829, %s5858
        %v5860 = vpop.permute.xlu0 %5859
        %s5862 = sor.u32 256, 64
        %5863 = vbcast.lane.b32.xlu0 %v5829, %s5862
        %v5864 = vpop.permute.xlu0 %5863
        %s5866 = sor.u32 256, 72
        %5867 = vbcast.lane.b32.xlu0 %v5829, %s5866
        %v5868 = vpop.permute.xlu0 %5867
        %s5870 = sor.u32 256, 80
        %5871 = vbcast.lane.b32.xlu0 %v5829, %s5870
        %v5872 = vpop.permute.xlu0 %5871
        %s5874 = sor.u32 256, 88
        %5875 = vbcast.lane.b32.xlu0 %v5829, %s5874
        %v5876 = vpop.permute.xlu0 %5875
        %s5878 = sor.u32 256, 96
        %5879 = vbcast.lane.b32.xlu0 %v5829, %s5878
        %v5880 = vpop.permute.xlu0 %5879
        %s5882 = sor.u32 256, 104
        %5883 = vbcast.lane.b32.xlu0 %v5829, %s5882
        %v5884 = vpop.permute.xlu0 %5883
        %s5886 = sor.u32 256, 112
        %5887 = vbcast.lane.b32.xlu0 %v5829, %s5886
        %v5888 = vpop.permute.xlu0 %5887
        %s5890 = sor.u32 256, 120
        %5891 = vbcast.lane.b32.xlu0 %v5829, %s5890
        %v5892 = vpop.permute.xlu0 %5891
        %v5909 = vmul.f32 %v5696, %v5832
        %v5910 = vmul.f32 %v5697, %v5836
        %v5911 = vmul.f32 %v5698, %v5840
        %v5912 = vmul.f32 %v5699, %v5844
        %v5913 = vmul.f32 %v5700, %v5848
        %v5914 = vmul.f32 %v5701, %v5852
        %v5915 = vmul.f32 %v5702, %v5856
        %v5916 = vmul.f32 %v5703, %v5860
        %v5917 = vmul.f32 %v5704, %v5864
        %v5918 = vmul.f32 %v5705, %v5868
        %v5919 = vmul.f32 %v5706, %v5872
        %v5920 = vmul.f32 %v5707, %v5876
        %v5921 = vmul.f32 %v5708, %v5880
        %v5922 = vmul.f32 %v5709, %v5884
        %v5923 = vmul.f32 %v5710, %v5888
        %v5924 = vmul.f32 %v5711, %v5892
        %v5925 = vmul.f32 %v5712, %v5832
        %v5926 = vmul.f32 %v5713, %v5836
        %v5927 = vmul.f32 %v5714, %v5840
        %v5928 = vmul.f32 %v5715, %v5844
        %v5929 = vmul.f32 %v5716, %v5848
        %v5930 = vmul.f32 %v5717, %v5852
        %v5931 = vmul.f32 %v5718, %v5856
        %v5932 = vmul.f32 %v5719, %v5860
        %v5933 = vmul.f32 %v5720, %v5864
        %v5934 = vmul.f32 %v5721, %v5868
        %v5935 = vmul.f32 %v5722, %v5872
        %v5936 = vmul.f32 %v5723, %v5876
        %v5937 = vmul.f32 %v5724, %v5880
        %v5938 = vmul.f32 %v5725, %v5884
        %v5939 = vmul.f32 %v5726, %v5888
        %v5940 = vmul.f32 %v5727, %v5892
        %v5941 = vmul.f32 %v5728, %v5832
        %v5942 = vmul.f32 %v5729, %v5836
        %v5943 = vmul.f32 %v5730, %v5840
        %v5944 = vmul.f32 %v5731, %v5844
        %v5945 = vmul.f32 %v5732, %v5848
        %v5946 = vmul.f32 %v5733, %v5852
        %v5947 = vmul.f32 %v5734, %v5856
        %v5948 = vmul.f32 %v5735, %v5860
        %v5949 = vmul.f32 %v5736, %v5864
        %v5950 = vmul.f32 %v5737, %v5868
        %v5951 = vmul.f32 %v5738, %v5872
        %v5952 = vmul.f32 %v5739, %v5876
        %v5953 = vmul.f32 %v5740, %v5880
        %v5954 = vmul.f32 %v5741, %v5884
        %v5955 = vmul.f32 %v5742, %v5888
        %v5956 = vmul.f32 %v5743, %v5892
        %v5957 = vmul.f32 %v5744, %v5832
        %v5958 = vmul.f32 %v5745, %v5836
        %v5959 = vmul.f32 %v5746, %v5840
        %v5960 = vmul.f32 %v5747, %v5844
        %v5961 = vmul.f32 %v5748, %v5848
        %v5962 = vmul.f32 %v5749, %v5852
        %v5963 = vmul.f32 %v5750, %v5856
        %v5964 = vmul.f32 %v5751, %v5860
        %v5965 = vmul.f32 %v5752, %v5864
        %v5966 = vmul.f32 %v5753, %v5868
        %v5967 = vmul.f32 %v5754, %v5872
        %v5968 = vmul.f32 %v5755, %v5876
        %v5969 = vmul.f32 %v5756, %v5880
        %v5970 = vmul.f32 %v5757, %v5884
        %v5971 = vmul.f32 %v5758, %v5888
        %v5972 = vmul.f32 %v5759, %v5892
        %v5973 = vmul.f32 %v5760, %v5832
        %v5974 = vmul.f32 %v5761, %v5836
        %v5975 = vmul.f32 %v5762, %v5840
        %v5976 = vmul.f32 %v5763, %v5844
        %v5977 = vmul.f32 %v5764, %v5848
        %v5978 = vmul.f32 %v5765, %v5852
        %v5979 = vmul.f32 %v5766, %v5856
        %v5980 = vmul.f32 %v5767, %v5860
        %v5981 = vmul.f32 %v5768, %v5864
        %v5982 = vmul.f32 %v5769, %v5868
        %v5983 = vmul.f32 %v5770, %v5872
        %v5984 = vmul.f32 %v5771, %v5876
        %v5985 = vmul.f32 %v5772, %v5880
        %v5986 = vmul.f32 %v5773, %v5884
        %v5987 = vmul.f32 %v5774, %v5888
        %v5988 = vmul.f32 %v5775, %v5892
        %v5989 = vmul.f32 %v5776, %v5832
        %v5990 = vmul.f32 %v5777, %v5836
        %v5991 = vmul.f32 %v5778, %v5840
        %v5992 = vmul.f32 %v5779, %v5844
        %v5993 = vmul.f32 %v5780, %v5848
        %v5994 = vmul.f32 %v5781, %v5852
        %v5995 = vmul.f32 %v5782, %v5856
        %v5996 = vmul.f32 %v5783, %v5860
        %v5997 = vmul.f32 %v5784, %v5864
        %v5998 = vmul.f32 %v5785, %v5868
        %v5999 = vmul.f32 %v5786, %v5872
        %v6000 = vmul.f32 %v5787, %v5876
        %v6001 = vmul.f32 %v5788, %v5880
        %v6002 = vmul.f32 %v5789, %v5884
        %v6003 = vmul.f32 %v5790, %v5888
        %v6004 = vmul.f32 %v5791, %v5892
        %v6005 = vmul.f32 %v5792, %v5832
        %v6006 = vmul.f32 %v5793, %v5836
        %v6007 = vmul.f32 %v5794, %v5840
        %v6008 = vmul.f32 %v5795, %v5844
        %v6009 = vmul.f32 %v5796, %v5848
        %v6010 = vmul.f32 %v5797, %v5852
        %v6011 = vmul.f32 %v5798, %v5856
        %v6012 = vmul.f32 %v5799, %v5860
        %v6013 = vmul.f32 %v5800, %v5864
        %v6014 = vmul.f32 %v5801, %v5868
        %v6015 = vmul.f32 %v5802, %v5872
        %v6016 = vmul.f32 %v5803, %v5876
        %v6017 = vmul.f32 %v5804, %v5880
        %v6018 = vmul.f32 %v5805, %v5884
        %v6019 = vmul.f32 %v5806, %v5888
        %v6020 = vmul.f32 %v5807, %v5892
        %v6021 = vmul.f32 %v5808, %v5832
        %v6022 = vmul.f32 %v5809, %v5836
        %v6023 = vmul.f32 %v5810, %v5840
        %v6024 = vmul.f32 %v5811, %v5844
        %v6025 = vmul.f32 %v5812, %v5848
        %v6026 = vmul.f32 %v5813, %v5852
        %v6027 = vmul.f32 %v5814, %v5856
        %v6028 = vmul.f32 %v5815, %v5860
        %v6029 = vmul.f32 %v5816, %v5864
        %v6030 = vmul.f32 %v5817, %v5868
        %v6031 = vmul.f32 %v5818, %v5872
        %v6032 = vmul.f32 %v5819, %v5876
        %v6033 = vmul.f32 %v5820, %v5880
        %v6034 = vmul.f32 %v5821, %v5884
        %v6035 = vmul.f32 %v5822, %v5888
        %v6036 = vmul.f32 %v5823, %v5892
        %s6037 = smul.u32 %s31, 8
        %v6038 = vlaneseq
        %v6039 = vshrl.u32 %v6038, 7
        %v6040 = vstv %s6037
        %v6041 = vadd.s32 %v6040, %v6039
        %v6042 = vcvt.s32.f32 %v6041
        %s6043 = sld [smem:[#allocation4 + $0x1]]
        %v6044 = vstv %s6043
        %vm6045 = vcmp.lt.f32.partialorder %v6042, %v6044
        %6174 = vset.pattern.permute.xlu0 0
        %6175 = vperm.xlu0 %6174, %v5909
        %v6176 = vpop.permute.xlu0 %6175
        %6177 = vset.pattern.permute.xlu0 0
        %6178 = vperm.xlu0 %6177, %v5910
        %v6179 = vpop.permute.xlu0 %6178
        %6180 = vset.pattern.permute.xlu0 0
        %6181 = vperm.xlu0 %6180, %v5911
        %v6182 = vpop.permute.xlu0 %6181
        %6183 = vset.pattern.permute.xlu0 0
        %6184 = vperm.xlu0 %6183, %v5912
        %v6185 = vpop.permute.xlu0 %6184
        %6186 = vset.pattern.permute.xlu0 0
        %6187 = vperm.xlu0 %6186, %v5913
        %v6188 = vpop.permute.xlu0 %6187
        %6189 = vset.pattern.permute.xlu0 0
        %6190 = vperm.xlu0 %6189, %v5914
        %v6191 = vpop.permute.xlu0 %6190
        %6192 = vset.pattern.permute.xlu0 0
        %6193 = vperm.xlu0 %6192, %v5915
        %v6194 = vpop.permute.xlu0 %6193
        %6195 = vset.pattern.permute.xlu0 0
        %6196 = vperm.xlu0 %6195, %v5916
        %v6197 = vpop.permute.xlu0 %6196
        %6198 = vset.pattern.permute.xlu0 0
        %6199 = vperm.xlu0 %6198, %v5917
        %v6200 = vpop.permute.xlu0 %6199
        %6201 = vset.pattern.permute.xlu0 0
        %6202 = vperm.xlu0 %6201, %v5918
        %v6203 = vpop.permute.xlu0 %6202
        %6204 = vset.pattern.permute.xlu0 0
        %6205 = vperm.xlu0 %6204, %v5919
        %v6206 = vpop.permute.xlu0 %6205
        %6207 = vset.pattern.permute.xlu0 0
        %6208 = vperm.xlu0 %6207, %v5920
        %v6209 = vpop.permute.xlu0 %6208
        %6210 = vset.pattern.permute.xlu0 0
        %6211 = vperm.xlu0 %6210, %v5921
        %v6212 = vpop.permute.xlu0 %6211
        %6213 = vset.pattern.permute.xlu0 0
        %6214 = vperm.xlu0 %6213, %v5922
        %v6215 = vpop.permute.xlu0 %6214
        %6216 = vset.pattern.permute.xlu0 0
        %6217 = vperm.xlu0 %6216, %v5923
        %v6218 = vpop.permute.xlu0 %6217
        %6219 = vset.pattern.permute.xlu0 0
        %6220 = vperm.xlu0 %6219, %v5924
        %v6221 = vpop.permute.xlu0 %6220
        %6222 = vset.pattern.permute.xlu0 0
        %6223 = vperm.xlu0 %6222, %v5925
        %v6224 = vpop.permute.xlu0 %6223
        %6225 = vset.pattern.permute.xlu0 0
        %6226 = vperm.xlu0 %6225, %v5926
        %v6227 = vpop.permute.xlu0 %6226
        %6228 = vset.pattern.permute.xlu0 0
        %6229 = vperm.xlu0 %6228, %v5927
        %v6230 = vpop.permute.xlu0 %6229
        %6231 = vset.pattern.permute.xlu0 0
        %6232 = vperm.xlu0 %6231, %v5928
        %v6233 = vpop.permute.xlu0 %6232
        %6234 = vset.pattern.permute.xlu0 0
        %6235 = vperm.xlu0 %6234, %v5929
        %v6236 = vpop.permute.xlu0 %6235
        %6237 = vset.pattern.permute.xlu0 0
        %6238 = vperm.xlu0 %6237, %v5930
        %v6239 = vpop.permute.xlu0 %6238
        %6240 = vset.pattern.permute.xlu0 0
        %6241 = vperm.xlu0 %6240, %v5931
        %v6242 = vpop.permute.xlu0 %6241
        %6243 = vset.pattern.permute.xlu0 0
        %6244 = vperm.xlu0 %6243, %v5932
        %v6245 = vpop.permute.xlu0 %6244
        %6246 = vset.pattern.permute.xlu0 0
        %6247 = vperm.xlu0 %6246, %v5933
        %v6248 = vpop.permute.xlu0 %6247
        %6249 = vset.pattern.permute.xlu0 0
        %6250 = vperm.xlu0 %6249, %v5934
        %v6251 = vpop.permute.xlu0 %6250
        %6252 = vset.pattern.permute.xlu0 0
        %6253 = vperm.xlu0 %6252, %v5935
        %v6254 = vpop.permute.xlu0 %6253
        %6255 = vset.pattern.permute.xlu0 0
        %6256 = vperm.xlu0 %6255, %v5936
        %v6257 = vpop.permute.xlu0 %6256
        %6258 = vset.pattern.permute.xlu0 0
        %6259 = vperm.xlu0 %6258, %v5937
        %v6260 = vpop.permute.xlu0 %6259
        %6261 = vset.pattern.permute.xlu0 0
        %6262 = vperm.xlu0 %6261, %v5938
        %v6263 = vpop.permute.xlu0 %6262
        %6264 = vset.pattern.permute.xlu0 0
        %6265 = vperm.xlu0 %6264, %v5939
        %v6266 = vpop.permute.xlu0 %6265
        %6267 = vset.pattern.permute.xlu0 0
        %6268 = vperm.xlu0 %6267, %v5940
        %v6269 = vpop.permute.xlu0 %6268
        %6270 = vset.pattern.permute.xlu0 0
        %6271 = vperm.xlu0 %6270, %v5941
        %v6272 = vpop.permute.xlu0 %6271
        %6273 = vset.pattern.permute.xlu0 0
        %6274 = vperm.xlu0 %6273, %v5942
        %v6275 = vpop.permute.xlu0 %6274
        %6276 = vset.pattern.permute.xlu0 0
        %6277 = vperm.xlu0 %6276, %v5943
        %v6278 = vpop.permute.xlu0 %6277
        %6279 = vset.pattern.permute.xlu0 0
        %6280 = vperm.xlu0 %6279, %v5944
        %v6281 = vpop.permute.xlu0 %6280
        %6282 = vset.pattern.permute.xlu0 0
        %6283 = vperm.xlu0 %6282, %v5945
        %v6284 = vpop.permute.xlu0 %6283
        %6285 = vset.pattern.permute.xlu0 0
        %6286 = vperm.xlu0 %6285, %v5946
        %v6287 = vpop.permute.xlu0 %6286
        %6288 = vset.pattern.permute.xlu0 0
        %6289 = vperm.xlu0 %6288, %v5947
        %v6290 = vpop.permute.xlu0 %6289
        %6291 = vset.pattern.permute.xlu0 0
        %6292 = vperm.xlu0 %6291, %v5948
        %v6293 = vpop.permute.xlu0 %6292
        %6294 = vset.pattern.permute.xlu0 0
        %6295 = vperm.xlu0 %6294, %v5949
        %v6296 = vpop.permute.xlu0 %6295
        %6297 = vset.pattern.permute.xlu0 0
        %6298 = vperm.xlu0 %6297, %v5950
        %v6299 = vpop.permute.xlu0 %6298
        %6300 = vset.pattern.permute.xlu0 0
        %6301 = vperm.xlu0 %6300, %v5951
        %v6302 = vpop.permute.xlu0 %6301
        %6303 = vset.pattern.permute.xlu0 0
        %6304 = vperm.xlu0 %6303, %v5952
        %v6305 = vpop.permute.xlu0 %6304
        %6306 = vset.pattern.permute.xlu0 0
        %6307 = vperm.xlu0 %6306, %v5953
        %v6308 = vpop.permute.xlu0 %6307
        %6309 = vset.pattern.permute.xlu0 0
        %6310 = vperm.xlu0 %6309, %v5954
        %v6311 = vpop.permute.xlu0 %6310
        %6312 = vset.pattern.permute.xlu0 0
        %6313 = vperm.xlu0 %6312, %v5955
        %v6314 = vpop.permute.xlu0 %6313
        %6315 = vset.pattern.permute.xlu0 0
        %6316 = vperm.xlu0 %6315, %v5956
        %v6317 = vpop.permute.xlu0 %6316
        %6318 = vset.pattern.permute.xlu0 0
        %6319 = vperm.xlu0 %6318, %v5957
        %v6320 = vpop.permute.xlu0 %6319
        %6321 = vset.pattern.permute.xlu0 0
        %6322 = vperm.xlu0 %6321, %v5958
        %v6323 = vpop.permute.xlu0 %6322
        %6324 = vset.pattern.permute.xlu0 0
        %6325 = vperm.xlu0 %6324, %v5959
        %v6326 = vpop.permute.xlu0 %6325
        %6327 = vset.pattern.permute.xlu0 0
        %6328 = vperm.xlu0 %6327, %v5960
        %v6329 = vpop.permute.xlu0 %6328
        %6330 = vset.pattern.permute.xlu0 0
        %6331 = vperm.xlu0 %6330, %v5961
        %v6332 = vpop.permute.xlu0 %6331
        %6333 = vset.pattern.permute.xlu0 0
        %6334 = vperm.xlu0 %6333, %v5962
        %v6335 = vpop.permute.xlu0 %6334
        %6336 = vset.pattern.permute.xlu0 0
        %6337 = vperm.xlu0 %6336, %v5963
        %v6338 = vpop.permute.xlu0 %6337
        %6339 = vset.pattern.permute.xlu0 0
        %6340 = vperm.xlu0 %6339, %v5964
        %v6341 = vpop.permute.xlu0 %6340
        %6342 = vset.pattern.permute.xlu0 0
        %6343 = vperm.xlu0 %6342, %v5965
        %v6344 = vpop.permute.xlu0 %6343
        %6345 = vset.pattern.permute.xlu0 0
        %6346 = vperm.xlu0 %6345, %v5966
        %v6347 = vpop.permute.xlu0 %6346
        %6348 = vset.pattern.permute.xlu0 0
        %6349 = vperm.xlu0 %6348, %v5967
        %v6350 = vpop.permute.xlu0 %6349
        %6351 = vset.pattern.permute.xlu0 0
        %6352 = vperm.xlu0 %6351, %v5968
        %v6353 = vpop.permute.xlu0 %6352
        %6354 = vset.pattern.permute.xlu0 0
        %6355 = vperm.xlu0 %6354, %v5969
        %v6356 = vpop.permute.xlu0 %6355
        %6357 = vset.pattern.permute.xlu0 0
        %6358 = vperm.xlu0 %6357, %v5970
        %v6359 = vpop.permute.xlu0 %6358
        %6360 = vset.pattern.permute.xlu0 0
        %6361 = vperm.xlu0 %6360, %v5971
        %v6362 = vpop.permute.xlu0 %6361
        %6363 = vset.pattern.permute.xlu0 0
        %6364 = vperm.xlu0 %6363, %v5972
        %v6365 = vpop.permute.xlu0 %6364
        %6366 = vset.pattern.permute.xlu0 0
        %6367 = vperm.xlu0 %6366, %v5973
        %v6368 = vpop.permute.xlu0 %6367
        %6369 = vset.pattern.permute.xlu0 0
        %6370 = vperm.xlu0 %6369, %v5974
        %v6371 = vpop.permute.xlu0 %6370
        %6372 = vset.pattern.permute.xlu0 0
        %6373 = vperm.xlu0 %6372, %v5975
        %v6374 = vpop.permute.xlu0 %6373
        %6375 = vset.pattern.permute.xlu0 0
        %6376 = vperm.xlu0 %6375, %v5976
        %v6377 = vpop.permute.xlu0 %6376
        %6378 = vset.pattern.permute.xlu0 0
        %6379 = vperm.xlu0 %6378, %v5977
        %v6380 = vpop.permute.xlu0 %6379
        %6381 = vset.pattern.permute.xlu0 0
        %6382 = vperm.xlu0 %6381, %v5978
        %v6383 = vpop.permute.xlu0 %6382
        %6384 = vset.pattern.permute.xlu0 0
        %6385 = vperm.xlu0 %6384, %v5979
        %v6386 = vpop.permute.xlu0 %6385
        %6387 = vset.pattern.permute.xlu0 0
        %6388 = vperm.xlu0 %6387, %v5980
        %v6389 = vpop.permute.xlu0 %6388
        %6390 = vset.pattern.permute.xlu0 0
        %6391 = vperm.xlu0 %6390, %v5981
        %v6392 = vpop.permute.xlu0 %6391
        %6393 = vset.pattern.permute.xlu0 0
        %6394 = vperm.xlu0 %6393, %v5982
        %v6395 = vpop.permute.xlu0 %6394
        %6396 = vset.pattern.permute.xlu0 0
        %6397 = vperm.xlu0 %6396, %v5983
        %v6398 = vpop.permute.xlu0 %6397
        %6399 = vset.pattern.permute.xlu0 0
        %6400 = vperm.xlu0 %6399, %v5984
        %v6401 = vpop.permute.xlu0 %6400
        %6402 = vset.pattern.permute.xlu0 0
        %6403 = vperm.xlu0 %6402, %v5985
        %v6404 = vpop.permute.xlu0 %6403
        %6405 = vset.pattern.permute.xlu0 0
        %6406 = vperm.xlu0 %6405, %v5986
        %v6407 = vpop.permute.xlu0 %6406
        %6408 = vset.pattern.permute.xlu0 0
        %6409 = vperm.xlu0 %6408, %v5987
        %v6410 = vpop.permute.xlu0 %6409
        %6411 = vset.pattern.permute.xlu0 0
        %6412 = vperm.xlu0 %6411, %v5988
        %v6413 = vpop.permute.xlu0 %6412
        %6414 = vset.pattern.permute.xlu0 0
        %6415 = vperm.xlu0 %6414, %v5989
        %v6416 = vpop.permute.xlu0 %6415
        %6417 = vset.pattern.permute.xlu0 0
        %6418 = vperm.xlu0 %6417, %v5990
        %v6419 = vpop.permute.xlu0 %6418
        %6420 = vset.pattern.permute.xlu0 0
        %6421 = vperm.xlu0 %6420, %v5991
        %v6422 = vpop.permute.xlu0 %6421
        %6423 = vset.pattern.permute.xlu0 0
        %6424 = vperm.xlu0 %6423, %v5992
        %v6425 = vpop.permute.xlu0 %6424
        %6426 = vset.pattern.permute.xlu0 0
        %6427 = vperm.xlu0 %6426, %v5993
        %v6428 = vpop.permute.xlu0 %6427
        %6429 = vset.pattern.permute.xlu0 0
        %6430 = vperm.xlu0 %6429, %v5994
        %v6431 = vpop.permute.xlu0 %6430
        %6432 = vset.pattern.permute.xlu0 0
        %6433 = vperm.xlu0 %6432, %v5995
        %v6434 = vpop.permute.xlu0 %6433
        %6435 = vset.pattern.permute.xlu0 0
        %6436 = vperm.xlu0 %6435, %v5996
        %v6437 = vpop.permute.xlu0 %6436
        %6438 = vset.pattern.permute.xlu0 0
        %6439 = vperm.xlu0 %6438, %v5997
        %v6440 = vpop.permute.xlu0 %6439
        %6441 = vset.pattern.permute.xlu0 0
        %6442 = vperm.xlu0 %6441, %v5998
        %v6443 = vpop.permute.xlu0 %6442
        %6444 = vset.pattern.permute.xlu0 0
        %6445 = vperm.xlu0 %6444, %v5999
        %v6446 = vpop.permute.xlu0 %6445
        %6447 = vset.pattern.permute.xlu0 0
        %6448 = vperm.xlu0 %6447, %v6000
        %v6449 = vpop.permute.xlu0 %6448
        %6450 = vset.pattern.permute.xlu0 0
        %6451 = vperm.xlu0 %6450, %v6001
        %v6452 = vpop.permute.xlu0 %6451
        %6453 = vset.pattern.permute.xlu0 0
        %6454 = vperm.xlu0 %6453, %v6002
        %v6455 = vpop.permute.xlu0 %6454
        %6456 = vset.pattern.permute.xlu0 0
        %6457 = vperm.xlu0 %6456, %v6003
        %v6458 = vpop.permute.xlu0 %6457
        %6459 = vset.pattern.permute.xlu0 0
        %6460 = vperm.xlu0 %6459, %v6004
        %v6461 = vpop.permute.xlu0 %6460
        %6462 = vset.pattern.permute.xlu0 0
        %6463 = vperm.xlu0 %6462, %v6005
        %v6464 = vpop.permute.xlu0 %6463
        %6465 = vset.pattern.permute.xlu0 0
        %6466 = vperm.xlu0 %6465, %v6006
        %v6467 = vpop.permute.xlu0 %6466
        %6468 = vset.pattern.permute.xlu0 0
        %6469 = vperm.xlu0 %6468, %v6007
        %v6470 = vpop.permute.xlu0 %6469
        %6471 = vset.pattern.permute.xlu0 0
        %6472 = vperm.xlu0 %6471, %v6008
        %v6473 = vpop.permute.xlu0 %6472
        %6474 = vset.pattern.permute.xlu0 0
        %6475 = vperm.xlu0 %6474, %v6009
        %v6476 = vpop.permute.xlu0 %6475
        %6477 = vset.pattern.permute.xlu0 0
        %6478 = vperm.xlu0 %6477, %v6010
        %v6479 = vpop.permute.xlu0 %6478
        %6480 = vset.pattern.permute.xlu0 0
        %6481 = vperm.xlu0 %6480, %v6011
        %v6482 = vpop.permute.xlu0 %6481
        %6483 = vset.pattern.permute.xlu0 0
        %6484 = vperm.xlu0 %6483, %v6012
        %v6485 = vpop.permute.xlu0 %6484
        %6486 = vset.pattern.permute.xlu0 0
        %6487 = vperm.xlu0 %6486, %v6013
        %v6488 = vpop.permute.xlu0 %6487
        %6489 = vset.pattern.permute.xlu0 0
        %6490 = vperm.xlu0 %6489, %v6014
        %v6491 = vpop.permute.xlu0 %6490
        %6492 = vset.pattern.permute.xlu0 0
        %6493 = vperm.xlu0 %6492, %v6015
        %v6494 = vpop.permute.xlu0 %6493
        %6495 = vset.pattern.permute.xlu0 0
        %6496 = vperm.xlu0 %6495, %v6016
        %v6497 = vpop.permute.xlu0 %6496
        %6498 = vset.pattern.permute.xlu0 0
        %6499 = vperm.xlu0 %6498, %v6017
        %v6500 = vpop.permute.xlu0 %6499
        %6501 = vset.pattern.permute.xlu0 0
        %6502 = vperm.xlu0 %6501, %v6018
        %v6503 = vpop.permute.xlu0 %6502
        %6504 = vset.pattern.permute.xlu0 0
        %6505 = vperm.xlu0 %6504, %v6019
        %v6506 = vpop.permute.xlu0 %6505
        %6507 = vset.pattern.permute.xlu0 0
        %6508 = vperm.xlu0 %6507, %v6020
        %v6509 = vpop.permute.xlu0 %6508
        %6510 = vset.pattern.permute.xlu0 0
        %6511 = vperm.xlu0 %6510, %v6021
        %v6512 = vpop.permute.xlu0 %6511
        %6513 = vset.pattern.permute.xlu0 0
        %6514 = vperm.xlu0 %6513, %v6022
        %v6515 = vpop.permute.xlu0 %6514
        %6516 = vset.pattern.permute.xlu0 0
        %6517 = vperm.xlu0 %6516, %v6023
        %v6518 = vpop.permute.xlu0 %6517
        %6519 = vset.pattern.permute.xlu0 0
        %6520 = vperm.xlu0 %6519, %v6024
        %v6521 = vpop.permute.xlu0 %6520
        %6522 = vset.pattern.permute.xlu0 0
        %6523 = vperm.xlu0 %6522, %v6025
        %v6524 = vpop.permute.xlu0 %6523
        %6525 = vset.pattern.permute.xlu0 0
        %6526 = vperm.xlu0 %6525, %v6026
        %v6527 = vpop.permute.xlu0 %6526
        %6528 = vset.pattern.permute.xlu0 0
        %6529 = vperm.xlu0 %6528, %v6027
        %v6530 = vpop.permute.xlu0 %6529
        %6531 = vset.pattern.permute.xlu0 0
        %6532 = vperm.xlu0 %6531, %v6028
        %v6533 = vpop.permute.xlu0 %6532
        %6534 = vset.pattern.permute.xlu0 0
        %6535 = vperm.xlu0 %6534, %v6029
        %v6536 = vpop.permute.xlu0 %6535
        %6537 = vset.pattern.permute.xlu0 0
        %6538 = vperm.xlu0 %6537, %v6030
        %v6539 = vpop.permute.xlu0 %6538
        %6540 = vset.pattern.permute.xlu0 0
        %6541 = vperm.xlu0 %6540, %v6031
        %v6542 = vpop.permute.xlu0 %6541
        %6543 = vset.pattern.permute.xlu0 0
        %6544 = vperm.xlu0 %6543, %v6032
        %v6545 = vpop.permute.xlu0 %6544
        %6546 = vset.pattern.permute.xlu0 0
        %6547 = vperm.xlu0 %6546, %v6033
        %v6548 = vpop.permute.xlu0 %6547
        %6549 = vset.pattern.permute.xlu0 0
        %6550 = vperm.xlu0 %6549, %v6034
        %v6551 = vpop.permute.xlu0 %6550
        %6552 = vset.pattern.permute.xlu0 0
        %6553 = vperm.xlu0 %6552, %v6035
        %v6554 = vpop.permute.xlu0 %6553
        %6555 = vset.pattern.permute.xlu0 0
        %6556 = vperm.xlu0 %6555, %v6036
        %v6557 = vpop.permute.xlu0 %6556
        %v6558 = vlaneseq
        %v6559 = vand.u32 %v6558, 127
        %v6560 = vlaneseq
        %v6561 = vshrl.u32 %v6560, 7
        %v6562 = vsub.s32 %v6559, %v6561
        %v6563 = vrot.slane %v6176, %v6562
        %v6564 = vadd.s32 %v6559, 4294967288
        %v6565 = vlaneseq
        %v6566 = vshrl.u32 %v6565, 7
        %v6567 = vsub.s32 %v6564, %v6566
        %v6568 = vrot.slane %v6179, %v6567
        %vm6569 = vcmask 130112
        %v6570 = vsel %vm6569, %v6568, %v6563
        %v6571 = vadd.s32 %v6559, 4294967280
        %v6572 = vlaneseq
        %v6573 = vshrl.u32 %v6572, 7
        %v6574 = vsub.s32 %v6571, %v6573
        %v6575 = vrot.slane %v6182, %v6574
        %vm6576 = vcmask 195712
        %v6577 = vsel %vm6576, %v6575, %v6570
        %v6578 = vadd.s32 %v6559, 4294967272
        %v6579 = vlaneseq
        %v6580 = vshrl.u32 %v6579, 7
        %v6581 = vsub.s32 %v6578, %v6580
        %v6582 = vrot.slane %v6185, %v6581
        %vm6583 = vcmask 261312
        %v6584 = vsel %vm6583, %v6582, %v6577
        %v6585 = vadd.s32 %v6559, 4294967264
        %v6586 = vlaneseq
        %v6587 = vshrl.u32 %v6586, 7
        %v6588 = vsub.s32 %v6585, %v6587
        %v6589 = vrot.slane %v6188, %v6588
        %vm6590 = vcmask 326912
        %v6591 = vsel %vm6590, %v6589, %v6584
        %v6592 = vadd.s32 %v6559, 4294967256
        %v6593 = vlaneseq
        %v6594 = vshrl.u32 %v6593, 7
        %v6595 = vsub.s32 %v6592, %v6594
        %v6596 = vrot.slane %v6191, %v6595
        %vm6597 = vcmask 392512
        %v6598 = vsel %vm6597, %v6596, %v6591
        %v6599 = vadd.s32 %v6559, 4294967248
        %v6600 = vlaneseq
        %v6601 = vshrl.u32 %v6600, 7
        %v6602 = vsub.s32 %v6599, %v6601
        %v6603 = vrot.slane %v6194, %v6602
        %vm6604 = vcmask 458112
        %v6605 = vsel %vm6604, %v6603, %v6598
        %v6606 = vadd.s32 %v6559, 4294967240
        %v6607 = vlaneseq
        %v6608 = vshrl.u32 %v6607, 7
        %v6609 = vsub.s32 %v6606, %v6608
        %v6610 = vrot.slane %v6197, %v6609
        %vm6611 = vcmask 523712
        %v6612 = vsel %vm6611, %v6610, %v6605
        %v6613 = vadd.s32 %v6559, 4294967232
        %v6614 = vlaneseq
        %v6615 = vshrl.u32 %v6614, 7
        %v6616 = vsub.s32 %v6613, %v6615
        %v6617 = vrot.slane %v6200, %v6616
        %vm6618 = vcmask 589312
        %v6619 = vsel %vm6618, %v6617, %v6612
        %v6620 = vadd.s32 %v6559, 4294967224
        %v6621 = vlaneseq
        %v6622 = vshrl.u32 %v6621, 7
        %v6623 = vsub.s32 %v6620, %v6622
        %v6624 = vrot.slane %v6203, %v6623
        %vm6625 = vcmask 654912
        %v6626 = vsel %vm6625, %v6624, %v6619
        %v6627 = vadd.s32 %v6559, 4294967216
        %v6628 = vlaneseq
        %v6629 = vshrl.u32 %v6628, 7
        %v6630 = vsub.s32 %v6627, %v6629
        %v6631 = vrot.slane %v6206, %v6630
        %vm6632 = vcmask 720512
        %v6633 = vsel %vm6632, %v6631, %v6626
        %v6634 = vadd.s32 %v6559, 4294967208
        %v6635 = vlaneseq
        %v6636 = vshrl.u32 %v6635, 7
        %v6637 = vsub.s32 %v6634, %v6636
        %v6638 = vrot.slane %v6209, %v6637
        %vm6639 = vcmask 786112
        %v6640 = vsel %vm6639, %v6638, %v6633
        %v6641 = vadd.s32 %v6559, 4294967200
        %v6642 = vlaneseq
        %v6643 = vshrl.u32 %v6642, 7
        %v6644 = vsub.s32 %v6641, %v6643
        %v6645 = vrot.slane %v6212, %v6644
        %vm6646 = vcmask 851712
        %v6647 = vsel %vm6646, %v6645, %v6640
        %v6648 = vadd.s32 %v6559, 4294967192
        %v6649 = vlaneseq
        %v6650 = vshrl.u32 %v6649, 7
        %v6651 = vsub.s32 %v6648, %v6650
        %v6652 = vrot.slane %v6215, %v6651
        %vm6653 = vcmask 917312
        %v6654 = vsel %vm6653, %v6652, %v6647
        %v6655 = vadd.s32 %v6559, 4294967184
        %v6656 = vlaneseq
        %v6657 = vshrl.u32 %v6656, 7
        %v6658 = vsub.s32 %v6655, %v6657
        %v6659 = vrot.slane %v6218, %v6658
        %vm6660 = vcmask 982912
        %v6661 = vsel %vm6660, %v6659, %v6654
        %v6662 = vadd.s32 %v6559, 4294967176
        %v6663 = vlaneseq
        %v6664 = vshrl.u32 %v6663, 7
        %v6665 = vsub.s32 %v6662, %v6664
        %v6666 = vrot.slane %v6221, %v6665
        %vm6667 = vcmask 1048512
        %v6668 = vsel %vm6667, %v6666, %v6661
        %v6669 = vlaneseq
        %v6670 = vshrl.u32 %v6669, 7
        %v6671 = vsub.s32 %v6559, %v6670
        %v6672 = vrot.slane %v6224, %v6671
        %v6673 = vlaneseq
        %v6674 = vshrl.u32 %v6673, 7
        %v6675 = vsub.s32 %v6564, %v6674
        %v6676 = vrot.slane %v6227, %v6675
        %v6677 = vsel %vm6569, %v6676, %v6672
        %v6678 = vlaneseq
        %v6679 = vshrl.u32 %v6678, 7
        %v6680 = vsub.s32 %v6571, %v6679
        %v6681 = vrot.slane %v6230, %v6680
        %v6682 = vsel %vm6576, %v6681, %v6677
        %v6683 = vlaneseq
        %v6684 = vshrl.u32 %v6683, 7
        %v6685 = vsub.s32 %v6578, %v6684
        %v6686 = vrot.slane %v6233, %v6685
        %v6687 = vsel %vm6583, %v6686, %v6682
        %v6688 = vlaneseq
        %v6689 = vshrl.u32 %v6688, 7
        %v6690 = vsub.s32 %v6585, %v6689
        %v6691 = vrot.slane %v6236, %v6690
        %v6692 = vsel %vm6590, %v6691, %v6687
        %v6693 = vlaneseq
        %v6694 = vshrl.u32 %v6693, 7
        %v6695 = vsub.s32 %v6592, %v6694
        %v6696 = vrot.slane %v6239, %v6695
        %v6697 = vsel %vm6597, %v6696, %v6692
        %v6698 = vlaneseq
        %v6699 = vshrl.u32 %v6698, 7
        %v6700 = vsub.s32 %v6599, %v6699
        %v6701 = vrot.slane %v6242, %v6700
        %v6702 = vsel %vm6604, %v6701, %v6697
        %v6703 = vlaneseq
        %v6704 = vshrl.u32 %v6703, 7
        %v6705 = vsub.s32 %v6606, %v6704
        %v6706 = vrot.slane %v6245, %v6705
        %v6707 = vsel %vm6611, %v6706, %v6702
        %v6708 = vlaneseq
        %v6709 = vshrl.u32 %v6708, 7
        %v6710 = vsub.s32 %v6613, %v6709
        %v6711 = vrot.slane %v6248, %v6710
        %v6712 = vsel %vm6618, %v6711, %v6707
        %v6713 = vlaneseq
        %v6714 = vshrl.u32 %v6713, 7
        %v6715 = vsub.s32 %v6620, %v6714
        %v6716 = vrot.slane %v6251, %v6715
        %v6717 = vsel %vm6625, %v6716, %v6712
        %v6718 = vlaneseq
        %v6719 = vshrl.u32 %v6718, 7
        %v6720 = vsub.s32 %v6627, %v6719
        %v6721 = vrot.slane %v6254, %v6720
        %v6722 = vsel %vm6632, %v6721, %v6717
        %v6723 = vlaneseq
        %v6724 = vshrl.u32 %v6723, 7
        %v6725 = vsub.s32 %v6634, %v6724
        %v6726 = vrot.slane %v6257, %v6725
        %v6727 = vsel %vm6639, %v6726, %v6722
        %v6728 = vlaneseq
        %v6729 = vshrl.u32 %v6728, 7
        %v6730 = vsub.s32 %v6641, %v6729
        %v6731 = vrot.slane %v6260, %v6730
        %v6732 = vsel %vm6646, %v6731, %v6727
        %v6733 = vlaneseq
        %v6734 = vshrl.u32 %v6733, 7
        %v6735 = vsub.s32 %v6648, %v6734
        %v6736 = vrot.slane %v6263, %v6735
        %v6737 = vsel %vm6653, %v6736, %v6732
        %v6738 = vlaneseq
        %v6739 = vshrl.u32 %v6738, 7
        %v6740 = vsub.s32 %v6655, %v6739
        %v6741 = vrot.slane %v6266, %v6740
        %v6742 = vsel %vm6660, %v6741, %v6737
        %v6743 = vlaneseq
        %v6744 = vshrl.u32 %v6743, 7
        %v6745 = vsub.s32 %v6662, %v6744
        %v6746 = vrot.slane %v6269, %v6745
        %v6747 = vsel %vm6667, %v6746, %v6742
        %v6748 = vlaneseq
        %v6749 = vshrl.u32 %v6748, 7
        %v6750 = vsub.s32 %v6559, %v6749
        %v6751 = vrot.slane %v6272, %v6750
        %v6752 = vlaneseq
        %v6753 = vshrl.u32 %v6752, 7
        %v6754 = vsub.s32 %v6564, %v6753
        %v6755 = vrot.slane %v6275, %v6754
        %v6756 = vsel %vm6569, %v6755, %v6751
        %v6757 = vlaneseq
        %v6758 = vshrl.u32 %v6757, 7
        %v6759 = vsub.s32 %v6571, %v6758
        %v6760 = vrot.slane %v6278, %v6759
        %v6761 = vsel %vm6576, %v6760, %v6756
        %v6762 = vlaneseq
        %v6763 = vshrl.u32 %v6762, 7
        %v6764 = vsub.s32 %v6578, %v6763
        %v6765 = vrot.slane %v6281, %v6764
        %v6766 = vsel %vm6583, %v6765, %v6761
        %v6767 = vlaneseq
        %v6768 = vshrl.u32 %v6767, 7
        %v6769 = vsub.s32 %v6585, %v6768
        %v6770 = vrot.slane %v6284, %v6769
        %v6771 = vsel %vm6590, %v6770, %v6766
        %v6772 = vlaneseq
        %v6773 = vshrl.u32 %v6772, 7
        %v6774 = vsub.s32 %v6592, %v6773
        %v6775 = vrot.slane %v6287, %v6774
        %v6776 = vsel %vm6597, %v6775, %v6771
        %v6777 = vlaneseq
        %v6778 = vshrl.u32 %v6777, 7
        %v6779 = vsub.s32 %v6599, %v6778
        %v6780 = vrot.slane %v6290, %v6779
        %v6781 = vsel %vm6604, %v6780, %v6776
        %v6782 = vlaneseq
        %v6783 = vshrl.u32 %v6782, 7
        %v6784 = vsub.s32 %v6606, %v6783
        %v6785 = vrot.slane %v6293, %v6784
        %v6786 = vsel %vm6611, %v6785, %v6781
        %v6787 = vlaneseq
        %v6788 = vshrl.u32 %v6787, 7
        %v6789 = vsub.s32 %v6613, %v6788
        %v6790 = vrot.slane %v6296, %v6789
        %v6791 = vsel %vm6618, %v6790, %v6786
        %v6792 = vlaneseq
        %v6793 = vshrl.u32 %v6792, 7
        %v6794 = vsub.s32 %v6620, %v6793
        %v6795 = vrot.slane %v6299, %v6794
        %v6796 = vsel %vm6625, %v6795, %v6791
        %v6797 = vlaneseq
        %v6798 = vshrl.u32 %v6797, 7
        %v6799 = vsub.s32 %v6627, %v6798
        %v6800 = vrot.slane %v6302, %v6799
        %v6801 = vsel %vm6632, %v6800, %v6796
        %v6802 = vlaneseq
        %v6803 = vshrl.u32 %v6802, 7
        %v6804 = vsub.s32 %v6634, %v6803
        %v6805 = vrot.slane %v6305, %v6804
        %v6806 = vsel %vm6639, %v6805, %v6801
        %v6807 = vlaneseq
        %v6808 = vshrl.u32 %v6807, 7
        %v6809 = vsub.s32 %v6641, %v6808
        %v6810 = vrot.slane %v6308, %v6809
        %v6811 = vsel %vm6646, %v6810, %v6806
        %v6812 = vlaneseq
        %v6813 = vshrl.u32 %v6812, 7
        %v6814 = vsub.s32 %v6648, %v6813
        %v6815 = vrot.slane %v6311, %v6814
        %v6816 = vsel %vm6653, %v6815, %v6811
        %v6817 = vlaneseq
        %v6818 = vshrl.u32 %v6817, 7
        %v6819 = vsub.s32 %v6655, %v6818
        %v6820 = vrot.slane %v6314, %v6819
        %v6821 = vsel %vm6660, %v6820, %v6816
        %v6822 = vlaneseq
        %v6823 = vshrl.u32 %v6822, 7
        %v6824 = vsub.s32 %v6662, %v6823
        %v6825 = vrot.slane %v6317, %v6824
        %v6826 = vsel %vm6667, %v6825, %v6821
        %v6827 = vlaneseq
        %v6828 = vshrl.u32 %v6827, 7
        %v6829 = vsub.s32 %v6559, %v6828
        %v6830 = vrot.slane %v6320, %v6829
        %v6831 = vlaneseq
        %v6832 = vshrl.u32 %v6831, 7
        %v6833 = vsub.s32 %v6564, %v6832
        %v6834 = vrot.slane %v6323, %v6833
        %v6835 = vsel %vm6569, %v6834, %v6830
        %v6836 = vlaneseq
        %v6837 = vshrl.u32 %v6836, 7
        %v6838 = vsub.s32 %v6571, %v6837
        %v6839 = vrot.slane %v6326, %v6838
        %v6840 = vsel %vm6576, %v6839, %v6835
        %v6841 = vlaneseq
        %v6842 = vshrl.u32 %v6841, 7
        %v6843 = vsub.s32 %v6578, %v6842
        %v6844 = vrot.slane %v6329, %v6843
        %v6845 = vsel %vm6583, %v6844, %v6840
        %v6846 = vlaneseq
        %v6847 = vshrl.u32 %v6846, 7
        %v6848 = vsub.s32 %v6585, %v6847
        %v6849 = vrot.slane %v6332, %v6848
        %v6850 = vsel %vm6590, %v6849, %v6845
        %v6851 = vlaneseq
        %v6852 = vshrl.u32 %v6851, 7
        %v6853 = vsub.s32 %v6592, %v6852
        %v6854 = vrot.slane %v6335, %v6853
        %v6855 = vsel %vm6597, %v6854, %v6850
        %v6856 = vlaneseq
        %v6857 = vshrl.u32 %v6856, 7
        %v6858 = vsub.s32 %v6599, %v6857
        %v6859 = vrot.slane %v6338, %v6858
        %v6860 = vsel %vm6604, %v6859, %v6855
        %v6861 = vlaneseq
        %v6862 = vshrl.u32 %v6861, 7
        %v6863 = vsub.s32 %v6606, %v6862
        %v6864 = vrot.slane %v6341, %v6863
        %v6865 = vsel %vm6611, %v6864, %v6860
        %v6866 = vlaneseq
        %v6867 = vshrl.u32 %v6866, 7
        %v6868 = vsub.s32 %v6613, %v6867
        %v6869 = vrot.slane %v6344, %v6868
        %v6870 = vsel %vm6618, %v6869, %v6865
        %v6871 = vlaneseq
        %v6872 = vshrl.u32 %v6871, 7
        %v6873 = vsub.s32 %v6620, %v6872
        %v6874 = vrot.slane %v6347, %v6873
        %v6875 = vsel %vm6625, %v6874, %v6870
        %v6876 = vlaneseq
        %v6877 = vshrl.u32 %v6876, 7
        %v6878 = vsub.s32 %v6627, %v6877
        %v6879 = vrot.slane %v6350, %v6878
        %v6880 = vsel %vm6632, %v6879, %v6875
        %v6881 = vlaneseq
        %v6882 = vshrl.u32 %v6881, 7
        %v6883 = vsub.s32 %v6634, %v6882
        %v6884 = vrot.slane %v6353, %v6883
        %v6885 = vsel %vm6639, %v6884, %v6880
        %v6886 = vlaneseq
        %v6887 = vshrl.u32 %v6886, 7
        %v6888 = vsub.s32 %v6641, %v6887
        %v6889 = vrot.slane %v6356, %v6888
        %v6890 = vsel %vm6646, %v6889, %v6885
        %v6891 = vlaneseq
        %v6892 = vshrl.u32 %v6891, 7
        %v6893 = vsub.s32 %v6648, %v6892
        %v6894 = vrot.slane %v6359, %v6893
        %v6895 = vsel %vm6653, %v6894, %v6890
        %v6896 = vlaneseq
        %v6897 = vshrl.u32 %v6896, 7
        %v6898 = vsub.s32 %v6655, %v6897
        %v6899 = vrot.slane %v6362, %v6898
        %v6900 = vsel %vm6660, %v6899, %v6895
        %v6901 = vlaneseq
        %v6902 = vshrl.u32 %v6901, 7
        %v6903 = vsub.s32 %v6662, %v6902
        %v6904 = vrot.slane %v6365, %v6903
        %v6905 = vsel %vm6667, %v6904, %v6900
        %v6906 = vlaneseq
        %v6907 = vshrl.u32 %v6906, 7
        %v6908 = vsub.s32 %v6559, %v6907
        %v6909 = vrot.slane %v6368, %v6908
        %v6910 = vlaneseq
        %v6911 = vshrl.u32 %v6910, 7
        %v6912 = vsub.s32 %v6564, %v6911
        %v6913 = vrot.slane %v6371, %v6912
        %v6914 = vsel %vm6569, %v6913, %v6909
        %v6915 = vlaneseq
        %v6916 = vshrl.u32 %v6915, 7
        %v6917 = vsub.s32 %v6571, %v6916
        %v6918 = vrot.slane %v6374, %v6917
        %v6919 = vsel %vm6576, %v6918, %v6914
        %v6920 = vlaneseq
        %v6921 = vshrl.u32 %v6920, 7
        %v6922 = vsub.s32 %v6578, %v6921
        %v6923 = vrot.slane %v6377, %v6922
        %v6924 = vsel %vm6583, %v6923, %v6919
        %v6925 = vlaneseq
        %v6926 = vshrl.u32 %v6925, 7
        %v6927 = vsub.s32 %v6585, %v6926
        %v6928 = vrot.slane %v6380, %v6927
        %v6929 = vsel %vm6590, %v6928, %v6924
        %v6930 = vlaneseq
        %v6931 = vshrl.u32 %v6930, 7
        %v6932 = vsub.s32 %v6592, %v6931
        %v6933 = vrot.slane %v6383, %v6932
        %v6934 = vsel %vm6597, %v6933, %v6929
        %v6935 = vlaneseq
        %v6936 = vshrl.u32 %v6935, 7
        %v6937 = vsub.s32 %v6599, %v6936
        %v6938 = vrot.slane %v6386, %v6937
        %v6939 = vsel %vm6604, %v6938, %v6934
        %v6940 = vlaneseq
        %v6941 = vshrl.u32 %v6940, 7
        %v6942 = vsub.s32 %v6606, %v6941
        %v6943 = vrot.slane %v6389, %v6942
        %v6944 = vsel %vm6611, %v6943, %v6939
        %v6945 = vlaneseq
        %v6946 = vshrl.u32 %v6945, 7
        %v6947 = vsub.s32 %v6613, %v6946
        %v6948 = vrot.slane %v6392, %v6947
        %v6949 = vsel %vm6618, %v6948, %v6944
        %v6950 = vlaneseq
        %v6951 = vshrl.u32 %v6950, 7
        %v6952 = vsub.s32 %v6620, %v6951
        %v6953 = vrot.slane %v6395, %v6952
        %v6954 = vsel %vm6625, %v6953, %v6949
        %v6955 = vlaneseq
        %v6956 = vshrl.u32 %v6955, 7
        %v6957 = vsub.s32 %v6627, %v6956
        %v6958 = vrot.slane %v6398, %v6957
        %v6959 = vsel %vm6632, %v6958, %v6954
        %v6960 = vlaneseq
        %v6961 = vshrl.u32 %v6960, 7
        %v6962 = vsub.s32 %v6634, %v6961
        %v6963 = vrot.slane %v6401, %v6962
        %v6964 = vsel %vm6639, %v6963, %v6959
        %v6965 = vlaneseq
        %v6966 = vshrl.u32 %v6965, 7
        %v6967 = vsub.s32 %v6641, %v6966
        %v6968 = vrot.slane %v6404, %v6967
        %v6969 = vsel %vm6646, %v6968, %v6964
        %v6970 = vlaneseq
        %v6971 = vshrl.u32 %v6970, 7
        %v6972 = vsub.s32 %v6648, %v6971
        %v6973 = vrot.slane %v6407, %v6972
        %v6974 = vsel %vm6653, %v6973, %v6969
        %v6975 = vlaneseq
        %v6976 = vshrl.u32 %v6975, 7
        %v6977 = vsub.s32 %v6655, %v6976
        %v6978 = vrot.slane %v6410, %v6977
        %v6979 = vsel %vm6660, %v6978, %v6974
        %v6980 = vlaneseq
        %v6981 = vshrl.u32 %v6980, 7
        %v6982 = vsub.s32 %v6662, %v6981
        %v6983 = vrot.slane %v6413, %v6982
        %v6984 = vsel %vm6667, %v6983, %v6979
        %v6985 = vlaneseq
        %v6986 = vshrl.u32 %v6985, 7
        %v6987 = vsub.s32 %v6559, %v6986
        %v6988 = vrot.slane %v6416, %v6987
        %v6989 = vlaneseq
        %v6990 = vshrl.u32 %v6989, 7
        %v6991 = vsub.s32 %v6564, %v6990
        %v6992 = vrot.slane %v6419, %v6991
        %v6993 = vsel %vm6569, %v6992, %v6988
        %v6994 = vlaneseq
        %v6995 = vshrl.u32 %v6994, 7
        %v6996 = vsub.s32 %v6571, %v6995
        %v6997 = vrot.slane %v6422, %v6996
        %v6998 = vsel %vm6576, %v6997, %v6993
        %v6999 = vlaneseq
        %v7000 = vshrl.u32 %v6999, 7
        %v7001 = vsub.s32 %v6578, %v7000
        %v7002 = vrot.slane %v6425, %v7001
        %v7003 = vsel %vm6583, %v7002, %v6998
        %v7004 = vlaneseq
        %v7005 = vshrl.u32 %v7004, 7
        %v7006 = vsub.s32 %v6585, %v7005
        %v7007 = vrot.slane %v6428, %v7006
        %v7008 = vsel %vm6590, %v7007, %v7003
        %v7009 = vlaneseq
        %v7010 = vshrl.u32 %v7009, 7
        %v7011 = vsub.s32 %v6592, %v7010
        %v7012 = vrot.slane %v6431, %v7011
        %v7013 = vsel %vm6597, %v7012, %v7008
        %v7014 = vlaneseq
        %v7015 = vshrl.u32 %v7014, 7
        %v7016 = vsub.s32 %v6599, %v7015
        %v7017 = vrot.slane %v6434, %v7016
        %v7018 = vsel %vm6604, %v7017, %v7013
        %v7019 = vlaneseq
        %v7020 = vshrl.u32 %v7019, 7
        %v7021 = vsub.s32 %v6606, %v7020
        %v7022 = vrot.slane %v6437, %v7021
        %v7023 = vsel %vm6611, %v7022, %v7018
        %v7024 = vlaneseq
        %v7025 = vshrl.u32 %v7024, 7
        %v7026 = vsub.s32 %v6613, %v7025
        %v7027 = vrot.slane %v6440, %v7026
        %v7028 = vsel %vm6618, %v7027, %v7023
        %v7029 = vlaneseq
        %v7030 = vshrl.u32 %v7029, 7
        %v7031 = vsub.s32 %v6620, %v7030
        %v7032 = vrot.slane %v6443, %v7031
        %v7033 = vsel %vm6625, %v7032, %v7028
        %v7034 = vlaneseq
        %v7035 = vshrl.u32 %v7034, 7
        %v7036 = vsub.s32 %v6627, %v7035
        %v7037 = vrot.slane %v6446, %v7036
        %v7038 = vsel %vm6632, %v7037, %v7033
        %v7039 = vlaneseq
        %v7040 = vshrl.u32 %v7039, 7
        %v7041 = vsub.s32 %v6634, %v7040
        %v7042 = vrot.slane %v6449, %v7041
        %v7043 = vsel %vm6639, %v7042, %v7038
        %v7044 = vlaneseq
        %v7045 = vshrl.u32 %v7044, 7
        %v7046 = vsub.s32 %v6641, %v7045
        %v7047 = vrot.slane %v6452, %v7046
        %v7048 = vsel %vm6646, %v7047, %v7043
        %v7049 = vlaneseq
        %v7050 = vshrl.u32 %v7049, 7
        %v7051 = vsub.s32 %v6648, %v7050
        %v7052 = vrot.slane %v6455, %v7051
        %v7053 = vsel %vm6653, %v7052, %v7048
        %v7054 = vlaneseq
        %v7055 = vshrl.u32 %v7054, 7
        %v7056 = vsub.s32 %v6655, %v7055
        %v7057 = vrot.slane %v6458, %v7056
        %v7058 = vsel %vm6660, %v7057, %v7053
        %v7059 = vlaneseq
        %v7060 = vshrl.u32 %v7059, 7
        %v7061 = vsub.s32 %v6662, %v7060
        %v7062 = vrot.slane %v6461, %v7061
        %v7063 = vsel %vm6667, %v7062, %v7058
        %v7064 = vlaneseq
        %v7065 = vshrl.u32 %v7064, 7
        %v7066 = vsub.s32 %v6559, %v7065
        %v7067 = vrot.slane %v6464, %v7066
        %v7068 = vlaneseq
        %v7069 = vshrl.u32 %v7068, 7
        %v7070 = vsub.s32 %v6564, %v7069
        %v7071 = vrot.slane %v6467, %v7070
        %v7072 = vsel %vm6569, %v7071, %v7067
        %v7073 = vlaneseq
        %v7074 = vshrl.u32 %v7073, 7
        %v7075 = vsub.s32 %v6571, %v7074
        %v7076 = vrot.slane %v6470, %v7075
        %v7077 = vsel %vm6576, %v7076, %v7072
        %v7078 = vlaneseq
        %v7079 = vshrl.u32 %v7078, 7
        %v7080 = vsub.s32 %v6578, %v7079
        %v7081 = vrot.slane %v6473, %v7080
        %v7082 = vsel %vm6583, %v7081, %v7077
        %v7083 = vlaneseq
        %v7084 = vshrl.u32 %v7083, 7
        %v7085 = vsub.s32 %v6585, %v7084
        %v7086 = vrot.slane %v6476, %v7085
        %v7087 = vsel %vm6590, %v7086, %v7082
        %v7088 = vlaneseq
        %v7089 = vshrl.u32 %v7088, 7
        %v7090 = vsub.s32 %v6592, %v7089
        %v7091 = vrot.slane %v6479, %v7090
        %v7092 = vsel %vm6597, %v7091, %v7087
        %v7093 = vlaneseq
        %v7094 = vshrl.u32 %v7093, 7
        %v7095 = vsub.s32 %v6599, %v7094
        %v7096 = vrot.slane %v6482, %v7095
        %v7097 = vsel %vm6604, %v7096, %v7092
        %v7098 = vlaneseq
        %v7099 = vshrl.u32 %v7098, 7
        %v7100 = vsub.s32 %v6606, %v7099
        %v7101 = vrot.slane %v6485, %v7100
        %v7102 = vsel %vm6611, %v7101, %v7097
        %v7103 = vlaneseq
        %v7104 = vshrl.u32 %v7103, 7
        %v7105 = vsub.s32 %v6613, %v7104
        %v7106 = vrot.slane %v6488, %v7105
        %v7107 = vsel %vm6618, %v7106, %v7102
        %v7108 = vlaneseq
        %v7109 = vshrl.u32 %v7108, 7
        %v7110 = vsub.s32 %v6620, %v7109
        %v7111 = vrot.slane %v6491, %v7110
        %v7112 = vsel %vm6625, %v7111, %v7107
        %v7113 = vlaneseq
        %v7114 = vshrl.u32 %v7113, 7
        %v7115 = vsub.s32 %v6627, %v7114
        %v7116 = vrot.slane %v6494, %v7115
        %v7117 = vsel %vm6632, %v7116, %v7112
        %v7118 = vlaneseq
        %v7119 = vshrl.u32 %v7118, 7
        %v7120 = vsub.s32 %v6634, %v7119
        %v7121 = vrot.slane %v6497, %v7120
        %v7122 = vsel %vm6639, %v7121, %v7117
        %v7123 = vlaneseq
        %v7124 = vshrl.u32 %v7123, 7
        %v7125 = vsub.s32 %v6641, %v7124
        %v7126 = vrot.slane %v6500, %v7125
        %v7127 = vsel %vm6646, %v7126, %v7122
        %v7128 = vlaneseq
        %v7129 = vshrl.u32 %v7128, 7
        %v7130 = vsub.s32 %v6648, %v7129
        %v7131 = vrot.slane %v6503, %v7130
        %v7132 = vsel %vm6653, %v7131, %v7127
        %v7133 = vlaneseq
        %v7134 = vshrl.u32 %v7133, 7
        %v7135 = vsub.s32 %v6655, %v7134
        %v7136 = vrot.slane %v6506, %v7135
        %v7137 = vsel %vm6660, %v7136, %v7132
        %v7138 = vlaneseq
        %v7139 = vshrl.u32 %v7138, 7
        %v7140 = vsub.s32 %v6662, %v7139
        %v7141 = vrot.slane %v6509, %v7140
        %v7142 = vsel %vm6667, %v7141, %v7137
        %v7143 = vlaneseq
        %v7144 = vshrl.u32 %v7143, 7
        %v7145 = vsub.s32 %v6559, %v7144
        %v7146 = vrot.slane %v6512, %v7145
        %v7147 = vlaneseq
        %v7148 = vshrl.u32 %v7147, 7
        %v7149 = vsub.s32 %v6564, %v7148
        %v7150 = vrot.slane %v6515, %v7149
        %v7151 = vsel %vm6569, %v7150, %v7146
        %v7152 = vlaneseq
        %v7153 = vshrl.u32 %v7152, 7
        %v7154 = vsub.s32 %v6571, %v7153
        %v7155 = vrot.slane %v6518, %v7154
        %v7156 = vsel %vm6576, %v7155, %v7151
        %v7157 = vlaneseq
        %v7158 = vshrl.u32 %v7157, 7
        %v7159 = vsub.s32 %v6578, %v7158
        %v7160 = vrot.slane %v6521, %v7159
        %v7161 = vsel %vm6583, %v7160, %v7156
        %v7162 = vlaneseq
        %v7163 = vshrl.u32 %v7162, 7
        %v7164 = vsub.s32 %v6585, %v7163
        %v7165 = vrot.slane %v6524, %v7164
        %v7166 = vsel %vm6590, %v7165, %v7161
        %v7167 = vlaneseq
        %v7168 = vshrl.u32 %v7167, 7
        %v7169 = vsub.s32 %v6592, %v7168
        %v7170 = vrot.slane %v6527, %v7169
        %v7171 = vsel %vm6597, %v7170, %v7166
        %v7172 = vlaneseq
        %v7173 = vshrl.u32 %v7172, 7
        %v7174 = vsub.s32 %v6599, %v7173
        %v7175 = vrot.slane %v6530, %v7174
        %v7176 = vsel %vm6604, %v7175, %v7171
        %v7177 = vlaneseq
        %v7178 = vshrl.u32 %v7177, 7
        %v7179 = vsub.s32 %v6606, %v7178
        %v7180 = vrot.slane %v6533, %v7179
        %v7181 = vsel %vm6611, %v7180, %v7176
        %v7182 = vlaneseq
        %v7183 = vshrl.u32 %v7182, 7
        %v7184 = vsub.s32 %v6613, %v7183
        %v7185 = vrot.slane %v6536, %v7184
        %v7186 = vsel %vm6618, %v7185, %v7181
        %v7187 = vlaneseq
        %v7188 = vshrl.u32 %v7187, 7
        %v7189 = vsub.s32 %v6620, %v7188
        %v7190 = vrot.slane %v6539, %v7189
        %v7191 = vsel %vm6625, %v7190, %v7186
        %v7192 = vlaneseq
        %v7193 = vshrl.u32 %v7192, 7
        %v7194 = vsub.s32 %v6627, %v7193
        %v7195 = vrot.slane %v6542, %v7194
        %v7196 = vsel %vm6632, %v7195, %v7191
        %v7197 = vlaneseq
        %v7198 = vshrl.u32 %v7197, 7
        %v7199 = vsub.s32 %v6634, %v7198
        %v7200 = vrot.slane %v6545, %v7199
        %v7201 = vsel %vm6639, %v7200, %v7196
        %v7202 = vlaneseq
        %v7203 = vshrl.u32 %v7202, 7
        %v7204 = vsub.s32 %v6641, %v7203
        %v7205 = vrot.slane %v6548, %v7204
        %v7206 = vsel %vm6646, %v7205, %v7201
        %v7207 = vlaneseq
        %v7208 = vshrl.u32 %v7207, 7
        %v7209 = vsub.s32 %v6648, %v7208
        %v7210 = vrot.slane %v6551, %v7209
        %v7211 = vsel %vm6653, %v7210, %v7206
        %v7212 = vlaneseq
        %v7213 = vshrl.u32 %v7212, 7
        %v7214 = vsub.s32 %v6655, %v7213
        %v7215 = vrot.slane %v6554, %v7214
        %v7216 = vsel %vm6660, %v7215, %v7211
        %v7217 = vlaneseq
        %v7218 = vshrl.u32 %v7217, 7
        %v7219 = vsub.s32 %v6662, %v7218
        %v7220 = vrot.slane %v6557, %v7219
        %v7221 = vsel %vm6667, %v7220, %v7216
        %vm7222 = vcmask 1041409
        %v7223 = vsel %vm7222, %v6747, %v6668
        %vm7224 = vcmask 1042434
        %v7225 = vsel %vm7224, %v6826, %v7223
        %vm7226 = vcmask 1043459
        %v7227 = vsel %vm7226, %v6905, %v7225
        %vm7228 = vcmask 1044484
        %v7229 = vsel %vm7228, %v6984, %v7227
        %vm7230 = vcmask 1045509
        %v7231 = vsel %vm7230, %v7063, %v7229
        %vm7232 = vcmask 1046534
        %v7233 = vsel %vm7232, %v7142, %v7231
        %vm7234 = vcmask 1047559
        %v7235 = vsel %vm7234, %v7221, %v7233
        %v7237 = vsel %vm6045, %v7235, 0.0
        %v7238 = vpack.c.bf16 %v7237, %v7237
        %7239 = vst [vmem:[%s523] sm:$0xf] %v7238
        %v7240 = vld [vmem:[%s529] sm:$0x1]
        %v7241 = vrot.slane %v7237, 4
        %v7242 = vadd.f32 %v7237, %v7241
        %v7243 = vrot.slane %v7242, 2
        %v7244 = vadd.f32 %v7242, %v7243
        %v7245 = vrot.slane %v7244, 1
        %v7246 = vadd.f32 %v7244, %v7245
        %v7247 = vadd.f32 %v7240, %v7246
        %7248 = vst [vmem:[%s529] sm:$0x1] %v7247
        %v7249 = vld [vmem:[%s535] sm:$0x1]
        %v7250 = vmul.f32 %v7237, %v7237
        %v7251 = vrot.slane %v7250, 4
        %v7252 = vadd.f32 %v7250, %v7251
        %v7253 = vrot.slane %v7252, 2
        %v7254 = vadd.f32 %v7252, %v7253
        %v7255 = vrot.slane %v7254, 1
        %v7256 = vadd.f32 %v7254, %v7255
        %v7257 = vadd.f32 %v7249, %v7256
        %7258 = vst [vmem:[%s535] sm:$0x1] %v7257
        %p7259 = scmp.lt.s32.totalorder %s29, 1
        %s7260 = scalar_select %p7259, %s29, 1
        %p7261 = scmp.lt.s32.totalorder %s31, 0
        %s7262 = scalar_select %p7261, %s31, 0
        %p7263 = scmp.lt.s32.totalorder %s30, 0
        %s7264 = scalar_select %p7263, %s30, 0
        %s7265 = sadd.s32 %s7264, %s7262
        %s7266 = sadd.s32 %s7265, %s7260
        %s7267 = smul.addr %s7266, 4
        %s7268 = scalar_lea.vmem %s9, %s7267
        %p7269 = scmp.lt.s32.totalorder %s29, 1
        %s7270 = scalar_select %p7269, %s29, 1
        %p7271 = scmp.lt.s32.totalorder %s30, 0
        %s7272 = scalar_select %p7271, %s30, 0
        %s7273 = sadd.s32 %s7272, %s7270
        %s7274 = scalar_lea.vmem %s10, %s7273
        %p7275 = scmp.lt.s32.totalorder %s29, 1
        %s7276 = scalar_select %p7275, %s29, 1
        %p7277 = scmp.lt.s32.totalorder %s30, 0
        %s7278 = scalar_select %p7277, %s30, 0
        %s7279 = sadd.s32 %s7278, %s7276
        %s7280 = scalar_lea.vmem %s11, %s7279
        // Predicated region
        $region65: #{dscript_forward.2} parent=55 // pred_check
          %p7281 = pneg %p275
        $region66: #{dscript_forward.2} parent=55 // pred_check_branch
          %7283 = sbr.rel (%p7281) target = $region68
        $region67: #{dscript_forward.2} parent=55 // pred_region
          _
        $region68: #{dscript_forward.2} parent=55 // pred_fallthru
          _
        // Predicated region
        $region69: #{dscript_forward.2} parent=55 // pred_check
          %p7284 = pneg %p303
        $region70: #{dscript_forward.2} parent=55 // pred_check_branch
          %7286 = sbr.rel (%p7284) target = $region72
        $region71: #{dscript_forward.2} parent=55 // pred_region
          _
        $region72: #{dscript_forward.2} parent=55 // pred_fallthru
          _
        // Predicated region
        $region73: #{dscript_forward.2} parent=55 // pred_check
          %p7287 = pneg %p331
        $region74: #{dscript_forward.2} parent=55 // pred_check_branch
          %7289 = sbr.rel (%p7287) target = $region76
        $region75: #{dscript_forward.2} parent=55 // pred_region
          _
        $region76: #{dscript_forward.2} parent=55 // pred_fallthru
          _
      $region56: #{dscript_forward.2} parent=5 // pred_fallthru
        _
      %p7290 = scmp.le.s32.totalorder 2, %s19
      // Predicated region
      $region77: #{dscript_forward.2} parent=5 // pred_check
        %p7291 = pneg %p7290
      $region78: #{dscript_forward.2} parent=5 // pred_check_branch
        %7293 = sbr.rel (%p7291) target = $region80
      $region79: #{dscript_forward.2} parent=5 // pred_region
        %s7294 = ssub.s32 %s19, 2
        // Predicated region
        $region81: #{dscript_forward.2} parent=79 // pred_check
          %p7295 = pneg %p281
        $region82: #{dscript_forward.2} parent=79 // pred_check_branch
          %7297 = sbr.rel (%p7295) target = $region84
        $region83: #{dscript_forward.2} parent=79 // pred_region
          %p7298 = scmp.lt.s32.totalorder %s32, 1
          %s7299 = scalar_select %p7298, %s32, 1
          %p7300 = scmp.lt.s32.totalorder %s34, 0
          %s7301 = scalar_select %p7300, %s34, 0
          %p7302 = scmp.lt.s32.totalorder %s33, 0
          %s7303 = scalar_select %p7302, %s33, 0
          %s7304 = sadd.s32 %s7303, %s7301
          %s7305 = sadd.s32 %s7304, %s7299
          %s7306 = smul.addr %s7305, 4
          %s7307 = scalar_lea.vmem %s9, %s7306
        $region84: #{dscript_forward.2} parent=79 // pred_fallthru
          _
        // Predicated region
        $region85: #{dscript_forward.2} parent=79 // pred_check
          %p7308 = pneg %p309
        $region86: #{dscript_forward.2} parent=79 // pred_check_branch
          %7310 = sbr.rel (%p7308) target = $region88
        $region87: #{dscript_forward.2} parent=79 // pred_region
          %p7311 = scmp.lt.s32.totalorder %s32, 1
          %s7312 = scalar_select %p7311, %s32, 1
          %p7313 = scmp.lt.s32.totalorder %s33, 0
          %s7314 = scalar_select %p7313, %s33, 0
          %s7315 = sadd.s32 %s7314, %s7312
          %s7316 = scalar_lea.vmem %s10, %s7315
        $region88: #{dscript_forward.2} parent=79 // pred_fallthru
          _
        // Predicated region
        $region89: #{dscript_forward.2} parent=79 // pred_check
          %p7317 = pneg %p337
        $region90: #{dscript_forward.2} parent=79 // pred_check_branch
          %7319 = sbr.rel (%p7317) target = $region92
        $region91: #{dscript_forward.2} parent=79 // pred_region
          %p7320 = scmp.lt.s32.totalorder %s32, 1
          %s7321 = scalar_select %p7320, %s32, 1
          %p7322 = scmp.lt.s32.totalorder %s33, 0
          %s7323 = scalar_select %p7322, %s33, 0
          %s7324 = sadd.s32 %s7323, %s7321
          %s7325 = scalar_lea.vmem %s11, %s7324
        $region92: #{dscript_forward.2} parent=79 // pred_fallthru
          _
      $region80: #{dscript_forward.2} parent=5 // pred_fallthru
        _
    $region6: #{dscript_forward.2} parent=1 // loop_footer
      %s23 = sadd.s32 1, %s19
    $region7: #{dscript_forward.2} parent=1 // loop_footer_branch
      %18 = sbr.rel target = $region3
    $region8: #{dscript_forward.2} parent=1 // loop_exit
      _
    %7326 = vsyncpa [#allocation5], 1
    %s7327 = scalar_lea.sflag [#allocation5], 1
    %7328 = vsyncpa %s7327, 1

</llo_original>
